<compile_context>
chip_gen: v7x
topology: tpu7x:2x2x1
jax: 0.10.0
libtpu: 0.0.40
codegen_flags: <defaults>
</compile_context>

<pallas_src>
import functools

import jax
import jax.numpy as jnp
from jax.experimental import pallas as pl
from jax.experimental.pallas import tpu as pltpu

_CP = 128        # every channel axis is carried at 128 lanes (zero padded)
_EPS = 1e-5      # torch GroupNorm default


# ----------------------------------------------------------------------------
# In-kernel helpers (operate on values / VMEM scratch refs)
# ----------------------------------------------------------------------------
def _conv3x3_im2col(pad_ref, act, w_bf16, bias, H, W):
    """3x3, stride 1, pad 1 conv as a single im2col matmul.

    act:     (H, W, _CP) f32 value
    pad_ref: (H+2, W+2, _CP) f32 VMEM scratch (zeroed + interior written here)
    w_bf16:  (9*_CP, _CP) bf16, taps in (kh, kw, cin) order, zero padded
    bias:    (1, _CP) f32
    returns  (H*W, _CP) f32
    """
    pad_ref[...] = jnp.zeros_like(pad_ref)
    pad_ref[pl.ds(1, H), pl.ds(1, W), :] = act
    cols = []
    for kh in range(3):
        for kw in range(3):
            win = pad_ref[pl.ds(kh, H), pl.ds(kw, W), :]            # (H, W, CP)
            cols.append(win.reshape(H * W, _CP).astype(jnp.bfloat16))
    patches = jnp.concatenate(cols, axis=-1)                        # (H*W, 9*CP) bf16
    acc = jnp.dot(patches, w_bf16, preferred_element_type=jnp.float32)
    return acc + bias


def _groupnorm(x2d, proj, gamma, beta, count, eps):
    """GroupNorm via a (C, C) 0/1 group projector matrix; two-pass (mean, then var).

    x2d: (HW, _CP) f32. Padded channels have zero projector columns and zero
    gamma/beta, so they stay exactly zero through the normalization.
    """
    inv_count = 1.0 / count
    s = jnp.sum(x2d, axis=0, keepdims=True)                          # (1, C)
    mean_c = jnp.dot(s, proj, preferred_element_type=jnp.float32) * inv_count
    d = x2d - mean_c
    ss = jnp.sum(d * d, axis=0, keepdims=True)                       # (1, C)
    var_c = jnp.dot(ss, proj, preferred_element_type=jnp.float32) * inv_count
    inv_c = jax.lax.rsqrt(var_c + eps)                               # biased var (torch)
    return d * inv_c * gamma + beta


def _maxpool2x2(buf_ref, H, W):
    """2x2/2 max pool; W pairs via strided sublane loads, H pairs via leading reshape."""
    Ho, Wo = H // 2, W // 2
    ev = buf_ref[:, pl.ds(0, Wo, stride=2), :]                       # (H, Wo, CP)
    od = buf_ref[:, pl.ds(1, Wo, stride=2), :]
    m = jnp.maximum(ev, od)
    return jnp.max(m.reshape(Ho, 2, Wo, _CP), axis=1)                # (Ho, Wo, CP)


# ----------------------------------------------------------------------------
# Fused conv stack: conv1 -> GN(4) -> ReLU -> pool -> conv2 -> ReLU
#                   -> conv3 -> ReLU -> GN(16) -> pool
# ----------------------------------------------------------------------------
def _convstack_kernel(x_ref,
                      w1_ref, b1_ref, g1_ref, be1_ref, p1_ref,
                      w2_ref, b2_ref,
                      w3_ref, b3_ref, g3_ref, be3_ref, p3_ref,
                      o_ref,
                      pad1, pad2, pad3, buf1, buf3,
                      *, H, W, gn1_count, gn3_count, eps):
    Hp, Wp = H // 2, W // 2
    Hq, Wq = Hp // 2, Wp // 2

    # layer 1: Conv(4->32) -> GroupNorm(4) -> ReLU -> MaxPool -> Dropout(identity)
    a1 = _conv3x3_im2col(pad1, x_ref[...], w1_ref[...], b1_ref[...], H, W)
    a1 = _groupnorm(a1, p1_ref[...], g1_ref[...], be1_ref[...], gn1_count, eps)
    a1 = jnp.maximum(a1, 0.0)
    buf1[...] = a1.reshape(H, W, _CP)
    pool1 = _maxpool2x2(buf1, H, W)                                  # (Hp, Wp, CP)

    # layer 2: Conv(32->64) -> ReLU -> Dropout(identity)
    a2 = _conv3x3_im2col(pad2, pool1, w2_ref[...], b2_ref[...], Hp, Wp)
    a2 = jnp.maximum(a2, 0.0)

    # layer 3: Conv(64->128) -> ReLU -> GroupNorm(16) -> MaxPool -> Dropout(identity)
    a3 = _conv3x3_im2col(pad3, a2.reshape(Hp, Wp, _CP), w3_ref[...], b3_ref[...],
                         Hp, Wp)
    a3 = jnp.maximum(a3, 0.0)
    a3 = _groupnorm(a3, p3_ref[...], g3_ref[...], be3_ref[...], gn3_count, eps)
    buf3[...] = a3.reshape(Hp, Wp, _CP)
    pool3 = _maxpool2x2(buf3, Hp, Wp)                                # (Hq, Wq, CP)

    # NHWC flatten order: row = h*Wq + w, lane = c  (matches permuted fc1 weight)
    o_ref[...] = pool3.reshape(Hq * Wq, _CP)


def conv_stack(x, kp):
    N, H, W, C = x.shape
    assert C == _CP
    Hp, Wp = H // 2, W // 2
    Hq, Wq = Hp // 2, Wp // 2
    kern = functools.partial(
        _convstack_kernel, H=H, W=W,
        gn1_count=float(H * W * (32 // 4)),
        gn3_count=float(Hp * Wp * (128 // 16)),
        eps=_EPS)
    wspec = pl.BlockSpec((9 * _CP, _CP), lambda n: (0, 0))
    cspec = pl.BlockSpec((1, _CP), lambda n: (0, 0))
    pspec = pl.BlockSpec((_CP, _CP), lambda n: (0, 0))
    return pl.pallas_call(
        kern,
        out_shape=jax.ShapeDtypeStruct((N, Hq * Wq, _CP), jnp.float32),
        grid=(N,),
        in_specs=[
            pl.BlockSpec((None, H, W, _CP), lambda n: (n, 0, 0, 0)),
            wspec, cspec, cspec, cspec, pspec,        # w1, b1, gamma1, beta1, proj1
            wspec, cspec,                             # w2, b2
            wspec, cspec, cspec, cspec, pspec,        # w3, b3, gamma3, beta3, proj3
        ],
        out_specs=pl.BlockSpec((None, Hq * Wq, _CP), lambda n: (n, 0, 0)),
        scratch_shapes=[
            pltpu.VMEM((H + 2, W + 2, _CP), jnp.float32),    # pad1
            pltpu.VMEM((Hp + 2, Wp + 2, _CP), jnp.float32),  # pad2
            pltpu.VMEM((Hp + 2, Wp + 2, _CP), jnp.float32),  # pad3
            pltpu.VMEM((H, W, _CP), jnp.float32),            # buf1 (pre-pool 1)
            pltpu.VMEM((Hp, Wp, _CP), jnp.float32),          # buf3 (pre-pool 2)
        ],
        compiler_params=pltpu.CompilerParams(dimension_semantics=("parallel",)),
    )(x, kp["w1"], kp["b1"], kp["g1"], kp["be1"], kp["proj1"],
      kp["w2"], kp["b2"],
      kp["w3"], kp["b3"], kp["g3"], kp["be3"], kp["proj3"])


# ----------------------------------------------------------------------------
# Fused classifier head: Linear(2048->512) -> ReLU -> Linear(512->num_classes)
# ----------------------------------------------------------------------------
def _mlp_kernel(x_ref, w1_ref, b1_ref, w2_ref, b2_ref, o_ref):
    h = jnp.dot(x_ref[...].astype(jnp.bfloat16), w1_ref[...],
                preferred_element_type=jnp.float32) + b1_ref[...]
    h = jnp.maximum(h, 0.0)
    o_ref[...] = jnp.dot(h.astype(jnp.bfloat16), w2_ref[...],
                         preferred_element_type=jnp.float32) + b2_ref[...]


def mlp(feat, kp):
    N = feat.shape[0]
    num_classes = kp["fw2"].shape[1]
    vmem = pl.BlockSpec(memory_space=pltpu.MemorySpace.VMEM)
    return pl.pallas_call(
        _mlp_kernel,
        out_shape=jax.ShapeDtypeStruct((N, num_classes), jnp.float32),
        in_specs=[vmem, vmem, vmem, vmem, vmem],
        out_specs=vmem,
    )(feat, kp["fw1"], kp["fb1"], kp["fw2"], kp["fb2"])


# ----------------------------------------------------------------------------
# Parameter preparation (done once, outside the hot path)
# ----------------------------------------------------------------------------
def _group_projector(c_real, groups):
    gsz = c_real // groups
    c = jnp.arange(_CP)
    same = (c[:, None] // gsz) == (c[None, :] // gsz)
    real = (c[:, None] < c_real) & (c[None, :] < c_real)
    return (same & real).astype(jnp.float32)                        # (_CP, _CP)


def prepare_params(p, *, hq, wq):
    """Torch-layout f32 params -> kernel layout (128-lane padded, bf16 MXU operands)."""

    def conv_w(w):
        kh, kw, cin, cout = w.shape
        wp = jnp.zeros((kh, kw, _CP, _CP), jnp.float32).at[:, :, :cin, :cout].set(w)
        return wp.reshape(kh * kw * _CP, _CP).astype(jnp.bfloat16)

    def chan(v):
        return jnp.zeros((1, _CP), jnp.float32).at[0, : v.shape[0]].set(v)

    c3 = p["w3"].shape[-1]
    assert c3 == _CP
    fc_in, hidden = p["fw1"].shape
    assert fc_in == c3 * hq * wq
    # torch flattens (C, H, W); kernel features are flattened (H, W, C) -> permute rows.
    fw1 = (p["fw1"].reshape(c3, hq, wq, hidden)
           .transpose(1, 2, 0, 3).reshape(fc_in, hidden))
    return {
        "w1": conv_w(p["w1"]), "b1": chan(p["b1"]),
        "g1": chan(p["g1"]), "be1": chan(p["be1"]),
        "proj1": _group_projector(32, 4),
        "w2": conv_w(p["w2"]), "b2": chan(p["b2"]),
        "w3": conv_w(p["w3"]), "b3": chan(p["b3"]),
        "g3": chan(p["g3"]), "be3": chan(p["be3"]),
        "proj3": _group_projector(128, 16),
        "fw1": fw1.astype(jnp.bfloat16),
        "fb1": p["fb1"].reshape(1, -1).astype(jnp.float32),
        "fw2": p["fw2"].astype(jnp.bfloat16),
        "fb2": p["fb2"].reshape(1, -1).astype(jnp.float32),
    }


# ----------------------------------------------------------------------------
# Full forward pass (mirrors SimpleNet.forward, eval semantics)
# ----------------------------------------------------------------------------
def simplenet_forward(x_nchw, kp):
    n, c, _, _ = x_nchw.shape
    x = jnp.transpose(x_nchw, (0, 2, 3, 1))                         # NCHW -> NHWC
    x = jnp.pad(x, ((0, 0), (0, 0), (0, 0), (0, _CP - c)))          # lane-pad input once
    feat = conv_stack(x, kp)                                        # (N, Hq*Wq, 128)
    feat = feat.reshape(n, -1)                                      # (h, w, c) flatten
    return mlp(feat, kp)                                            # (N, num_classes)


if __name__ == "__main__":
    # Small, module-consistent shapes: input_shape=(4, 16, 16), batch=2, 10 classes.
    N, Cin, H, W = 2, 4, 16, 16
    num_classes = 10
    fc_in = 128 * (H // 4) * (W // 4)

    key = jax.random.PRNGKey(0)
    ks = jax.random.split(key, 16)
    p = {
        "w1": 0.10 * jax.random.normal(ks[0], (3, 3, Cin, 32), jnp.float32),
        "b1": 0.10 * jax.random.normal(ks[1], (32,), jnp.float32),
        "g1": 1.0 + 0.10 * jax.random.normal(ks[2], (32,), jnp.float32),
        "be1": 0.10 * jax.random.normal(ks[3], (32,), jnp.float32),
        "w2": 0.05 * jax.random.normal(ks[4], (3, 3, 32, 64), jnp.float32),
        "b2": 0.10 * jax.random.normal(ks[5], (64,), jnp.float32),
        "w3": 0.05 * jax.random.normal(ks[6], (3, 3, 64, 128), jnp.float32),
        "b3": 0.10 * jax.random.normal(ks[7], (128,), jnp.float32),
        "g3": 1.0 + 0.10 * jax.random.normal(ks[8], (128,), jnp.float32),
        "be3": 0.10 * jax.random.normal(ks[9], (128,), jnp.float32),
        "fw1": 0.02 * jax.random.normal(ks[10], (fc_in, 512), jnp.float32),
        "fb1": 0.10 * jax.random.normal(ks[11], (512,), jnp.float32),
        "fw2": 0.05 * jax.random.normal(ks[12], (512, num_classes), jnp.float32),
        "fb2": 0.10 * jax.random.normal(ks[13], (num_classes,), jnp.float32),
    }
    kp = prepare_params(p, hq=H // 4, wq=W // 4)

    x = jax.random.normal(ks[14], (N, Cin, H, W), jnp.float32)      # NCHW like torch
    out = jax.jit(simplenet_forward)(x, kp)
    out = jax.block_until_ready(out)
    assert out.shape == (N, num_classes), out.shape
    assert bool(jnp.all(jnp.isfinite(out)))
    print("KERNEL_OK")
</pallas_src>

<mosaic_0001>
module attributes {stable_mosaic.version = 11 : i64} {
  func.func @_convstack_kernel(%arg0: i32, %arg1: memref<1x16x16x128xf32, #tpu.memory_space<vmem>>, %arg2: memref<1152x128xbf16, #tpu.memory_space<vmem>>, %arg3: memref<1x128xf32, #tpu.memory_space<vmem>>, %arg4: memref<1x128xf32, #tpu.memory_space<vmem>>, %arg5: memref<1x128xf32, #tpu.memory_space<vmem>>, %arg6: memref<128x128xf32, #tpu.memory_space<vmem>>, %arg7: memref<1152x128xbf16, #tpu.memory_space<vmem>>, %arg8: memref<1x128xf32, #tpu.memory_space<vmem>>, %arg9: memref<1152x128xbf16, #tpu.memory_space<vmem>>, %arg10: memref<1x128xf32, #tpu.memory_space<vmem>>, %arg11: memref<1x128xf32, #tpu.memory_space<vmem>>, %arg12: memref<1x128xf32, #tpu.memory_space<vmem>>, %arg13: memref<128x128xf32, #tpu.memory_space<vmem>>, %arg14: memref<1x16x128xf32, #tpu.memory_space<vmem>>, %arg15: memref<18x18x128xf32, #tpu.memory_space<vmem>>, %arg16: memref<10x10x128xf32, #tpu.memory_space<vmem>>, %arg17: memref<10x10x128xf32, #tpu.memory_space<vmem>>, %arg18: memref<16x16x128xf32, #tpu.memory_space<vmem>>, %arg19: memref<8x8x128xf32, #tpu.memory_space<vmem>>) attributes {dimension_semantics = [#tpu.dimension_semantics<parallel>], iteration_bounds = array<i64: 2>, scalar_prefetch = 0 : i64, scratch_operands = 5 : i64, tpu.core_type = #tpu.core_type<tc>, window_params = [{transform_indices = @transform_0, window_bounds = array<i64: 1, 16, 16, 128>}, {pipeline_mode = #tpu.pipeline_mode<synchronous>, transform_indices = @transform_1, window_bounds = array<i64: 1152, 128>}, {pipeline_mode = #tpu.pipeline_mode<synchronous>, transform_indices = @transform_2, window_bounds = array<i64: 1, 128>}, {pipeline_mode = #tpu.pipeline_mode<synchronous>, transform_indices = @transform_3, window_bounds = array<i64: 1, 128>}, {pipeline_mode = #tpu.pipeline_mode<synchronous>, transform_indices = @transform_4, window_bounds = array<i64: 1, 128>}, {pipeline_mode = #tpu.pipeline_mode<synchronous>, transform_indices = @transform_5, window_bounds = array<i64: 128, 128>}, {pipeline_mode = #tpu.pipeline_mode<synchronous>, transform_indices = @transform_6, window_bounds = array<i64: 1152, 128>}, {pipeline_mode = #tpu.pipeline_mode<synchronous>, transform_indices = @transform_7, window_bounds = array<i64: 1, 128>}, {pipeline_mode = #tpu.pipeline_mode<synchronous>, transform_indices = @transform_8, window_bounds = array<i64: 1152, 128>}, {pipeline_mode = #tpu.pipeline_mode<synchronous>, transform_indices = @transform_9, window_bounds = array<i64: 1, 128>}, {pipeline_mode = #tpu.pipeline_mode<synchronous>, transform_indices = @transform_10, window_bounds = array<i64: 1, 128>}, {pipeline_mode = #tpu.pipeline_mode<synchronous>, transform_indices = @transform_11, window_bounds = array<i64: 1, 128>}, {pipeline_mode = #tpu.pipeline_mode<synchronous>, transform_indices = @transform_12, window_bounds = array<i64: 128, 128>}, {transform_indices = @transform_13, window_bounds = array<i64: 1, 16, 128>}]} {
    %c0 = arith.constant 0 : index
    %c0_0 = arith.constant 0 : index
    %c0_1 = arith.constant 0 : index
    %c0_2 = arith.constant 0 : index
    %0 = vector.load %arg1[%c0, %c0_0, %c0_1, %c0_2] : memref<1x16x16x128xf32, #tpu.memory_space<vmem>>, vector<1x16x16x128xf32>
    %1 = vector.shape_cast %0 : vector<1x16x16x128xf32> to vector<16x16x128xf32>
    %c0_3 = arith.constant 0 : index
    %c0_4 = arith.constant 0 : index
    %2 = vector.load %arg2[%c0_3, %c0_4] : memref<1152x128xbf16, #tpu.memory_space<vmem>>, vector<1152x128xbf16>
    %c0_5 = arith.constant 0 : index
    %c0_6 = arith.constant 0 : index
    %3 = vector.load %arg3[%c0_5, %c0_6] : memref<1x128xf32, #tpu.memory_space<vmem>>, vector<1x128xf32>
    %cst = arith.constant 0.000000e+00 : f32
    %4 = vector.broadcast %cst : f32 to vector<18x18x128xf32>
    %c0_7 = arith.constant 0 : index
    %c0_8 = arith.constant 0 : index
    %c0_9 = arith.constant 0 : index
    %5 = vector.load %arg15[%c0_7, %c0_8, %c0_9] : memref<18x18x128xf32, #tpu.memory_space<vmem>>, vector<18x18x128xf32>
    tpu.vector_store %arg15[%c0_7, %c0_8, %c0_9], %4 {strides = array<i32>} : memref<18x18x128xf32, #tpu.memory_space<vmem>>, vector<18x18x128xf32>,
    %c1 = arith.constant 1 : index
    %c1_10 = arith.constant 1 : index
    %c0_11 = arith.constant 0 : index
    %6 = vector.load %arg15[%c1, %c1_10, %c0_11] : memref<18x18x128xf32, #tpu.memory_space<vmem>>, vector<16x16x128xf32>
    tpu.vector_store %arg15[%c1, %c1_10, %c0_11], %1 {strides = array<i32>} : memref<18x18x128xf32, #tpu.memory_space<vmem>>, vector<16x16x128xf32>,
    %c0_12 = arith.constant 0 : index
    %c0_13 = arith.constant 0 : index
    %c0_14 = arith.constant 0 : index
    %7 = vector.load %arg15[%c0_12, %c0_13, %c0_14] : memref<18x18x128xf32, #tpu.memory_space<vmem>>, vector<16x16x128xf32>
    %8 = vector.shape_cast %7 : vector<16x16x128xf32> to vector<256x128xf32>
    %9 = arith.truncf %8 : vector<256x128xf32> to vector<256x128xbf16>
    %c0_15 = arith.constant 0 : index
    %c1_16 = arith.constant 1 : index
    %c0_17 = arith.constant 0 : index
    %10 = vector.load %arg15[%c0_15, %c1_16, %c0_17] : memref<18x18x128xf32, #tpu.memory_space<vmem>>, vector<16x16x128xf32>
    %11 = vector.shape_cast %10 : vector<16x16x128xf32> to vector<256x128xf32>
    %12 = arith.truncf %11 : vector<256x128xf32> to vector<256x128xbf16>
    %c0_18 = arith.constant 0 : index
    %c2 = arith.constant 2 : index
    %c0_19 = arith.constant 0 : index
    %13 = vector.load %arg15[%c0_18, %c2, %c0_19] : memref<18x18x128xf32, #tpu.memory_space<vmem>>, vector<16x16x128xf32>
    %14 = vector.shape_cast %13 : vector<16x16x128xf32> to vector<256x128xf32>
    %15 = arith.truncf %14 : vector<256x128xf32> to vector<256x128xbf16>
    %c1_20 = arith.constant 1 : index
    %c0_21 = arith.constant 0 : index
    %c0_22 = arith.constant 0 : index
    %16 = vector.load %arg15[%c1_20, %c0_21, %c0_22] : memref<18x18x128xf32, #tpu.memory_space<vmem>>, vector<16x16x128xf32>
    %17 = vector.shape_cast %16 : vector<16x16x128xf32> to vector<256x128xf32>
    %18 = arith.truncf %17 : vector<256x128xf32> to vector<256x128xbf16>
    %c1_23 = arith.constant 1 : index
    %c1_24 = arith.constant 1 : index
    %c0_25 = arith.constant 0 : index
    %19 = vector.load %arg15[%c1_23, %c1_24, %c0_25] : memref<18x18x128xf32, #tpu.memory_space<vmem>>, vector<16x16x128xf32>
    %20 = vector.shape_cast %19 : vector<16x16x128xf32> to vector<256x128xf32>
    %21 = arith.truncf %20 : vector<256x128xf32> to vector<256x128xbf16>
    %c1_26 = arith.constant 1 : index
    %c2_27 = arith.constant 2 : index
    %c0_28 = arith.constant 0 : index
    %22 = vector.load %arg15[%c1_26, %c2_27, %c0_28] : memref<18x18x128xf32, #tpu.memory_space<vmem>>, vector<16x16x128xf32>
    %23 = vector.shape_cast %22 : vector<16x16x128xf32> to vector<256x128xf32>
    %24 = arith.truncf %23 : vector<256x128xf32> to vector<256x128xbf16>
    %c2_29 = arith.constant 2 : index
    %c0_30 = arith.constant 0 : index
    %c0_31 = arith.constant 0 : index
    %25 = vector.load %arg15[%c2_29, %c0_30, %c0_31] : memref<18x18x128xf32, #tpu.memory_space<vmem>>, vector<16x16x128xf32>
    %26 = vector.shape_cast %25 : vector<16x16x128xf32> to vector<256x128xf32>
    %27 = arith.truncf %26 : vector<256x128xf32> to vector<256x128xbf16>
    %c2_32 = arith.constant 2 : index
    %c1_33 = arith.constant 1 : index
    %c0_34 = arith.constant 0 : index
    %28 = vector.load %arg15[%c2_32, %c1_33, %c0_34] : memref<18x18x128xf32, #tpu.memory_space<vmem>>, vector<16x16x128xf32>
    %29 = vector.shape_cast %28 : vector<16x16x128xf32> to vector<256x128xf32>
    %30 = arith.truncf %29 : vector<256x128xf32> to vector<256x128xbf16>
    %c2_35 = arith.constant 2 : index
    %c2_36 = arith.constant 2 : index
    %c0_37 = arith.constant 0 : index
    %31 = vector.load %arg15[%c2_35, %c2_36, %c0_37] : memref<18x18x128xf32, #tpu.memory_space<vmem>>, vector<16x16x128xf32>
    %32 = vector.shape_cast %31 : vector<16x16x128xf32> to vector<256x128xf32>
    %33 = arith.truncf %32 : vector<256x128xf32> to vector<256x128xbf16>
    %34 = tpu.concatenate %9, %12, %15, %18, %21, %24, %27, %30, %33 in 1 : vector<256x128xbf16>, vector<256x128xbf16>, vector<256x128xbf16>, vector<256x128xbf16>, vector<256x128xbf16>, vector<256x128xbf16>, vector<256x128xbf16>, vector<256x128xbf16>, vector<256x128xbf16> -> vector<256x1152xbf16>
    %cst_38 = arith.constant dense<0.000000e+00> : vector<256x128xf32>
    %35 = tpu.matmul %34, %2, %cst_38 {dimension_numbers = #tpu.dot_dimension_numbers<[1], [0], [0], [1], [0, 0, 1, 1], [], []>} : vector<256x1152xbf16>, vector<1152x128xbf16>, vector<256x128xf32> -> vector<256x128xf32>
    %36 = vector.broadcast %3 : vector<1x128xf32> to vector<256x128xf32>
    %37 = arith.addf %35, %36 : vector<256x128xf32>
    %c0_39 = arith.constant 0 : index
    %c0_40 = arith.constant 0 : index
    %38 = vector.load %arg6[%c0_39, %c0_40] : memref<128x128xf32, #tpu.memory_space<vmem>>, vector<128x128xf32>
    %c0_41 = arith.constant 0 : index
    %c0_42 = arith.constant 0 : index
    %39 = vector.load %arg4[%c0_41, %c0_42] : memref<1x128xf32, #tpu.memory_space<vmem>>, vector<1x128xf32>
    %c0_43 = arith.constant 0 : index
    %c0_44 = arith.constant 0 : index
    %40 = vector.load %arg5[%c0_43, %c0_44] : memref<1x128xf32, #tpu.memory_space<vmem>>, vector<1x128xf32>
    %cst_45 = arith.constant dense<0.000000e+00> : vector<128xf32>
    %41 = vector.multi_reduction <add>, %37, %cst_45 [0] : vector<256x128xf32> to vector<128xf32>
    %42 = vector.shape_cast %41 : vector<128xf32> to vector<1x128xf32>
    %cst_46 = arith.constant dense<0.000000e+00> : vector<1x128xf32>
    %43 = tpu.matmul %42, %38, %cst_46 {dimension_numbers = #tpu.dot_dimension_numbers<[1], [0], [0], [1], [0, 0, 1, 1], [], []>} : vector<1x128xf32>, vector<128x128xf32>, vector<1x128xf32> -> vector<1x128xf32>
    %cst_47 = arith.constant 4.8828125E-4 : f32
    %44 = vector.broadcast %cst_47 : f32 to vector<1x128xf32>
    %45 = arith.mulf %43, %44 : vector<1x128xf32>
    %46 = vector.broadcast %45 : vector<1x128xf32> to vector<256x128xf32>
    %47 = arith.subf %37, %46 : vector<256x128xf32>
    %48 = arith.mulf %47, %47 : vector<256x128xf32>
    %cst_48 = arith.constant dense<0.000000e+00> : vector<128xf32>
    %49 = vector.multi_reduction <add>, %48, %cst_48 [0] : vector<256x128xf32> to vector<128xf32>
    %50 = vector.shape_cast %49 : vector<128xf32> to vector<1x128xf32>
    %cst_49 = arith.constant dense<0.000000e+00> : vector<1x128xf32>
    %51 = tpu.matmul %50, %38, %cst_49 {dimension_numbers = #tpu.dot_dimension_numbers<[1], [0], [0], [1], [0, 0, 1, 1], [], []>} : vector<1x128xf32>, vector<128x128xf32>, vector<1x128xf32> -> vector<1x128xf32>
    %cst_50 = arith.constant 4.8828125E-4 : f32
    %52 = vector.broadcast %cst_50 : f32 to vector<1x128xf32>
    %53 = arith.mulf %51, %52 : vector<1x128xf32>
    %cst_51 = arith.constant 9.99999974E-6 : f32
    %54 = vector.broadcast %cst_51 : f32 to vector<1x128xf32>
    %55 = arith.addf %53, %54 : vector<1x128xf32>
    %56 = math.rsqrt %55 : vector<1x128xf32>
    %57 = vector.broadcast %56 : vector<1x128xf32> to vector<256x128xf32>
    %58 = arith.mulf %47, %57 : vector<256x128xf32>
    %59 = vector.broadcast %39 : vector<1x128xf32> to vector<256x128xf32>
    %60 = arith.mulf %58, %59 : vector<256x128xf32>
    %61 = vector.broadcast %40 : vector<1x128xf32> to vector<256x128xf32>
    %62 = arith.addf %60, %61 : vector<256x128xf32>
    %cst_52 = arith.constant 0.000000e+00 : f32
    %63 = vector.broadcast %cst_52 : f32 to vector<256x128xf32>
    %64 = arith.maximumf %62, %63 : vector<256x128xf32>
    %65 = vector.shape_cast %64 : vector<256x128xf32> to vector<16x16x128xf32>
    %c0_53 = arith.constant 0 : index
    %c0_54 = arith.constant 0 : index
    %c0_55 = arith.constant 0 : index
    %66 = vector.load %arg18[%c0_53, %c0_54, %c0_55] : memref<16x16x128xf32, #tpu.memory_space<vmem>>, vector<16x16x128xf32>
    tpu.vector_store %arg18[%c0_53, %c0_54, %c0_55], %65 {strides = array<i32>} : memref<16x16x128xf32, #tpu.memory_space<vmem>>, vector<16x16x128xf32>,
    %c0_56 = arith.constant 0 : index
    %c0_57 = arith.constant 0 : index
    %c0_58 = arith.constant 0 : index
    %67 = tpu.strided_load %arg18[%c0_56, %c0_57, %c0_58] {strides = array<i32: 1, 2, 1>} : memref<16x16x128xf32, #tpu.memory_space<vmem>>, vector<16x8x128xf32>
    %c0_59 = arith.constant 0 : index
    %c1_60 = arith.constant 1 : index
    %c0_61 = arith.constant 0 : index
    %68 = tpu.strided_load %arg18[%c0_59, %c1_60, %c0_61] {strides = array<i32: 1, 2, 1>} : memref<16x16x128xf32, #tpu.memory_space<vmem>>, vector<16x8x128xf32>
    %69 = arith.maximumf %67, %68 : vector<16x8x128xf32>
    %70 = vector.shape_cast %69 : vector<16x8x128xf32> to vector<8x2x8x128xf32>
    %cst_62 = arith.constant dense<0xFF800000> : vector<8x8x128xf32>
    %71 = vector.multi_reduction <maximumf>, %70, %cst_62 [1] : vector<8x2x8x128xf32> to vector<8x8x128xf32>
    %c0_63 = arith.constant 0 : index
    %c0_64 = arith.constant 0 : index
    %72 = vector.load %arg7[%c0_63, %c0_64] : memref<1152x128xbf16, #tpu.memory_space<vmem>>, vector<1152x128xbf16>
    %c0_65 = arith.constant 0 : index
    %c0_66 = arith.constant 0 : index
    %73 = vector.load %arg8[%c0_65, %c0_66] : memref<1x128xf32, #tpu.memory_space<vmem>>, vector<1x128xf32>
    %cst_67 = arith.constant 0.000000e+00 : f32
    %74 = vector.broadcast %cst_67 : f32 to vector<10x10x128xf32>
    %c0_68 = arith.constant 0 : index
    %c0_69 = arith.constant 0 : index
    %c0_70 = arith.constant 0 : index
    %75 = vector.load %arg16[%c0_68, %c0_69, %c0_70] : memref<10x10x128xf32, #tpu.memory_space<vmem>>, vector<10x10x128xf32>
    tpu.vector_store %arg16[%c0_68, %c0_69, %c0_70], %74 {strides = array<i32>} : memref<10x10x128xf32, #tpu.memory_space<vmem>>, vector<10x10x128xf32>,
    %c1_71 = arith.constant 1 : index
    %c1_72 = arith.constant 1 : index
    %c0_73 = arith.constant 0 : index
    %76 = vector.load %arg16[%c1_71, %c1_72, %c0_73] : memref<10x10x128xf32, #tpu.memory_space<vmem>>, vector<8x8x128xf32>
    tpu.vector_store %arg16[%c1_71, %c1_72, %c0_73], %71 {strides = array<i32>} : memref<10x10x128xf32, #tpu.memory_space<vmem>>, vector<8x8x128xf32>,
    %c0_74 = arith.constant 0 : index
    %c0_75 = arith.constant 0 : index
    %c0_76 = arith.constant 0 : index
    %77 = vector.load %arg16[%c0_74, %c0_75, %c0_76] : memref<10x10x128xf32, #tpu.memory_space<vmem>>, vector<8x8x128xf32>
    %78 = vector.shape_cast %77 : vector<8x8x128xf32> to vector<64x128xf32>
    %79 = arith.truncf %78 : vector<64x128xf32> to vector<64x128xbf16>
    %c0_77 = arith.constant 0 : index
    %c1_78 = arith.constant 1 : index
    %c0_79 = arith.constant 0 : index
    %80 = vector.load %arg16[%c0_77, %c1_78, %c0_79] : memref<10x10x128xf32, #tpu.memory_space<vmem>>, vector<8x8x128xf32>
    %81 = vector.shape_cast %80 : vector<8x8x128xf32> to vector<64x128xf32>
    %82 = arith.truncf %81 : vector<64x128xf32> to vector<64x128xbf16>
    %c0_80 = arith.constant 0 : index
    %c2_81 = arith.constant 2 : index
    %c0_82 = arith.constant 0 : index
    %83 = vector.load %arg16[%c0_80, %c2_81, %c0_82] : memref<10x10x128xf32, #tpu.memory_space<vmem>>, vector<8x8x128xf32>
    %84 = vector.shape_cast %83 : vector<8x8x128xf32> to vector<64x128xf32>
    %85 = arith.truncf %84 : vector<64x128xf32> to vector<64x128xbf16>
    %c1_83 = arith.constant 1 : index
    %c0_84 = arith.constant 0 : index
    %c0_85 = arith.constant 0 : index
    %86 = vector.load %arg16[%c1_83, %c0_84, %c0_85] : memref<10x10x128xf32, #tpu.memory_space<vmem>>, vector<8x8x128xf32>
    %87 = vector.shape_cast %86 : vector<8x8x128xf32> to vector<64x128xf32>
    %88 = arith.truncf %87 : vector<64x128xf32> to vector<64x128xbf16>
    %c1_86 = arith.constant 1 : index
    %c1_87 = arith.constant 1 : index
    %c0_88 = arith.constant 0 : index
    %89 = vector.load %arg16[%c1_86, %c1_87, %c0_88] : memref<10x10x128xf32, #tpu.memory_space<vmem>>, vector<8x8x128xf32>
    %90 = vector.shape_cast %89 : vector<8x8x128xf32> to vector<64x128xf32>
    %91 = arith.truncf %90 : vector<64x128xf32> to vector<64x128xbf16>
    %c1_89 = arith.constant 1 : index
    %c2_90 = arith.constant 2 : index
    %c0_91 = arith.constant 0 : index
    %92 = vector.load %arg16[%c1_89, %c2_90, %c0_91] : memref<10x10x128xf32, #tpu.memory_space<vmem>>, vector<8x8x128xf32>
    %93 = vector.shape_cast %92 : vector<8x8x128xf32> to vector<64x128xf32>
    %94 = arith.truncf %93 : vector<64x128xf32> to vector<64x128xbf16>
    %c2_92 = arith.constant 2 : index
    %c0_93 = arith.constant 0 : index
    %c0_94 = arith.constant 0 : index
    %95 = vector.load %arg16[%c2_92, %c0_93, %c0_94] : memref<10x10x128xf32, #tpu.memory_space<vmem>>, vector<8x8x128xf32>
    %96 = vector.shape_cast %95 : vector<8x8x128xf32> to vector<64x128xf32>
    %97 = arith.truncf %96 : vector<64x128xf32> to vector<64x128xbf16>
    %c2_95 = arith.constant 2 : index
    %c1_96 = arith.constant 1 : index
    %c0_97 = arith.constant 0 : index
    %98 = vector.load %arg16[%c2_95, %c1_96, %c0_97] : memref<10x10x128xf32, #tpu.memory_space<vmem>>, vector<8x8x128xf32>
    %99 = vector.shape_cast %98 : vector<8x8x128xf32> to vector<64x128xf32>
    %100 = arith.truncf %99 : vector<64x128xf32> to vector<64x128xbf16>
    %c2_98 = arith.constant 2 : index
    %c2_99 = arith.constant 2 : index
    %c0_100 = arith.constant 0 : index
    %101 = vector.load %arg16[%c2_98, %c2_99, %c0_100] : memref<10x10x128xf32, #tpu.memory_space<vmem>>, vector<8x8x128xf32>
    %102 = vector.shape_cast %101 : vector<8x8x128xf32> to vector<64x128xf32>
    %103 = arith.truncf %102 : vector<64x128xf32> to vector<64x128xbf16>
    %104 = tpu.concatenate %79, %82, %85, %88, %91, %94, %97, %100, %103 in 1 : vector<64x128xbf16>, vector<64x128xbf16>, vector<64x128xbf16>, vector<64x128xbf16>, vector<64x128xbf16>, vector<64x128xbf16>, vector<64x128xbf16>, vector<64x128xbf16>, vector<64x128xbf16> -> vector<64x1152xbf16>
    %cst_101 = arith.constant dense<0.000000e+00> : vector<64x128xf32>
    %105 = tpu.matmul %104, %72, %cst_101 {dimension_numbers = #tpu.dot_dimension_numbers<[1], [0], [0], [1], [0, 0, 1, 1], [], []>} : vector<64x1152xbf16>, vector<1152x128xbf16>, vector<64x128xf32> -> vector<64x128xf32>
    %106 = vector.broadcast %73 : vector<1x128xf32> to vector<64x128xf32>
    %107 = arith.addf %105, %106 : vector<64x128xf32>
    %cst_102 = arith.constant 0.000000e+00 : f32
    %108 = vector.broadcast %cst_102 : f32 to vector<64x128xf32>
    %109 = arith.maximumf %107, %108 : vector<64x128xf32>
    %110 = vector.shape_cast %109 : vector<64x128xf32> to vector<8x8x128xf32>
    %c0_103 = arith.constant 0 : index
    %c0_104 = arith.constant 0 : index
    %111 = vector.load %arg9[%c0_103, %c0_104] : memref<1152x128xbf16, #tpu.memory_space<vmem>>, vector<1152x128xbf16>
    %c0_105 = arith.constant 0 : index
    %c0_106 = arith.constant 0 : index
    %112 = vector.load %arg10[%c0_105, %c0_106] : memref<1x128xf32, #tpu.memory_space<vmem>>, vector<1x128xf32>
    %cst_107 = arith.constant 0.000000e+00 : f32
    %113 = vector.broadcast %cst_107 : f32 to vector<10x10x128xf32>
    %c0_108 = arith.constant 0 : index
    %c0_109 = arith.constant 0 : index
    %c0_110 = arith.constant 0 : index
    %114 = vector.load %arg17[%c0_108, %c0_109, %c0_110] : memref<10x10x128xf32, #tpu.memory_space<vmem>>, vector<10x10x128xf32>
    tpu.vector_store %arg17[%c0_108, %c0_109, %c0_110], %113 {strides = array<i32>} : memref<10x10x128xf32, #tpu.memory_space<vmem>>, vector<10x10x128xf32>,
    %c1_111 = arith.constant 1 : index
    %c1_112 = arith.constant 1 : index
    %c0_113 = arith.constant 0 : index
    %115 = vector.load %arg17[%c1_111, %c1_112, %c0_113] : memref<10x10x128xf32, #tpu.memory_space<vmem>>, vector<8x8x128xf32>
    tpu.vector_store %arg17[%c1_111, %c1_112, %c0_113], %110 {strides = array<i32>} : memref<10x10x128xf32, #tpu.memory_space<vmem>>, vector<8x8x128xf32>,
    %c0_114 = arith.constant 0 : index
    %c0_115 = arith.constant 0 : index
    %c0_116 = arith.constant 0 : index
    %116 = vector.load %arg17[%c0_114, %c0_115, %c0_116] : memref<10x10x128xf32, #tpu.memory_space<vmem>>, vector<8x8x128xf32>
    %117 = vector.shape_cast %116 : vector<8x8x128xf32> to vector<64x128xf32>
    %118 = arith.truncf %117 : vector<64x128xf32> to vector<64x128xbf16>
    %c0_117 = arith.constant 0 : index
    %c1_118 = arith.constant 1 : index
    %c0_119 = arith.constant 0 : index
    %119 = vector.load %arg17[%c0_117, %c1_118, %c0_119] : memref<10x10x128xf32, #tpu.memory_space<vmem>>, vector<8x8x128xf32>
    %120 = vector.shape_cast %119 : vector<8x8x128xf32> to vector<64x128xf32>
    %121 = arith.truncf %120 : vector<64x128xf32> to vector<64x128xbf16>
    %c0_120 = arith.constant 0 : index
    %c2_121 = arith.constant 2 : index
    %c0_122 = arith.constant 0 : index
    %122 = vector.load %arg17[%c0_120, %c2_121, %c0_122] : memref<10x10x128xf32, #tpu.memory_space<vmem>>, vector<8x8x128xf32>
    %123 = vector.shape_cast %122 : vector<8x8x128xf32> to vector<64x128xf32>
    %124 = arith.truncf %123 : vector<64x128xf32> to vector<64x128xbf16>
    %c1_123 = arith.constant 1 : index
    %c0_124 = arith.constant 0 : index
    %c0_125 = arith.constant 0 : index
    %125 = vector.load %arg17[%c1_123, %c0_124, %c0_125] : memref<10x10x128xf32, #tpu.memory_space<vmem>>, vector<8x8x128xf32>
    %126 = vector.shape_cast %125 : vector<8x8x128xf32> to vector<64x128xf32>
    %127 = arith.truncf %126 : vector<64x128xf32> to vector<64x128xbf16>
    %c1_126 = arith.constant 1 : index
    %c1_127 = arith.constant 1 : index
    %c0_128 = arith.constant 0 : index
    %128 = vector.load %arg17[%c1_126, %c1_127, %c0_128] : memref<10x10x128xf32, #tpu.memory_space<vmem>>, vector<8x8x128xf32>
    %129 = vector.shape_cast %128 : vector<8x8x128xf32> to vector<64x128xf32>
    %130 = arith.truncf %129 : vector<64x128xf32> to vector<64x128xbf16>
    %c1_129 = arith.constant 1 : index
    %c2_130 = arith.constant 2 : index
    %c0_131 = arith.constant 0 : index
    %131 = vector.load %arg17[%c1_129, %c2_130, %c0_131] : memref<10x10x128xf32, #tpu.memory_space<vmem>>, vector<8x8x128xf32>
    %132 = vector.shape_cast %131 : vector<8x8x128xf32> to vector<64x128xf32>
    %133 = arith.truncf %132 : vector<64x128xf32> to vector<64x128xbf16>
    %c2_132 = arith.constant 2 : index
    %c0_133 = arith.constant 0 : index
    %c0_134 = arith.constant 0 : index
    %134 = vector.load %arg17[%c2_132, %c0_133, %c0_134] : memref<10x10x128xf32, #tpu.memory_space<vmem>>, vector<8x8x128xf32>
    %135 = vector.shape_cast %134 : vector<8x8x128xf32> to vector<64x128xf32>
    %136 = arith.truncf %135 : vector<64x128xf32> to vector<64x128xbf16>
    %c2_135 = arith.constant 2 : index
    %c1_136 = arith.constant 1 : index
    %c0_137 = arith.constant 0 : index
    %137 = vector.load %arg17[%c2_135, %c1_136, %c0_137] : memref<10x10x128xf32, #tpu.memory_space<vmem>>, vector<8x8x128xf32>
    %138 = vector.shape_cast %137 : vector<8x8x128xf32> to vector<64x128xf32>
    %139 = arith.truncf %138 : vector<64x128xf32> to vector<64x128xbf16>
    %c2_138 = arith.constant 2 : index
    %c2_139 = arith.constant 2 : index
    %c0_140 = arith.constant 0 : index
    %140 = vector.load %arg17[%c2_138, %c2_139, %c0_140] : memref<10x10x128xf32, #tpu.memory_space<vmem>>, vector<8x8x128xf32>
    %141 = vector.shape_cast %140 : vector<8x8x128xf32> to vector<64x128xf32>
    %142 = arith.truncf %141 : vector<64x128xf32> to vector<64x128xbf16>
    %143 = tpu.concatenate %118, %121, %124, %127, %130, %133, %136, %139, %142 in 1 : vector<64x128xbf16>, vector<64x128xbf16>, vector<64x128xbf16>, vector<64x128xbf16>, vector<64x128xbf16>, vector<64x128xbf16>, vector<64x128xbf16>, vector<64x128xbf16>, vector<64x128xbf16> -> vector<64x1152xbf16>
    %cst_141 = arith.constant dense<0.000000e+00> : vector<64x128xf32>
    %144 = tpu.matmul %143, %111, %cst_141 {dimension_numbers = #tpu.dot_dimension_numbers<[1], [0], [0], [1], [0, 0, 1, 1], [], []>} : vector<64x1152xbf16>, vector<1152x128xbf16>, vector<64x128xf32> -> vector<64x128xf32>
    %145 = vector.broadcast %112 : vector<1x128xf32> to vector<64x128xf32>
    %146 = arith.addf %144, %145 : vector<64x128xf32>
    %cst_142 = arith.constant 0.000000e+00 : f32
    %147 = vector.broadcast %cst_142 : f32 to vector<64x128xf32>
    %148 = arith.maximumf %146, %147 : vector<64x128xf32>
    %c0_143 = arith.constant 0 : index
    %c0_144 = arith.constant 0 : index
    %149 = vector.load %arg13[%c0_143, %c0_144] : memref<128x128xf32, #tpu.memory_space<vmem>>, vector<128x128xf32>
    %c0_145 = arith.constant 0 : index
    %c0_146 = arith.constant 0 : index
    %150 = vector.load %arg11[%c0_145, %c0_146] : memref<1x128xf32, #tpu.memory_space<vmem>>, vector<1x128xf32>
    %c0_147 = arith.constant 0 : index
    %c0_148 = arith.constant 0 : index
    %151 = vector.load %arg12[%c0_147, %c0_148] : memref<1x128xf32, #tpu.memory_space<vmem>>, vector<1x128xf32>
    %cst_149 = arith.constant dense<0.000000e+00> : vector<128xf32>
    %152 = vector.multi_reduction <add>, %148, %cst_149 [0] : vector<64x128xf32> to vector<128xf32>
    %153 = vector.shape_cast %152 : vector<128xf32> to vector<1x128xf32>
    %cst_150 = arith.constant dense<0.000000e+00> : vector<1x128xf32>
    %154 = tpu.matmul %153, %149, %cst_150 {dimension_numbers = #tpu.dot_dimension_numbers<[1], [0], [0], [1], [0, 0, 1, 1], [], []>} : vector<1x128xf32>, vector<128x128xf32>, vector<1x128xf32> -> vector<1x128xf32>
    %cst_151 = arith.constant 0.001953125 : f32
    %155 = vector.broadcast %cst_151 : f32 to vector<1x128xf32>
    %156 = arith.mulf %154, %155 : vector<1x128xf32>
    %157 = vector.broadcast %156 : vector<1x128xf32> to vector<64x128xf32>
    %158 = arith.subf %148, %157 : vector<64x128xf32>
    %159 = arith.mulf %158, %158 : vector<64x128xf32>
    %cst_152 = arith.constant dense<0.000000e+00> : vector<128xf32>
    %160 = vector.multi_reduction <add>, %159, %cst_152 [0] : vector<64x128xf32> to vector<128xf32>
    %161 = vector.shape_cast %160 : vector<128xf32> to vector<1x128xf32>
    %cst_153 = arith.constant dense<0.000000e+00> : vector<1x128xf32>
    %162 = tpu.matmul %161, %149, %cst_153 {dimension_numbers = #tpu.dot_dimension_numbers<[1], [0], [0], [1], [0, 0, 1, 1], [], []>} : vector<1x128xf32>, vector<128x128xf32>, vector<1x128xf32> -> vector<1x128xf32>
    %cst_154 = arith.constant 0.001953125 : f32
    %163 = vector.broadcast %cst_154 : f32 to vector<1x128xf32>
    %164 = arith.mulf %162, %163 : vector<1x128xf32>
    %cst_155 = arith.constant 9.99999974E-6 : f32
    %165 = vector.broadcast %cst_155 : f32 to vector<1x128xf32>
    %166 = arith.addf %164, %165 : vector<1x128xf32>
    %167 = math.rsqrt %166 : vector<1x128xf32>
    %168 = vector.broadcast %167 : vector<1x128xf32> to vector<64x128xf32>
    %169 = arith.mulf %158, %168 : vector<64x128xf32>
    %170 = vector.broadcast %150 : vector<1x128xf32> to vector<64x128xf32>
    %171 = arith.mulf %169, %170 : vector<64x128xf32>
    %172 = vector.broadcast %151 : vector<1x128xf32> to vector<64x128xf32>
    %173 = arith.addf %171, %172 : vector<64x128xf32>
    %174 = vector.shape_cast %173 : vector<64x128xf32> to vector<8x8x128xf32>
    %c0_156 = arith.constant 0 : index
    %c0_157 = arith.constant 0 : index
    %c0_158 = arith.constant 0 : index
    %175 = vector.load %arg19[%c0_156, %c0_157, %c0_158] : memref<8x8x128xf32, #tpu.memory_space<vmem>>, vector<8x8x128xf32>
    tpu.vector_store %arg19[%c0_156, %c0_157, %c0_158], %174 {strides = array<i32>} : memref<8x8x128xf32, #tpu.memory_space<vmem>>, vector<8x8x128xf32>,
    %c0_159 = arith.constant 0 : index
    %c0_160 = arith.constant 0 : index
    %c0_161 = arith.constant 0 : index
    %176 = tpu.strided_load %arg19[%c0_159, %c0_160, %c0_161] {strides = array<i32: 1, 2, 1>} : memref<8x8x128xf32, #tpu.memory_space<vmem>>, vector<8x4x128xf32>
    %c0_162 = arith.constant 0 : index
    %c1_163 = arith.constant 1 : index
    %c0_164 = arith.constant 0 : index
    %177 = tpu.strided_load %arg19[%c0_162, %c1_163, %c0_164] {strides = array<i32: 1, 2, 1>} : memref<8x8x128xf32, #tpu.memory_space<vmem>>, vector<8x4x128xf32>
    %178 = arith.maximumf %176, %177 : vector<8x4x128xf32>
    %179 = vector.shape_cast %178 : vector<8x4x128xf32> to vector<4x2x4x128xf32>
    %cst_165 = arith.constant dense<0xFF800000> : vector<4x4x128xf32>
    %180 = vector.multi_reduction <maximumf>, %179, %cst_165 [1] : vector<4x2x4x128xf32> to vector<4x4x128xf32>
    %181 = vector.shape_cast %180 : vector<4x4x128xf32> to vector<16x128xf32>
    %c0_166 = arith.constant 0 : index
    %c0_167 = arith.constant 0 : index
    %c0_168 = arith.constant 0 : index
    %182 = vector.load %arg14[%c0_166, %c0_167, %c0_168] : memref<1x16x128xf32, #tpu.memory_space<vmem>>, vector<1x16x128xf32>
    %183 = vector.shape_cast %182 : vector<1x16x128xf32> to vector<16x128xf32>
    %184 = vector.shape_cast %181 : vector<16x128xf32> to vector<1x16x128xf32>
    tpu.vector_store %arg14[%c0_166, %c0_167, %c0_168], %184 {strides = array<i32>} : memref<1x16x128xf32, #tpu.memory_space<vmem>>, vector<1x16x128xf32>,
    return
  }
  func.func @transform_0(%arg0: i32) -> (i32, i32, i32, i32) {
    %c0_i32 = arith.constant 0 : i32
    %c0_i32_0 = arith.constant 0 : i32
    %c0_i32_1 = arith.constant 0 : i32
    %c0_i32_2 = arith.constant 0 : i32
    return %arg0, %c0_i32, %c0_i32_0, %c0_i32_1 : i32, i32, i32, i32
  }
  func.func @transform_1(%arg0: i32) -> (i32, i32) {
    %c0_i32 = arith.constant 0 : i32
    %c0_i32_0 = arith.constant 0 : i32
    %c0_i32_1 = arith.constant 0 : i32
    return %c0_i32, %c0_i32_0 : i32, i32
  }
  func.func @transform_2(%arg0: i32) -> (i32, i32) {
    %c0_i32 = arith.constant 0 : i32
    %c0_i32_0 = arith.constant 0 : i32
    %c0_i32_1 = arith.constant 0 : i32
    return %c0_i32, %c0_i32_0 : i32, i32
  }
  func.func @transform_3(%arg0: i32) -> (i32, i32) {
    %c0_i32 = arith.constant 0 : i32
    %c0_i32_0 = arith.constant 0 : i32
    %c0_i32_1 = arith.constant 0 : i32
    return %c0_i32, %c0_i32_0 : i32, i32
  }
  func.func @transform_4(%arg0: i32) -> (i32, i32) {
    %c0_i32 = arith.constant 0 : i32
    %c0_i32_0 = arith.constant 0 : i32
    %c0_i32_1 = arith.constant 0 : i32
    return %c0_i32, %c0_i32_0 : i32, i32
  }
  func.func @transform_5(%arg0: i32) -> (i32, i32) {
    %c0_i32 = arith.constant 0 : i32
    %c0_i32_0 = arith.constant 0 : i32
    %c0_i32_1 = arith.constant 0 : i32
    return %c0_i32, %c0_i32_0 : i32, i32
  }
  func.func @transform_6(%arg0: i32) -> (i32, i32) {
    %c0_i32 = arith.constant 0 : i32
    %c0_i32_0 = arith.constant 0 : i32
    %c0_i32_1 = arith.constant 0 : i32
    return %c0_i32, %c0_i32_0 : i32, i32
  }
  func.func @transform_7(%arg0: i32) -> (i32, i32) {
    %c0_i32 = arith.constant 0 : i32
    %c0_i32_0 = arith.constant 0 : i32
    %c0_i32_1 = arith.constant 0 : i32
    return %c0_i32, %c0_i32_0 : i32, i32
  }
  func.func @transform_8(%arg0: i32) -> (i32, i32) {
    %c0_i32 = arith.constant 0 : i32
    %c0_i32_0 = arith.constant 0 : i32
    %c0_i32_1 = arith.constant 0 : i32
    return %c0_i32, %c0_i32_0 : i32, i32
  }
  func.func @transform_9(%arg0: i32) -> (i32, i32) {
    %c0_i32 = arith.constant 0 : i32
    %c0_i32_0 = arith.constant 0 : i32
    %c0_i32_1 = arith.constant 0 : i32
    return %c0_i32, %c0_i32_0 : i32, i32
  }
  func.func @transform_10(%arg0: i32) -> (i32, i32) {
    %c0_i32 = arith.constant 0 : i32
    %c0_i32_0 = arith.constant 0 : i32
    %c0_i32_1 = arith.constant 0 : i32
    return %c0_i32, %c0_i32_0 : i32, i32
  }
  func.func @transform_11(%arg0: i32) -> (i32, i32) {
    %c0_i32 = arith.constant 0 : i32
    %c0_i32_0 = arith.constant 0 : i32
    %c0_i32_1 = arith.constant 0 : i32
    return %c0_i32, %c0_i32_0 : i32, i32
  }
  func.func @transform_12(%arg0: i32) -> (i32, i32) {
    %c0_i32 = arith.constant 0 : i32
    %c0_i32_0 = arith.constant 0 : i32
    %c0_i32_1 = arith.constant 0 : i32
    return %c0_i32, %c0_i32_0 : i32, i32
  }
  func.func @transform_13(%arg0: i32) -> (i32, i32, i32) {
    %c0_i32 = arith.constant 0 : i32
    %c0_i32_0 = arith.constant 0 : i32
    %c0_i32_1 = arith.constant 0 : i32
    return %arg0, %c0_i32, %c0_i32_0 : i32, i32, i32
  }
}

module attributes {stable_mosaic.version = 11 : i64} {
  func.func @_mlp_kernel(%arg0: memref<2x2048xf32, #tpu.memory_space<vmem>>, %arg1: memref<2048x512xbf16, #tpu.memory_space<vmem>>, %arg2: memref<1x512xf32, #tpu.memory_space<vmem>>, %arg3: memref<512x10xbf16, #tpu.memory_space<vmem>>, %arg4: memref<1x10xf32, #tpu.memory_space<vmem>>, %arg5: memref<2x10xf32, #tpu.memory_space<vmem>>) attributes {dimension_semantics = [], scalar_prefetch = 0 : i64, scratch_operands = 0 : i64, tpu.core_type = #tpu.core_type<tc>} {
    %c0 = arith.constant 0 : index
    %c0_0 = arith.constant 0 : index
    %0 = vector.load %arg0[%c0, %c0_0] : memref<2x2048xf32, #tpu.memory_space<vmem>>, vector<2x2048xf32>
    %1 = arith.truncf %0 : vector<2x2048xf32> to vector<2x2048xbf16>
    %c0_1 = arith.constant 0 : index
    %c0_2 = arith.constant 0 : index
    %2 = vector.load %arg1[%c0_1, %c0_2] : memref<2048x512xbf16, #tpu.memory_space<vmem>>, vector<2048x512xbf16>
    %cst = arith.constant dense<0.000000e+00> : vector<2x512xf32>
    %3 = tpu.matmul %1, %2, %cst {dimension_numbers = #tpu.dot_dimension_numbers<[1], [0], [0], [1], [0, 0, 1, 1], [], []>} : vector<2x2048xbf16>, vector<2048x512xbf16>, vector<2x512xf32> -> vector<2x512xf32>
    %c0_3 = arith.constant 0 : index
    %c0_4 = arith.constant 0 : index
    %4 = vector.load %arg2[%c0_3, %c0_4] : memref<1x512xf32, #tpu.memory_space<vmem>>, vector<1x512xf32>
    %5 = vector.broadcast %4 : vector<1x512xf32> to vector<2x512xf32>
    %6 = arith.addf %3, %5 : vector<2x512xf32>
    %cst_5 = arith.constant 0.000000e+00 : f32
    %7 = vector.broadcast %cst_5 : f32 to vector<2x512xf32>
    %8 = arith.maximumf %6, %7 : vector<2x512xf32>
    %9 = arith.truncf %8 : vector<2x512xf32> to vector<2x512xbf16>
    %c0_6 = arith.constant 0 : index
    %c0_7 = arith.constant 0 : index
    %10 = vector.load %arg3[%c0_6, %c0_7] : memref<512x10xbf16, #tpu.memory_space<vmem>>, vector<512x10xbf16>
    %cst_8 = arith.constant dense<0.000000e+00> : vector<2x10xf32>
    %11 = tpu.matmul %9, %10, %cst_8 {dimension_numbers = #tpu.dot_dimension_numbers<[1], [0], [0], [1], [0, 0, 1, 1], [], []>} : vector<2x512xbf16>, vector<512x10xbf16>, vector<2x10xf32> -> vector<2x10xf32>
    %c0_9 = arith.constant 0 : index
    %c0_10 = arith.constant 0 : index
    %12 = vector.load %arg4[%c0_9, %c0_10] : memref<1x10xf32, #tpu.memory_space<vmem>>, vector<1x10xf32>
    %13 = vector.broadcast %12 : vector<1x10xf32> to vector<2x10xf32>
    %14 = arith.addf %11, %13 : vector<2x10xf32>
    %c0_11 = arith.constant 0 : index
    %c0_12 = arith.constant 0 : index
    %15 = vector.load %arg5[%c0_11, %c0_12] : memref<2x10xf32, #tpu.memory_space<vmem>>, vector<2x10xf32>
    tpu.vector_store %arg5[%c0_11, %c0_12], %14 {strides = array<i32>} : memref<2x10xf32, #tpu.memory_space<vmem>>, vector<2x10xf32>,
    return
  }
}

</mosaic_0001>

<llo_original>
// kernel: simplenet_forward.3
$region0: #{simplenet_forward.3}
  #allocation0 [shape = 'u32[]', space=smem, size = 0x4, offset = 0x4, fixed_abs, tag = 'smem constant byte address 0x4 - core index']
  #allocation1 [shape = 'u32[144,128]{1,0:T(1,128)}', space=vmem, size = 0x12000, scoped, tag = 'internal scratch']
  %s0 = inlined_call_operand.vmem [shape: f32[2,2048], index: 0, kind: input, shape index: {}]
  %s1 = inlined_call_operand.vmem [shape: bf16[2048,512], index: 1, kind: input, shape index: {}]
  %s2 = inlined_call_operand.vmem [shape: f32[1,512], index: 2, kind: input, shape index: {}]
  %s3 = inlined_call_operand.vmem [shape: bf16[512,10], index: 3, kind: input, shape index: {}]
  %s4 = inlined_call_operand.vmem [shape: f32[1,10], index: 4, kind: input, shape index: {}]
  %s5 = inlined_call_operand.hbm [shape: f32[2,10], index: 5, kind: output, shape index: {}]
  %s6 = sld [smem:[#allocation0]]
  $region30: #{simplenet_forward.3} parent=0
    _
  %s8 = ssub.s32 1, %s6
  %s9 = scalar_select 0, %s8, %s6
  $region1: #{simplenet_forward.3} parent=0
    #allocation2 [shape = 'u8[1024]{0}', space=vmem, size = 0x400, scoped, tag = 'output window, operand 0, single buffered']
    #allocation3 [shape = 's32[1]{0}', space=sflag, size = 0x4, scoped, tag = 'scoped memory for simplenet_forward.3']
    %10 = vsyncpa [#allocation3], 0
    // Predicated region
    $region2: #{simplenet_forward.3} parent=1 // pred_check
      _
    $region3: #{simplenet_forward.3} parent=1 // pred_check_branch
      %12 = sbr.rel (0) target = $region5
    $region4: #{simplenet_forward.3} parent=1 // pred_region
      _
    $region5: #{simplenet_forward.3} parent=1 // pred_fallthru
      _
    // Predicated region
    $region6: #{simplenet_forward.3} parent=1 // pred_check
      _
    $region7: #{simplenet_forward.3} parent=1 // pred_check_branch
      %14 = sbr.rel (0) target = $region9
    $region8: #{simplenet_forward.3} parent=1 // pred_region
      _
    $region9: #{simplenet_forward.3} parent=1 // pred_fallthru
      _
    // Predicated region
    $region10: #{simplenet_forward.3} parent=1 // pred_check
      _
    $region11: #{simplenet_forward.3} parent=1 // pred_check_branch
      %16 = sbr.rel (0) target = $region13
    $region12: #{simplenet_forward.3} parent=1 // pred_region
      _
    $region13: #{simplenet_forward.3} parent=1 // pred_fallthru
      _
    // Predicated region
    $region14: #{simplenet_forward.3} parent=1 // pred_check
      _
    $region15: #{simplenet_forward.3} parent=1 // pred_check_branch
      %18 = sbr.rel (0) target = $region17
    $region16: #{simplenet_forward.3} parent=1 // pred_region
      _
    $region17: #{simplenet_forward.3} parent=1 // pred_fallthru
      _
    // Predicated region
    $region18: #{simplenet_forward.3} parent=1 // pred_check
      _
    $region19: #{simplenet_forward.3} parent=1 // pred_check_branch
      %20 = sbr.rel (0) target = $region21
    $region20: #{simplenet_forward.3} parent=1 // pred_region
      _
    $region21: #{simplenet_forward.3} parent=1 // pred_fallthru
      _
    %v22 = vld [vmem:[%s0] sm:$0xff]
    %v23 = vld [vmem:[%s0 + $0x8] sm:$0xff]
    %v24 = vld [vmem:[%s0 + $0x10] sm:$0xff]
    %v25 = vld [vmem:[%s0 + $0x18] sm:$0xff]
    %v30 = vcombine.high %v22, %v22
    %v32 = vunpack.c.l.s4 1983009808
    %v33 = vunpack.c.0.s8 %v32
    %v34 = vlaneseq
    %v35 = vshrl.u32 %v34, 7
    %v36 = vsub.s32 %v33, %v35
    %v37 = vrot.slane %v22, %v36
    %v39 = vunpack.c.l.s4 1983009808
    %v40 = vunpack.c.0.s8 %v39
    %v41 = vlaneseq
    %v42 = vshrl.u32 %v41, 7
    %v43 = vsub.s32 %v40, %v42
    %v44 = vrot.slane %v30, %v43
    %v45 = vcombine.high %v37, %v37
    %v46 = vcombine.high %v44, %v44
    %v47 = vcombine.high %v23, %v23
    %v49 = vunpack.c.l.s4 1983009808
    %v50 = vunpack.c.0.s8 %v49
    %v51 = vlaneseq
    %v52 = vshrl.u32 %v51, 7
    %v53 = vsub.s32 %v50, %v52
    %v54 = vrot.slane %v23, %v53
    %v56 = vunpack.c.l.s4 1983009808
    %v57 = vunpack.c.0.s8 %v56
    %v58 = vlaneseq
    %v59 = vshrl.u32 %v58, 7
    %v60 = vsub.s32 %v57, %v59
    %v61 = vrot.slane %v47, %v60
    %v62 = vcombine.high %v54, %v54
    %v63 = vcombine.high %v61, %v61
    %v64 = vcombine.high %v24, %v24
    %v66 = vunpack.c.l.s4 1983009808
    %v67 = vunpack.c.0.s8 %v66
    %v68 = vlaneseq
    %v69 = vshrl.u32 %v68, 7
    %v70 = vsub.s32 %v67, %v69
    %v71 = vrot.slane %v24, %v70
    %v73 = vunpack.c.l.s4 1983009808
    %v74 = vunpack.c.0.s8 %v73
    %v75 = vlaneseq
    %v76 = vshrl.u32 %v75, 7
    %v77 = vsub.s32 %v74, %v76
    %v78 = vrot.slane %v64, %v77
    %v79 = vcombine.high %v71, %v71
    %v80 = vcombine.high %v78, %v78
    %v81 = vcombine.high %v25, %v25
    %v83 = vunpack.c.l.s4 1983009808
    %v84 = vunpack.c.0.s8 %v83
    %v85 = vlaneseq
    %v86 = vshrl.u32 %v85, 7
    %v87 = vsub.s32 %v84, %v86
    %v88 = vrot.slane %v25, %v87
    %v90 = vunpack.c.l.s4 1983009808
    %v91 = vunpack.c.0.s8 %v90
    %v92 = vlaneseq
    %v93 = vshrl.u32 %v92, 7
    %v94 = vsub.s32 %v91, %v93
    %v95 = vrot.slane %v81, %v94
    %v96 = vcombine.high %v88, %v88
    %v97 = vcombine.high %v95, %v95
    %v114 = vpack.c.bf16 %v37, %v37
    %v115 = vpack.c.bf16 %v45, %v45
    %v116 = vpack.c.bf16 %v44, %v44
    %v117 = vpack.c.bf16 %v46, %v46
    %v118 = vpack.c.bf16 %v54, %v54
    %v119 = vpack.c.bf16 %v62, %v62
    %v120 = vpack.c.bf16 %v61, %v61
    %v121 = vpack.c.bf16 %v63, %v63
    %v122 = vpack.c.bf16 %v71, %v71
    %v123 = vpack.c.bf16 %v79, %v79
    %v124 = vpack.c.bf16 %v78, %v78
    %v125 = vpack.c.bf16 %v80, %v80
    %v126 = vpack.c.bf16 %v88, %v88
    %v127 = vpack.c.bf16 %v96, %v96
    %v128 = vpack.c.bf16 %v95, %v95
    %v129 = vpack.c.bf16 %v97, %v97
    %v130 = vld [vmem:[%s1] sm:$0xff]
    %v131 = vld [vmem:[%s1 + $0x8] sm:$0xff]
    %v132 = vld [vmem:[%s1 + $0x10] sm:$0xff]
    %v133 = vld [vmem:[%s1 + $0x18] sm:$0xff]
    %v134 = vld [vmem:[%s1 + $0x20] sm:$0xff]
    %v135 = vld [vmem:[%s1 + $0x28] sm:$0xff]
    %v136 = vld [vmem:[%s1 + $0x30] sm:$0xff]
    %v137 = vld [vmem:[%s1 + $0x38] sm:$0xff]
    %v138 = vld [vmem:[%s1 + $0x40] sm:$0xff]
    %v139 = vld [vmem:[%s1 + $0x48] sm:$0xff]
    %v140 = vld [vmem:[%s1 + $0x50] sm:$0xff]
    %v141 = vld [vmem:[%s1 + $0x58] sm:$0xff]
    %v142 = vld [vmem:[%s1 + $0x60] sm:$0xff]
    %v143 = vld [vmem:[%s1 + $0x68] sm:$0xff]
    %v144 = vld [vmem:[%s1 + $0x70] sm:$0xff]
    %v145 = vld [vmem:[%s1 + $0x78] sm:$0xff]
    %v146 = vld [vmem:[%s1 + $0x80] sm:$0xff]
    %v147 = vld [vmem:[%s1 + $0x88] sm:$0xff]
    %v148 = vld [vmem:[%s1 + $0x90] sm:$0xff]
    %v149 = vld [vmem:[%s1 + $0x98] sm:$0xff]
    %v150 = vld [vmem:[%s1 + $0xa0] sm:$0xff]
    %v151 = vld [vmem:[%s1 + $0xa8] sm:$0xff]
    %v152 = vld [vmem:[%s1 + $0xb0] sm:$0xff]
    %v153 = vld [vmem:[%s1 + $0xb8] sm:$0xff]
    %v154 = vld [vmem:[%s1 + $0xc0] sm:$0xff]
    %v155 = vld [vmem:[%s1 + $0xc8] sm:$0xff]
    %v156 = vld [vmem:[%s1 + $0xd0] sm:$0xff]
    %v157 = vld [vmem:[%s1 + $0xd8] sm:$0xff]
    %v158 = vld [vmem:[%s1 + $0xe0] sm:$0xff]
    %v159 = vld [vmem:[%s1 + $0xe8] sm:$0xff]
    %v160 = vld [vmem:[%s1 + $0xf0] sm:$0xff]
    %v161 = vld [vmem:[%s1 + $0xf8] sm:$0xff]
    %v162 = vld [vmem:[%s1 + $0x100] sm:$0xff]
    %v163 = vld [vmem:[%s1 + $0x108] sm:$0xff]
    %v164 = vld [vmem:[%s1 + $0x110] sm:$0xff]
    %v165 = vld [vmem:[%s1 + $0x118] sm:$0xff]
    %v166 = vld [vmem:[%s1 + $0x120] sm:$0xff]
    %v167 = vld [vmem:[%s1 + $0x128] sm:$0xff]
    %v168 = vld [vmem:[%s1 + $0x130] sm:$0xff]
    %v169 = vld [vmem:[%s1 + $0x138] sm:$0xff]
    %v170 = vld [vmem:[%s1 + $0x140] sm:$0xff]
    %v171 = vld [vmem:[%s1 + $0x148] sm:$0xff]
    %v172 = vld [vmem:[%s1 + $0x150] sm:$0xff]
    %v173 = vld [vmem:[%s1 + $0x158] sm:$0xff]
    %v174 = vld [vmem:[%s1 + $0x160] sm:$0xff]
    %v175 = vld [vmem:[%s1 + $0x168] sm:$0xff]
    %v176 = vld [vmem:[%s1 + $0x170] sm:$0xff]
    %v177 = vld [vmem:[%s1 + $0x178] sm:$0xff]
    %v178 = vld [vmem:[%s1 + $0x180] sm:$0xff]
    %v179 = vld [vmem:[%s1 + $0x188] sm:$0xff]
    %v180 = vld [vmem:[%s1 + $0x190] sm:$0xff]
    %v181 = vld [vmem:[%s1 + $0x198] sm:$0xff]
    %v182 = vld [vmem:[%s1 + $0x1a0] sm:$0xff]
    %v183 = vld [vmem:[%s1 + $0x1a8] sm:$0xff]
    %v184 = vld [vmem:[%s1 + $0x1b0] sm:$0xff]
    %v185 = vld [vmem:[%s1 + $0x1b8] sm:$0xff]
    %v186 = vld [vmem:[%s1 + $0x1c0] sm:$0xff]
    %v187 = vld [vmem:[%s1 + $0x1c8] sm:$0xff]
    %v188 = vld [vmem:[%s1 + $0x1d0] sm:$0xff]
    %v189 = vld [vmem:[%s1 + $0x1d8] sm:$0xff]
    %v190 = vld [vmem:[%s1 + $0x1e0] sm:$0xff]
    %v191 = vld [vmem:[%s1 + $0x1e8] sm:$0xff]
    %v192 = vld [vmem:[%s1 + $0x1f0] sm:$0xff]
    %v193 = vld [vmem:[%s1 + $0x1f8] sm:$0xff]
    %v194 = vld [vmem:[%s1 + $0x200] sm:$0xff]
    %v195 = vld [vmem:[%s1 + $0x208] sm:$0xff]
    %v196 = vld [vmem:[%s1 + $0x210] sm:$0xff]
    %v197 = vld [vmem:[%s1 + $0x218] sm:$0xff]
    %v198 = vld [vmem:[%s1 + $0x220] sm:$0xff]
    %v199 = vld [vmem:[%s1 + $0x228] sm:$0xff]
    %v200 = vld [vmem:[%s1 + $0x230] sm:$0xff]
    %v201 = vld [vmem:[%s1 + $0x238] sm:$0xff]
    %v202 = vld [vmem:[%s1 + $0x240] sm:$0xff]
    %v203 = vld [vmem:[%s1 + $0x248] sm:$0xff]
    %v204 = vld [vmem:[%s1 + $0x250] sm:$0xff]
    %v205 = vld [vmem:[%s1 + $0x258] sm:$0xff]
    %v206 = vld [vmem:[%s1 + $0x260] sm:$0xff]
    %v207 = vld [vmem:[%s1 + $0x268] sm:$0xff]
    %v208 = vld [vmem:[%s1 + $0x270] sm:$0xff]
    %v209 = vld [vmem:[%s1 + $0x278] sm:$0xff]
    %v210 = vld [vmem:[%s1 + $0x280] sm:$0xff]
    %v211 = vld [vmem:[%s1 + $0x288] sm:$0xff]
    %v212 = vld [vmem:[%s1 + $0x290] sm:$0xff]
    %v213 = vld [vmem:[%s1 + $0x298] sm:$0xff]
    %v214 = vld [vmem:[%s1 + $0x2a0] sm:$0xff]
    %v215 = vld [vmem:[%s1 + $0x2a8] sm:$0xff]
    %v216 = vld [vmem:[%s1 + $0x2b0] sm:$0xff]
    %v217 = vld [vmem:[%s1 + $0x2b8] sm:$0xff]
    %v218 = vld [vmem:[%s1 + $0x2c0] sm:$0xff]
    %v219 = vld [vmem:[%s1 + $0x2c8] sm:$0xff]
    %v220 = vld [vmem:[%s1 + $0x2d0] sm:$0xff]
    %v221 = vld [vmem:[%s1 + $0x2d8] sm:$0xff]
    %v222 = vld [vmem:[%s1 + $0x2e0] sm:$0xff]
    %v223 = vld [vmem:[%s1 + $0x2e8] sm:$0xff]
    %v224 = vld [vmem:[%s1 + $0x2f0] sm:$0xff]
    %v225 = vld [vmem:[%s1 + $0x2f8] sm:$0xff]
    %v226 = vld [vmem:[%s1 + $0x300] sm:$0xff]
    %v227 = vld [vmem:[%s1 + $0x308] sm:$0xff]
    %v228 = vld [vmem:[%s1 + $0x310] sm:$0xff]
    %v229 = vld [vmem:[%s1 + $0x318] sm:$0xff]
    %v230 = vld [vmem:[%s1 + $0x320] sm:$0xff]
    %v231 = vld [vmem:[%s1 + $0x328] sm:$0xff]
    %v232 = vld [vmem:[%s1 + $0x330] sm:$0xff]
    %v233 = vld [vmem:[%s1 + $0x338] sm:$0xff]
    %v234 = vld [vmem:[%s1 + $0x340] sm:$0xff]
    %v235 = vld [vmem:[%s1 + $0x348] sm:$0xff]
    %v236 = vld [vmem:[%s1 + $0x350] sm:$0xff]
    %v237 = vld [vmem:[%s1 + $0x358] sm:$0xff]
    %v238 = vld [vmem:[%s1 + $0x360] sm:$0xff]
    %v239 = vld [vmem:[%s1 + $0x368] sm:$0xff]
    %v240 = vld [vmem:[%s1 + $0x370] sm:$0xff]
    %v241 = vld [vmem:[%s1 + $0x378] sm:$0xff]
    %v242 = vld [vmem:[%s1 + $0x380] sm:$0xff]
    %v243 = vld [vmem:[%s1 + $0x388] sm:$0xff]
    %v244 = vld [vmem:[%s1 + $0x390] sm:$0xff]
    %v245 = vld [vmem:[%s1 + $0x398] sm:$0xff]
    %v246 = vld [vmem:[%s1 + $0x3a0] sm:$0xff]
    %v247 = vld [vmem:[%s1 + $0x3a8] sm:$0xff]
    %v248 = vld [vmem:[%s1 + $0x3b0] sm:$0xff]
    %v249 = vld [vmem:[%s1 + $0x3b8] sm:$0xff]
    %v250 = vld [vmem:[%s1 + $0x3c0] sm:$0xff]
    %v251 = vld [vmem:[%s1 + $0x3c8] sm:$0xff]
    %v252 = vld [vmem:[%s1 + $0x3d0] sm:$0xff]
    %v253 = vld [vmem:[%s1 + $0x3d8] sm:$0xff]
    %v254 = vld [vmem:[%s1 + $0x3e0] sm:$0xff]
    %v255 = vld [vmem:[%s1 + $0x3e8] sm:$0xff]
    %v256 = vld [vmem:[%s1 + $0x3f0] sm:$0xff]
    %v257 = vld [vmem:[%s1 + $0x3f8] sm:$0xff]
    %v258 = vld [vmem:[%s1 + $0x400] sm:$0xff]
    %v259 = vld [vmem:[%s1 + $0x408] sm:$0xff]
    %v260 = vld [vmem:[%s1 + $0x410] sm:$0xff]
    %v261 = vld [vmem:[%s1 + $0x418] sm:$0xff]
    %v262 = vld [vmem:[%s1 + $0x420] sm:$0xff]
    %v263 = vld [vmem:[%s1 + $0x428] sm:$0xff]
    %v264 = vld [vmem:[%s1 + $0x430] sm:$0xff]
    %v265 = vld [vmem:[%s1 + $0x438] sm:$0xff]
    %v266 = vld [vmem:[%s1 + $0x440] sm:$0xff]
    %v267 = vld [vmem:[%s1 + $0x448] sm:$0xff]
    %v268 = vld [vmem:[%s1 + $0x450] sm:$0xff]
    %v269 = vld [vmem:[%s1 + $0x458] sm:$0xff]
    %v270 = vld [vmem:[%s1 + $0x460] sm:$0xff]
    %v271 = vld [vmem:[%s1 + $0x468] sm:$0xff]
    %v272 = vld [vmem:[%s1 + $0x470] sm:$0xff]
    %v273 = vld [vmem:[%s1 + $0x478] sm:$0xff]
    %v274 = vld [vmem:[%s1 + $0x480] sm:$0xff]
    %v275 = vld [vmem:[%s1 + $0x488] sm:$0xff]
    %v276 = vld [vmem:[%s1 + $0x490] sm:$0xff]
    %v277 = vld [vmem:[%s1 + $0x498] sm:$0xff]
    %v278 = vld [vmem:[%s1 + $0x4a0] sm:$0xff]
    %v279 = vld [vmem:[%s1 + $0x4a8] sm:$0xff]
    %v280 = vld [vmem:[%s1 + $0x4b0] sm:$0xff]
    %v281 = vld [vmem:[%s1 + $0x4b8] sm:$0xff]
    %v282 = vld [vmem:[%s1 + $0x4c0] sm:$0xff]
    %v283 = vld [vmem:[%s1 + $0x4c8] sm:$0xff]
    %v284 = vld [vmem:[%s1 + $0x4d0] sm:$0xff]
    %v285 = vld [vmem:[%s1 + $0x4d8] sm:$0xff]
    %v286 = vld [vmem:[%s1 + $0x4e0] sm:$0xff]
    %v287 = vld [vmem:[%s1 + $0x4e8] sm:$0xff]
    %v288 = vld [vmem:[%s1 + $0x4f0] sm:$0xff]
    %v289 = vld [vmem:[%s1 + $0x4f8] sm:$0xff]
    %v290 = vld [vmem:[%s1 + $0x500] sm:$0xff]
    %v291 = vld [vmem:[%s1 + $0x508] sm:$0xff]
    %v292 = vld [vmem:[%s1 + $0x510] sm:$0xff]
    %v293 = vld [vmem:[%s1 + $0x518] sm:$0xff]
    %v294 = vld [vmem:[%s1 + $0x520] sm:$0xff]
    %v295 = vld [vmem:[%s1 + $0x528] sm:$0xff]
    %v296 = vld [vmem:[%s1 + $0x530] sm:$0xff]
    %v297 = vld [vmem:[%s1 + $0x538] sm:$0xff]
    %v298 = vld [vmem:[%s1 + $0x540] sm:$0xff]
    %v299 = vld [vmem:[%s1 + $0x548] sm:$0xff]
    %v300 = vld [vmem:[%s1 + $0x550] sm:$0xff]
    %v301 = vld [vmem:[%s1 + $0x558] sm:$0xff]
    %v302 = vld [vmem:[%s1 + $0x560] sm:$0xff]
    %v303 = vld [vmem:[%s1 + $0x568] sm:$0xff]
    %v304 = vld [vmem:[%s1 + $0x570] sm:$0xff]
    %v305 = vld [vmem:[%s1 + $0x578] sm:$0xff]
    %v306 = vld [vmem:[%s1 + $0x580] sm:$0xff]
    %v307 = vld [vmem:[%s1 + $0x588] sm:$0xff]
    %v308 = vld [vmem:[%s1 + $0x590] sm:$0xff]
    %v309 = vld [vmem:[%s1 + $0x598] sm:$0xff]
    %v310 = vld [vmem:[%s1 + $0x5a0] sm:$0xff]
    %v311 = vld [vmem:[%s1 + $0x5a8] sm:$0xff]
    %v312 = vld [vmem:[%s1 + $0x5b0] sm:$0xff]
    %v313 = vld [vmem:[%s1 + $0x5b8] sm:$0xff]
    %v314 = vld [vmem:[%s1 + $0x5c0] sm:$0xff]
    %v315 = vld [vmem:[%s1 + $0x5c8] sm:$0xff]
    %v316 = vld [vmem:[%s1 + $0x5d0] sm:$0xff]
    %v317 = vld [vmem:[%s1 + $0x5d8] sm:$0xff]
    %v318 = vld [vmem:[%s1 + $0x5e0] sm:$0xff]
    %v319 = vld [vmem:[%s1 + $0x5e8] sm:$0xff]
    %v320 = vld [vmem:[%s1 + $0x5f0] sm:$0xff]
    %v321 = vld [vmem:[%s1 + $0x5f8] sm:$0xff]
    %v322 = vld [vmem:[%s1 + $0x600] sm:$0xff]
    %v323 = vld [vmem:[%s1 + $0x608] sm:$0xff]
    %v324 = vld [vmem:[%s1 + $0x610] sm:$0xff]
    %v325 = vld [vmem:[%s1 + $0x618] sm:$0xff]
    %v326 = vld [vmem:[%s1 + $0x620] sm:$0xff]
    %v327 = vld [vmem:[%s1 + $0x628] sm:$0xff]
    %v328 = vld [vmem:[%s1 + $0x630] sm:$0xff]
    %v329 = vld [vmem:[%s1 + $0x638] sm:$0xff]
    %v330 = vld [vmem:[%s1 + $0x640] sm:$0xff]
    %v331 = vld [vmem:[%s1 + $0x648] sm:$0xff]
    %v332 = vld [vmem:[%s1 + $0x650] sm:$0xff]
    %v333 = vld [vmem:[%s1 + $0x658] sm:$0xff]
    %v334 = vld [vmem:[%s1 + $0x660] sm:$0xff]
    %v335 = vld [vmem:[%s1 + $0x668] sm:$0xff]
    %v336 = vld [vmem:[%s1 + $0x670] sm:$0xff]
    %v337 = vld [vmem:[%s1 + $0x678] sm:$0xff]
    %v338 = vld [vmem:[%s1 + $0x680] sm:$0xff]
    %v339 = vld [vmem:[%s1 + $0x688] sm:$0xff]
    %v340 = vld [vmem:[%s1 + $0x690] sm:$0xff]
    %v341 = vld [vmem:[%s1 + $0x698] sm:$0xff]
    %v342 = vld [vmem:[%s1 + $0x6a0] sm:$0xff]
    %v343 = vld [vmem:[%s1 + $0x6a8] sm:$0xff]
    %v344 = vld [vmem:[%s1 + $0x6b0] sm:$0xff]
    %v345 = vld [vmem:[%s1 + $0x6b8] sm:$0xff]
    %v346 = vld [vmem:[%s1 + $0x6c0] sm:$0xff]
    %v347 = vld [vmem:[%s1 + $0x6c8] sm:$0xff]
    %v348 = vld [vmem:[%s1 + $0x6d0] sm:$0xff]
    %v349 = vld [vmem:[%s1 + $0x6d8] sm:$0xff]
    %v350 = vld [vmem:[%s1 + $0x6e0] sm:$0xff]
    %v351 = vld [vmem:[%s1 + $0x6e8] sm:$0xff]
    %v352 = vld [vmem:[%s1 + $0x6f0] sm:$0xff]
    %v353 = vld [vmem:[%s1 + $0x6f8] sm:$0xff]
    %v354 = vld [vmem:[%s1 + $0x700] sm:$0xff]
    %v355 = vld [vmem:[%s1 + $0x708] sm:$0xff]
    %v356 = vld [vmem:[%s1 + $0x710] sm:$0xff]
    %v357 = vld [vmem:[%s1 + $0x718] sm:$0xff]
    %v358 = vld [vmem:[%s1 + $0x720] sm:$0xff]
    %v359 = vld [vmem:[%s1 + $0x728] sm:$0xff]
    %v360 = vld [vmem:[%s1 + $0x730] sm:$0xff]
    %v361 = vld [vmem:[%s1 + $0x738] sm:$0xff]
    %v362 = vld [vmem:[%s1 + $0x740] sm:$0xff]
    %v363 = vld [vmem:[%s1 + $0x748] sm:$0xff]
    %v364 = vld [vmem:[%s1 + $0x750] sm:$0xff]
    %v365 = vld [vmem:[%s1 + $0x758] sm:$0xff]
    %v366 = vld [vmem:[%s1 + $0x760] sm:$0xff]
    %v367 = vld [vmem:[%s1 + $0x768] sm:$0xff]
    %v368 = vld [vmem:[%s1 + $0x770] sm:$0xff]
    %v369 = vld [vmem:[%s1 + $0x778] sm:$0xff]
    %v370 = vld [vmem:[%s1 + $0x780] sm:$0xff]
    %v371 = vld [vmem:[%s1 + $0x788] sm:$0xff]
    %v372 = vld [vmem:[%s1 + $0x790] sm:$0xff]
    %v373 = vld [vmem:[%s1 + $0x798] sm:$0xff]
    %v374 = vld [vmem:[%s1 + $0x7a0] sm:$0xff]
    %v375 = vld [vmem:[%s1 + $0x7a8] sm:$0xff]
    %v376 = vld [vmem:[%s1 + $0x7b0] sm:$0xff]
    %v377 = vld [vmem:[%s1 + $0x7b8] sm:$0xff]
    %v378 = vld [vmem:[%s1 + $0x7c0] sm:$0xff]
    %v379 = vld [vmem:[%s1 + $0x7c8] sm:$0xff]
    %v380 = vld [vmem:[%s1 + $0x7d0] sm:$0xff]
    %v381 = vld [vmem:[%s1 + $0x7d8] sm:$0xff]
    %v382 = vld [vmem:[%s1 + $0x7e0] sm:$0xff]
    %v383 = vld [vmem:[%s1 + $0x7e8] sm:$0xff]
    %v384 = vld [vmem:[%s1 + $0x7f0] sm:$0xff]
    %v385 = vld [vmem:[%s1 + $0x7f8] sm:$0xff]
    %v386 = vld [vmem:[%s1 + $0x800] sm:$0xff]
    %v387 = vld [vmem:[%s1 + $0x808] sm:$0xff]
    %v388 = vld [vmem:[%s1 + $0x810] sm:$0xff]
    %v389 = vld [vmem:[%s1 + $0x818] sm:$0xff]
    %v390 = vld [vmem:[%s1 + $0x820] sm:$0xff]
    %v391 = vld [vmem:[%s1 + $0x828] sm:$0xff]
    %v392 = vld [vmem:[%s1 + $0x830] sm:$0xff]
    %v393 = vld [vmem:[%s1 + $0x838] sm:$0xff]
    %v394 = vld [vmem:[%s1 + $0x840] sm:$0xff]
    %v395 = vld [vmem:[%s1 + $0x848] sm:$0xff]
    %v396 = vld [vmem:[%s1 + $0x850] sm:$0xff]
    %v397 = vld [vmem:[%s1 + $0x858] sm:$0xff]
    %v398 = vld [vmem:[%s1 + $0x860] sm:$0xff]
    %v399 = vld [vmem:[%s1 + $0x868] sm:$0xff]
    %v400 = vld [vmem:[%s1 + $0x870] sm:$0xff]
    %v401 = vld [vmem:[%s1 + $0x878] sm:$0xff]
    %v402 = vld [vmem:[%s1 + $0x880] sm:$0xff]
    %v403 = vld [vmem:[%s1 + $0x888] sm:$0xff]
    %v404 = vld [vmem:[%s1 + $0x890] sm:$0xff]
    %v405 = vld [vmem:[%s1 + $0x898] sm:$0xff]
    %v406 = vld [vmem:[%s1 + $0x8a0] sm:$0xff]
    %v407 = vld [vmem:[%s1 + $0x8a8] sm:$0xff]
    %v408 = vld [vmem:[%s1 + $0x8b0] sm:$0xff]
    %v409 = vld [vmem:[%s1 + $0x8b8] sm:$0xff]
    %v410 = vld [vmem:[%s1 + $0x8c0] sm:$0xff]
    %v411 = vld [vmem:[%s1 + $0x8c8] sm:$0xff]
    %v412 = vld [vmem:[%s1 + $0x8d0] sm:$0xff]
    %v413 = vld [vmem:[%s1 + $0x8d8] sm:$0xff]
    %v414 = vld [vmem:[%s1 + $0x8e0] sm:$0xff]
    %v415 = vld [vmem:[%s1 + $0x8e8] sm:$0xff]
    %v416 = vld [vmem:[%s1 + $0x8f0] sm:$0xff]
    %v417 = vld [vmem:[%s1 + $0x8f8] sm:$0xff]
    %v418 = vld [vmem:[%s1 + $0x900] sm:$0xff]
    %v419 = vld [vmem:[%s1 + $0x908] sm:$0xff]
    %v420 = vld [vmem:[%s1 + $0x910] sm:$0xff]
    %v421 = vld [vmem:[%s1 + $0x918] sm:$0xff]
    %v422 = vld [vmem:[%s1 + $0x920] sm:$0xff]
    %v423 = vld [vmem:[%s1 + $0x928] sm:$0xff]
    %v424 = vld [vmem:[%s1 + $0x930] sm:$0xff]
    %v425 = vld [vmem:[%s1 + $0x938] sm:$0xff]
    %v426 = vld [vmem:[%s1 + $0x940] sm:$0xff]
    %v427 = vld [vmem:[%s1 + $0x948] sm:$0xff]
    %v428 = vld [vmem:[%s1 + $0x950] sm:$0xff]
    %v429 = vld [vmem:[%s1 + $0x958] sm:$0xff]
    %v430 = vld [vmem:[%s1 + $0x960] sm:$0xff]
    %v431 = vld [vmem:[%s1 + $0x968] sm:$0xff]
    %v432 = vld [vmem:[%s1 + $0x970] sm:$0xff]
    %v433 = vld [vmem:[%s1 + $0x978] sm:$0xff]
    %v434 = vld [vmem:[%s1 + $0x980] sm:$0xff]
    %v435 = vld [vmem:[%s1 + $0x988] sm:$0xff]
    %v436 = vld [vmem:[%s1 + $0x990] sm:$0xff]
    %v437 = vld [vmem:[%s1 + $0x998] sm:$0xff]
    %v438 = vld [vmem:[%s1 + $0x9a0] sm:$0xff]
    %v439 = vld [vmem:[%s1 + $0x9a8] sm:$0xff]
    %v440 = vld [vmem:[%s1 + $0x9b0] sm:$0xff]
    %v441 = vld [vmem:[%s1 + $0x9b8] sm:$0xff]
    %v442 = vld [vmem:[%s1 + $0x9c0] sm:$0xff]
    %v443 = vld [vmem:[%s1 + $0x9c8] sm:$0xff]
    %v444 = vld [vmem:[%s1 + $0x9d0] sm:$0xff]
    %v445 = vld [vmem:[%s1 + $0x9d8] sm:$0xff]
    %v446 = vld [vmem:[%s1 + $0x9e0] sm:$0xff]
    %v447 = vld [vmem:[%s1 + $0x9e8] sm:$0xff]
    %v448 = vld [vmem:[%s1 + $0x9f0] sm:$0xff]
    %v449 = vld [vmem:[%s1 + $0x9f8] sm:$0xff]
    %v450 = vld [vmem:[%s1 + $0xa00] sm:$0xff]
    %v451 = vld [vmem:[%s1 + $0xa08] sm:$0xff]
    %v452 = vld [vmem:[%s1 + $0xa10] sm:$0xff]
    %v453 = vld [vmem:[%s1 + $0xa18] sm:$0xff]
    %v454 = vld [vmem:[%s1 + $0xa20] sm:$0xff]
    %v455 = vld [vmem:[%s1 + $0xa28] sm:$0xff]
    %v456 = vld [vmem:[%s1 + $0xa30] sm:$0xff]
    %v457 = vld [vmem:[%s1 + $0xa38] sm:$0xff]
    %v458 = vld [vmem:[%s1 + $0xa40] sm:$0xff]
    %v459 = vld [vmem:[%s1 + $0xa48] sm:$0xff]
    %v460 = vld [vmem:[%s1 + $0xa50] sm:$0xff]
    %v461 = vld [vmem:[%s1 + $0xa58] sm:$0xff]
    %v462 = vld [vmem:[%s1 + $0xa60] sm:$0xff]
    %v463 = vld [vmem:[%s1 + $0xa68] sm:$0xff]
    %v464 = vld [vmem:[%s1 + $0xa70] sm:$0xff]
    %v465 = vld [vmem:[%s1 + $0xa78] sm:$0xff]
    %v466 = vld [vmem:[%s1 + $0xa80] sm:$0xff]
    %v467 = vld [vmem:[%s1 + $0xa88] sm:$0xff]
    %v468 = vld [vmem:[%s1 + $0xa90] sm:$0xff]
    %v469 = vld [vmem:[%s1 + $0xa98] sm:$0xff]
    %v470 = vld [vmem:[%s1 + $0xaa0] sm:$0xff]
    %v471 = vld [vmem:[%s1 + $0xaa8] sm:$0xff]
    %v472 = vld [vmem:[%s1 + $0xab0] sm:$0xff]
    %v473 = vld [vmem:[%s1 + $0xab8] sm:$0xff]
    %v474 = vld [vmem:[%s1 + $0xac0] sm:$0xff]
    %v475 = vld [vmem:[%s1 + $0xac8] sm:$0xff]
    %v476 = vld [vmem:[%s1 + $0xad0] sm:$0xff]
    %v477 = vld [vmem:[%s1 + $0xad8] sm:$0xff]
    %v478 = vld [vmem:[%s1 + $0xae0] sm:$0xff]
    %v479 = vld [vmem:[%s1 + $0xae8] sm:$0xff]
    %v480 = vld [vmem:[%s1 + $0xaf0] sm:$0xff]
    %v481 = vld [vmem:[%s1 + $0xaf8] sm:$0xff]
    %v482 = vld [vmem:[%s1 + $0xb00] sm:$0xff]
    %v483 = vld [vmem:[%s1 + $0xb08] sm:$0xff]
    %v484 = vld [vmem:[%s1 + $0xb10] sm:$0xff]
    %v485 = vld [vmem:[%s1 + $0xb18] sm:$0xff]
    %v486 = vld [vmem:[%s1 + $0xb20] sm:$0xff]
    %v487 = vld [vmem:[%s1 + $0xb28] sm:$0xff]
    %v488 = vld [vmem:[%s1 + $0xb30] sm:$0xff]
    %v489 = vld [vmem:[%s1 + $0xb38] sm:$0xff]
    %v490 = vld [vmem:[%s1 + $0xb40] sm:$0xff]
    %v491 = vld [vmem:[%s1 + $0xb48] sm:$0xff]
    %v492 = vld [vmem:[%s1 + $0xb50] sm:$0xff]
    %v493 = vld [vmem:[%s1 + $0xb58] sm:$0xff]
    %v494 = vld [vmem:[%s1 + $0xb60] sm:$0xff]
    %v495 = vld [vmem:[%s1 + $0xb68] sm:$0xff]
    %v496 = vld [vmem:[%s1 + $0xb70] sm:$0xff]
    %v497 = vld [vmem:[%s1 + $0xb78] sm:$0xff]
    %v498 = vld [vmem:[%s1 + $0xb80] sm:$0xff]
    %v499 = vld [vmem:[%s1 + $0xb88] sm:$0xff]
    %v500 = vld [vmem:[%s1 + $0xb90] sm:$0xff]
    %v501 = vld [vmem:[%s1 + $0xb98] sm:$0xff]
    %v502 = vld [vmem:[%s1 + $0xba0] sm:$0xff]
    %v503 = vld [vmem:[%s1 + $0xba8] sm:$0xff]
    %v504 = vld [vmem:[%s1 + $0xbb0] sm:$0xff]
    %v505 = vld [vmem:[%s1 + $0xbb8] sm:$0xff]
    %v506 = vld [vmem:[%s1 + $0xbc0] sm:$0xff]
    %v507 = vld [vmem:[%s1 + $0xbc8] sm:$0xff]
    %v508 = vld [vmem:[%s1 + $0xbd0] sm:$0xff]
    %v509 = vld [vmem:[%s1 + $0xbd8] sm:$0xff]
    %v510 = vld [vmem:[%s1 + $0xbe0] sm:$0xff]
    %v511 = vld [vmem:[%s1 + $0xbe8] sm:$0xff]
    %v512 = vld [vmem:[%s1 + $0xbf0] sm:$0xff]
    %v513 = vld [vmem:[%s1 + $0xbf8] sm:$0xff]
    %v514 = vld [vmem:[%s1 + $0xc00] sm:$0xff]
    %v515 = vld [vmem:[%s1 + $0xc08] sm:$0xff]
    %v516 = vld [vmem:[%s1 + $0xc10] sm:$0xff]
    %v517 = vld [vmem:[%s1 + $0xc18] sm:$0xff]
    %v518 = vld [vmem:[%s1 + $0xc20] sm:$0xff]
    %v519 = vld [vmem:[%s1 + $0xc28] sm:$0xff]
    %v520 = vld [vmem:[%s1 + $0xc30] sm:$0xff]
    %v521 = vld [vmem:[%s1 + $0xc38] sm:$0xff]
    %v522 = vld [vmem:[%s1 + $0xc40] sm:$0xff]
    %v523 = vld [vmem:[%s1 + $0xc48] sm:$0xff]
    %v524 = vld [vmem:[%s1 + $0xc50] sm:$0xff]
    %v525 = vld [vmem:[%s1 + $0xc58] sm:$0xff]
    %v526 = vld [vmem:[%s1 + $0xc60] sm:$0xff]
    %v527 = vld [vmem:[%s1 + $0xc68] sm:$0xff]
    %v528 = vld [vmem:[%s1 + $0xc70] sm:$0xff]
    %v529 = vld [vmem:[%s1 + $0xc78] sm:$0xff]
    %v530 = vld [vmem:[%s1 + $0xc80] sm:$0xff]
    %v531 = vld [vmem:[%s1 + $0xc88] sm:$0xff]
    %v532 = vld [vmem:[%s1 + $0xc90] sm:$0xff]
    %v533 = vld [vmem:[%s1 + $0xc98] sm:$0xff]
    %v534 = vld [vmem:[%s1 + $0xca0] sm:$0xff]
    %v535 = vld [vmem:[%s1 + $0xca8] sm:$0xff]
    %v536 = vld [vmem:[%s1 + $0xcb0] sm:$0xff]
    %v537 = vld [vmem:[%s1 + $0xcb8] sm:$0xff]
    %v538 = vld [vmem:[%s1 + $0xcc0] sm:$0xff]
    %v539 = vld [vmem:[%s1 + $0xcc8] sm:$0xff]
    %v540 = vld [vmem:[%s1 + $0xcd0] sm:$0xff]
    %v541 = vld [vmem:[%s1 + $0xcd8] sm:$0xff]
    %v542 = vld [vmem:[%s1 + $0xce0] sm:$0xff]
    %v543 = vld [vmem:[%s1 + $0xce8] sm:$0xff]
    %v544 = vld [vmem:[%s1 + $0xcf0] sm:$0xff]
    %v545 = vld [vmem:[%s1 + $0xcf8] sm:$0xff]
    %v546 = vld [vmem:[%s1 + $0xd00] sm:$0xff]
    %v547 = vld [vmem:[%s1 + $0xd08] sm:$0xff]
    %v548 = vld [vmem:[%s1 + $0xd10] sm:$0xff]
    %v549 = vld [vmem:[%s1 + $0xd18] sm:$0xff]
    %v550 = vld [vmem:[%s1 + $0xd20] sm:$0xff]
    %v551 = vld [vmem:[%s1 + $0xd28] sm:$0xff]
    %v552 = vld [vmem:[%s1 + $0xd30] sm:$0xff]
    %v553 = vld [vmem:[%s1 + $0xd38] sm:$0xff]
    %v554 = vld [vmem:[%s1 + $0xd40] sm:$0xff]
    %v555 = vld [vmem:[%s1 + $0xd48] sm:$0xff]
    %v556 = vld [vmem:[%s1 + $0xd50] sm:$0xff]
    %v557 = vld [vmem:[%s1 + $0xd58] sm:$0xff]
    %v558 = vld [vmem:[%s1 + $0xd60] sm:$0xff]
    %v559 = vld [vmem:[%s1 + $0xd68] sm:$0xff]
    %v560 = vld [vmem:[%s1 + $0xd70] sm:$0xff]
    %v561 = vld [vmem:[%s1 + $0xd78] sm:$0xff]
    %v562 = vld [vmem:[%s1 + $0xd80] sm:$0xff]
    %v563 = vld [vmem:[%s1 + $0xd88] sm:$0xff]
    %v564 = vld [vmem:[%s1 + $0xd90] sm:$0xff]
    %v565 = vld [vmem:[%s1 + $0xd98] sm:$0xff]
    %v566 = vld [vmem:[%s1 + $0xda0] sm:$0xff]
    %v567 = vld [vmem:[%s1 + $0xda8] sm:$0xff]
    %v568 = vld [vmem:[%s1 + $0xdb0] sm:$0xff]
    %v569 = vld [vmem:[%s1 + $0xdb8] sm:$0xff]
    %v570 = vld [vmem:[%s1 + $0xdc0] sm:$0xff]
    %v571 = vld [vmem:[%s1 + $0xdc8] sm:$0xff]
    %v572 = vld [vmem:[%s1 + $0xdd0] sm:$0xff]
    %v573 = vld [vmem:[%s1 + $0xdd8] sm:$0xff]
    %v574 = vld [vmem:[%s1 + $0xde0] sm:$0xff]
    %v575 = vld [vmem:[%s1 + $0xde8] sm:$0xff]
    %v576 = vld [vmem:[%s1 + $0xdf0] sm:$0xff]
    %v577 = vld [vmem:[%s1 + $0xdf8] sm:$0xff]
    %v578 = vld [vmem:[%s1 + $0xe00] sm:$0xff]
    %v579 = vld [vmem:[%s1 + $0xe08] sm:$0xff]
    %v580 = vld [vmem:[%s1 + $0xe10] sm:$0xff]
    %v581 = vld [vmem:[%s1 + $0xe18] sm:$0xff]
    %v582 = vld [vmem:[%s1 + $0xe20] sm:$0xff]
    %v583 = vld [vmem:[%s1 + $0xe28] sm:$0xff]
    %v584 = vld [vmem:[%s1 + $0xe30] sm:$0xff]
    %v585 = vld [vmem:[%s1 + $0xe38] sm:$0xff]
    %v586 = vld [vmem:[%s1 + $0xe40] sm:$0xff]
    %v587 = vld [vmem:[%s1 + $0xe48] sm:$0xff]
    %v588 = vld [vmem:[%s1 + $0xe50] sm:$0xff]
    %v589 = vld [vmem:[%s1 + $0xe58] sm:$0xff]
    %v590 = vld [vmem:[%s1 + $0xe60] sm:$0xff]
    %v591 = vld [vmem:[%s1 + $0xe68] sm:$0xff]
    %v592 = vld [vmem:[%s1 + $0xe70] sm:$0xff]
    %v593 = vld [vmem:[%s1 + $0xe78] sm:$0xff]
    %v594 = vld [vmem:[%s1 + $0xe80] sm:$0xff]
    %v595 = vld [vmem:[%s1 + $0xe88] sm:$0xff]
    %v596 = vld [vmem:[%s1 + $0xe90] sm:$0xff]
    %v597 = vld [vmem:[%s1 + $0xe98] sm:$0xff]
    %v598 = vld [vmem:[%s1 + $0xea0] sm:$0xff]
    %v599 = vld [vmem:[%s1 + $0xea8] sm:$0xff]
    %v600 = vld [vmem:[%s1 + $0xeb0] sm:$0xff]
    %v601 = vld [vmem:[%s1 + $0xeb8] sm:$0xff]
    %v602 = vld [vmem:[%s1 + $0xec0] sm:$0xff]
    %v603 = vld [vmem:[%s1 + $0xec8] sm:$0xff]
    %v604 = vld [vmem:[%s1 + $0xed0] sm:$0xff]
    %v605 = vld [vmem:[%s1 + $0xed8] sm:$0xff]
    %v606 = vld [vmem:[%s1 + $0xee0] sm:$0xff]
    %v607 = vld [vmem:[%s1 + $0xee8] sm:$0xff]
    %v608 = vld [vmem:[%s1 + $0xef0] sm:$0xff]
    %v609 = vld [vmem:[%s1 + $0xef8] sm:$0xff]
    %v610 = vld [vmem:[%s1 + $0xf00] sm:$0xff]
    %v611 = vld [vmem:[%s1 + $0xf08] sm:$0xff]
    %v612 = vld [vmem:[%s1 + $0xf10] sm:$0xff]
    %v613 = vld [vmem:[%s1 + $0xf18] sm:$0xff]
    %v614 = vld [vmem:[%s1 + $0xf20] sm:$0xff]
    %v615 = vld [vmem:[%s1 + $0xf28] sm:$0xff]
    %v616 = vld [vmem:[%s1 + $0xf30] sm:$0xff]
    %v617 = vld [vmem:[%s1 + $0xf38] sm:$0xff]
    %v618 = vld [vmem:[%s1 + $0xf40] sm:$0xff]
    %v619 = vld [vmem:[%s1 + $0xf48] sm:$0xff]
    %v620 = vld [vmem:[%s1 + $0xf50] sm:$0xff]
    %v621 = vld [vmem:[%s1 + $0xf58] sm:$0xff]
    %v622 = vld [vmem:[%s1 + $0xf60] sm:$0xff]
    %v623 = vld [vmem:[%s1 + $0xf68] sm:$0xff]
    %v624 = vld [vmem:[%s1 + $0xf70] sm:$0xff]
    %v625 = vld [vmem:[%s1 + $0xf78] sm:$0xff]
    %v626 = vld [vmem:[%s1 + $0xf80] sm:$0xff]
    %v627 = vld [vmem:[%s1 + $0xf88] sm:$0xff]
    %v628 = vld [vmem:[%s1 + $0xf90] sm:$0xff]
    %v629 = vld [vmem:[%s1 + $0xf98] sm:$0xff]
    %v630 = vld [vmem:[%s1 + $0xfa0] sm:$0xff]
    %v631 = vld [vmem:[%s1 + $0xfa8] sm:$0xff]
    %v632 = vld [vmem:[%s1 + $0xfb0] sm:$0xff]
    %v633 = vld [vmem:[%s1 + $0xfb8] sm:$0xff]
    %v634 = vld [vmem:[%s1 + $0xfc0] sm:$0xff]
    %v635 = vld [vmem:[%s1 + $0xfc8] sm:$0xff]
    %v636 = vld [vmem:[%s1 + $0xfd0] sm:$0xff]
    %v637 = vld [vmem:[%s1 + $0xfd8] sm:$0xff]
    %v638 = vld [vmem:[%s1 + $0xfe0] sm:$0xff]
    %v639 = vld [vmem:[%s1 + $0xfe8] sm:$0xff]
    %v640 = vld [vmem:[%s1 + $0xff0] sm:$0xff]
    %v641 = vld [vmem:[%s1 + $0xff8] sm:$0xff]
    %v642 = vld [vmem:[%s2] sm:$0xf]
    %v644 = vlaneseq
    %v645 = vshrl.u32 %v644, 7
    %v646 = vsub.s32 0, %v645
    %v647 = vrot.slane %v642, %v646
    %v648 = vlaneseq
    %v649 = vshrl.u32 %v648, 7
    %v650 = vsub.s32 1, %v649
    %v651 = vrot.slane %v642, %v650
    %v652 = vlaneseq
    %v653 = vshrl.u32 %v652, 7
    %v654 = vsub.s32 2, %v653
    %v655 = vrot.slane %v642, %v654
    %v656 = vlaneseq
    %v657 = vshrl.u32 %v656, 7
    %v658 = vsub.s32 3, %v657
    %v659 = vrot.slane %v642, %v658
    %v1176 = vunpack.c.l.b16 %v130
    %v1177 = vunpack.c.h.b16 %v130
    %v1178 = vunpack.c.l.b16 %v131
    %v1179 = vunpack.c.h.b16 %v131
    %v1180 = vunpack.c.l.b16 %v132
    %v1181 = vunpack.c.h.b16 %v132
    %v1182 = vunpack.c.l.b16 %v133
    %v1183 = vunpack.c.h.b16 %v133
    %v1184 = vunpack.c.l.b16 %v134
    %v1185 = vunpack.c.h.b16 %v134
    %v1186 = vunpack.c.l.b16 %v135
    %v1187 = vunpack.c.h.b16 %v135
    %v1188 = vunpack.c.l.b16 %v136
    %v1189 = vunpack.c.h.b16 %v136
    %v1190 = vunpack.c.l.b16 %v137
    %v1191 = vunpack.c.h.b16 %v137
    %v1192 = vunpack.c.l.b16 %v138
    %v1193 = vunpack.c.h.b16 %v138
    %v1194 = vunpack.c.l.b16 %v139
    %v1195 = vunpack.c.h.b16 %v139
    %v1196 = vunpack.c.l.b16 %v140
    %v1197 = vunpack.c.h.b16 %v140
    %v1198 = vunpack.c.l.b16 %v141
    %v1199 = vunpack.c.h.b16 %v141
    %v1200 = vunpack.c.l.b16 %v142
    %v1201 = vunpack.c.h.b16 %v142
    %v1202 = vunpack.c.l.b16 %v143
    %v1203 = vunpack.c.h.b16 %v143
    %v1204 = vunpack.c.l.b16 %v144
    %v1205 = vunpack.c.h.b16 %v144
    %v1206 = vunpack.c.l.b16 %v145
    %v1207 = vunpack.c.h.b16 %v145
    %v1208 = vunpack.c.l.b16 %v146
    %v1209 = vunpack.c.h.b16 %v146
    %v1210 = vunpack.c.l.b16 %v147
    %v1211 = vunpack.c.h.b16 %v147
    %v1212 = vunpack.c.l.b16 %v148
    %v1213 = vunpack.c.h.b16 %v148
    %v1214 = vunpack.c.l.b16 %v149
    %v1215 = vunpack.c.h.b16 %v149
    %v1216 = vunpack.c.l.b16 %v150
    %v1217 = vunpack.c.h.b16 %v150
    %v1218 = vunpack.c.l.b16 %v151
    %v1219 = vunpack.c.h.b16 %v151
    %v1220 = vunpack.c.l.b16 %v152
    %v1221 = vunpack.c.h.b16 %v152
    %v1222 = vunpack.c.l.b16 %v153
    %v1223 = vunpack.c.h.b16 %v153
    %v1224 = vunpack.c.l.b16 %v154
    %v1225 = vunpack.c.h.b16 %v154
    %v1226 = vunpack.c.l.b16 %v155
    %v1227 = vunpack.c.h.b16 %v155
    %v1228 = vunpack.c.l.b16 %v156
    %v1229 = vunpack.c.h.b16 %v156
    %v1230 = vunpack.c.l.b16 %v157
    %v1231 = vunpack.c.h.b16 %v157
    %v1232 = vunpack.c.l.b16 %v158
    %v1233 = vunpack.c.h.b16 %v158
    %v1234 = vunpack.c.l.b16 %v159
    %v1235 = vunpack.c.h.b16 %v159
    %v1236 = vunpack.c.l.b16 %v160
    %v1237 = vunpack.c.h.b16 %v160
    %v1238 = vunpack.c.l.b16 %v161
    %v1239 = vunpack.c.h.b16 %v161
    %v1240 = vunpack.c.l.b16 %v162
    %v1241 = vunpack.c.h.b16 %v162
    %v1242 = vunpack.c.l.b16 %v163
    %v1243 = vunpack.c.h.b16 %v163
    %v1244 = vunpack.c.l.b16 %v164
    %v1245 = vunpack.c.h.b16 %v164
    %v1246 = vunpack.c.l.b16 %v165
    %v1247 = vunpack.c.h.b16 %v165
    %v1248 = vunpack.c.l.b16 %v166
    %v1249 = vunpack.c.h.b16 %v166
    %v1250 = vunpack.c.l.b16 %v167
    %v1251 = vunpack.c.h.b16 %v167
    %v1252 = vunpack.c.l.b16 %v168
    %v1253 = vunpack.c.h.b16 %v168
    %v1254 = vunpack.c.l.b16 %v169
    %v1255 = vunpack.c.h.b16 %v169
    %v1256 = vunpack.c.l.b16 %v170
    %v1257 = vunpack.c.h.b16 %v170
    %v1258 = vunpack.c.l.b16 %v171
    %v1259 = vunpack.c.h.b16 %v171
    %v1260 = vunpack.c.l.b16 %v172
    %v1261 = vunpack.c.h.b16 %v172
    %v1262 = vunpack.c.l.b16 %v173
    %v1263 = vunpack.c.h.b16 %v173
    %v1264 = vunpack.c.l.b16 %v174
    %v1265 = vunpack.c.h.b16 %v174
    %v1266 = vunpack.c.l.b16 %v175
    %v1267 = vunpack.c.h.b16 %v175
    %v1268 = vunpack.c.l.b16 %v176
    %v1269 = vunpack.c.h.b16 %v176
    %v1270 = vunpack.c.l.b16 %v177
    %v1271 = vunpack.c.h.b16 %v177
    %v1272 = vunpack.c.l.b16 %v178
    %v1273 = vunpack.c.h.b16 %v178
    %v1274 = vunpack.c.l.b16 %v179
    %v1275 = vunpack.c.h.b16 %v179
    %v1276 = vunpack.c.l.b16 %v180
    %v1277 = vunpack.c.h.b16 %v180
    %v1278 = vunpack.c.l.b16 %v181
    %v1279 = vunpack.c.h.b16 %v181
    %v1280 = vunpack.c.l.b16 %v182
    %v1281 = vunpack.c.h.b16 %v182
    %v1282 = vunpack.c.l.b16 %v183
    %v1283 = vunpack.c.h.b16 %v183
    %v1284 = vunpack.c.l.b16 %v184
    %v1285 = vunpack.c.h.b16 %v184
    %v1286 = vunpack.c.l.b16 %v185
    %v1287 = vunpack.c.h.b16 %v185
    %v1288 = vunpack.c.l.b16 %v186
    %v1289 = vunpack.c.h.b16 %v186
    %v1290 = vunpack.c.l.b16 %v187
    %v1291 = vunpack.c.h.b16 %v187
    %v1292 = vunpack.c.l.b16 %v188
    %v1293 = vunpack.c.h.b16 %v188
    %v1294 = vunpack.c.l.b16 %v189
    %v1295 = vunpack.c.h.b16 %v189
    %v1296 = vunpack.c.l.b16 %v190
    %v1297 = vunpack.c.h.b16 %v190
    %v1298 = vunpack.c.l.b16 %v191
    %v1299 = vunpack.c.h.b16 %v191
    %v1300 = vunpack.c.l.b16 %v192
    %v1301 = vunpack.c.h.b16 %v192
    %v1302 = vunpack.c.l.b16 %v193
    %v1303 = vunpack.c.h.b16 %v193
    %v1304 = vunpack.c.l.b16 %v194
    %v1305 = vunpack.c.h.b16 %v194
    %v1306 = vunpack.c.l.b16 %v195
    %v1307 = vunpack.c.h.b16 %v195
    %v1308 = vunpack.c.l.b16 %v196
    %v1309 = vunpack.c.h.b16 %v196
    %v1310 = vunpack.c.l.b16 %v197
    %v1311 = vunpack.c.h.b16 %v197
    %v1312 = vunpack.c.l.b16 %v198
    %v1313 = vunpack.c.h.b16 %v198
    %v1314 = vunpack.c.l.b16 %v199
    %v1315 = vunpack.c.h.b16 %v199
    %v1316 = vunpack.c.l.b16 %v200
    %v1317 = vunpack.c.h.b16 %v200
    %v1318 = vunpack.c.l.b16 %v201
    %v1319 = vunpack.c.h.b16 %v201
    %v1320 = vunpack.c.l.b16 %v202
    %v1321 = vunpack.c.h.b16 %v202
    %v1322 = vunpack.c.l.b16 %v203
    %v1323 = vunpack.c.h.b16 %v203
    %v1324 = vunpack.c.l.b16 %v204
    %v1325 = vunpack.c.h.b16 %v204
    %v1326 = vunpack.c.l.b16 %v205
    %v1327 = vunpack.c.h.b16 %v205
    %v1328 = vunpack.c.l.b16 %v206
    %v1329 = vunpack.c.h.b16 %v206
    %v1330 = vunpack.c.l.b16 %v207
    %v1331 = vunpack.c.h.b16 %v207
    %v1332 = vunpack.c.l.b16 %v208
    %v1333 = vunpack.c.h.b16 %v208
    %v1334 = vunpack.c.l.b16 %v209
    %v1335 = vunpack.c.h.b16 %v209
    %v1336 = vunpack.c.l.b16 %v210
    %v1337 = vunpack.c.h.b16 %v210
    %v1338 = vunpack.c.l.b16 %v211
    %v1339 = vunpack.c.h.b16 %v211
    %v1340 = vunpack.c.l.b16 %v212
    %v1341 = vunpack.c.h.b16 %v212
    %v1342 = vunpack.c.l.b16 %v213
    %v1343 = vunpack.c.h.b16 %v213
    %v1344 = vunpack.c.l.b16 %v214
    %v1345 = vunpack.c.h.b16 %v214
    %v1346 = vunpack.c.l.b16 %v215
    %v1347 = vunpack.c.h.b16 %v215
    %v1348 = vunpack.c.l.b16 %v216
    %v1349 = vunpack.c.h.b16 %v216
    %v1350 = vunpack.c.l.b16 %v217
    %v1351 = vunpack.c.h.b16 %v217
    %v1352 = vunpack.c.l.b16 %v218
    %v1353 = vunpack.c.h.b16 %v218
    %v1354 = vunpack.c.l.b16 %v219
    %v1355 = vunpack.c.h.b16 %v219
    %v1356 = vunpack.c.l.b16 %v220
    %v1357 = vunpack.c.h.b16 %v220
    %v1358 = vunpack.c.l.b16 %v221
    %v1359 = vunpack.c.h.b16 %v221
    %v1360 = vunpack.c.l.b16 %v222
    %v1361 = vunpack.c.h.b16 %v222
    %v1362 = vunpack.c.l.b16 %v223
    %v1363 = vunpack.c.h.b16 %v223
    %v1364 = vunpack.c.l.b16 %v224
    %v1365 = vunpack.c.h.b16 %v224
    %v1366 = vunpack.c.l.b16 %v225
    %v1367 = vunpack.c.h.b16 %v225
    %v1368 = vunpack.c.l.b16 %v226
    %v1369 = vunpack.c.h.b16 %v226
    %v1370 = vunpack.c.l.b16 %v227
    %v1371 = vunpack.c.h.b16 %v227
    %v1372 = vunpack.c.l.b16 %v228
    %v1373 = vunpack.c.h.b16 %v228
    %v1374 = vunpack.c.l.b16 %v229
    %v1375 = vunpack.c.h.b16 %v229
    %v1376 = vunpack.c.l.b16 %v230
    %v1377 = vunpack.c.h.b16 %v230
    %v1378 = vunpack.c.l.b16 %v231
    %v1379 = vunpack.c.h.b16 %v231
    %v1380 = vunpack.c.l.b16 %v232
    %v1381 = vunpack.c.h.b16 %v232
    %v1382 = vunpack.c.l.b16 %v233
    %v1383 = vunpack.c.h.b16 %v233
    %v1384 = vunpack.c.l.b16 %v234
    %v1385 = vunpack.c.h.b16 %v234
    %v1386 = vunpack.c.l.b16 %v235
    %v1387 = vunpack.c.h.b16 %v235
    %v1388 = vunpack.c.l.b16 %v236
    %v1389 = vunpack.c.h.b16 %v236
    %v1390 = vunpack.c.l.b16 %v237
    %v1391 = vunpack.c.h.b16 %v237
    %v1392 = vunpack.c.l.b16 %v238
    %v1393 = vunpack.c.h.b16 %v238
    %v1394 = vunpack.c.l.b16 %v239
    %v1395 = vunpack.c.h.b16 %v239
    %v1396 = vunpack.c.l.b16 %v240
    %v1397 = vunpack.c.h.b16 %v240
    %v1398 = vunpack.c.l.b16 %v241
    %v1399 = vunpack.c.h.b16 %v241
    %v1400 = vunpack.c.l.b16 %v242
    %v1401 = vunpack.c.h.b16 %v242
    %v1402 = vunpack.c.l.b16 %v243
    %v1403 = vunpack.c.h.b16 %v243
    %v1404 = vunpack.c.l.b16 %v244
    %v1405 = vunpack.c.h.b16 %v244
    %v1406 = vunpack.c.l.b16 %v245
    %v1407 = vunpack.c.h.b16 %v245
    %v1408 = vunpack.c.l.b16 %v246
    %v1409 = vunpack.c.h.b16 %v246
    %v1410 = vunpack.c.l.b16 %v247
    %v1411 = vunpack.c.h.b16 %v247
    %v1412 = vunpack.c.l.b16 %v248
    %v1413 = vunpack.c.h.b16 %v248
    %v1414 = vunpack.c.l.b16 %v249
    %v1415 = vunpack.c.h.b16 %v249
    %v1416 = vunpack.c.l.b16 %v250
    %v1417 = vunpack.c.h.b16 %v250
    %v1418 = vunpack.c.l.b16 %v251
    %v1419 = vunpack.c.h.b16 %v251
    %v1420 = vunpack.c.l.b16 %v252
    %v1421 = vunpack.c.h.b16 %v252
    %v1422 = vunpack.c.l.b16 %v253
    %v1423 = vunpack.c.h.b16 %v253
    %v1424 = vunpack.c.l.b16 %v254
    %v1425 = vunpack.c.h.b16 %v254
    %v1426 = vunpack.c.l.b16 %v255
    %v1427 = vunpack.c.h.b16 %v255
    %v1428 = vunpack.c.l.b16 %v256
    %v1429 = vunpack.c.h.b16 %v256
    %v1430 = vunpack.c.l.b16 %v257
    %v1431 = vunpack.c.h.b16 %v257
    %v1432 = vunpack.c.l.b16 %v258
    %v1433 = vunpack.c.h.b16 %v258
    %v1434 = vunpack.c.l.b16 %v259
    %v1435 = vunpack.c.h.b16 %v259
    %v1436 = vunpack.c.l.b16 %v260
    %v1437 = vunpack.c.h.b16 %v260
    %v1438 = vunpack.c.l.b16 %v261
    %v1439 = vunpack.c.h.b16 %v261
    %v1440 = vunpack.c.l.b16 %v262
    %v1441 = vunpack.c.h.b16 %v262
    %v1442 = vunpack.c.l.b16 %v263
    %v1443 = vunpack.c.h.b16 %v263
    %v1444 = vunpack.c.l.b16 %v264
    %v1445 = vunpack.c.h.b16 %v264
    %v1446 = vunpack.c.l.b16 %v265
    %v1447 = vunpack.c.h.b16 %v265
    %v1448 = vunpack.c.l.b16 %v266
    %v1449 = vunpack.c.h.b16 %v266
    %v1450 = vunpack.c.l.b16 %v267
    %v1451 = vunpack.c.h.b16 %v267
    %v1452 = vunpack.c.l.b16 %v268
    %v1453 = vunpack.c.h.b16 %v268
    %v1454 = vunpack.c.l.b16 %v269
    %v1455 = vunpack.c.h.b16 %v269
    %v1456 = vunpack.c.l.b16 %v270
    %v1457 = vunpack.c.h.b16 %v270
    %v1458 = vunpack.c.l.b16 %v271
    %v1459 = vunpack.c.h.b16 %v271
    %v1460 = vunpack.c.l.b16 %v272
    %v1461 = vunpack.c.h.b16 %v272
    %v1462 = vunpack.c.l.b16 %v273
    %v1463 = vunpack.c.h.b16 %v273
    %v1464 = vunpack.c.l.b16 %v274
    %v1465 = vunpack.c.h.b16 %v274
    %v1466 = vunpack.c.l.b16 %v275
    %v1467 = vunpack.c.h.b16 %v275
    %v1468 = vunpack.c.l.b16 %v276
    %v1469 = vunpack.c.h.b16 %v276
    %v1470 = vunpack.c.l.b16 %v277
    %v1471 = vunpack.c.h.b16 %v277
    %v1472 = vunpack.c.l.b16 %v278
    %v1473 = vunpack.c.h.b16 %v278
    %v1474 = vunpack.c.l.b16 %v279
    %v1475 = vunpack.c.h.b16 %v279
    %v1476 = vunpack.c.l.b16 %v280
    %v1477 = vunpack.c.h.b16 %v280
    %v1478 = vunpack.c.l.b16 %v281
    %v1479 = vunpack.c.h.b16 %v281
    %v1480 = vunpack.c.l.b16 %v282
    %v1481 = vunpack.c.h.b16 %v282
    %v1482 = vunpack.c.l.b16 %v283
    %v1483 = vunpack.c.h.b16 %v283
    %v1484 = vunpack.c.l.b16 %v284
    %v1485 = vunpack.c.h.b16 %v284
    %v1486 = vunpack.c.l.b16 %v285
    %v1487 = vunpack.c.h.b16 %v285
    %v1488 = vunpack.c.l.b16 %v286
    %v1489 = vunpack.c.h.b16 %v286
    %v1490 = vunpack.c.l.b16 %v287
    %v1491 = vunpack.c.h.b16 %v287
    %v1492 = vunpack.c.l.b16 %v288
    %v1493 = vunpack.c.h.b16 %v288
    %v1494 = vunpack.c.l.b16 %v289
    %v1495 = vunpack.c.h.b16 %v289
    %v1496 = vunpack.c.l.b16 %v290
    %v1497 = vunpack.c.h.b16 %v290
    %v1498 = vunpack.c.l.b16 %v291
    %v1499 = vunpack.c.h.b16 %v291
    %v1500 = vunpack.c.l.b16 %v292
    %v1501 = vunpack.c.h.b16 %v292
    %v1502 = vunpack.c.l.b16 %v293
    %v1503 = vunpack.c.h.b16 %v293
    %v1504 = vunpack.c.l.b16 %v294
    %v1505 = vunpack.c.h.b16 %v294
    %v1506 = vunpack.c.l.b16 %v295
    %v1507 = vunpack.c.h.b16 %v295
    %v1508 = vunpack.c.l.b16 %v296
    %v1509 = vunpack.c.h.b16 %v296
    %v1510 = vunpack.c.l.b16 %v297
    %v1511 = vunpack.c.h.b16 %v297
    %v1512 = vunpack.c.l.b16 %v298
    %v1513 = vunpack.c.h.b16 %v298
    %v1514 = vunpack.c.l.b16 %v299
    %v1515 = vunpack.c.h.b16 %v299
    %v1516 = vunpack.c.l.b16 %v300
    %v1517 = vunpack.c.h.b16 %v300
    %v1518 = vunpack.c.l.b16 %v301
    %v1519 = vunpack.c.h.b16 %v301
    %v1520 = vunpack.c.l.b16 %v302
    %v1521 = vunpack.c.h.b16 %v302
    %v1522 = vunpack.c.l.b16 %v303
    %v1523 = vunpack.c.h.b16 %v303
    %v1524 = vunpack.c.l.b16 %v304
    %v1525 = vunpack.c.h.b16 %v304
    %v1526 = vunpack.c.l.b16 %v305
    %v1527 = vunpack.c.h.b16 %v305
    %v1528 = vunpack.c.l.b16 %v306
    %v1529 = vunpack.c.h.b16 %v306
    %v1530 = vunpack.c.l.b16 %v307
    %v1531 = vunpack.c.h.b16 %v307
    %v1532 = vunpack.c.l.b16 %v308
    %v1533 = vunpack.c.h.b16 %v308
    %v1534 = vunpack.c.l.b16 %v309
    %v1535 = vunpack.c.h.b16 %v309
    %v1536 = vunpack.c.l.b16 %v310
    %v1537 = vunpack.c.h.b16 %v310
    %v1538 = vunpack.c.l.b16 %v311
    %v1539 = vunpack.c.h.b16 %v311
    %v1540 = vunpack.c.l.b16 %v312
    %v1541 = vunpack.c.h.b16 %v312
    %v1542 = vunpack.c.l.b16 %v313
    %v1543 = vunpack.c.h.b16 %v313
    %v1544 = vunpack.c.l.b16 %v314
    %v1545 = vunpack.c.h.b16 %v314
    %v1546 = vunpack.c.l.b16 %v315
    %v1547 = vunpack.c.h.b16 %v315
    %v1548 = vunpack.c.l.b16 %v316
    %v1549 = vunpack.c.h.b16 %v316
    %v1550 = vunpack.c.l.b16 %v317
    %v1551 = vunpack.c.h.b16 %v317
    %v1552 = vunpack.c.l.b16 %v318
    %v1553 = vunpack.c.h.b16 %v318
    %v1554 = vunpack.c.l.b16 %v319
    %v1555 = vunpack.c.h.b16 %v319
    %v1556 = vunpack.c.l.b16 %v320
    %v1557 = vunpack.c.h.b16 %v320
    %v1558 = vunpack.c.l.b16 %v321
    %v1559 = vunpack.c.h.b16 %v321
    %v1560 = vunpack.c.l.b16 %v322
    %v1561 = vunpack.c.h.b16 %v322
    %v1562 = vunpack.c.l.b16 %v323
    %v1563 = vunpack.c.h.b16 %v323
    %v1564 = vunpack.c.l.b16 %v324
    %v1565 = vunpack.c.h.b16 %v324
    %v1566 = vunpack.c.l.b16 %v325
    %v1567 = vunpack.c.h.b16 %v325
    %v1568 = vunpack.c.l.b16 %v326
    %v1569 = vunpack.c.h.b16 %v326
    %v1570 = vunpack.c.l.b16 %v327
    %v1571 = vunpack.c.h.b16 %v327
    %v1572 = vunpack.c.l.b16 %v328
    %v1573 = vunpack.c.h.b16 %v328
    %v1574 = vunpack.c.l.b16 %v329
    %v1575 = vunpack.c.h.b16 %v329
    %v1576 = vunpack.c.l.b16 %v330
    %v1577 = vunpack.c.h.b16 %v330
    %v1578 = vunpack.c.l.b16 %v331
    %v1579 = vunpack.c.h.b16 %v331
    %v1580 = vunpack.c.l.b16 %v332
    %v1581 = vunpack.c.h.b16 %v332
    %v1582 = vunpack.c.l.b16 %v333
    %v1583 = vunpack.c.h.b16 %v333
    %v1584 = vunpack.c.l.b16 %v334
    %v1585 = vunpack.c.h.b16 %v334
    %v1586 = vunpack.c.l.b16 %v335
    %v1587 = vunpack.c.h.b16 %v335
    %v1588 = vunpack.c.l.b16 %v336
    %v1589 = vunpack.c.h.b16 %v336
    %v1590 = vunpack.c.l.b16 %v337
    %v1591 = vunpack.c.h.b16 %v337
    %v1592 = vunpack.c.l.b16 %v338
    %v1593 = vunpack.c.h.b16 %v338
    %v1594 = vunpack.c.l.b16 %v339
    %v1595 = vunpack.c.h.b16 %v339
    %v1596 = vunpack.c.l.b16 %v340
    %v1597 = vunpack.c.h.b16 %v340
    %v1598 = vunpack.c.l.b16 %v341
    %v1599 = vunpack.c.h.b16 %v341
    %v1600 = vunpack.c.l.b16 %v342
    %v1601 = vunpack.c.h.b16 %v342
    %v1602 = vunpack.c.l.b16 %v343
    %v1603 = vunpack.c.h.b16 %v343
    %v1604 = vunpack.c.l.b16 %v344
    %v1605 = vunpack.c.h.b16 %v344
    %v1606 = vunpack.c.l.b16 %v345
    %v1607 = vunpack.c.h.b16 %v345
    %v1608 = vunpack.c.l.b16 %v346
    %v1609 = vunpack.c.h.b16 %v346
    %v1610 = vunpack.c.l.b16 %v347
    %v1611 = vunpack.c.h.b16 %v347
    %v1612 = vunpack.c.l.b16 %v348
    %v1613 = vunpack.c.h.b16 %v348
    %v1614 = vunpack.c.l.b16 %v349
    %v1615 = vunpack.c.h.b16 %v349
    %v1616 = vunpack.c.l.b16 %v350
    %v1617 = vunpack.c.h.b16 %v350
    %v1618 = vunpack.c.l.b16 %v351
    %v1619 = vunpack.c.h.b16 %v351
    %v1620 = vunpack.c.l.b16 %v352
    %v1621 = vunpack.c.h.b16 %v352
    %v1622 = vunpack.c.l.b16 %v353
    %v1623 = vunpack.c.h.b16 %v353
    %v1624 = vunpack.c.l.b16 %v354
    %v1625 = vunpack.c.h.b16 %v354
    %v1626 = vunpack.c.l.b16 %v355
    %v1627 = vunpack.c.h.b16 %v355
    %v1628 = vunpack.c.l.b16 %v356
    %v1629 = vunpack.c.h.b16 %v356
    %v1630 = vunpack.c.l.b16 %v357
    %v1631 = vunpack.c.h.b16 %v357
    %v1632 = vunpack.c.l.b16 %v358
    %v1633 = vunpack.c.h.b16 %v358
    %v1634 = vunpack.c.l.b16 %v359
    %v1635 = vunpack.c.h.b16 %v359
    %v1636 = vunpack.c.l.b16 %v360
    %v1637 = vunpack.c.h.b16 %v360
    %v1638 = vunpack.c.l.b16 %v361
    %v1639 = vunpack.c.h.b16 %v361
    %v1640 = vunpack.c.l.b16 %v362
    %v1641 = vunpack.c.h.b16 %v362
    %v1642 = vunpack.c.l.b16 %v363
    %v1643 = vunpack.c.h.b16 %v363
    %v1644 = vunpack.c.l.b16 %v364
    %v1645 = vunpack.c.h.b16 %v364
    %v1646 = vunpack.c.l.b16 %v365
    %v1647 = vunpack.c.h.b16 %v365
    %v1648 = vunpack.c.l.b16 %v366
    %v1649 = vunpack.c.h.b16 %v366
    %v1650 = vunpack.c.l.b16 %v367
    %v1651 = vunpack.c.h.b16 %v367
    %v1652 = vunpack.c.l.b16 %v368
    %v1653 = vunpack.c.h.b16 %v368
    %v1654 = vunpack.c.l.b16 %v369
    %v1655 = vunpack.c.h.b16 %v369
    %v1656 = vunpack.c.l.b16 %v370
    %v1657 = vunpack.c.h.b16 %v370
    %v1658 = vunpack.c.l.b16 %v371
    %v1659 = vunpack.c.h.b16 %v371
    %v1660 = vunpack.c.l.b16 %v372
    %v1661 = vunpack.c.h.b16 %v372
    %v1662 = vunpack.c.l.b16 %v373
    %v1663 = vunpack.c.h.b16 %v373
    %v1664 = vunpack.c.l.b16 %v374
    %v1665 = vunpack.c.h.b16 %v374
    %v1666 = vunpack.c.l.b16 %v375
    %v1667 = vunpack.c.h.b16 %v375
    %v1668 = vunpack.c.l.b16 %v376
    %v1669 = vunpack.c.h.b16 %v376
    %v1670 = vunpack.c.l.b16 %v377
    %v1671 = vunpack.c.h.b16 %v377
    %v1672 = vunpack.c.l.b16 %v378
    %v1673 = vunpack.c.h.b16 %v378
    %v1674 = vunpack.c.l.b16 %v379
    %v1675 = vunpack.c.h.b16 %v379
    %v1676 = vunpack.c.l.b16 %v380
    %v1677 = vunpack.c.h.b16 %v380
    %v1678 = vunpack.c.l.b16 %v381
    %v1679 = vunpack.c.h.b16 %v381
    %v1680 = vunpack.c.l.b16 %v382
    %v1681 = vunpack.c.h.b16 %v382
    %v1682 = vunpack.c.l.b16 %v383
    %v1683 = vunpack.c.h.b16 %v383
    %v1684 = vunpack.c.l.b16 %v384
    %v1685 = vunpack.c.h.b16 %v384
    %v1686 = vunpack.c.l.b16 %v385
    %v1687 = vunpack.c.h.b16 %v385
    %v1688 = vunpack.c.l.b16 %v386
    %v1689 = vunpack.c.h.b16 %v386
    %v1690 = vunpack.c.l.b16 %v387
    %v1691 = vunpack.c.h.b16 %v387
    %v1692 = vunpack.c.l.b16 %v388
    %v1693 = vunpack.c.h.b16 %v388
    %v1694 = vunpack.c.l.b16 %v389
    %v1695 = vunpack.c.h.b16 %v389
    %v1696 = vunpack.c.l.b16 %v390
    %v1697 = vunpack.c.h.b16 %v390
    %v1698 = vunpack.c.l.b16 %v391
    %v1699 = vunpack.c.h.b16 %v391
    %v1700 = vunpack.c.l.b16 %v392
    %v1701 = vunpack.c.h.b16 %v392
    %v1702 = vunpack.c.l.b16 %v393
    %v1703 = vunpack.c.h.b16 %v393
    %v1704 = vunpack.c.l.b16 %v394
    %v1705 = vunpack.c.h.b16 %v394
    %v1706 = vunpack.c.l.b16 %v395
    %v1707 = vunpack.c.h.b16 %v395
    %v1708 = vunpack.c.l.b16 %v396
    %v1709 = vunpack.c.h.b16 %v396
    %v1710 = vunpack.c.l.b16 %v397
    %v1711 = vunpack.c.h.b16 %v397
    %v1712 = vunpack.c.l.b16 %v398
    %v1713 = vunpack.c.h.b16 %v398
    %v1714 = vunpack.c.l.b16 %v399
    %v1715 = vunpack.c.h.b16 %v399
    %v1716 = vunpack.c.l.b16 %v400
    %v1717 = vunpack.c.h.b16 %v400
    %v1718 = vunpack.c.l.b16 %v401
    %v1719 = vunpack.c.h.b16 %v401
    %v1720 = vunpack.c.l.b16 %v402
    %v1721 = vunpack.c.h.b16 %v402
    %v1722 = vunpack.c.l.b16 %v403
    %v1723 = vunpack.c.h.b16 %v403
    %v1724 = vunpack.c.l.b16 %v404
    %v1725 = vunpack.c.h.b16 %v404
    %v1726 = vunpack.c.l.b16 %v405
    %v1727 = vunpack.c.h.b16 %v405
    %v1728 = vunpack.c.l.b16 %v406
    %v1729 = vunpack.c.h.b16 %v406
    %v1730 = vunpack.c.l.b16 %v407
    %v1731 = vunpack.c.h.b16 %v407
    %v1732 = vunpack.c.l.b16 %v408
    %v1733 = vunpack.c.h.b16 %v408
    %v1734 = vunpack.c.l.b16 %v409
    %v1735 = vunpack.c.h.b16 %v409
    %v1736 = vunpack.c.l.b16 %v410
    %v1737 = vunpack.c.h.b16 %v410
    %v1738 = vunpack.c.l.b16 %v411
    %v1739 = vunpack.c.h.b16 %v411
    %v1740 = vunpack.c.l.b16 %v412
    %v1741 = vunpack.c.h.b16 %v412
    %v1742 = vunpack.c.l.b16 %v413
    %v1743 = vunpack.c.h.b16 %v413
    %v1744 = vunpack.c.l.b16 %v414
    %v1745 = vunpack.c.h.b16 %v414
    %v1746 = vunpack.c.l.b16 %v415
    %v1747 = vunpack.c.h.b16 %v415
    %v1748 = vunpack.c.l.b16 %v416
    %v1749 = vunpack.c.h.b16 %v416
    %v1750 = vunpack.c.l.b16 %v417
    %v1751 = vunpack.c.h.b16 %v417
    %v1752 = vunpack.c.l.b16 %v418
    %v1753 = vunpack.c.h.b16 %v418
    %v1754 = vunpack.c.l.b16 %v419
    %v1755 = vunpack.c.h.b16 %v419
    %v1756 = vunpack.c.l.b16 %v420
    %v1757 = vunpack.c.h.b16 %v420
    %v1758 = vunpack.c.l.b16 %v421
    %v1759 = vunpack.c.h.b16 %v421
    %v1760 = vunpack.c.l.b16 %v422
    %v1761 = vunpack.c.h.b16 %v422
    %v1762 = vunpack.c.l.b16 %v423
    %v1763 = vunpack.c.h.b16 %v423
    %v1764 = vunpack.c.l.b16 %v424
    %v1765 = vunpack.c.h.b16 %v424
    %v1766 = vunpack.c.l.b16 %v425
    %v1767 = vunpack.c.h.b16 %v425
    %v1768 = vunpack.c.l.b16 %v426
    %v1769 = vunpack.c.h.b16 %v426
    %v1770 = vunpack.c.l.b16 %v427
    %v1771 = vunpack.c.h.b16 %v427
    %v1772 = vunpack.c.l.b16 %v428
    %v1773 = vunpack.c.h.b16 %v428
    %v1774 = vunpack.c.l.b16 %v429
    %v1775 = vunpack.c.h.b16 %v429
    %v1776 = vunpack.c.l.b16 %v430
    %v1777 = vunpack.c.h.b16 %v430
    %v1778 = vunpack.c.l.b16 %v431
    %v1779 = vunpack.c.h.b16 %v431
    %v1780 = vunpack.c.l.b16 %v432
    %v1781 = vunpack.c.h.b16 %v432
    %v1782 = vunpack.c.l.b16 %v433
    %v1783 = vunpack.c.h.b16 %v433
    %v1784 = vunpack.c.l.b16 %v434
    %v1785 = vunpack.c.h.b16 %v434
    %v1786 = vunpack.c.l.b16 %v435
    %v1787 = vunpack.c.h.b16 %v435
    %v1788 = vunpack.c.l.b16 %v436
    %v1789 = vunpack.c.h.b16 %v436
    %v1790 = vunpack.c.l.b16 %v437
    %v1791 = vunpack.c.h.b16 %v437
    %v1792 = vunpack.c.l.b16 %v438
    %v1793 = vunpack.c.h.b16 %v438
    %v1794 = vunpack.c.l.b16 %v439
    %v1795 = vunpack.c.h.b16 %v439
    %v1796 = vunpack.c.l.b16 %v440
    %v1797 = vunpack.c.h.b16 %v440
    %v1798 = vunpack.c.l.b16 %v441
    %v1799 = vunpack.c.h.b16 %v441
    %v1800 = vunpack.c.l.b16 %v442
    %v1801 = vunpack.c.h.b16 %v442
    %v1802 = vunpack.c.l.b16 %v443
    %v1803 = vunpack.c.h.b16 %v443
    %v1804 = vunpack.c.l.b16 %v444
    %v1805 = vunpack.c.h.b16 %v444
    %v1806 = vunpack.c.l.b16 %v445
    %v1807 = vunpack.c.h.b16 %v445
    %v1808 = vunpack.c.l.b16 %v446
    %v1809 = vunpack.c.h.b16 %v446
    %v1810 = vunpack.c.l.b16 %v447
    %v1811 = vunpack.c.h.b16 %v447
    %v1812 = vunpack.c.l.b16 %v448
    %v1813 = vunpack.c.h.b16 %v448
    %v1814 = vunpack.c.l.b16 %v449
    %v1815 = vunpack.c.h.b16 %v449
    %v1816 = vunpack.c.l.b16 %v450
    %v1817 = vunpack.c.h.b16 %v450
    %v1818 = vunpack.c.l.b16 %v451
    %v1819 = vunpack.c.h.b16 %v451
    %v1820 = vunpack.c.l.b16 %v452
    %v1821 = vunpack.c.h.b16 %v452
    %v1822 = vunpack.c.l.b16 %v453
    %v1823 = vunpack.c.h.b16 %v453
    %v1824 = vunpack.c.l.b16 %v454
    %v1825 = vunpack.c.h.b16 %v454
    %v1826 = vunpack.c.l.b16 %v455
    %v1827 = vunpack.c.h.b16 %v455
    %v1828 = vunpack.c.l.b16 %v456
    %v1829 = vunpack.c.h.b16 %v456
    %v1830 = vunpack.c.l.b16 %v457
    %v1831 = vunpack.c.h.b16 %v457
    %v1832 = vunpack.c.l.b16 %v458
    %v1833 = vunpack.c.h.b16 %v458
    %v1834 = vunpack.c.l.b16 %v459
    %v1835 = vunpack.c.h.b16 %v459
    %v1836 = vunpack.c.l.b16 %v460
    %v1837 = vunpack.c.h.b16 %v460
    %v1838 = vunpack.c.l.b16 %v461
    %v1839 = vunpack.c.h.b16 %v461
    %v1840 = vunpack.c.l.b16 %v462
    %v1841 = vunpack.c.h.b16 %v462
    %v1842 = vunpack.c.l.b16 %v463
    %v1843 = vunpack.c.h.b16 %v463
    %v1844 = vunpack.c.l.b16 %v464
    %v1845 = vunpack.c.h.b16 %v464
    %v1846 = vunpack.c.l.b16 %v465
    %v1847 = vunpack.c.h.b16 %v465
    %v1848 = vunpack.c.l.b16 %v466
    %v1849 = vunpack.c.h.b16 %v466
    %v1850 = vunpack.c.l.b16 %v467
    %v1851 = vunpack.c.h.b16 %v467
    %v1852 = vunpack.c.l.b16 %v468
    %v1853 = vunpack.c.h.b16 %v468
    %v1854 = vunpack.c.l.b16 %v469
    %v1855 = vunpack.c.h.b16 %v469
    %v1856 = vunpack.c.l.b16 %v470
    %v1857 = vunpack.c.h.b16 %v470
    %v1858 = vunpack.c.l.b16 %v471
    %v1859 = vunpack.c.h.b16 %v471
    %v1860 = vunpack.c.l.b16 %v472
    %v1861 = vunpack.c.h.b16 %v472
    %v1862 = vunpack.c.l.b16 %v473
    %v1863 = vunpack.c.h.b16 %v473
    %v1864 = vunpack.c.l.b16 %v474
    %v1865 = vunpack.c.h.b16 %v474
    %v1866 = vunpack.c.l.b16 %v475
    %v1867 = vunpack.c.h.b16 %v475
    %v1868 = vunpack.c.l.b16 %v476
    %v1869 = vunpack.c.h.b16 %v476
    %v1870 = vunpack.c.l.b16 %v477
    %v1871 = vunpack.c.h.b16 %v477
    %v1872 = vunpack.c.l.b16 %v478
    %v1873 = vunpack.c.h.b16 %v478
    %v1874 = vunpack.c.l.b16 %v479
    %v1875 = vunpack.c.h.b16 %v479
    %v1876 = vunpack.c.l.b16 %v480
    %v1877 = vunpack.c.h.b16 %v480
    %v1878 = vunpack.c.l.b16 %v481
    %v1879 = vunpack.c.h.b16 %v481
    %v1880 = vunpack.c.l.b16 %v482
    %v1881 = vunpack.c.h.b16 %v482
    %v1882 = vunpack.c.l.b16 %v483
    %v1883 = vunpack.c.h.b16 %v483
    %v1884 = vunpack.c.l.b16 %v484
    %v1885 = vunpack.c.h.b16 %v484
    %v1886 = vunpack.c.l.b16 %v485
    %v1887 = vunpack.c.h.b16 %v485
    %v1888 = vunpack.c.l.b16 %v486
    %v1889 = vunpack.c.h.b16 %v486
    %v1890 = vunpack.c.l.b16 %v487
    %v1891 = vunpack.c.h.b16 %v487
    %v1892 = vunpack.c.l.b16 %v488
    %v1893 = vunpack.c.h.b16 %v488
    %v1894 = vunpack.c.l.b16 %v489
    %v1895 = vunpack.c.h.b16 %v489
    %v1896 = vunpack.c.l.b16 %v490
    %v1897 = vunpack.c.h.b16 %v490
    %v1898 = vunpack.c.l.b16 %v491
    %v1899 = vunpack.c.h.b16 %v491
    %v1900 = vunpack.c.l.b16 %v492
    %v1901 = vunpack.c.h.b16 %v492
    %v1902 = vunpack.c.l.b16 %v493
    %v1903 = vunpack.c.h.b16 %v493
    %v1904 = vunpack.c.l.b16 %v494
    %v1905 = vunpack.c.h.b16 %v494
    %v1906 = vunpack.c.l.b16 %v495
    %v1907 = vunpack.c.h.b16 %v495
    %v1908 = vunpack.c.l.b16 %v496
    %v1909 = vunpack.c.h.b16 %v496
    %v1910 = vunpack.c.l.b16 %v497
    %v1911 = vunpack.c.h.b16 %v497
    %v1912 = vunpack.c.l.b16 %v498
    %v1913 = vunpack.c.h.b16 %v498
    %v1914 = vunpack.c.l.b16 %v499
    %v1915 = vunpack.c.h.b16 %v499
    %v1916 = vunpack.c.l.b16 %v500
    %v1917 = vunpack.c.h.b16 %v500
    %v1918 = vunpack.c.l.b16 %v501
    %v1919 = vunpack.c.h.b16 %v501
    %v1920 = vunpack.c.l.b16 %v502
    %v1921 = vunpack.c.h.b16 %v502
    %v1922 = vunpack.c.l.b16 %v503
    %v1923 = vunpack.c.h.b16 %v503
    %v1924 = vunpack.c.l.b16 %v504
    %v1925 = vunpack.c.h.b16 %v504
    %v1926 = vunpack.c.l.b16 %v505
    %v1927 = vunpack.c.h.b16 %v505
    %v1928 = vunpack.c.l.b16 %v506
    %v1929 = vunpack.c.h.b16 %v506
    %v1930 = vunpack.c.l.b16 %v507
    %v1931 = vunpack.c.h.b16 %v507
    %v1932 = vunpack.c.l.b16 %v508
    %v1933 = vunpack.c.h.b16 %v508
    %v1934 = vunpack.c.l.b16 %v509
    %v1935 = vunpack.c.h.b16 %v509
    %v1936 = vunpack.c.l.b16 %v510
    %v1937 = vunpack.c.h.b16 %v510
    %v1938 = vunpack.c.l.b16 %v511
    %v1939 = vunpack.c.h.b16 %v511
    %v1940 = vunpack.c.l.b16 %v512
    %v1941 = vunpack.c.h.b16 %v512
    %v1942 = vunpack.c.l.b16 %v513
    %v1943 = vunpack.c.h.b16 %v513
    %v1944 = vunpack.c.l.b16 %v514
    %v1945 = vunpack.c.h.b16 %v514
    %v1946 = vunpack.c.l.b16 %v515
    %v1947 = vunpack.c.h.b16 %v515
    %v1948 = vunpack.c.l.b16 %v516
    %v1949 = vunpack.c.h.b16 %v516
    %v1950 = vunpack.c.l.b16 %v517
    %v1951 = vunpack.c.h.b16 %v517
    %v1952 = vunpack.c.l.b16 %v518
    %v1953 = vunpack.c.h.b16 %v518
    %v1954 = vunpack.c.l.b16 %v519
    %v1955 = vunpack.c.h.b16 %v519
    %v1956 = vunpack.c.l.b16 %v520
    %v1957 = vunpack.c.h.b16 %v520
    %v1958 = vunpack.c.l.b16 %v521
    %v1959 = vunpack.c.h.b16 %v521
    %v1960 = vunpack.c.l.b16 %v522
    %v1961 = vunpack.c.h.b16 %v522
    %v1962 = vunpack.c.l.b16 %v523
    %v1963 = vunpack.c.h.b16 %v523
    %v1964 = vunpack.c.l.b16 %v524
    %v1965 = vunpack.c.h.b16 %v524
    %v1966 = vunpack.c.l.b16 %v525
    %v1967 = vunpack.c.h.b16 %v525
    %v1968 = vunpack.c.l.b16 %v526
    %v1969 = vunpack.c.h.b16 %v526
    %v1970 = vunpack.c.l.b16 %v527
    %v1971 = vunpack.c.h.b16 %v527
    %v1972 = vunpack.c.l.b16 %v528
    %v1973 = vunpack.c.h.b16 %v528
    %v1974 = vunpack.c.l.b16 %v529
    %v1975 = vunpack.c.h.b16 %v529
    %v1976 = vunpack.c.l.b16 %v530
    %v1977 = vunpack.c.h.b16 %v530
    %v1978 = vunpack.c.l.b16 %v531
    %v1979 = vunpack.c.h.b16 %v531
    %v1980 = vunpack.c.l.b16 %v532
    %v1981 = vunpack.c.h.b16 %v532
    %v1982 = vunpack.c.l.b16 %v533
    %v1983 = vunpack.c.h.b16 %v533
    %v1984 = vunpack.c.l.b16 %v534
    %v1985 = vunpack.c.h.b16 %v534
    %v1986 = vunpack.c.l.b16 %v535
    %v1987 = vunpack.c.h.b16 %v535
    %v1988 = vunpack.c.l.b16 %v536
    %v1989 = vunpack.c.h.b16 %v536
    %v1990 = vunpack.c.l.b16 %v537
    %v1991 = vunpack.c.h.b16 %v537
    %v1992 = vunpack.c.l.b16 %v538
    %v1993 = vunpack.c.h.b16 %v538
    %v1994 = vunpack.c.l.b16 %v539
    %v1995 = vunpack.c.h.b16 %v539
    %v1996 = vunpack.c.l.b16 %v540
    %v1997 = vunpack.c.h.b16 %v540
    %v1998 = vunpack.c.l.b16 %v541
    %v1999 = vunpack.c.h.b16 %v541
    %v2000 = vunpack.c.l.b16 %v542
    %v2001 = vunpack.c.h.b16 %v542
    %v2002 = vunpack.c.l.b16 %v543
    %v2003 = vunpack.c.h.b16 %v543
    %v2004 = vunpack.c.l.b16 %v544
    %v2005 = vunpack.c.h.b16 %v544
    %v2006 = vunpack.c.l.b16 %v545
    %v2007 = vunpack.c.h.b16 %v545
    %v2008 = vunpack.c.l.b16 %v546
    %v2009 = vunpack.c.h.b16 %v546
    %v2010 = vunpack.c.l.b16 %v547
    %v2011 = vunpack.c.h.b16 %v547
    %v2012 = vunpack.c.l.b16 %v548
    %v2013 = vunpack.c.h.b16 %v548
    %v2014 = vunpack.c.l.b16 %v549
    %v2015 = vunpack.c.h.b16 %v549
    %v2016 = vunpack.c.l.b16 %v550
    %v2017 = vunpack.c.h.b16 %v550
    %v2018 = vunpack.c.l.b16 %v551
    %v2019 = vunpack.c.h.b16 %v551
    %v2020 = vunpack.c.l.b16 %v552
    %v2021 = vunpack.c.h.b16 %v552
    %v2022 = vunpack.c.l.b16 %v553
    %v2023 = vunpack.c.h.b16 %v553
    %v2024 = vunpack.c.l.b16 %v554
    %v2025 = vunpack.c.h.b16 %v554
    %v2026 = vunpack.c.l.b16 %v555
    %v2027 = vunpack.c.h.b16 %v555
    %v2028 = vunpack.c.l.b16 %v556
    %v2029 = vunpack.c.h.b16 %v556
    %v2030 = vunpack.c.l.b16 %v557
    %v2031 = vunpack.c.h.b16 %v557
    %v2032 = vunpack.c.l.b16 %v558
    %v2033 = vunpack.c.h.b16 %v558
    %v2034 = vunpack.c.l.b16 %v559
    %v2035 = vunpack.c.h.b16 %v559
    %v2036 = vunpack.c.l.b16 %v560
    %v2037 = vunpack.c.h.b16 %v560
    %v2038 = vunpack.c.l.b16 %v561
    %v2039 = vunpack.c.h.b16 %v561
    %v2040 = vunpack.c.l.b16 %v562
    %v2041 = vunpack.c.h.b16 %v562
    %v2042 = vunpack.c.l.b16 %v563
    %v2043 = vunpack.c.h.b16 %v563
    %v2044 = vunpack.c.l.b16 %v564
    %v2045 = vunpack.c.h.b16 %v564
    %v2046 = vunpack.c.l.b16 %v565
    %v2047 = vunpack.c.h.b16 %v565
    %v2048 = vunpack.c.l.b16 %v566
    %v2049 = vunpack.c.h.b16 %v566
    %v2050 = vunpack.c.l.b16 %v567
    %v2051 = vunpack.c.h.b16 %v567
    %v2052 = vunpack.c.l.b16 %v568
    %v2053 = vunpack.c.h.b16 %v568
    %v2054 = vunpack.c.l.b16 %v569
    %v2055 = vunpack.c.h.b16 %v569
    %v2056 = vunpack.c.l.b16 %v570
    %v2057 = vunpack.c.h.b16 %v570
    %v2058 = vunpack.c.l.b16 %v571
    %v2059 = vunpack.c.h.b16 %v571
    %v2060 = vunpack.c.l.b16 %v572
    %v2061 = vunpack.c.h.b16 %v572
    %v2062 = vunpack.c.l.b16 %v573
    %v2063 = vunpack.c.h.b16 %v573
    %v2064 = vunpack.c.l.b16 %v574
    %v2065 = vunpack.c.h.b16 %v574
    %v2066 = vunpack.c.l.b16 %v575
    %v2067 = vunpack.c.h.b16 %v575
    %v2068 = vunpack.c.l.b16 %v576
    %v2069 = vunpack.c.h.b16 %v576
    %v2070 = vunpack.c.l.b16 %v577
    %v2071 = vunpack.c.h.b16 %v577
    %v2072 = vunpack.c.l.b16 %v578
    %v2073 = vunpack.c.h.b16 %v578
    %v2074 = vunpack.c.l.b16 %v579
    %v2075 = vunpack.c.h.b16 %v579
    %v2076 = vunpack.c.l.b16 %v580
    %v2077 = vunpack.c.h.b16 %v580
    %v2078 = vunpack.c.l.b16 %v581
    %v2079 = vunpack.c.h.b16 %v581
    %v2080 = vunpack.c.l.b16 %v582
    %v2081 = vunpack.c.h.b16 %v582
    %v2082 = vunpack.c.l.b16 %v583
    %v2083 = vunpack.c.h.b16 %v583
    %v2084 = vunpack.c.l.b16 %v584
    %v2085 = vunpack.c.h.b16 %v584
    %v2086 = vunpack.c.l.b16 %v585
    %v2087 = vunpack.c.h.b16 %v585
    %v2088 = vunpack.c.l.b16 %v586
    %v2089 = vunpack.c.h.b16 %v586
    %v2090 = vunpack.c.l.b16 %v587
    %v2091 = vunpack.c.h.b16 %v587
    %v2092 = vunpack.c.l.b16 %v588
    %v2093 = vunpack.c.h.b16 %v588
    %v2094 = vunpack.c.l.b16 %v589
    %v2095 = vunpack.c.h.b16 %v589
    %v2096 = vunpack.c.l.b16 %v590
    %v2097 = vunpack.c.h.b16 %v590
    %v2098 = vunpack.c.l.b16 %v591
    %v2099 = vunpack.c.h.b16 %v591
    %v2100 = vunpack.c.l.b16 %v592
    %v2101 = vunpack.c.h.b16 %v592
    %v2102 = vunpack.c.l.b16 %v593
    %v2103 = vunpack.c.h.b16 %v593
    %v2104 = vunpack.c.l.b16 %v594
    %v2105 = vunpack.c.h.b16 %v594
    %v2106 = vunpack.c.l.b16 %v595
    %v2107 = vunpack.c.h.b16 %v595
    %v2108 = vunpack.c.l.b16 %v596
    %v2109 = vunpack.c.h.b16 %v596
    %v2110 = vunpack.c.l.b16 %v597
    %v2111 = vunpack.c.h.b16 %v597
    %v2112 = vunpack.c.l.b16 %v598
    %v2113 = vunpack.c.h.b16 %v598
    %v2114 = vunpack.c.l.b16 %v599
    %v2115 = vunpack.c.h.b16 %v599
    %v2116 = vunpack.c.l.b16 %v600
    %v2117 = vunpack.c.h.b16 %v600
    %v2118 = vunpack.c.l.b16 %v601
    %v2119 = vunpack.c.h.b16 %v601
    %v2120 = vunpack.c.l.b16 %v602
    %v2121 = vunpack.c.h.b16 %v602
    %v2122 = vunpack.c.l.b16 %v603
    %v2123 = vunpack.c.h.b16 %v603
    %v2124 = vunpack.c.l.b16 %v604
    %v2125 = vunpack.c.h.b16 %v604
    %v2126 = vunpack.c.l.b16 %v605
    %v2127 = vunpack.c.h.b16 %v605
    %v2128 = vunpack.c.l.b16 %v606
    %v2129 = vunpack.c.h.b16 %v606
    %v2130 = vunpack.c.l.b16 %v607
    %v2131 = vunpack.c.h.b16 %v607
    %v2132 = vunpack.c.l.b16 %v608
    %v2133 = vunpack.c.h.b16 %v608
    %v2134 = vunpack.c.l.b16 %v609
    %v2135 = vunpack.c.h.b16 %v609
    %v2136 = vunpack.c.l.b16 %v610
    %v2137 = vunpack.c.h.b16 %v610
    %v2138 = vunpack.c.l.b16 %v611
    %v2139 = vunpack.c.h.b16 %v611
    %v2140 = vunpack.c.l.b16 %v612
    %v2141 = vunpack.c.h.b16 %v612
    %v2142 = vunpack.c.l.b16 %v613
    %v2143 = vunpack.c.h.b16 %v613
    %v2144 = vunpack.c.l.b16 %v614
    %v2145 = vunpack.c.h.b16 %v614
    %v2146 = vunpack.c.l.b16 %v615
    %v2147 = vunpack.c.h.b16 %v615
    %v2148 = vunpack.c.l.b16 %v616
    %v2149 = vunpack.c.h.b16 %v616
    %v2150 = vunpack.c.l.b16 %v617
    %v2151 = vunpack.c.h.b16 %v617
    %v2152 = vunpack.c.l.b16 %v618
    %v2153 = vunpack.c.h.b16 %v618
    %v2154 = vunpack.c.l.b16 %v619
    %v2155 = vunpack.c.h.b16 %v619
    %v2156 = vunpack.c.l.b16 %v620
    %v2157 = vunpack.c.h.b16 %v620
    %v2158 = vunpack.c.l.b16 %v621
    %v2159 = vunpack.c.h.b16 %v621
    %v2160 = vunpack.c.l.b16 %v622
    %v2161 = vunpack.c.h.b16 %v622
    %v2162 = vunpack.c.l.b16 %v623
    %v2163 = vunpack.c.h.b16 %v623
    %v2164 = vunpack.c.l.b16 %v624
    %v2165 = vunpack.c.h.b16 %v624
    %v2166 = vunpack.c.l.b16 %v625
    %v2167 = vunpack.c.h.b16 %v625
    %v2168 = vunpack.c.l.b16 %v626
    %v2169 = vunpack.c.h.b16 %v626
    %v2170 = vunpack.c.l.b16 %v627
    %v2171 = vunpack.c.h.b16 %v627
    %v2172 = vunpack.c.l.b16 %v628
    %v2173 = vunpack.c.h.b16 %v628
    %v2174 = vunpack.c.l.b16 %v629
    %v2175 = vunpack.c.h.b16 %v629
    %v2176 = vunpack.c.l.b16 %v630
    %v2177 = vunpack.c.h.b16 %v630
    %v2178 = vunpack.c.l.b16 %v631
    %v2179 = vunpack.c.h.b16 %v631
    %v2180 = vunpack.c.l.b16 %v632
    %v2181 = vunpack.c.h.b16 %v632
    %v2182 = vunpack.c.l.b16 %v633
    %v2183 = vunpack.c.h.b16 %v633
    %v2184 = vunpack.c.l.b16 %v634
    %v2185 = vunpack.c.h.b16 %v634
    %v2186 = vunpack.c.l.b16 %v635
    %v2187 = vunpack.c.h.b16 %v635
    %v2188 = vunpack.c.l.b16 %v636
    %v2189 = vunpack.c.h.b16 %v636
    %v2190 = vunpack.c.l.b16 %v637
    %v2191 = vunpack.c.h.b16 %v637
    %v2192 = vunpack.c.l.b16 %v638
    %v2193 = vunpack.c.h.b16 %v638
    %v2194 = vunpack.c.l.b16 %v639
    %v2195 = vunpack.c.h.b16 %v639
    %v2196 = vunpack.c.l.b16 %v640
    %v2197 = vunpack.c.h.b16 %v640
    %v2198 = vunpack.c.l.b16 %v641
    %v2199 = vunpack.c.h.b16 %v641
    %v2200 = vpack.c.b16 %v1180, %v1176
    %v2201 = vpack.c.b16 %v1181, %v1177
    %v2202 = vpack.c.b16 %v1182, %v1178
    %v2203 = vpack.c.b16 %v1183, %v1179
    %v2204 = vpack.c.b16 %v1188, %v1184
    %v2205 = vpack.c.b16 %v1189, %v1185
    %v2206 = vpack.c.b16 %v1190, %v1186
    %v2207 = vpack.c.b16 %v1191, %v1187
    %v2208 = vpack.c.b16 %v1196, %v1192
    %v2209 = vpack.c.b16 %v1197, %v1193
    %v2210 = vpack.c.b16 %v1198, %v1194
    %v2211 = vpack.c.b16 %v1199, %v1195
    %v2212 = vpack.c.b16 %v1204, %v1200
    %v2213 = vpack.c.b16 %v1205, %v1201
    %v2214 = vpack.c.b16 %v1206, %v1202
    %v2215 = vpack.c.b16 %v1207, %v1203
    %v2216 = vpack.c.b16 %v1212, %v1208
    %v2217 = vpack.c.b16 %v1213, %v1209
    %v2218 = vpack.c.b16 %v1214, %v1210
    %v2219 = vpack.c.b16 %v1215, %v1211
    %v2220 = vpack.c.b16 %v1220, %v1216
    %v2221 = vpack.c.b16 %v1221, %v1217
    %v2222 = vpack.c.b16 %v1222, %v1218
    %v2223 = vpack.c.b16 %v1223, %v1219
    %v2224 = vpack.c.b16 %v1228, %v1224
    %v2225 = vpack.c.b16 %v1229, %v1225
    %v2226 = vpack.c.b16 %v1230, %v1226
    %v2227 = vpack.c.b16 %v1231, %v1227
    %v2228 = vpack.c.b16 %v1236, %v1232
    %v2229 = vpack.c.b16 %v1237, %v1233
    %v2230 = vpack.c.b16 %v1238, %v1234
    %v2231 = vpack.c.b16 %v1239, %v1235
    %v2232 = vpack.c.b16 %v1244, %v1240
    %v2233 = vpack.c.b16 %v1245, %v1241
    %v2234 = vpack.c.b16 %v1246, %v1242
    %v2235 = vpack.c.b16 %v1247, %v1243
    %v2236 = vpack.c.b16 %v1252, %v1248
    %v2237 = vpack.c.b16 %v1253, %v1249
    %v2238 = vpack.c.b16 %v1254, %v1250
    %v2239 = vpack.c.b16 %v1255, %v1251
    %v2240 = vpack.c.b16 %v1260, %v1256
    %v2241 = vpack.c.b16 %v1261, %v1257
    %v2242 = vpack.c.b16 %v1262, %v1258
    %v2243 = vpack.c.b16 %v1263, %v1259
    %v2244 = vpack.c.b16 %v1268, %v1264
    %v2245 = vpack.c.b16 %v1269, %v1265
    %v2246 = vpack.c.b16 %v1270, %v1266
    %v2247 = vpack.c.b16 %v1271, %v1267
    %v2248 = vpack.c.b16 %v1276, %v1272
    %v2249 = vpack.c.b16 %v1277, %v1273
    %v2250 = vpack.c.b16 %v1278, %v1274
    %v2251 = vpack.c.b16 %v1279, %v1275
    %v2252 = vpack.c.b16 %v1284, %v1280
    %v2253 = vpack.c.b16 %v1285, %v1281
    %v2254 = vpack.c.b16 %v1286, %v1282
    %v2255 = vpack.c.b16 %v1287, %v1283
    %v2256 = vpack.c.b16 %v1292, %v1288
    %v2257 = vpack.c.b16 %v1293, %v1289
    %v2258 = vpack.c.b16 %v1294, %v1290
    %v2259 = vpack.c.b16 %v1295, %v1291
    %v2260 = vpack.c.b16 %v1300, %v1296
    %v2261 = vpack.c.b16 %v1301, %v1297
    %v2262 = vpack.c.b16 %v1302, %v1298
    %v2263 = vpack.c.b16 %v1303, %v1299
    %v2264 = vpack.c.b16 %v1308, %v1304
    %v2265 = vpack.c.b16 %v1309, %v1305
    %v2266 = vpack.c.b16 %v1310, %v1306
    %v2267 = vpack.c.b16 %v1311, %v1307
    %v2268 = vpack.c.b16 %v1316, %v1312
    %v2269 = vpack.c.b16 %v1317, %v1313
    %v2270 = vpack.c.b16 %v1318, %v1314
    %v2271 = vpack.c.b16 %v1319, %v1315
    %v2272 = vpack.c.b16 %v1324, %v1320
    %v2273 = vpack.c.b16 %v1325, %v1321
    %v2274 = vpack.c.b16 %v1326, %v1322
    %v2275 = vpack.c.b16 %v1327, %v1323
    %v2276 = vpack.c.b16 %v1332, %v1328
    %v2277 = vpack.c.b16 %v1333, %v1329
    %v2278 = vpack.c.b16 %v1334, %v1330
    %v2279 = vpack.c.b16 %v1335, %v1331
    %v2280 = vpack.c.b16 %v1340, %v1336
    %v2281 = vpack.c.b16 %v1341, %v1337
    %v2282 = vpack.c.b16 %v1342, %v1338
    %v2283 = vpack.c.b16 %v1343, %v1339
    %v2284 = vpack.c.b16 %v1348, %v1344
    %v2285 = vpack.c.b16 %v1349, %v1345
    %v2286 = vpack.c.b16 %v1350, %v1346
    %v2287 = vpack.c.b16 %v1351, %v1347
    %v2288 = vpack.c.b16 %v1356, %v1352
    %v2289 = vpack.c.b16 %v1357, %v1353
    %v2290 = vpack.c.b16 %v1358, %v1354
    %v2291 = vpack.c.b16 %v1359, %v1355
    %v2292 = vpack.c.b16 %v1364, %v1360
    %v2293 = vpack.c.b16 %v1365, %v1361
    %v2294 = vpack.c.b16 %v1366, %v1362
    %v2295 = vpack.c.b16 %v1367, %v1363
    %v2296 = vpack.c.b16 %v1372, %v1368
    %v2297 = vpack.c.b16 %v1373, %v1369
    %v2298 = vpack.c.b16 %v1374, %v1370
    %v2299 = vpack.c.b16 %v1375, %v1371
    %v2300 = vpack.c.b16 %v1380, %v1376
    %v2301 = vpack.c.b16 %v1381, %v1377
    %v2302 = vpack.c.b16 %v1382, %v1378
    %v2303 = vpack.c.b16 %v1383, %v1379
    %v2304 = vpack.c.b16 %v1388, %v1384
    %v2305 = vpack.c.b16 %v1389, %v1385
    %v2306 = vpack.c.b16 %v1390, %v1386
    %v2307 = vpack.c.b16 %v1391, %v1387
    %v2308 = vpack.c.b16 %v1396, %v1392
    %v2309 = vpack.c.b16 %v1397, %v1393
    %v2310 = vpack.c.b16 %v1398, %v1394
    %v2311 = vpack.c.b16 %v1399, %v1395
    %v2312 = vpack.c.b16 %v1404, %v1400
    %v2313 = vpack.c.b16 %v1405, %v1401
    %v2314 = vpack.c.b16 %v1406, %v1402
    %v2315 = vpack.c.b16 %v1407, %v1403
    %v2316 = vpack.c.b16 %v1412, %v1408
    %v2317 = vpack.c.b16 %v1413, %v1409
    %v2318 = vpack.c.b16 %v1414, %v1410
    %v2319 = vpack.c.b16 %v1415, %v1411
    %v2320 = vpack.c.b16 %v1420, %v1416
    %v2321 = vpack.c.b16 %v1421, %v1417
    %v2322 = vpack.c.b16 %v1422, %v1418
    %v2323 = vpack.c.b16 %v1423, %v1419
    %v2324 = vpack.c.b16 %v1428, %v1424
    %v2325 = vpack.c.b16 %v1429, %v1425
    %v2326 = vpack.c.b16 %v1430, %v1426
    %v2327 = vpack.c.b16 %v1431, %v1427
    %v2328 = vpack.c.b16 %v1436, %v1432
    %v2329 = vpack.c.b16 %v1437, %v1433
    %v2330 = vpack.c.b16 %v1438, %v1434
    %v2331 = vpack.c.b16 %v1439, %v1435
    %v2332 = vpack.c.b16 %v1444, %v1440
    %v2333 = vpack.c.b16 %v1445, %v1441
    %v2334 = vpack.c.b16 %v1446, %v1442
    %v2335 = vpack.c.b16 %v1447, %v1443
    %v2336 = vpack.c.b16 %v1452, %v1448
    %v2337 = vpack.c.b16 %v1453, %v1449
    %v2338 = vpack.c.b16 %v1454, %v1450
    %v2339 = vpack.c.b16 %v1455, %v1451
    %v2340 = vpack.c.b16 %v1460, %v1456
    %v2341 = vpack.c.b16 %v1461, %v1457
    %v2342 = vpack.c.b16 %v1462, %v1458
    %v2343 = vpack.c.b16 %v1463, %v1459
    %v2344 = vpack.c.b16 %v1468, %v1464
    %v2345 = vpack.c.b16 %v1469, %v1465
    %v2346 = vpack.c.b16 %v1470, %v1466
    %v2347 = vpack.c.b16 %v1471, %v1467
    %v2348 = vpack.c.b16 %v1476, %v1472
    %v2349 = vpack.c.b16 %v1477, %v1473
    %v2350 = vpack.c.b16 %v1478, %v1474
    %v2351 = vpack.c.b16 %v1479, %v1475
    %v2352 = vpack.c.b16 %v1484, %v1480
    %v2353 = vpack.c.b16 %v1485, %v1481
    %v2354 = vpack.c.b16 %v1486, %v1482
    %v2355 = vpack.c.b16 %v1487, %v1483
    %v2356 = vpack.c.b16 %v1492, %v1488
    %v2357 = vpack.c.b16 %v1493, %v1489
    %v2358 = vpack.c.b16 %v1494, %v1490
    %v2359 = vpack.c.b16 %v1495, %v1491
    %v2360 = vpack.c.b16 %v1500, %v1496
    %v2361 = vpack.c.b16 %v1501, %v1497
    %v2362 = vpack.c.b16 %v1502, %v1498
    %v2363 = vpack.c.b16 %v1503, %v1499
    %v2364 = vpack.c.b16 %v1508, %v1504
    %v2365 = vpack.c.b16 %v1509, %v1505
    %v2366 = vpack.c.b16 %v1510, %v1506
    %v2367 = vpack.c.b16 %v1511, %v1507
    %v2368 = vpack.c.b16 %v1516, %v1512
    %v2369 = vpack.c.b16 %v1517, %v1513
    %v2370 = vpack.c.b16 %v1518, %v1514
    %v2371 = vpack.c.b16 %v1519, %v1515
    %v2372 = vpack.c.b16 %v1524, %v1520
    %v2373 = vpack.c.b16 %v1525, %v1521
    %v2374 = vpack.c.b16 %v1526, %v1522
    %v2375 = vpack.c.b16 %v1527, %v1523
    %v2376 = vpack.c.b16 %v1532, %v1528
    %v2377 = vpack.c.b16 %v1533, %v1529
    %v2378 = vpack.c.b16 %v1534, %v1530
    %v2379 = vpack.c.b16 %v1535, %v1531
    %v2380 = vpack.c.b16 %v1540, %v1536
    %v2381 = vpack.c.b16 %v1541, %v1537
    %v2382 = vpack.c.b16 %v1542, %v1538
    %v2383 = vpack.c.b16 %v1543, %v1539
    %v2384 = vpack.c.b16 %v1548, %v1544
    %v2385 = vpack.c.b16 %v1549, %v1545
    %v2386 = vpack.c.b16 %v1550, %v1546
    %v2387 = vpack.c.b16 %v1551, %v1547
    %v2388 = vpack.c.b16 %v1556, %v1552
    %v2389 = vpack.c.b16 %v1557, %v1553
    %v2390 = vpack.c.b16 %v1558, %v1554
    %v2391 = vpack.c.b16 %v1559, %v1555
    %v2392 = vpack.c.b16 %v1564, %v1560
    %v2393 = vpack.c.b16 %v1565, %v1561
    %v2394 = vpack.c.b16 %v1566, %v1562
    %v2395 = vpack.c.b16 %v1567, %v1563
    %v2396 = vpack.c.b16 %v1572, %v1568
    %v2397 = vpack.c.b16 %v1573, %v1569
    %v2398 = vpack.c.b16 %v1574, %v1570
    %v2399 = vpack.c.b16 %v1575, %v1571
    %v2400 = vpack.c.b16 %v1580, %v1576
    %v2401 = vpack.c.b16 %v1581, %v1577
    %v2402 = vpack.c.b16 %v1582, %v1578
    %v2403 = vpack.c.b16 %v1583, %v1579
    %v2404 = vpack.c.b16 %v1588, %v1584
    %v2405 = vpack.c.b16 %v1589, %v1585
    %v2406 = vpack.c.b16 %v1590, %v1586
    %v2407 = vpack.c.b16 %v1591, %v1587
    %v2408 = vpack.c.b16 %v1596, %v1592
    %v2409 = vpack.c.b16 %v1597, %v1593
    %v2410 = vpack.c.b16 %v1598, %v1594
    %v2411 = vpack.c.b16 %v1599, %v1595
    %v2412 = vpack.c.b16 %v1604, %v1600
    %v2413 = vpack.c.b16 %v1605, %v1601
    %v2414 = vpack.c.b16 %v1606, %v1602
    %v2415 = vpack.c.b16 %v1607, %v1603
    %v2416 = vpack.c.b16 %v1612, %v1608
    %v2417 = vpack.c.b16 %v1613, %v1609
    %v2418 = vpack.c.b16 %v1614, %v1610
    %v2419 = vpack.c.b16 %v1615, %v1611
    %v2420 = vpack.c.b16 %v1620, %v1616
    %v2421 = vpack.c.b16 %v1621, %v1617
    %v2422 = vpack.c.b16 %v1622, %v1618
    %v2423 = vpack.c.b16 %v1623, %v1619
    %v2424 = vpack.c.b16 %v1628, %v1624
    %v2425 = vpack.c.b16 %v1629, %v1625
    %v2426 = vpack.c.b16 %v1630, %v1626
    %v2427 = vpack.c.b16 %v1631, %v1627
    %v2428 = vpack.c.b16 %v1636, %v1632
    %v2429 = vpack.c.b16 %v1637, %v1633
    %v2430 = vpack.c.b16 %v1638, %v1634
    %v2431 = vpack.c.b16 %v1639, %v1635
    %v2432 = vpack.c.b16 %v1644, %v1640
    %v2433 = vpack.c.b16 %v1645, %v1641
    %v2434 = vpack.c.b16 %v1646, %v1642
    %v2435 = vpack.c.b16 %v1647, %v1643
    %v2436 = vpack.c.b16 %v1652, %v1648
    %v2437 = vpack.c.b16 %v1653, %v1649
    %v2438 = vpack.c.b16 %v1654, %v1650
    %v2439 = vpack.c.b16 %v1655, %v1651
    %v2440 = vpack.c.b16 %v1660, %v1656
    %v2441 = vpack.c.b16 %v1661, %v1657
    %v2442 = vpack.c.b16 %v1662, %v1658
    %v2443 = vpack.c.b16 %v1663, %v1659
    %v2444 = vpack.c.b16 %v1668, %v1664
    %v2445 = vpack.c.b16 %v1669, %v1665
    %v2446 = vpack.c.b16 %v1670, %v1666
    %v2447 = vpack.c.b16 %v1671, %v1667
    %v2448 = vpack.c.b16 %v1676, %v1672
    %v2449 = vpack.c.b16 %v1677, %v1673
    %v2450 = vpack.c.b16 %v1678, %v1674
    %v2451 = vpack.c.b16 %v1679, %v1675
    %v2452 = vpack.c.b16 %v1684, %v1680
    %v2453 = vpack.c.b16 %v1685, %v1681
    %v2454 = vpack.c.b16 %v1686, %v1682
    %v2455 = vpack.c.b16 %v1687, %v1683
    %v2456 = vpack.c.b16 %v1692, %v1688
    %v2457 = vpack.c.b16 %v1693, %v1689
    %v2458 = vpack.c.b16 %v1694, %v1690
    %v2459 = vpack.c.b16 %v1695, %v1691
    %v2460 = vpack.c.b16 %v1700, %v1696
    %v2461 = vpack.c.b16 %v1701, %v1697
    %v2462 = vpack.c.b16 %v1702, %v1698
    %v2463 = vpack.c.b16 %v1703, %v1699
    %v2464 = vpack.c.b16 %v1708, %v1704
    %v2465 = vpack.c.b16 %v1709, %v1705
    %v2466 = vpack.c.b16 %v1710, %v1706
    %v2467 = vpack.c.b16 %v1711, %v1707
    %v2468 = vpack.c.b16 %v1716, %v1712
    %v2469 = vpack.c.b16 %v1717, %v1713
    %v2470 = vpack.c.b16 %v1718, %v1714
    %v2471 = vpack.c.b16 %v1719, %v1715
    %v2472 = vpack.c.b16 %v1724, %v1720
    %v2473 = vpack.c.b16 %v1725, %v1721
    %v2474 = vpack.c.b16 %v1726, %v1722
    %v2475 = vpack.c.b16 %v1727, %v1723
    %v2476 = vpack.c.b16 %v1732, %v1728
    %v2477 = vpack.c.b16 %v1733, %v1729
    %v2478 = vpack.c.b16 %v1734, %v1730
    %v2479 = vpack.c.b16 %v1735, %v1731
    %v2480 = vpack.c.b16 %v1740, %v1736
    %v2481 = vpack.c.b16 %v1741, %v1737
    %v2482 = vpack.c.b16 %v1742, %v1738
    %v2483 = vpack.c.b16 %v1743, %v1739
    %v2484 = vpack.c.b16 %v1748, %v1744
    %v2485 = vpack.c.b16 %v1749, %v1745
    %v2486 = vpack.c.b16 %v1750, %v1746
    %v2487 = vpack.c.b16 %v1751, %v1747
    %v2488 = vpack.c.b16 %v1756, %v1752
    %v2489 = vpack.c.b16 %v1757, %v1753
    %v2490 = vpack.c.b16 %v1758, %v1754
    %v2491 = vpack.c.b16 %v1759, %v1755
    %v2492 = vpack.c.b16 %v1764, %v1760
    %v2493 = vpack.c.b16 %v1765, %v1761
    %v2494 = vpack.c.b16 %v1766, %v1762
    %v2495 = vpack.c.b16 %v1767, %v1763
    %v2496 = vpack.c.b16 %v1772, %v1768
    %v2497 = vpack.c.b16 %v1773, %v1769
    %v2498 = vpack.c.b16 %v1774, %v1770
    %v2499 = vpack.c.b16 %v1775, %v1771
    %v2500 = vpack.c.b16 %v1780, %v1776
    %v2501 = vpack.c.b16 %v1781, %v1777
    %v2502 = vpack.c.b16 %v1782, %v1778
    %v2503 = vpack.c.b16 %v1783, %v1779
    %v2504 = vpack.c.b16 %v1788, %v1784
    %v2505 = vpack.c.b16 %v1789, %v1785
    %v2506 = vpack.c.b16 %v1790, %v1786
    %v2507 = vpack.c.b16 %v1791, %v1787
    %v2508 = vpack.c.b16 %v1796, %v1792
    %v2509 = vpack.c.b16 %v1797, %v1793
    %v2510 = vpack.c.b16 %v1798, %v1794
    %v2511 = vpack.c.b16 %v1799, %v1795
    %v2512 = vpack.c.b16 %v1804, %v1800
    %v2513 = vpack.c.b16 %v1805, %v1801
    %v2514 = vpack.c.b16 %v1806, %v1802
    %v2515 = vpack.c.b16 %v1807, %v1803
    %v2516 = vpack.c.b16 %v1812, %v1808
    %v2517 = vpack.c.b16 %v1813, %v1809
    %v2518 = vpack.c.b16 %v1814, %v1810
    %v2519 = vpack.c.b16 %v1815, %v1811
    %v2520 = vpack.c.b16 %v1820, %v1816
    %v2521 = vpack.c.b16 %v1821, %v1817
    %v2522 = vpack.c.b16 %v1822, %v1818
    %v2523 = vpack.c.b16 %v1823, %v1819
    %v2524 = vpack.c.b16 %v1828, %v1824
    %v2525 = vpack.c.b16 %v1829, %v1825
    %v2526 = vpack.c.b16 %v1830, %v1826
    %v2527 = vpack.c.b16 %v1831, %v1827
    %v2528 = vpack.c.b16 %v1836, %v1832
    %v2529 = vpack.c.b16 %v1837, %v1833
    %v2530 = vpack.c.b16 %v1838, %v1834
    %v2531 = vpack.c.b16 %v1839, %v1835
    %v2532 = vpack.c.b16 %v1844, %v1840
    %v2533 = vpack.c.b16 %v1845, %v1841
    %v2534 = vpack.c.b16 %v1846, %v1842
    %v2535 = vpack.c.b16 %v1847, %v1843
    %v2536 = vpack.c.b16 %v1852, %v1848
    %v2537 = vpack.c.b16 %v1853, %v1849
    %v2538 = vpack.c.b16 %v1854, %v1850
    %v2539 = vpack.c.b16 %v1855, %v1851
    %v2540 = vpack.c.b16 %v1860, %v1856
    %v2541 = vpack.c.b16 %v1861, %v1857
    %v2542 = vpack.c.b16 %v1862, %v1858
    %v2543 = vpack.c.b16 %v1863, %v1859
    %v2544 = vpack.c.b16 %v1868, %v1864
    %v2545 = vpack.c.b16 %v1869, %v1865
    %v2546 = vpack.c.b16 %v1870, %v1866
    %v2547 = vpack.c.b16 %v1871, %v1867
    %v2548 = vpack.c.b16 %v1876, %v1872
    %v2549 = vpack.c.b16 %v1877, %v1873
    %v2550 = vpack.c.b16 %v1878, %v1874
    %v2551 = vpack.c.b16 %v1879, %v1875
    %v2552 = vpack.c.b16 %v1884, %v1880
    %v2553 = vpack.c.b16 %v1885, %v1881
    %v2554 = vpack.c.b16 %v1886, %v1882
    %v2555 = vpack.c.b16 %v1887, %v1883
    %v2556 = vpack.c.b16 %v1892, %v1888
    %v2557 = vpack.c.b16 %v1893, %v1889
    %v2558 = vpack.c.b16 %v1894, %v1890
    %v2559 = vpack.c.b16 %v1895, %v1891
    %v2560 = vpack.c.b16 %v1900, %v1896
    %v2561 = vpack.c.b16 %v1901, %v1897
    %v2562 = vpack.c.b16 %v1902, %v1898
    %v2563 = vpack.c.b16 %v1903, %v1899
    %v2564 = vpack.c.b16 %v1908, %v1904
    %v2565 = vpack.c.b16 %v1909, %v1905
    %v2566 = vpack.c.b16 %v1910, %v1906
    %v2567 = vpack.c.b16 %v1911, %v1907
    %v2568 = vpack.c.b16 %v1916, %v1912
    %v2569 = vpack.c.b16 %v1917, %v1913
    %v2570 = vpack.c.b16 %v1918, %v1914
    %v2571 = vpack.c.b16 %v1919, %v1915
    %v2572 = vpack.c.b16 %v1924, %v1920
    %v2573 = vpack.c.b16 %v1925, %v1921
    %v2574 = vpack.c.b16 %v1926, %v1922
    %v2575 = vpack.c.b16 %v1927, %v1923
    %v2576 = vpack.c.b16 %v1932, %v1928
    %v2577 = vpack.c.b16 %v1933, %v1929
    %v2578 = vpack.c.b16 %v1934, %v1930
    %v2579 = vpack.c.b16 %v1935, %v1931
    %v2580 = vpack.c.b16 %v1940, %v1936
    %v2581 = vpack.c.b16 %v1941, %v1937
    %v2582 = vpack.c.b16 %v1942, %v1938
    %v2583 = vpack.c.b16 %v1943, %v1939
    %v2584 = vpack.c.b16 %v1948, %v1944
    %v2585 = vpack.c.b16 %v1949, %v1945
    %v2586 = vpack.c.b16 %v1950, %v1946
    %v2587 = vpack.c.b16 %v1951, %v1947
    %v2588 = vpack.c.b16 %v1956, %v1952
    %v2589 = vpack.c.b16 %v1957, %v1953
    %v2590 = vpack.c.b16 %v1958, %v1954
    %v2591 = vpack.c.b16 %v1959, %v1955
    %v2592 = vpack.c.b16 %v1964, %v1960
    %v2593 = vpack.c.b16 %v1965, %v1961
    %v2594 = vpack.c.b16 %v1966, %v1962
    %v2595 = vpack.c.b16 %v1967, %v1963
    %v2596 = vpack.c.b16 %v1972, %v1968
    %v2597 = vpack.c.b16 %v1973, %v1969
    %v2598 = vpack.c.b16 %v1974, %v1970
    %v2599 = vpack.c.b16 %v1975, %v1971
    %v2600 = vpack.c.b16 %v1980, %v1976
    %v2601 = vpack.c.b16 %v1981, %v1977
    %v2602 = vpack.c.b16 %v1982, %v1978
    %v2603 = vpack.c.b16 %v1983, %v1979
    %v2604 = vpack.c.b16 %v1988, %v1984
    %v2605 = vpack.c.b16 %v1989, %v1985
    %v2606 = vpack.c.b16 %v1990, %v1986
    %v2607 = vpack.c.b16 %v1991, %v1987
    %v2608 = vpack.c.b16 %v1996, %v1992
    %v2609 = vpack.c.b16 %v1997, %v1993
    %v2610 = vpack.c.b16 %v1998, %v1994
    %v2611 = vpack.c.b16 %v1999, %v1995
    %v2612 = vpack.c.b16 %v2004, %v2000
    %v2613 = vpack.c.b16 %v2005, %v2001
    %v2614 = vpack.c.b16 %v2006, %v2002
    %v2615 = vpack.c.b16 %v2007, %v2003
    %v2616 = vpack.c.b16 %v2012, %v2008
    %v2617 = vpack.c.b16 %v2013, %v2009
    %v2618 = vpack.c.b16 %v2014, %v2010
    %v2619 = vpack.c.b16 %v2015, %v2011
    %v2620 = vpack.c.b16 %v2020, %v2016
    %v2621 = vpack.c.b16 %v2021, %v2017
    %v2622 = vpack.c.b16 %v2022, %v2018
    %v2623 = vpack.c.b16 %v2023, %v2019
    %v2624 = vpack.c.b16 %v2028, %v2024
    %v2625 = vpack.c.b16 %v2029, %v2025
    %v2626 = vpack.c.b16 %v2030, %v2026
    %v2627 = vpack.c.b16 %v2031, %v2027
    %v2628 = vpack.c.b16 %v2036, %v2032
    %v2629 = vpack.c.b16 %v2037, %v2033
    %v2630 = vpack.c.b16 %v2038, %v2034
    %v2631 = vpack.c.b16 %v2039, %v2035
    %v2632 = vpack.c.b16 %v2044, %v2040
    %v2633 = vpack.c.b16 %v2045, %v2041
    %v2634 = vpack.c.b16 %v2046, %v2042
    %v2635 = vpack.c.b16 %v2047, %v2043
    %v2636 = vpack.c.b16 %v2052, %v2048
    %v2637 = vpack.c.b16 %v2053, %v2049
    %v2638 = vpack.c.b16 %v2054, %v2050
    %v2639 = vpack.c.b16 %v2055, %v2051
    %v2640 = vpack.c.b16 %v2060, %v2056
    %v2641 = vpack.c.b16 %v2061, %v2057
    %v2642 = vpack.c.b16 %v2062, %v2058
    %v2643 = vpack.c.b16 %v2063, %v2059
    %v2644 = vpack.c.b16 %v2068, %v2064
    %v2645 = vpack.c.b16 %v2069, %v2065
    %v2646 = vpack.c.b16 %v2070, %v2066
    %v2647 = vpack.c.b16 %v2071, %v2067
    %v2648 = vpack.c.b16 %v2076, %v2072
    %v2649 = vpack.c.b16 %v2077, %v2073
    %v2650 = vpack.c.b16 %v2078, %v2074
    %v2651 = vpack.c.b16 %v2079, %v2075
    %v2652 = vpack.c.b16 %v2084, %v2080
    %v2653 = vpack.c.b16 %v2085, %v2081
    %v2654 = vpack.c.b16 %v2086, %v2082
    %v2655 = vpack.c.b16 %v2087, %v2083
    %v2656 = vpack.c.b16 %v2092, %v2088
    %v2657 = vpack.c.b16 %v2093, %v2089
    %v2658 = vpack.c.b16 %v2094, %v2090
    %v2659 = vpack.c.b16 %v2095, %v2091
    %v2660 = vpack.c.b16 %v2100, %v2096
    %v2661 = vpack.c.b16 %v2101, %v2097
    %v2662 = vpack.c.b16 %v2102, %v2098
    %v2663 = vpack.c.b16 %v2103, %v2099
    %v2664 = vpack.c.b16 %v2108, %v2104
    %v2665 = vpack.c.b16 %v2109, %v2105
    %v2666 = vpack.c.b16 %v2110, %v2106
    %v2667 = vpack.c.b16 %v2111, %v2107
    %v2668 = vpack.c.b16 %v2116, %v2112
    %v2669 = vpack.c.b16 %v2117, %v2113
    %v2670 = vpack.c.b16 %v2118, %v2114
    %v2671 = vpack.c.b16 %v2119, %v2115
    %v2672 = vpack.c.b16 %v2124, %v2120
    %v2673 = vpack.c.b16 %v2125, %v2121
    %v2674 = vpack.c.b16 %v2126, %v2122
    %v2675 = vpack.c.b16 %v2127, %v2123
    %v2676 = vpack.c.b16 %v2132, %v2128
    %v2677 = vpack.c.b16 %v2133, %v2129
    %v2678 = vpack.c.b16 %v2134, %v2130
    %v2679 = vpack.c.b16 %v2135, %v2131
    %v2680 = vpack.c.b16 %v2140, %v2136
    %v2681 = vpack.c.b16 %v2141, %v2137
    %v2682 = vpack.c.b16 %v2142, %v2138
    %v2683 = vpack.c.b16 %v2143, %v2139
    %v2684 = vpack.c.b16 %v2148, %v2144
    %v2685 = vpack.c.b16 %v2149, %v2145
    %v2686 = vpack.c.b16 %v2150, %v2146
    %v2687 = vpack.c.b16 %v2151, %v2147
    %v2688 = vpack.c.b16 %v2156, %v2152
    %v2689 = vpack.c.b16 %v2157, %v2153
    %v2690 = vpack.c.b16 %v2158, %v2154
    %v2691 = vpack.c.b16 %v2159, %v2155
    %v2692 = vpack.c.b16 %v2164, %v2160
    %v2693 = vpack.c.b16 %v2165, %v2161
    %v2694 = vpack.c.b16 %v2166, %v2162
    %v2695 = vpack.c.b16 %v2167, %v2163
    %v2696 = vpack.c.b16 %v2172, %v2168
    %v2697 = vpack.c.b16 %v2173, %v2169
    %v2698 = vpack.c.b16 %v2174, %v2170
    %v2699 = vpack.c.b16 %v2175, %v2171
    %v2700 = vpack.c.b16 %v2180, %v2176
    %v2701 = vpack.c.b16 %v2181, %v2177
    %v2702 = vpack.c.b16 %v2182, %v2178
    %v2703 = vpack.c.b16 %v2183, %v2179
    %v2704 = vpack.c.b16 %v2188, %v2184
    %v2705 = vpack.c.b16 %v2189, %v2185
    %v2706 = vpack.c.b16 %v2190, %v2186
    %v2707 = vpack.c.b16 %v2191, %v2187
    %v2708 = vpack.c.b16 %v2196, %v2192
    %v2709 = vpack.c.b16 %v2197, %v2193
    %v2710 = vpack.c.b16 %v2198, %v2194
    %v2711 = vpack.c.b16 %v2199, %v2195
    %3224 = vmatprep.subr.bf16.mxu0 %v2201
    %3225 = vmatpush1.bf16.msra.mxu0 %v2200
    %3226 = vmatprep.subr.bf16.mxu0 %v2205
    %3227 = vmatpush1.bf16.msra.mxu0 %v2204
    %3228 = vmatprep.subr.bf16.mxu0 %v2209
    %3229 = vmatpush1.bf16.msra.mxu0 %v2208
    %3230 = vmatprep.subr.bf16.mxu0 %v2213
    %3231 = vmatpush1.bf16.msra.mxu0 %v2212
    %3232 = vmatprep.subr.bf16.mxu0 %v2217
    %3233 = vmatpush1.bf16.msra.mxu0 %v2216
    %3234 = vmatprep.subr.bf16.mxu0 %v2221
    %3235 = vmatpush1.bf16.msra.mxu0 %v2220
    %3236 = vmatprep.subr.bf16.mxu0 %v2225
    %3237 = vmatpush1.bf16.msra.mxu0 %v2224
    %3238 = vmatprep.subr.bf16.mxu0 %v2229
    %3239 = vmatpush1.bf16.msra.mxu0 %v2228
    %3240 = vmatprep.subr.bf16.mxu0 %v2233
    %3241 = vmatpush1.bf16.msra.mxu0 %v2232
    %3242 = vmatprep.subr.bf16.mxu0 %v2237
    %3243 = vmatpush1.bf16.msra.mxu0 %v2236
    %3244 = vmatprep.subr.bf16.mxu0 %v2241
    %3245 = vmatpush1.bf16.msra.mxu0 %v2240
    %3246 = vmatprep.subr.bf16.mxu0 %v2245
    %3247 = vmatpush1.bf16.msra.mxu0 %v2244
    %3248 = vmatprep.subr.bf16.mxu0 %v2249
    %3249 = vmatpush1.bf16.msra.mxu0 %v2248
    %3250 = vmatprep.subr.bf16.mxu0 %v2253
    %3251 = vmatpush1.bf16.msra.mxu0 %v2252
    %3252 = vmatprep.subr.bf16.mxu0 %v2257
    %3253 = vmatpush1.bf16.msra.mxu0 %v2256
    %3254 = vmatprep.subr.bf16.mxu0 %v2261
    %3255 = vmatpush1.bf16.msra.mxu0 %v2260
    %3256 = vmatprep.mubr.bf16.mxu0 %v115
    %3257 = vmatmul.mubr.bf16.gmra.mrb[0].mxu0 %v114
    %v3258 = vpop.f32.mrb[0].mxu0
    %v3259 = vadd.f32 %v647, %v3258
    %v3260 = vpop.f32.mrb[0].mxu0
    %v3261 = vadd.f32 %v651, %v3260
    %v3262 = vpop.f32.mrb[0].mxu0
    %v3263 = vpop.f32.mrb[0].mxu0
    %3264 = vdwg.mxu0
    %3265 = vmatprep.subr.bf16.mxu0 %v2265
    %3266 = vmatpush1.bf16.msra.mxu0 %v2264
    %3267 = vmatprep.subr.bf16.mxu0 %v2269
    %3268 = vmatpush1.bf16.msra.mxu0 %v2268
    %3269 = vmatprep.subr.bf16.mxu0 %v2273
    %3270 = vmatpush1.bf16.msra.mxu0 %v2272
    %3271 = vmatprep.subr.bf16.mxu0 %v2277
    %3272 = vmatpush1.bf16.msra.mxu0 %v2276
    %3273 = vmatprep.subr.bf16.mxu0 %v2281
    %3274 = vmatpush1.bf16.msra.mxu0 %v2280
    %3275 = vmatprep.subr.bf16.mxu0 %v2285
    %3276 = vmatpush1.bf16.msra.mxu0 %v2284
    %3277 = vmatprep.subr.bf16.mxu0 %v2289
    %3278 = vmatpush1.bf16.msra.mxu0 %v2288
    %3279 = vmatprep.subr.bf16.mxu0 %v2293
    %3280 = vmatpush1.bf16.msra.mxu0 %v2292
    %3281 = vmatprep.subr.bf16.mxu0 %v2297
    %3282 = vmatpush1.bf16.msra.mxu0 %v2296
    %3283 = vmatprep.subr.bf16.mxu0 %v2301
    %3284 = vmatpush1.bf16.msra.mxu0 %v2300
    %3285 = vmatprep.subr.bf16.mxu0 %v2305
    %3286 = vmatpush1.bf16.msra.mxu0 %v2304
    %3287 = vmatprep.subr.bf16.mxu0 %v2309
    %3288 = vmatpush1.bf16.msra.mxu0 %v2308
    %3289 = vmatprep.subr.bf16.mxu0 %v2313
    %3290 = vmatpush1.bf16.msra.mxu0 %v2312
    %3291 = vmatprep.subr.bf16.mxu0 %v2317
    %3292 = vmatpush1.bf16.msra.mxu0 %v2316
    %3293 = vmatprep.subr.bf16.mxu0 %v2321
    %3294 = vmatpush1.bf16.msra.mxu0 %v2320
    %3295 = vmatprep.subr.bf16.mxu0 %v2325
    %3296 = vmatpush1.bf16.msra.mxu0 %v2324
    %3297 = vmatprep.mubr.bf16.mxu0 %v117
    %3298 = vmatmul.mubr.bf16.gmra.mrb[0].mxu0 %v116
    %v3299 = vpop.f32.mrb[0].mxu0
    %v3300 = vadd.f32 %v3259, %v3299
    %v3301 = vpop.f32.mrb[0].mxu0
    %v3302 = vadd.f32 %v3261, %v3301
    %v3303 = vpop.f32.mrb[0].mxu0
    %v3304 = vpop.f32.mrb[0].mxu0
    %3305 = vdwg.mxu0
    %3306 = vmatprep.subr.bf16.mxu0 %v2329
    %3307 = vmatpush1.bf16.msra.mxu0 %v2328
    %3308 = vmatprep.subr.bf16.mxu0 %v2333
    %3309 = vmatpush1.bf16.msra.mxu0 %v2332
    %3310 = vmatprep.subr.bf16.mxu0 %v2337
    %3311 = vmatpush1.bf16.msra.mxu0 %v2336
    %3312 = vmatprep.subr.bf16.mxu0 %v2341
    %3313 = vmatpush1.bf16.msra.mxu0 %v2340
    %3314 = vmatprep.subr.bf16.mxu0 %v2345
    %3315 = vmatpush1.bf16.msra.mxu0 %v2344
    %3316 = vmatprep.subr.bf16.mxu0 %v2349
    %3317 = vmatpush1.bf16.msra.mxu0 %v2348
    %3318 = vmatprep.subr.bf16.mxu0 %v2353
    %3319 = vmatpush1.bf16.msra.mxu0 %v2352
    %3320 = vmatprep.subr.bf16.mxu0 %v2357
    %3321 = vmatpush1.bf16.msra.mxu0 %v2356
    %3322 = vmatprep.subr.bf16.mxu0 %v2361
    %3323 = vmatpush1.bf16.msra.mxu0 %v2360
    %3324 = vmatprep.subr.bf16.mxu0 %v2365
    %3325 = vmatpush1.bf16.msra.mxu0 %v2364
    %3326 = vmatprep.subr.bf16.mxu0 %v2369
    %3327 = vmatpush1.bf16.msra.mxu0 %v2368
    %3328 = vmatprep.subr.bf16.mxu0 %v2373
    %3329 = vmatpush1.bf16.msra.mxu0 %v2372
    %3330 = vmatprep.subr.bf16.mxu0 %v2377
    %3331 = vmatpush1.bf16.msra.mxu0 %v2376
    %3332 = vmatprep.subr.bf16.mxu0 %v2381
    %3333 = vmatpush1.bf16.msra.mxu0 %v2380
    %3334 = vmatprep.subr.bf16.mxu0 %v2385
    %3335 = vmatpush1.bf16.msra.mxu0 %v2384
    %3336 = vmatprep.subr.bf16.mxu0 %v2389
    %3337 = vmatpush1.bf16.msra.mxu0 %v2388
    %3338 = vmatprep.mubr.bf16.mxu0 %v119
    %3339 = vmatmul.mubr.bf16.gmra.mrb[0].mxu0 %v118
    %v3340 = vpop.f32.mrb[0].mxu0
    %v3341 = vadd.f32 %v3300, %v3340
    %v3342 = vpop.f32.mrb[0].mxu0
    %v3343 = vadd.f32 %v3302, %v3342
    %v3344 = vpop.f32.mrb[0].mxu0
    %v3345 = vpop.f32.mrb[0].mxu0
    %3346 = vdwg.mxu0
    %3347 = vmatprep.subr.bf16.mxu0 %v2393
    %3348 = vmatpush1.bf16.msra.mxu0 %v2392
    %3349 = vmatprep.subr.bf16.mxu0 %v2397
    %3350 = vmatpush1.bf16.msra.mxu0 %v2396
    %3351 = vmatprep.subr.bf16.mxu0 %v2401
    %3352 = vmatpush1.bf16.msra.mxu0 %v2400
    %3353 = vmatprep.subr.bf16.mxu0 %v2405
    %3354 = vmatpush1.bf16.msra.mxu0 %v2404
    %3355 = vmatprep.subr.bf16.mxu0 %v2409
    %3356 = vmatpush1.bf16.msra.mxu0 %v2408
    %3357 = vmatprep.subr.bf16.mxu0 %v2413
    %3358 = vmatpush1.bf16.msra.mxu0 %v2412
    %3359 = vmatprep.subr.bf16.mxu0 %v2417
    %3360 = vmatpush1.bf16.msra.mxu0 %v2416
    %3361 = vmatprep.subr.bf16.mxu0 %v2421
    %3362 = vmatpush1.bf16.msra.mxu0 %v2420
    %3363 = vmatprep.subr.bf16.mxu0 %v2425
    %3364 = vmatpush1.bf16.msra.mxu0 %v2424
    %3365 = vmatprep.subr.bf16.mxu0 %v2429
    %3366 = vmatpush1.bf16.msra.mxu0 %v2428
    %3367 = vmatprep.subr.bf16.mxu0 %v2433
    %3368 = vmatpush1.bf16.msra.mxu0 %v2432
    %3369 = vmatprep.subr.bf16.mxu0 %v2437
    %3370 = vmatpush1.bf16.msra.mxu0 %v2436
    %3371 = vmatprep.subr.bf16.mxu0 %v2441
    %3372 = vmatpush1.bf16.msra.mxu0 %v2440
    %3373 = vmatprep.subr.bf16.mxu0 %v2445
    %3374 = vmatpush1.bf16.msra.mxu0 %v2444
    %3375 = vmatprep.subr.bf16.mxu0 %v2449
    %3376 = vmatpush1.bf16.msra.mxu0 %v2448
    %3377 = vmatprep.subr.bf16.mxu0 %v2453
    %3378 = vmatpush1.bf16.msra.mxu0 %v2452
    %3379 = vmatprep.mubr.bf16.mxu0 %v121
    %3380 = vmatmul.mubr.bf16.gmra.mrb[0].mxu0 %v120
    %v3381 = vpop.f32.mrb[0].mxu0
    %v3382 = vadd.f32 %v3341, %v3381
    %v3383 = vpop.f32.mrb[0].mxu0
    %v3384 = vadd.f32 %v3343, %v3383
    %v3385 = vpop.f32.mrb[0].mxu0
    %v3386 = vpop.f32.mrb[0].mxu0
    %3387 = vdwg.mxu0
    %3388 = vmatprep.subr.bf16.mxu0 %v2457
    %3389 = vmatpush1.bf16.msra.mxu0 %v2456
    %3390 = vmatprep.subr.bf16.mxu0 %v2461
    %3391 = vmatpush1.bf16.msra.mxu0 %v2460
    %3392 = vmatprep.subr.bf16.mxu0 %v2465
    %3393 = vmatpush1.bf16.msra.mxu0 %v2464
    %3394 = vmatprep.subr.bf16.mxu0 %v2469
    %3395 = vmatpush1.bf16.msra.mxu0 %v2468
    %3396 = vmatprep.subr.bf16.mxu0 %v2473
    %3397 = vmatpush1.bf16.msra.mxu0 %v2472
    %3398 = vmatprep.subr.bf16.mxu0 %v2477
    %3399 = vmatpush1.bf16.msra.mxu0 %v2476
    %3400 = vmatprep.subr.bf16.mxu0 %v2481
    %3401 = vmatpush1.bf16.msra.mxu0 %v2480
    %3402 = vmatprep.subr.bf16.mxu0 %v2485
    %3403 = vmatpush1.bf16.msra.mxu0 %v2484
    %3404 = vmatprep.subr.bf16.mxu0 %v2489
    %3405 = vmatpush1.bf16.msra.mxu0 %v2488
    %3406 = vmatprep.subr.bf16.mxu0 %v2493
    %3407 = vmatpush1.bf16.msra.mxu0 %v2492
    %3408 = vmatprep.subr.bf16.mxu0 %v2497
    %3409 = vmatpush1.bf16.msra.mxu0 %v2496
    %3410 = vmatprep.subr.bf16.mxu0 %v2501
    %3411 = vmatpush1.bf16.msra.mxu0 %v2500
    %3412 = vmatprep.subr.bf16.mxu0 %v2505
    %3413 = vmatpush1.bf16.msra.mxu0 %v2504
    %3414 = vmatprep.subr.bf16.mxu0 %v2509
    %3415 = vmatpush1.bf16.msra.mxu0 %v2508
    %3416 = vmatprep.subr.bf16.mxu0 %v2513
    %3417 = vmatpush1.bf16.msra.mxu0 %v2512
    %3418 = vmatprep.subr.bf16.mxu0 %v2517
    %3419 = vmatpush1.bf16.msra.mxu0 %v2516
    %3420 = vmatprep.mubr.bf16.mxu0 %v123
    %3421 = vmatmul.mubr.bf16.gmra.mrb[0].mxu0 %v122
    %v3422 = vpop.f32.mrb[0].mxu0
    %v3423 = vadd.f32 %v3382, %v3422
    %v3424 = vpop.f32.mrb[0].mxu0
    %v3425 = vadd.f32 %v3384, %v3424
    %v3426 = vpop.f32.mrb[0].mxu0
    %v3427 = vpop.f32.mrb[0].mxu0
    %3428 = vdwg.mxu0
    %3429 = vmatprep.subr.bf16.mxu0 %v2521
    %3430 = vmatpush1.bf16.msra.mxu0 %v2520
    %3431 = vmatprep.subr.bf16.mxu0 %v2525
    %3432 = vmatpush1.bf16.msra.mxu0 %v2524
    %3433 = vmatprep.subr.bf16.mxu0 %v2529
    %3434 = vmatpush1.bf16.msra.mxu0 %v2528
    %3435 = vmatprep.subr.bf16.mxu0 %v2533
    %3436 = vmatpush1.bf16.msra.mxu0 %v2532
    %3437 = vmatprep.subr.bf16.mxu0 %v2537
    %3438 = vmatpush1.bf16.msra.mxu0 %v2536
    %3439 = vmatprep.subr.bf16.mxu0 %v2541
    %3440 = vmatpush1.bf16.msra.mxu0 %v2540
    %3441 = vmatprep.subr.bf16.mxu0 %v2545
    %3442 = vmatpush1.bf16.msra.mxu0 %v2544
    %3443 = vmatprep.subr.bf16.mxu0 %v2549
    %3444 = vmatpush1.bf16.msra.mxu0 %v2548
    %3445 = vmatprep.subr.bf16.mxu0 %v2553
    %3446 = vmatpush1.bf16.msra.mxu0 %v2552
    %3447 = vmatprep.subr.bf16.mxu0 %v2557
    %3448 = vmatpush1.bf16.msra.mxu0 %v2556
    %3449 = vmatprep.subr.bf16.mxu0 %v2561
    %3450 = vmatpush1.bf16.msra.mxu0 %v2560
    %3451 = vmatprep.subr.bf16.mxu0 %v2565
    %3452 = vmatpush1.bf16.msra.mxu0 %v2564
    %3453 = vmatprep.subr.bf16.mxu0 %v2569
    %3454 = vmatpush1.bf16.msra.mxu0 %v2568
    %3455 = vmatprep.subr.bf16.mxu0 %v2573
    %3456 = vmatpush1.bf16.msra.mxu0 %v2572
    %3457 = vmatprep.subr.bf16.mxu0 %v2577
    %3458 = vmatpush1.bf16.msra.mxu0 %v2576
    %3459 = vmatprep.subr.bf16.mxu0 %v2581
    %3460 = vmatpush1.bf16.msra.mxu0 %v2580
    %3461 = vmatprep.mubr.bf16.mxu0 %v125
    %3462 = vmatmul.mubr.bf16.gmra.mrb[0].mxu0 %v124
    %v3463 = vpop.f32.mrb[0].mxu0
    %v3464 = vadd.f32 %v3423, %v3463
    %v3465 = vpop.f32.mrb[0].mxu0
    %v3466 = vadd.f32 %v3425, %v3465
    %v3467 = vpop.f32.mrb[0].mxu0
    %v3468 = vpop.f32.mrb[0].mxu0
    %3469 = vdwg.mxu0
    %3470 = vmatprep.subr.bf16.mxu0 %v2585
    %3471 = vmatpush1.bf16.msra.mxu0 %v2584
    %3472 = vmatprep.subr.bf16.mxu0 %v2589
    %3473 = vmatpush1.bf16.msra.mxu0 %v2588
    %3474 = vmatprep.subr.bf16.mxu0 %v2593
    %3475 = vmatpush1.bf16.msra.mxu0 %v2592
    %3476 = vmatprep.subr.bf16.mxu0 %v2597
    %3477 = vmatpush1.bf16.msra.mxu0 %v2596
    %3478 = vmatprep.subr.bf16.mxu0 %v2601
    %3479 = vmatpush1.bf16.msra.mxu0 %v2600
    %3480 = vmatprep.subr.bf16.mxu0 %v2605
    %3481 = vmatpush1.bf16.msra.mxu0 %v2604
    %3482 = vmatprep.subr.bf16.mxu0 %v2609
    %3483 = vmatpush1.bf16.msra.mxu0 %v2608
    %3484 = vmatprep.subr.bf16.mxu0 %v2613
    %3485 = vmatpush1.bf16.msra.mxu0 %v2612
    %3486 = vmatprep.subr.bf16.mxu0 %v2617
    %3487 = vmatpush1.bf16.msra.mxu0 %v2616
    %3488 = vmatprep.subr.bf16.mxu0 %v2621
    %3489 = vmatpush1.bf16.msra.mxu0 %v2620
    %3490 = vmatprep.subr.bf16.mxu0 %v2625
    %3491 = vmatpush1.bf16.msra.mxu0 %v2624
    %3492 = vmatprep.subr.bf16.mxu0 %v2629
    %3493 = vmatpush1.bf16.msra.mxu0 %v2628
    %3494 = vmatprep.subr.bf16.mxu0 %v2633
    %3495 = vmatpush1.bf16.msra.mxu0 %v2632
    %3496 = vmatprep.subr.bf16.mxu0 %v2637
    %3497 = vmatpush1.bf16.msra.mxu0 %v2636
    %3498 = vmatprep.subr.bf16.mxu0 %v2641
    %3499 = vmatpush1.bf16.msra.mxu0 %v2640
    %3500 = vmatprep.subr.bf16.mxu0 %v2645
    %3501 = vmatpush1.bf16.msra.mxu0 %v2644
    %3502 = vmatprep.mubr.bf16.mxu0 %v127
    %3503 = vmatmul.mubr.bf16.gmra.mrb[0].mxu0 %v126
    %v3504 = vpop.f32.mrb[0].mxu0
    %v3505 = vadd.f32 %v3464, %v3504
    %v3506 = vpop.f32.mrb[0].mxu0
    %v3507 = vadd.f32 %v3466, %v3506
    %v3508 = vpop.f32.mrb[0].mxu0
    %v3509 = vpop.f32.mrb[0].mxu0
    %3510 = vdwg.mxu0
    %3511 = vmatprep.subr.bf16.mxu0 %v2649
    %3512 = vmatpush1.bf16.msra.mxu0 %v2648
    %3513 = vmatprep.subr.bf16.mxu0 %v2653
    %3514 = vmatpush1.bf16.msra.mxu0 %v2652
    %3515 = vmatprep.subr.bf16.mxu0 %v2657
    %3516 = vmatpush1.bf16.msra.mxu0 %v2656
    %3517 = vmatprep.subr.bf16.mxu0 %v2661
    %3518 = vmatpush1.bf16.msra.mxu0 %v2660
    %3519 = vmatprep.subr.bf16.mxu0 %v2665
    %3520 = vmatpush1.bf16.msra.mxu0 %v2664
    %3521 = vmatprep.subr.bf16.mxu0 %v2669
    %3522 = vmatpush1.bf16.msra.mxu0 %v2668
    %3523 = vmatprep.subr.bf16.mxu0 %v2673
    %3524 = vmatpush1.bf16.msra.mxu0 %v2672
    %3525 = vmatprep.subr.bf16.mxu0 %v2677
    %3526 = vmatpush1.bf16.msra.mxu0 %v2676
    %3527 = vmatprep.subr.bf16.mxu0 %v2681
    %3528 = vmatpush1.bf16.msra.mxu0 %v2680
    %3529 = vmatprep.subr.bf16.mxu0 %v2685
    %3530 = vmatpush1.bf16.msra.mxu0 %v2684
    %3531 = vmatprep.subr.bf16.mxu0 %v2689
    %3532 = vmatpush1.bf16.msra.mxu0 %v2688
    %3533 = vmatprep.subr.bf16.mxu0 %v2693
    %3534 = vmatpush1.bf16.msra.mxu0 %v2692
    %3535 = vmatprep.subr.bf16.mxu0 %v2697
    %3536 = vmatpush1.bf16.msra.mxu0 %v2696
    %3537 = vmatprep.subr.bf16.mxu0 %v2701
    %3538 = vmatpush1.bf16.msra.mxu0 %v2700
    %3539 = vmatprep.subr.bf16.mxu0 %v2705
    %3540 = vmatpush1.bf16.msra.mxu0 %v2704
    %3541 = vmatprep.subr.bf16.mxu0 %v2709
    %3542 = vmatpush1.bf16.msra.mxu0 %v2708
    %3543 = vmatprep.mubr.bf16.mxu0 %v129
    %3544 = vmatmul.mubr.bf16.gmra.mrb[0].mxu0 %v128
    %v3545 = vpop.f32.mrb[0].mxu0
    %v3546 = vadd.f32 %v3505, %v3545
    %v3547 = vpop.f32.mrb[0].mxu0
    %v3548 = vadd.f32 %v3507, %v3547
    %v3549 = vpop.f32.mrb[0].mxu0
    %v3550 = vpop.f32.mrb[0].mxu0
    %3551 = vdwg.mxu0
    %3552 = vmatprep.subr.bf16.mxu0 %v2203
    %3553 = vmatpush1.bf16.msra.mxu0 %v2202
    %3554 = vmatprep.subr.bf16.mxu0 %v2207
    %3555 = vmatpush1.bf16.msra.mxu0 %v2206
    %3556 = vmatprep.subr.bf16.mxu0 %v2211
    %3557 = vmatpush1.bf16.msra.mxu0 %v2210
    %3558 = vmatprep.subr.bf16.mxu0 %v2215
    %3559 = vmatpush1.bf16.msra.mxu0 %v2214
    %3560 = vmatprep.subr.bf16.mxu0 %v2219
    %3561 = vmatpush1.bf16.msra.mxu0 %v2218
    %3562 = vmatprep.subr.bf16.mxu0 %v2223
    %3563 = vmatpush1.bf16.msra.mxu0 %v2222
    %3564 = vmatprep.subr.bf16.mxu0 %v2227
    %3565 = vmatpush1.bf16.msra.mxu0 %v2226
    %3566 = vmatprep.subr.bf16.mxu0 %v2231
    %3567 = vmatpush1.bf16.msra.mxu0 %v2230
    %3568 = vmatprep.subr.bf16.mxu0 %v2235
    %3569 = vmatpush1.bf16.msra.mxu0 %v2234
    %3570 = vmatprep.subr.bf16.mxu0 %v2239
    %3571 = vmatpush1.bf16.msra.mxu0 %v2238
    %3572 = vmatprep.subr.bf16.mxu0 %v2243
    %3573 = vmatpush1.bf16.msra.mxu0 %v2242
    %3574 = vmatprep.subr.bf16.mxu0 %v2247
    %3575 = vmatpush1.bf16.msra.mxu0 %v2246
    %3576 = vmatprep.subr.bf16.mxu0 %v2251
    %3577 = vmatpush1.bf16.msra.mxu0 %v2250
    %3578 = vmatprep.subr.bf16.mxu0 %v2255
    %3579 = vmatpush1.bf16.msra.mxu0 %v2254
    %3580 = vmatprep.subr.bf16.mxu0 %v2259
    %3581 = vmatpush1.bf16.msra.mxu0 %v2258
    %3582 = vmatprep.subr.bf16.mxu0 %v2263
    %3583 = vmatpush1.bf16.msra.mxu0 %v2262
    %3584 = vmatprep.mubr.bf16.mxu0 %v115
    %3585 = vmatmul.mubr.bf16.gmra.mrb[0].mxu0 %v114
    %v3586 = vpop.f32.mrb[0].mxu0
    %v3587 = vadd.f32 %v655, %v3586
    %v3588 = vpop.f32.mrb[0].mxu0
    %v3589 = vadd.f32 %v659, %v3588
    %v3590 = vpop.f32.mrb[0].mxu0
    %v3591 = vpop.f32.mrb[0].mxu0
    %3592 = vdwg.mxu0
    %3593 = vmatprep.subr.bf16.mxu0 %v2267
    %3594 = vmatpush1.bf16.msra.mxu0 %v2266
    %3595 = vmatprep.subr.bf16.mxu0 %v2271
    %3596 = vmatpush1.bf16.msra.mxu0 %v2270
    %3597 = vmatprep.subr.bf16.mxu0 %v2275
    %3598 = vmatpush1.bf16.msra.mxu0 %v2274
    %3599 = vmatprep.subr.bf16.mxu0 %v2279
    %3600 = vmatpush1.bf16.msra.mxu0 %v2278
    %3601 = vmatprep.subr.bf16.mxu0 %v2283
    %3602 = vmatpush1.bf16.msra.mxu0 %v2282
    %3603 = vmatprep.subr.bf16.mxu0 %v2287
    %3604 = vmatpush1.bf16.msra.mxu0 %v2286
    %3605 = vmatprep.subr.bf16.mxu0 %v2291
    %3606 = vmatpush1.bf16.msra.mxu0 %v2290
    %3607 = vmatprep.subr.bf16.mxu0 %v2295
    %3608 = vmatpush1.bf16.msra.mxu0 %v2294
    %3609 = vmatprep.subr.bf16.mxu0 %v2299
    %3610 = vmatpush1.bf16.msra.mxu0 %v2298
    %3611 = vmatprep.subr.bf16.mxu0 %v2303
    %3612 = vmatpush1.bf16.msra.mxu0 %v2302
    %3613 = vmatprep.subr.bf16.mxu0 %v2307
    %3614 = vmatpush1.bf16.msra.mxu0 %v2306
    %3615 = vmatprep.subr.bf16.mxu0 %v2311
    %3616 = vmatpush1.bf16.msra.mxu0 %v2310
    %3617 = vmatprep.subr.bf16.mxu0 %v2315
    %3618 = vmatpush1.bf16.msra.mxu0 %v2314
    %3619 = vmatprep.subr.bf16.mxu0 %v2319
    %3620 = vmatpush1.bf16.msra.mxu0 %v2318
    %3621 = vmatprep.subr.bf16.mxu0 %v2323
    %3622 = vmatpush1.bf16.msra.mxu0 %v2322
    %3623 = vmatprep.subr.bf16.mxu0 %v2327
    %3624 = vmatpush1.bf16.msra.mxu0 %v2326
    %3625 = vmatprep.mubr.bf16.mxu0 %v117
    %3626 = vmatmul.mubr.bf16.gmra.mrb[0].mxu0 %v116
    %v3627 = vpop.f32.mrb[0].mxu0
    %v3628 = vadd.f32 %v3587, %v3627
    %v3629 = vpop.f32.mrb[0].mxu0
    %v3630 = vadd.f32 %v3589, %v3629
    %v3631 = vpop.f32.mrb[0].mxu0
    %v3632 = vpop.f32.mrb[0].mxu0
    %3633 = vdwg.mxu0
    %3634 = vmatprep.subr.bf16.mxu0 %v2331
    %3635 = vmatpush1.bf16.msra.mxu0 %v2330
    %3636 = vmatprep.subr.bf16.mxu0 %v2335
    %3637 = vmatpush1.bf16.msra.mxu0 %v2334
    %3638 = vmatprep.subr.bf16.mxu0 %v2339
    %3639 = vmatpush1.bf16.msra.mxu0 %v2338
    %3640 = vmatprep.subr.bf16.mxu0 %v2343
    %3641 = vmatpush1.bf16.msra.mxu0 %v2342
    %3642 = vmatprep.subr.bf16.mxu0 %v2347
    %3643 = vmatpush1.bf16.msra.mxu0 %v2346
    %3644 = vmatprep.subr.bf16.mxu0 %v2351
    %3645 = vmatpush1.bf16.msra.mxu0 %v2350
    %3646 = vmatprep.subr.bf16.mxu0 %v2355
    %3647 = vmatpush1.bf16.msra.mxu0 %v2354
    %3648 = vmatprep.subr.bf16.mxu0 %v2359
    %3649 = vmatpush1.bf16.msra.mxu0 %v2358
    %3650 = vmatprep.subr.bf16.mxu0 %v2363
    %3651 = vmatpush1.bf16.msra.mxu0 %v2362
    %3652 = vmatprep.subr.bf16.mxu0 %v2367
    %3653 = vmatpush1.bf16.msra.mxu0 %v2366
    %3654 = vmatprep.subr.bf16.mxu0 %v2371
    %3655 = vmatpush1.bf16.msra.mxu0 %v2370
    %3656 = vmatprep.subr.bf16.mxu0 %v2375
    %3657 = vmatpush1.bf16.msra.mxu0 %v2374
    %3658 = vmatprep.subr.bf16.mxu0 %v2379
    %3659 = vmatpush1.bf16.msra.mxu0 %v2378
    %3660 = vmatprep.subr.bf16.mxu0 %v2383
    %3661 = vmatpush1.bf16.msra.mxu0 %v2382
    %3662 = vmatprep.subr.bf16.mxu0 %v2387
    %3663 = vmatpush1.bf16.msra.mxu0 %v2386
    %3664 = vmatprep.subr.bf16.mxu0 %v2391
    %3665 = vmatpush1.bf16.msra.mxu0 %v2390
    %3666 = vmatprep.mubr.bf16.mxu0 %v119
    %3667 = vmatmul.mubr.bf16.gmra.mrb[0].mxu0 %v118
    %v3668 = vpop.f32.mrb[0].mxu0
    %v3669 = vadd.f32 %v3628, %v3668
    %v3670 = vpop.f32.mrb[0].mxu0
    %v3671 = vadd.f32 %v3630, %v3670
    %v3672 = vpop.f32.mrb[0].mxu0
    %v3673 = vpop.f32.mrb[0].mxu0
    %3674 = vdwg.mxu0
    %3675 = vmatprep.subr.bf16.mxu0 %v2395
    %3676 = vmatpush1.bf16.msra.mxu0 %v2394
    %3677 = vmatprep.subr.bf16.mxu0 %v2399
    %3678 = vmatpush1.bf16.msra.mxu0 %v2398
    %3679 = vmatprep.subr.bf16.mxu0 %v2403
    %3680 = vmatpush1.bf16.msra.mxu0 %v2402
    %3681 = vmatprep.subr.bf16.mxu0 %v2407
    %3682 = vmatpush1.bf16.msra.mxu0 %v2406
    %3683 = vmatprep.subr.bf16.mxu0 %v2411
    %3684 = vmatpush1.bf16.msra.mxu0 %v2410
    %3685 = vmatprep.subr.bf16.mxu0 %v2415
    %3686 = vmatpush1.bf16.msra.mxu0 %v2414
    %3687 = vmatprep.subr.bf16.mxu0 %v2419
    %3688 = vmatpush1.bf16.msra.mxu0 %v2418
    %3689 = vmatprep.subr.bf16.mxu0 %v2423
    %3690 = vmatpush1.bf16.msra.mxu0 %v2422
    %3691 = vmatprep.subr.bf16.mxu0 %v2427
    %3692 = vmatpush1.bf16.msra.mxu0 %v2426
    %3693 = vmatprep.subr.bf16.mxu0 %v2431
    %3694 = vmatpush1.bf16.msra.mxu0 %v2430
    %3695 = vmatprep.subr.bf16.mxu0 %v2435
    %3696 = vmatpush1.bf16.msra.mxu0 %v2434
    %3697 = vmatprep.subr.bf16.mxu0 %v2439
    %3698 = vmatpush1.bf16.msra.mxu0 %v2438
    %3699 = vmatprep.subr.bf16.mxu0 %v2443
    %3700 = vmatpush1.bf16.msra.mxu0 %v2442
    %3701 = vmatprep.subr.bf16.mxu0 %v2447
    %3702 = vmatpush1.bf16.msra.mxu0 %v2446
    %3703 = vmatprep.subr.bf16.mxu0 %v2451
    %3704 = vmatpush1.bf16.msra.mxu0 %v2450
    %3705 = vmatprep.subr.bf16.mxu0 %v2455
    %3706 = vmatpush1.bf16.msra.mxu0 %v2454
    %3707 = vmatprep.mubr.bf16.mxu0 %v121
    %3708 = vmatmul.mubr.bf16.gmra.mrb[0].mxu0 %v120
    %v3709 = vpop.f32.mrb[0].mxu0
    %v3710 = vadd.f32 %v3669, %v3709
    %v3711 = vpop.f32.mrb[0].mxu0
    %v3712 = vadd.f32 %v3671, %v3711
    %v3713 = vpop.f32.mrb[0].mxu0
    %v3714 = vpop.f32.mrb[0].mxu0
    %3715 = vdwg.mxu0
    %3716 = vmatprep.subr.bf16.mxu0 %v2459
    %3717 = vmatpush1.bf16.msra.mxu0 %v2458
    %3718 = vmatprep.subr.bf16.mxu0 %v2463
    %3719 = vmatpush1.bf16.msra.mxu0 %v2462
    %3720 = vmatprep.subr.bf16.mxu0 %v2467
    %3721 = vmatpush1.bf16.msra.mxu0 %v2466
    %3722 = vmatprep.subr.bf16.mxu0 %v2471
    %3723 = vmatpush1.bf16.msra.mxu0 %v2470
    %3724 = vmatprep.subr.bf16.mxu0 %v2475
    %3725 = vmatpush1.bf16.msra.mxu0 %v2474
    %3726 = vmatprep.subr.bf16.mxu0 %v2479
    %3727 = vmatpush1.bf16.msra.mxu0 %v2478
    %3728 = vmatprep.subr.bf16.mxu0 %v2483
    %3729 = vmatpush1.bf16.msra.mxu0 %v2482
    %3730 = vmatprep.subr.bf16.mxu0 %v2487
    %3731 = vmatpush1.bf16.msra.mxu0 %v2486
    %3732 = vmatprep.subr.bf16.mxu0 %v2491
    %3733 = vmatpush1.bf16.msra.mxu0 %v2490
    %3734 = vmatprep.subr.bf16.mxu0 %v2495
    %3735 = vmatpush1.bf16.msra.mxu0 %v2494
    %3736 = vmatprep.subr.bf16.mxu0 %v2499
    %3737 = vmatpush1.bf16.msra.mxu0 %v2498
    %3738 = vmatprep.subr.bf16.mxu0 %v2503
    %3739 = vmatpush1.bf16.msra.mxu0 %v2502
    %3740 = vmatprep.subr.bf16.mxu0 %v2507
    %3741 = vmatpush1.bf16.msra.mxu0 %v2506
    %3742 = vmatprep.subr.bf16.mxu0 %v2511
    %3743 = vmatpush1.bf16.msra.mxu0 %v2510
    %3744 = vmatprep.subr.bf16.mxu0 %v2515
    %3745 = vmatpush1.bf16.msra.mxu0 %v2514
    %3746 = vmatprep.subr.bf16.mxu0 %v2519
    %3747 = vmatpush1.bf16.msra.mxu0 %v2518
    %3748 = vmatprep.mubr.bf16.mxu0 %v123
    %3749 = vmatmul.mubr.bf16.gmra.mrb[0].mxu0 %v122
    %v3750 = vpop.f32.mrb[0].mxu0
    %v3751 = vadd.f32 %v3710, %v3750
    %v3752 = vpop.f32.mrb[0].mxu0
    %v3753 = vadd.f32 %v3712, %v3752
    %v3754 = vpop.f32.mrb[0].mxu0
    %v3755 = vpop.f32.mrb[0].mxu0
    %3756 = vdwg.mxu0
    %3757 = vmatprep.subr.bf16.mxu0 %v2523
    %3758 = vmatpush1.bf16.msra.mxu0 %v2522
    %3759 = vmatprep.subr.bf16.mxu0 %v2527
    %3760 = vmatpush1.bf16.msra.mxu0 %v2526
    %3761 = vmatprep.subr.bf16.mxu0 %v2531
    %3762 = vmatpush1.bf16.msra.mxu0 %v2530
    %3763 = vmatprep.subr.bf16.mxu0 %v2535
    %3764 = vmatpush1.bf16.msra.mxu0 %v2534
    %3765 = vmatprep.subr.bf16.mxu0 %v2539
    %3766 = vmatpush1.bf16.msra.mxu0 %v2538
    %3767 = vmatprep.subr.bf16.mxu0 %v2543
    %3768 = vmatpush1.bf16.msra.mxu0 %v2542
    %3769 = vmatprep.subr.bf16.mxu0 %v2547
    %3770 = vmatpush1.bf16.msra.mxu0 %v2546
    %3771 = vmatprep.subr.bf16.mxu0 %v2551
    %3772 = vmatpush1.bf16.msra.mxu0 %v2550
    %3773 = vmatprep.subr.bf16.mxu0 %v2555
    %3774 = vmatpush1.bf16.msra.mxu0 %v2554
    %3775 = vmatprep.subr.bf16.mxu0 %v2559
    %3776 = vmatpush1.bf16.msra.mxu0 %v2558
    %3777 = vmatprep.subr.bf16.mxu0 %v2563
    %3778 = vmatpush1.bf16.msra.mxu0 %v2562
    %3779 = vmatprep.subr.bf16.mxu0 %v2567
    %3780 = vmatpush1.bf16.msra.mxu0 %v2566
    %3781 = vmatprep.subr.bf16.mxu0 %v2571
    %3782 = vmatpush1.bf16.msra.mxu0 %v2570
    %3783 = vmatprep.subr.bf16.mxu0 %v2575
    %3784 = vmatpush1.bf16.msra.mxu0 %v2574
    %3785 = vmatprep.subr.bf16.mxu0 %v2579
    %3786 = vmatpush1.bf16.msra.mxu0 %v2578
    %3787 = vmatprep.subr.bf16.mxu0 %v2583
    %3788 = vmatpush1.bf16.msra.mxu0 %v2582
    %3789 = vmatprep.mubr.bf16.mxu0 %v125
    %3790 = vmatmul.mubr.bf16.gmra.mrb[0].mxu0 %v124
    %v3791 = vpop.f32.mrb[0].mxu0
    %v3792 = vadd.f32 %v3751, %v3791
    %v3793 = vpop.f32.mrb[0].mxu0
    %v3794 = vadd.f32 %v3753, %v3793
    %v3795 = vpop.f32.mrb[0].mxu0
    %v3796 = vpop.f32.mrb[0].mxu0
    %3797 = vdwg.mxu0
    %3798 = vmatprep.subr.bf16.mxu0 %v2587
    %3799 = vmatpush1.bf16.msra.mxu0 %v2586
    %3800 = vmatprep.subr.bf16.mxu0 %v2591
    %3801 = vmatpush1.bf16.msra.mxu0 %v2590
    %3802 = vmatprep.subr.bf16.mxu0 %v2595
    %3803 = vmatpush1.bf16.msra.mxu0 %v2594
    %3804 = vmatprep.subr.bf16.mxu0 %v2599
    %3805 = vmatpush1.bf16.msra.mxu0 %v2598
    %3806 = vmatprep.subr.bf16.mxu0 %v2603
    %3807 = vmatpush1.bf16.msra.mxu0 %v2602
    %3808 = vmatprep.subr.bf16.mxu0 %v2607
    %3809 = vmatpush1.bf16.msra.mxu0 %v2606
    %3810 = vmatprep.subr.bf16.mxu0 %v2611
    %3811 = vmatpush1.bf16.msra.mxu0 %v2610
    %3812 = vmatprep.subr.bf16.mxu0 %v2615
    %3813 = vmatpush1.bf16.msra.mxu0 %v2614
    %3814 = vmatprep.subr.bf16.mxu0 %v2619
    %3815 = vmatpush1.bf16.msra.mxu0 %v2618
    %3816 = vmatprep.subr.bf16.mxu0 %v2623
    %3817 = vmatpush1.bf16.msra.mxu0 %v2622
    %3818 = vmatprep.subr.bf16.mxu0 %v2627
    %3819 = vmatpush1.bf16.msra.mxu0 %v2626
    %3820 = vmatprep.subr.bf16.mxu0 %v2631
    %3821 = vmatpush1.bf16.msra.mxu0 %v2630
    %3822 = vmatprep.subr.bf16.mxu0 %v2635
    %3823 = vmatpush1.bf16.msra.mxu0 %v2634
    %3824 = vmatprep.subr.bf16.mxu0 %v2639
    %3825 = vmatpush1.bf16.msra.mxu0 %v2638
    %3826 = vmatprep.subr.bf16.mxu0 %v2643
    %3827 = vmatpush1.bf16.msra.mxu0 %v2642
    %3828 = vmatprep.subr.bf16.mxu0 %v2647
    %3829 = vmatpush1.bf16.msra.mxu0 %v2646
    %3830 = vmatprep.mubr.bf16.mxu0 %v127
    %3831 = vmatmul.mubr.bf16.gmra.mrb[0].mxu0 %v126
    %v3832 = vpop.f32.mrb[0].mxu0
    %v3833 = vadd.f32 %v3792, %v3832
    %v3834 = vpop.f32.mrb[0].mxu0
    %v3835 = vadd.f32 %v3794, %v3834
    %v3836 = vpop.f32.mrb[0].mxu0
    %v3837 = vpop.f32.mrb[0].mxu0
    %3838 = vdwg.mxu0
    %3839 = vmatprep.subr.bf16.mxu0 %v2651
    %3840 = vmatpush1.bf16.msra.mxu0 %v2650
    %3841 = vmatprep.subr.bf16.mxu0 %v2655
    %3842 = vmatpush1.bf16.msra.mxu0 %v2654
    %3843 = vmatprep.subr.bf16.mxu0 %v2659
    %3844 = vmatpush1.bf16.msra.mxu0 %v2658
    %3845 = vmatprep.subr.bf16.mxu0 %v2663
    %3846 = vmatpush1.bf16.msra.mxu0 %v2662
    %3847 = vmatprep.subr.bf16.mxu0 %v2667
    %3848 = vmatpush1.bf16.msra.mxu0 %v2666
    %3849 = vmatprep.subr.bf16.mxu0 %v2671
    %3850 = vmatpush1.bf16.msra.mxu0 %v2670
    %3851 = vmatprep.subr.bf16.mxu0 %v2675
    %3852 = vmatpush1.bf16.msra.mxu0 %v2674
    %3853 = vmatprep.subr.bf16.mxu0 %v2679
    %3854 = vmatpush1.bf16.msra.mxu0 %v2678
    %3855 = vmatprep.subr.bf16.mxu0 %v2683
    %3856 = vmatpush1.bf16.msra.mxu0 %v2682
    %3857 = vmatprep.subr.bf16.mxu0 %v2687
    %3858 = vmatpush1.bf16.msra.mxu0 %v2686
    %3859 = vmatprep.subr.bf16.mxu0 %v2691
    %3860 = vmatpush1.bf16.msra.mxu0 %v2690
    %3861 = vmatprep.subr.bf16.mxu0 %v2695
    %3862 = vmatpush1.bf16.msra.mxu0 %v2694
    %3863 = vmatprep.subr.bf16.mxu0 %v2699
    %3864 = vmatpush1.bf16.msra.mxu0 %v2698
    %3865 = vmatprep.subr.bf16.mxu0 %v2703
    %3866 = vmatpush1.bf16.msra.mxu0 %v2702
    %3867 = vmatprep.subr.bf16.mxu0 %v2707
    %3868 = vmatpush1.bf16.msra.mxu0 %v2706
    %3869 = vmatprep.subr.bf16.mxu0 %v2711
    %3870 = vmatpush1.bf16.msra.mxu0 %v2710
    %3871 = vmatprep.mubr.bf16.mxu0 %v129
    %3872 = vmatmul.mubr.bf16.gmra.mrb[0].mxu0 %v128
    %v3873 = vpop.f32.mrb[0].mxu0
    %v3874 = vadd.f32 %v3833, %v3873
    %v3875 = vpop.f32.mrb[0].mxu0
    %v3876 = vadd.f32 %v3835, %v3875
    %v3877 = vpop.f32.mrb[0].mxu0
    %v3878 = vpop.f32.mrb[0].mxu0
    %3879 = vdwg.mxu0
    %v3880 = vmax.f32 %v3546, 0.0
    %v3881 = vmax.f32 %v3548, 0.0
    %v3882 = vmax.f32 %v3874, 0.0
    %v3883 = vmax.f32 %v3876, 0.0
    %v3884 = vpack.c.bf16 %v3880, %v3880
    %v3885 = vpack.c.bf16 %v3881, %v3881
    %v3886 = vpack.c.bf16 %v3882, %v3882
    %v3887 = vpack.c.bf16 %v3883, %v3883
    %v3888 = vld [vmem:[%s3] sm:$0xf]
    %v3889 = vld [vmem:[%s3 + $0x4] sm:$0xf]
    %v3890 = vld [vmem:[%s3 + $0x8] sm:$0xf]
    %v3891 = vld [vmem:[%s3 + $0xc] sm:$0xf]
    %v3892 = vld [vmem:[%s3 + $0x10] sm:$0xf]
    %v3893 = vld [vmem:[%s3 + $0x14] sm:$0xf]
    %v3894 = vld [vmem:[%s3 + $0x18] sm:$0xf]
    %v3895 = vld [vmem:[%s3 + $0x1c] sm:$0xf]
    %v3896 = vld [vmem:[%s3 + $0x20] sm:$0xf]
    %v3897 = vld [vmem:[%s3 + $0x24] sm:$0xf]
    %v3898 = vld [vmem:[%s3 + $0x28] sm:$0xf]
    %v3899 = vld [vmem:[%s3 + $0x2c] sm:$0xf]
    %v3900 = vld [vmem:[%s3 + $0x30] sm:$0xf]
    %v3901 = vld [vmem:[%s3 + $0x34] sm:$0xf]
    %v3902 = vld [vmem:[%s3 + $0x38] sm:$0xf]
    %v3903 = vld [vmem:[%s3 + $0x3c] sm:$0xf]
    %v3904 = vld [vmem:[%s3 + $0x40] sm:$0xf]
    %v3905 = vld [vmem:[%s3 + $0x44] sm:$0xf]
    %v3906 = vld [vmem:[%s3 + $0x48] sm:$0xf]
    %v3907 = vld [vmem:[%s3 + $0x4c] sm:$0xf]
    %v3908 = vld [vmem:[%s3 + $0x50] sm:$0xf]
    %v3909 = vld [vmem:[%s3 + $0x54] sm:$0xf]
    %v3910 = vld [vmem:[%s3 + $0x58] sm:$0xf]
    %v3911 = vld [vmem:[%s3 + $0x5c] sm:$0xf]
    %v3912 = vld [vmem:[%s3 + $0x60] sm:$0xf]
    %v3913 = vld [vmem:[%s3 + $0x64] sm:$0xf]
    %v3914 = vld [vmem:[%s3 + $0x68] sm:$0xf]
    %v3915 = vld [vmem:[%s3 + $0x6c] sm:$0xf]
    %v3916 = vld [vmem:[%s3 + $0x70] sm:$0xf]
    %v3917 = vld [vmem:[%s3 + $0x74] sm:$0xf]
    %v3918 = vld [vmem:[%s3 + $0x78] sm:$0xf]
    %v3919 = vld [vmem:[%s3 + $0x7c] sm:$0xf]
    %v3920 = vld [vmem:[%s3 + $0x80] sm:$0xf]
    %v3921 = vld [vmem:[%s3 + $0x84] sm:$0xf]
    %v3922 = vld [vmem:[%s3 + $0x88] sm:$0xf]
    %v3923 = vld [vmem:[%s3 + $0x8c] sm:$0xf]
    %v3924 = vld [vmem:[%s3 + $0x90] sm:$0xf]
    %v3925 = vld [vmem:[%s3 + $0x94] sm:$0xf]
    %v3926 = vld [vmem:[%s3 + $0x98] sm:$0xf]
    %v3927 = vld [vmem:[%s3 + $0x9c] sm:$0xf]
    %v3928 = vld [vmem:[%s3 + $0xa0] sm:$0xf]
    %v3929 = vld [vmem:[%s3 + $0xa4] sm:$0xf]
    %v3930 = vld [vmem:[%s3 + $0xa8] sm:$0xf]
    %v3931 = vld [vmem:[%s3 + $0xac] sm:$0xf]
    %v3932 = vld [vmem:[%s3 + $0xb0] sm:$0xf]
    %v3933 = vld [vmem:[%s3 + $0xb4] sm:$0xf]
    %v3934 = vld [vmem:[%s3 + $0xb8] sm:$0xf]
    %v3935 = vld [vmem:[%s3 + $0xbc] sm:$0xf]
    %v3936 = vld [vmem:[%s3 + $0xc0] sm:$0xf]
    %v3937 = vld [vmem:[%s3 + $0xc4] sm:$0xf]
    %v3938 = vld [vmem:[%s3 + $0xc8] sm:$0xf]
    %v3939 = vld [vmem:[%s3 + $0xcc] sm:$0xf]
    %v3940 = vld [vmem:[%s3 + $0xd0] sm:$0xf]
    %v3941 = vld [vmem:[%s3 + $0xd4] sm:$0xf]
    %v3942 = vld [vmem:[%s3 + $0xd8] sm:$0xf]
    %v3943 = vld [vmem:[%s3 + $0xdc] sm:$0xf]
    %v3944 = vld [vmem:[%s3 + $0xe0] sm:$0xf]
    %v3945 = vld [vmem:[%s3 + $0xe4] sm:$0xf]
    %v3946 = vld [vmem:[%s3 + $0xe8] sm:$0xf]
    %v3947 = vld [vmem:[%s3 + $0xec] sm:$0xf]
    %v3948 = vld [vmem:[%s3 + $0xf0] sm:$0xf]
    %v3949 = vld [vmem:[%s3 + $0xf4] sm:$0xf]
    %v3950 = vld [vmem:[%s3 + $0xf8] sm:$0xf]
    %v3951 = vld [vmem:[%s3 + $0xfc] sm:$0xf]
    %v3952 = vld [vmem:[%s4] sm:$0x1]
    %v3954 = vlaneseq
    %v3955 = vshrl.u32 %v3954, 7
    %v3956 = vsub.s32 0, %v3955
    %v3957 = vrot.slane %v3952, %v3956
    %v4023 = vunpack.c.l.b16 %v3888
    %v4024 = vunpack.c.l.b16 %v3889
    %v4025 = vunpack.c.l.b16 %v3890
    %v4026 = vunpack.c.l.b16 %v3891
    %v4027 = vunpack.c.l.b16 %v3892
    %v4028 = vunpack.c.l.b16 %v3893
    %v4029 = vunpack.c.l.b16 %v3894
    %v4030 = vunpack.c.l.b16 %v3895
    %v4031 = vunpack.c.l.b16 %v3896
    %v4032 = vunpack.c.l.b16 %v3897
    %v4033 = vunpack.c.l.b16 %v3898
    %v4034 = vunpack.c.l.b16 %v3899
    %v4035 = vunpack.c.l.b16 %v3900
    %v4036 = vunpack.c.l.b16 %v3901
    %v4037 = vunpack.c.l.b16 %v3902
    %v4038 = vunpack.c.l.b16 %v3903
    %v4039 = vunpack.c.l.b16 %v3904
    %v4040 = vunpack.c.l.b16 %v3905
    %v4041 = vunpack.c.l.b16 %v3906
    %v4042 = vunpack.c.l.b16 %v3907
    %v4043 = vunpack.c.l.b16 %v3908
    %v4044 = vunpack.c.l.b16 %v3909
    %v4045 = vunpack.c.l.b16 %v3910
    %v4046 = vunpack.c.l.b16 %v3911
    %v4047 = vunpack.c.l.b16 %v3912
    %v4048 = vunpack.c.l.b16 %v3913
    %v4049 = vunpack.c.l.b16 %v3914
    %v4050 = vunpack.c.l.b16 %v3915
    %v4051 = vunpack.c.l.b16 %v3916
    %v4052 = vunpack.c.l.b16 %v3917
    %v4053 = vunpack.c.l.b16 %v3918
    %v4054 = vunpack.c.l.b16 %v3919
    %v4055 = vunpack.c.l.b16 %v3920
    %v4056 = vunpack.c.l.b16 %v3921
    %v4057 = vunpack.c.l.b16 %v3922
    %v4058 = vunpack.c.l.b16 %v3923
    %v4059 = vunpack.c.l.b16 %v3924
    %v4060 = vunpack.c.l.b16 %v3925
    %v4061 = vunpack.c.l.b16 %v3926
    %v4062 = vunpack.c.l.b16 %v3927
    %v4063 = vunpack.c.l.b16 %v3928
    %v4064 = vunpack.c.l.b16 %v3929
    %v4065 = vunpack.c.l.b16 %v3930
    %v4066 = vunpack.c.l.b16 %v3931
    %v4067 = vunpack.c.l.b16 %v3932
    %v4068 = vunpack.c.l.b16 %v3933
    %v4069 = vunpack.c.l.b16 %v3934
    %v4070 = vunpack.c.l.b16 %v3935
    %v4071 = vunpack.c.l.b16 %v3936
    %v4072 = vunpack.c.l.b16 %v3937
    %v4073 = vunpack.c.l.b16 %v3938
    %v4074 = vunpack.c.l.b16 %v3939
    %v4075 = vunpack.c.l.b16 %v3940
    %v4076 = vunpack.c.l.b16 %v3941
    %v4077 = vunpack.c.l.b16 %v3942
    %v4078 = vunpack.c.l.b16 %v3943
    %v4079 = vunpack.c.l.b16 %v3944
    %v4080 = vunpack.c.l.b16 %v3945
    %v4081 = vunpack.c.l.b16 %v3946
    %v4082 = vunpack.c.l.b16 %v3947
    %v4083 = vunpack.c.l.b16 %v3948
    %v4084 = vunpack.c.l.b16 %v3949
    %v4085 = vunpack.c.l.b16 %v3950
    %v4086 = vunpack.c.l.b16 %v3951
    %v4087 = vpack.c.b16 %v4024, %v4023
    %v4088 = vpack.c.b16 %v4026, %v4025
    %v4089 = vpack.c.b16 %v4028, %v4027
    %v4090 = vpack.c.b16 %v4030, %v4029
    %v4091 = vpack.c.b16 %v4032, %v4031
    %v4092 = vpack.c.b16 %v4034, %v4033
    %v4093 = vpack.c.b16 %v4036, %v4035
    %v4094 = vpack.c.b16 %v4038, %v4037
    %v4095 = vpack.c.b16 %v4040, %v4039
    %v4096 = vpack.c.b16 %v4042, %v4041
    %v4097 = vpack.c.b16 %v4044, %v4043
    %v4098 = vpack.c.b16 %v4046, %v4045
    %v4099 = vpack.c.b16 %v4048, %v4047
    %v4100 = vpack.c.b16 %v4050, %v4049
    %v4101 = vpack.c.b16 %v4052, %v4051
    %v4102 = vpack.c.b16 %v4054, %v4053
    %v4103 = vpack.c.b16 %v4056, %v4055
    %v4104 = vpack.c.b16 %v4058, %v4057
    %v4105 = vpack.c.b16 %v4060, %v4059
    %v4106 = vpack.c.b16 %v4062, %v4061
    %v4107 = vpack.c.b16 %v4064, %v4063
    %v4108 = vpack.c.b16 %v4066, %v4065
    %v4109 = vpack.c.b16 %v4068, %v4067
    %v4110 = vpack.c.b16 %v4070, %v4069
    %v4111 = vpack.c.b16 %v4072, %v4071
    %v4112 = vpack.c.b16 %v4074, %v4073
    %v4113 = vpack.c.b16 %v4076, %v4075
    %v4114 = vpack.c.b16 %v4078, %v4077
    %v4115 = vpack.c.b16 %v4080, %v4079
    %v4116 = vpack.c.b16 %v4082, %v4081
    %v4117 = vpack.c.b16 %v4084, %v4083
    %v4118 = vpack.c.b16 %v4086, %v4085
    %4151 = vmatprep.subr.bf16.mxu0 0
    %4152 = vmatpush1.bf16.msra.mxu0 %v4087
    %4153 = vmatprep.subr.bf16.mxu0 0
    %4154 = vmatpush1.bf16.msra.mxu0 %v4088
    %4155 = vmatprep.subr.bf16.mxu0 0
    %4156 = vmatpush1.bf16.msra.mxu0 %v4089
    %4157 = vmatprep.subr.bf16.mxu0 0
    %4158 = vmatpush1.bf16.msra.mxu0 %v4090
    %4159 = vmatprep.subr.bf16.mxu0 0
    %4160 = vmatpush1.bf16.msra.mxu0 %v4091
    %4161 = vmatprep.subr.bf16.mxu0 0
    %4162 = vmatpush1.bf16.msra.mxu0 %v4092
    %4163 = vmatprep.subr.bf16.mxu0 0
    %4164 = vmatpush1.bf16.msra.mxu0 %v4093
    %4165 = vmatprep.subr.bf16.mxu0 0
    %4166 = vmatpush1.bf16.msra.mxu0 %v4094
    %4167 = vmatprep.subr.bf16.mxu0 0
    %4168 = vmatpush1.bf16.msra.mxu0 %v4095
    %4169 = vmatprep.subr.bf16.mxu0 0
    %4170 = vmatpush1.bf16.msra.mxu0 %v4096
    %4171 = vmatprep.subr.bf16.mxu0 0
    %4172 = vmatpush1.bf16.msra.mxu0 %v4097
    %4173 = vmatprep.subr.bf16.mxu0 0
    %4174 = vmatpush1.bf16.msra.mxu0 %v4098
    %4175 = vmatprep.subr.bf16.mxu0 0
    %4176 = vmatpush1.bf16.msra.mxu0 %v4099
    %4177 = vmatprep.subr.bf16.mxu0 0
    %4178 = vmatpush1.bf16.msra.mxu0 %v4100
    %4179 = vmatprep.subr.bf16.mxu0 0
    %4180 = vmatpush1.bf16.msra.mxu0 %v4101
    %4181 = vmatprep.subr.bf16.mxu0 0
    %4182 = vmatpush1.bf16.msra.mxu0 %v4102
    %4183 = vmatprep.mubr.bf16.mxu0 %v3885
    %4184 = vmatmul.mubr.bf16.gmra.mrb[0].mxu0 %v3884
    %v4185 = vpop.f32.mrb[0].mxu0
    %v4186 = vadd.f32 %v3957, %v4185
    %v4187 = vpop.f32.mrb[0].mxu0
    %v4188 = vpop.f32.mrb[0].mxu0
    %v4189 = vpop.f32.mrb[0].mxu0
    %4190 = vdwg.mxu0
    %4191 = vmatprep.subr.bf16.mxu0 0
    %4192 = vmatpush1.bf16.msra.mxu0 %v4103
    %4193 = vmatprep.subr.bf16.mxu0 0
    %4194 = vmatpush1.bf16.msra.mxu0 %v4104
    %4195 = vmatprep.subr.bf16.mxu0 0
    %4196 = vmatpush1.bf16.msra.mxu0 %v4105
    %4197 = vmatprep.subr.bf16.mxu0 0
    %4198 = vmatpush1.bf16.msra.mxu0 %v4106
    %4199 = vmatprep.subr.bf16.mxu0 0
    %4200 = vmatpush1.bf16.msra.mxu0 %v4107
    %4201 = vmatprep.subr.bf16.mxu0 0
    %4202 = vmatpush1.bf16.msra.mxu0 %v4108
    %4203 = vmatprep.subr.bf16.mxu0 0
    %4204 = vmatpush1.bf16.msra.mxu0 %v4109
    %4205 = vmatprep.subr.bf16.mxu0 0
    %4206 = vmatpush1.bf16.msra.mxu0 %v4110
    %4207 = vmatprep.subr.bf16.mxu0 0
    %4208 = vmatpush1.bf16.msra.mxu0 %v4111
    %4209 = vmatprep.subr.bf16.mxu0 0
    %4210 = vmatpush1.bf16.msra.mxu0 %v4112
    %4211 = vmatprep.subr.bf16.mxu0 0
    %4212 = vmatpush1.bf16.msra.mxu0 %v4113
    %4213 = vmatprep.subr.bf16.mxu0 0
    %4214 = vmatpush1.bf16.msra.mxu0 %v4114
    %4215 = vmatprep.subr.bf16.mxu0 0
    %4216 = vmatpush1.bf16.msra.mxu0 %v4115
    %4217 = vmatprep.subr.bf16.mxu0 0
    %4218 = vmatpush1.bf16.msra.mxu0 %v4116
    %4219 = vmatprep.subr.bf16.mxu0 0
    %4220 = vmatpush1.bf16.msra.mxu0 %v4117
    %4221 = vmatprep.subr.bf16.mxu0 0
    %4222 = vmatpush1.bf16.msra.mxu0 %v4118
    %4223 = vmatprep.mubr.bf16.mxu0 %v3887
    %4224 = vmatmul.mubr.bf16.gmra.mrb[0].mxu0 %v3886
    %v4225 = vpop.f32.mrb[0].mxu0
    %v4226 = vadd.f32 %v4186, %v4225
    %v4227 = vpop.f32.mrb[0].mxu0
    %v4228 = vpop.f32.mrb[0].mxu0
    %v4229 = vpop.f32.mrb[0].mxu0
    %4230 = vdwg.mxu0
    %vm4231 = vcmask 74752
    %4232 = vst.msk [vmem:[#allocation2] sm:$0x3] %vm4231, %v4226
    // Predicated region
    $region22: #{simplenet_forward.3} parent=1 // pred_check
      _
    $region23: #{simplenet_forward.3} parent=1 // pred_check_branch
      %4234 = sbr.rel (0) target = $region25
    $region24: #{simplenet_forward.3} parent=1 // pred_region
      %s4236 = ssub.s32 32, 32
      %4237 = vsyncadd [#allocation3], %s4236
      %s4239 = sshll.u32 [#allocation2], 4
      %s4240 = int_to_ptr.vmem [resolvable:$true] %s4239
      %4242 = dma.vmem_to_hbm [thread:$0]  %s4240, 32, %s5, [#allocation3]
    $region25: #{simplenet_forward.3} parent=1 // pred_fallthru
      _
    // Predicated region
    $region26: #{simplenet_forward.3} parent=1 // pred_check
      _
    $region27: #{simplenet_forward.3} parent=1 // pred_check_branch
      %4244 = sbr.rel (0) target = $region29
    $region28: #{simplenet_forward.3} parent=1 // pred_region
      %4245 = dma.done [#allocation3], 32
    $region29: #{simplenet_forward.3} parent=1 // pred_fallthru
      _
    %4246 = vsyncpa [#allocation3], 1

// kernel: simplenet_forward.2
$region0: #{simplenet_forward.2}
  #allocation0 [shape = 'u32[]', space=smem, size = 0x4, offset = 0x4, fixed_abs, tag = 'smem constant byte address 0x4 - core index']
  #allocation1 [shape = 'u32[144,128]{1,0:T(1,128)}', space=vmem, size = 0x12000, scoped, tag = 'internal scratch']
  #allocation2 [shape = 'f32[18,18,128]{2,1,0:T(8,128)}', space=vmem, size = 0x36000, scoped, tag = 'scratch operand']
  #allocation3 [shape = 'f32[10,10,128]{2,1,0:T(8,128)}', space=vmem, size = 0x14000, scoped, tag = 'scratch operand']
  #allocation4 [shape = 'f32[10,10,128]{2,1,0:T(8,128)}', space=vmem, size = 0x14000, scoped, tag = 'scratch operand']
  #allocation5 [shape = 'f32[16,16,128]{2,1,0:T(8,128)}', space=vmem, size = 0x20000, scoped, tag = 'scratch operand']
  #allocation6 [shape = 'f32[8,8,128]{2,1,0:T(8,128)}', space=vmem, size = 0x8000, scoped, tag = 'scratch operand']
  %s0 = inlined_call_operand.vmem [shape: f32[2,16,16,128], index: 0, kind: input, shape index: {}]
  %s1 = inlined_call_operand.hbm [shape: bf16[1152,128], index: 1, kind: input, shape index: {}]
  %s2 = inlined_call_operand.hbm [shape: f32[1,128], index: 2, kind: input, shape index: {}]
  %s3 = inlined_call_operand.hbm [shape: f32[1,128], index: 3, kind: input, shape index: {}]
  %s4 = inlined_call_operand.hbm [shape: f32[1,128], index: 4, kind: input, shape index: {}]
  %s5 = inlined_call_operand.hbm [shape: f32[128,128], index: 5, kind: input, shape index: {}]
  %s6 = inlined_call_operand.hbm [shape: bf16[1152,128], index: 6, kind: input, shape index: {}]
  %s7 = inlined_call_operand.hbm [shape: f32[1,128], index: 7, kind: input, shape index: {}]
  %s8 = inlined_call_operand.hbm [shape: bf16[1152,128], index: 8, kind: input, shape index: {}]
  %s9 = inlined_call_operand.hbm [shape: f32[1,128], index: 9, kind: input, shape index: {}]
  %s10 = inlined_call_operand.hbm [shape: f32[1,128], index: 10, kind: input, shape index: {}]
  %s11 = inlined_call_operand.hbm [shape: f32[1,128], index: 11, kind: input, shape index: {}]
  %s12 = inlined_call_operand.hbm [shape: f32[128,128], index: 12, kind: input, shape index: {}]
  %s13 = inlined_call_operand.vmem [shape: f32[2,16,128], index: 13, kind: output, shape index: {}]
  %s14 = sld [smem:[#allocation0]]
  $region133: #{simplenet_forward.2} parent=0
    _
  %s16 = ssub.s32 1, %s14
  %s17 = scalar_select 0, %s16, %s14
  $region1: #{simplenet_forward.2} parent=0
    #allocation7 [shape = 'u8[294912]{0}', space=vmem, size = 0x48000, scoped, tag = 'input window, operand 1, single buffered']
    #allocation8 [shape = 's32[2]{0}', space=sflag, size = 0x8, scoped, tag = 'scoped memory for simplenet_forward.2']
    #allocation9 [shape = 'u8[512]{0}', space=vmem, size = 0x400, scoped, tag = 'input window, operand 2, single buffered']
    #allocation10 [shape = 's32[1]{0}', space=sflag, size = 0x4, scoped, tag = 'scoped memory for simplenet_forward.2']
    #allocation11 [shape = 'u8[512]{0}', space=vmem, size = 0x400, scoped, tag = 'input window, operand 3, single buffered']
    #allocation12 [shape = 'u8[512]{0}', space=vmem, size = 0x400, scoped, tag = 'input window, operand 4, single buffered']
    #allocation13 [shape = 's32[1]{0}', space=sflag, size = 0x4, scoped, tag = 'scoped memory for simplenet_forward.2']
    #allocation14 [shape = 'u8[65536]{0}', space=vmem, size = 0x10000, scoped, tag = 'input window, operand 5, single buffered']
    #allocation15 [shape = 'u8[294912]{0}', space=vmem, size = 0x48000, scoped, tag = 'input window, operand 6, single buffered']
    #allocation16 [shape = 's32[1]{0}', space=sflag, size = 0x4, scoped, tag = 'scoped memory for simplenet_forward.2']
    #allocation17 [shape = 'u8[512]{0}', space=vmem, size = 0x400, scoped, tag = 'input window, operand 7, single buffered']
    #allocation18 [shape = 'u8[294912]{0}', space=vmem, size = 0x48000, scoped, tag = 'input window, operand 8, single buffered']
    #allocation19 [shape = 's32[1]{0}', space=sflag, size = 0x4, scoped, tag = 'scoped memory for simplenet_forward.2']
    #allocation20 [shape = 'u8[512]{0}', space=vmem, size = 0x400, scoped, tag = 'input window, operand 9, single buffered']
    #allocation21 [shape = 'u8[512]{0}', space=vmem, size = 0x400, scoped, tag = 'input window, operand 10, single buffered']
    #allocation22 [shape = 's32[1]{0}', space=sflag, size = 0x4, scoped, tag = 'scoped memory for simplenet_forward.2']
    #allocation23 [shape = 'u8[512]{0}', space=vmem, size = 0x400, scoped, tag = 'input window, operand 11, single buffered']
    #allocation24 [shape = 'u8[65536]{0}', space=vmem, size = 0x10000, scoped, tag = 'input window, operand 12, single buffered']
    #allocation25 [shape = 's32[1]{0}', space=sflag, size = 0x4, scoped, tag = 'scoped memory for simplenet_forward.2']
    %18 = vsyncpa [#allocation8], 0
    %19 = vsyncpa [#allocation10], 0
    %20 = vsyncpa [#allocation13], 0
    %21 = vsyncpa [#allocation16], 0
    %22 = vsyncpa [#allocation19], 0
    %23 = vsyncpa [#allocation22], 0
    %24 = vsyncpa [#allocation25], 0
    loop: start=0, step=1, limit=4
    $region2: #{simplenet_forward.2} parent=1 // loop_pre_header
      _
    $region3: #{simplenet_forward.2} parent=1 // loop_header
      %s26 = sphi 0, %s30
      %p27 = scmp.ge.s32.totalorder %s26, 4
      %s36 = sphi 0, %s38
      %s39 = sphi 0, %s36
      %s40 = sphi 0, %s39
      %s56 = sphi 0, %s40
      %s60 = sphi 0, %s60
      %s62 = sphi 0, %s60
      %s63 = sphi 0, %s62
      %s77 = sphi 0, %s63
      %s81 = sphi 0, %s81
      %s83 = sphi 0, %s81
      %s84 = sphi 0, %s83
      %s98 = sphi 0, %s84
      %s102 = sphi 0, %s102
      %s104 = sphi 0, %s102
      %s105 = sphi 0, %s104
      %s119 = sphi 0, %s105
      %s123 = sphi 0, %s123
      %s125 = sphi 0, %s123
      %s126 = sphi 0, %s125
      %s140 = sphi 0, %s126
      %s144 = sphi 0, %s144
      %s146 = sphi 0, %s144
      %s147 = sphi 0, %s146
      %s161 = sphi 0, %s147
      %s165 = sphi 0, %s165
      %s167 = sphi 0, %s165
      %s168 = sphi 0, %s167
      %s182 = sphi 0, %s168
      %s186 = sphi 0, %s186
      %s188 = sphi 0, %s186
      %s189 = sphi 0, %s188
      %s203 = sphi 0, %s189
      %s207 = sphi 0, %s207
      %s209 = sphi 0, %s207
      %s210 = sphi 0, %s209
      %s224 = sphi 0, %s210
      %s228 = sphi 0, %s228
      %s230 = sphi 0, %s228
      %s231 = sphi 0, %s230
      %s245 = sphi 0, %s231
      %s249 = sphi 0, %s249
      %s251 = sphi 0, %s249
      %s252 = sphi 0, %s251
      %s266 = sphi 0, %s252
      %s270 = sphi 0, %s270
      %s272 = sphi 0, %s270
      %s273 = sphi 0, %s272
      %s287 = sphi 0, %s273
      %s291 = sphi 0, %s291
      %s293 = sphi 0, %s291
      %s294 = sphi 0, %s293
      %s308 = sphi 0, %s294
      %s314 = sphi 0, %s316
      %s317 = sphi 0, %s314
      %s318 = sphi 0, %s317
      %s334 = sphi 0, %s318
    $region4: #{simplenet_forward.2} parent=1 // loop_header_branch
      %29 = sbr.rel (%p27) target = $region8
    $region5: #{simplenet_forward.2} parent=1 // loop_body
      %s31 = ssub.s32 %s26, 1
      %s32 = ssub.s32 %s26, 2
      %s33 = sadd.s32 %s26, 1
      %s34 = ssub.s32 %s26, %s33
      %p35 = scmp.eq.s32.totalorder %s34, 0
      %s37 = sadd.s32 %s36, 1
      %s38 = scalar_select %p35, %s36, %s37
      %p41 = pneg %p35
      %p42 = scmp.eq.s32.totalorder %s26, 1
      %p43 = por %p41, %p42
      %p44 = scmp.ne.s32.totalorder %s36, %s39
      %p45 = scmp.eq.s32.totalorder %s26, 0
      %p46 = por %p44, %p45
      %p47 = scmp.ne.s32.totalorder %s36, %s39
      %p48 = scmp.eq.s32.totalorder %s31, 1
      %p49 = por %p47, %p48
      %p50 = scmp.ne.s32.totalorder %s39, %s40
      %p51 = scmp.eq.s32.totalorder %s31, 0
      %p52 = por %p50, %p51
      %p53 = scmp.ne.s32.totalorder %s39, %s40
      %p54 = scmp.eq.s32.totalorder %s32, 1
      %p55 = por %p53, %p54
      %p57 = scmp.ne.s32.totalorder %s40, %s56
      %p58 = scmp.eq.s32.totalorder %s32, 0
      %p59 = por %p57, %p58
      %s61 = sadd.s32 %s60, 1
      %p64 = scmp.eq.s32.totalorder %s26, 1
      %p65 = scmp.ne.s32.totalorder %s60, %s62
      %p66 = scmp.eq.s32.totalorder %s26, 0
      %p67 = por %p65, %p66
      %p68 = scmp.ne.s32.totalorder %s60, %s62
      %p69 = scmp.eq.s32.totalorder %s31, 1
      %p70 = por %p68, %p69
      %p71 = scmp.ne.s32.totalorder %s62, %s63
      %p72 = scmp.eq.s32.totalorder %s31, 0
      %p73 = por %p71, %p72
      %p74 = scmp.ne.s32.totalorder %s62, %s63
      %p75 = scmp.eq.s32.totalorder %s32, 1
      %p76 = por %p74, %p75
      %p78 = scmp.ne.s32.totalorder %s63, %s77
      %p79 = scmp.eq.s32.totalorder %s32, 0
      %p80 = por %p78, %p79
      %s82 = sadd.s32 %s81, 1
      %p85 = scmp.eq.s32.totalorder %s26, 1
      %p86 = scmp.ne.s32.totalorder %s81, %s83
      %p87 = scmp.eq.s32.totalorder %s26, 0
      %p88 = por %p86, %p87
      %p89 = scmp.ne.s32.totalorder %s81, %s83
      %p90 = scmp.eq.s32.totalorder %s31, 1
      %p91 = por %p89, %p90
      %p92 = scmp.ne.s32.totalorder %s83, %s84
      %p93 = scmp.eq.s32.totalorder %s31, 0
      %p94 = por %p92, %p93
      %p95 = scmp.ne.s32.totalorder %s83, %s84
      %p96 = scmp.eq.s32.totalorder %s32, 1
      %p97 = por %p95, %p96
      %p99 = scmp.ne.s32.totalorder %s84, %s98
      %p100 = scmp.eq.s32.totalorder %s32, 0
      %p101 = por %p99, %p100
      %s103 = sadd.s32 %s102, 1
      %p106 = scmp.eq.s32.totalorder %s26, 1
      %p107 = scmp.ne.s32.totalorder %s102, %s104
      %p108 = scmp.eq.s32.totalorder %s26, 0
      %p109 = por %p107, %p108
      %p110 = scmp.ne.s32.totalorder %s102, %s104
      %p111 = scmp.eq.s32.totalorder %s31, 1
      %p112 = por %p110, %p111
      %p113 = scmp.ne.s32.totalorder %s104, %s105
      %p114 = scmp.eq.s32.totalorder %s31, 0
      %p115 = por %p113, %p114
      %p116 = scmp.ne.s32.totalorder %s104, %s105
      %p117 = scmp.eq.s32.totalorder %s32, 1
      %p118 = por %p116, %p117
      %p120 = scmp.ne.s32.totalorder %s105, %s119
      %p121 = scmp.eq.s32.totalorder %s32, 0
      %p122 = por %p120, %p121
      %s124 = sadd.s32 %s123, 1
      %p127 = scmp.eq.s32.totalorder %s26, 1
      %p128 = scmp.ne.s32.totalorder %s123, %s125
      %p129 = scmp.eq.s32.totalorder %s26, 0
      %p130 = por %p128, %p129
      %p131 = scmp.ne.s32.totalorder %s123, %s125
      %p132 = scmp.eq.s32.totalorder %s31, 1
      %p133 = por %p131, %p132
      %p134 = scmp.ne.s32.totalorder %s125, %s126
      %p135 = scmp.eq.s32.totalorder %s31, 0
      %p136 = por %p134, %p135
      %p137 = scmp.ne.s32.totalorder %s125, %s126
      %p138 = scmp.eq.s32.totalorder %s32, 1
      %p139 = por %p137, %p138
      %p141 = scmp.ne.s32.totalorder %s126, %s140
      %p142 = scmp.eq.s32.totalorder %s32, 0
      %p143 = por %p141, %p142
      %s145 = sadd.s32 %s144, 1
      %p148 = scmp.eq.s32.totalorder %s26, 1
      %p149 = scmp.ne.s32.totalorder %s144, %s146
      %p150 = scmp.eq.s32.totalorder %s26, 0
      %p151 = por %p149, %p150
      %p152 = scmp.ne.s32.totalorder %s144, %s146
      %p153 = scmp.eq.s32.totalorder %s31, 1
      %p154 = por %p152, %p153
      %p155 = scmp.ne.s32.totalorder %s146, %s147
      %p156 = scmp.eq.s32.totalorder %s31, 0
      %p157 = por %p155, %p156
      %p158 = scmp.ne.s32.totalorder %s146, %s147
      %p159 = scmp.eq.s32.totalorder %s32, 1
      %p160 = por %p158, %p159
      %p162 = scmp.ne.s32.totalorder %s147, %s161
      %p163 = scmp.eq.s32.totalorder %s32, 0
      %p164 = por %p162, %p163
      %s166 = sadd.s32 %s165, 1
      %p169 = scmp.eq.s32.totalorder %s26, 1
      %p170 = scmp.ne.s32.totalorder %s165, %s167
      %p171 = scmp.eq.s32.totalorder %s26, 0
      %p172 = por %p170, %p171
      %p173 = scmp.ne.s32.totalorder %s165, %s167
      %p174 = scmp.eq.s32.totalorder %s31, 1
      %p175 = por %p173, %p174
      %p176 = scmp.ne.s32.totalorder %s167, %s168
      %p177 = scmp.eq.s32.totalorder %s31, 0
      %p178 = por %p176, %p177
      %p179 = scmp.ne.s32.totalorder %s167, %s168
      %p180 = scmp.eq.s32.totalorder %s32, 1
      %p181 = por %p179, %p180
      %p183 = scmp.ne.s32.totalorder %s168, %s182
      %p184 = scmp.eq.s32.totalorder %s32, 0
      %p185 = por %p183, %p184
      %s187 = sadd.s32 %s186, 1
      %p190 = scmp.eq.s32.totalorder %s26, 1
      %p191 = scmp.ne.s32.totalorder %s186, %s188
      %p192 = scmp.eq.s32.totalorder %s26, 0
      %p193 = por %p191, %p192
      %p194 = scmp.ne.s32.totalorder %s186, %s188
      %p195 = scmp.eq.s32.totalorder %s31, 1
      %p196 = por %p194, %p195
      %p197 = scmp.ne.s32.totalorder %s188, %s189
      %p198 = scmp.eq.s32.totalorder %s31, 0
      %p199 = por %p197, %p198
      %p200 = scmp.ne.s32.totalorder %s188, %s189
      %p201 = scmp.eq.s32.totalorder %s32, 1
      %p202 = por %p200, %p201
      %p204 = scmp.ne.s32.totalorder %s189, %s203
      %p205 = scmp.eq.s32.totalorder %s32, 0
      %p206 = por %p204, %p205
      %s208 = sadd.s32 %s207, 1
      %p211 = scmp.eq.s32.totalorder %s26, 1
      %p212 = scmp.ne.s32.totalorder %s207, %s209
      %p213 = scmp.eq.s32.totalorder %s26, 0
      %p214 = por %p212, %p213
      %p215 = scmp.ne.s32.totalorder %s207, %s209
      %p216 = scmp.eq.s32.totalorder %s31, 1
      %p217 = por %p215, %p216
      %p218 = scmp.ne.s32.totalorder %s209, %s210
      %p219 = scmp.eq.s32.totalorder %s31, 0
      %p220 = por %p218, %p219
      %p221 = scmp.ne.s32.totalorder %s209, %s210
      %p222 = scmp.eq.s32.totalorder %s32, 1
      %p223 = por %p221, %p222
      %p225 = scmp.ne.s32.totalorder %s210, %s224
      %p226 = scmp.eq.s32.totalorder %s32, 0
      %p227 = por %p225, %p226
      %s229 = sadd.s32 %s228, 1
      %p232 = scmp.eq.s32.totalorder %s26, 1
      %p233 = scmp.ne.s32.totalorder %s228, %s230
      %p234 = scmp.eq.s32.totalorder %s26, 0
      %p235 = por %p233, %p234
      %p236 = scmp.ne.s32.totalorder %s228, %s230
      %p237 = scmp.eq.s32.totalorder %s31, 1
      %p238 = por %p236, %p237
      %p239 = scmp.ne.s32.totalorder %s230, %s231
      %p240 = scmp.eq.s32.totalorder %s31, 0
      %p241 = por %p239, %p240
      %p242 = scmp.ne.s32.totalorder %s230, %s231
      %p243 = scmp.eq.s32.totalorder %s32, 1
      %p244 = por %p242, %p243
      %p246 = scmp.ne.s32.totalorder %s231, %s245
      %p247 = scmp.eq.s32.totalorder %s32, 0
      %p248 = por %p246, %p247
      %s250 = sadd.s32 %s249, 1
      %p253 = scmp.eq.s32.totalorder %s26, 1
      %p254 = scmp.ne.s32.totalorder %s249, %s251
      %p255 = scmp.eq.s32.totalorder %s26, 0
      %p256 = por %p254, %p255
      %p257 = scmp.ne.s32.totalorder %s249, %s251
      %p258 = scmp.eq.s32.totalorder %s31, 1
      %p259 = por %p257, %p258
      %p260 = scmp.ne.s32.totalorder %s251, %s252
      %p261 = scmp.eq.s32.totalorder %s31, 0
      %p262 = por %p260, %p261
      %p263 = scmp.ne.s32.totalorder %s251, %s252
      %p264 = scmp.eq.s32.totalorder %s32, 1
      %p265 = por %p263, %p264
      %p267 = scmp.ne.s32.totalorder %s252, %s266
      %p268 = scmp.eq.s32.totalorder %s32, 0
      %p269 = por %p267, %p268
      %s271 = sadd.s32 %s270, 1
      %p274 = scmp.eq.s32.totalorder %s26, 1
      %p275 = scmp.ne.s32.totalorder %s270, %s272
      %p276 = scmp.eq.s32.totalorder %s26, 0
      %p277 = por %p275, %p276
      %p278 = scmp.ne.s32.totalorder %s270, %s272
      %p279 = scmp.eq.s32.totalorder %s31, 1
      %p280 = por %p278, %p279
      %p281 = scmp.ne.s32.totalorder %s272, %s273
      %p282 = scmp.eq.s32.totalorder %s31, 0
      %p283 = por %p281, %p282
      %p284 = scmp.ne.s32.totalorder %s272, %s273
      %p285 = scmp.eq.s32.totalorder %s32, 1
      %p286 = por %p284, %p285
      %p288 = scmp.ne.s32.totalorder %s273, %s287
      %p289 = scmp.eq.s32.totalorder %s32, 0
      %p290 = por %p288, %p289
      %s292 = sadd.s32 %s291, 1
      %p295 = scmp.eq.s32.totalorder %s26, 1
      %p296 = scmp.ne.s32.totalorder %s291, %s293
      %p297 = scmp.eq.s32.totalorder %s26, 0
      %p298 = por %p296, %p297
      %p299 = scmp.ne.s32.totalorder %s291, %s293
      %p300 = scmp.eq.s32.totalorder %s31, 1
      %p301 = por %p299, %p300
      %p302 = scmp.ne.s32.totalorder %s293, %s294
      %p303 = scmp.eq.s32.totalorder %s31, 0
      %p304 = por %p302, %p303
      %p305 = scmp.ne.s32.totalorder %s293, %s294
      %p306 = scmp.eq.s32.totalorder %s32, 1
      %p307 = por %p305, %p306
      %p309 = scmp.ne.s32.totalorder %s294, %s308
      %p310 = scmp.eq.s32.totalorder %s32, 0
      %p311 = por %p309, %p310
      %s312 = ssub.s32 %s26, %s33
      %p313 = scmp.eq.s32.totalorder %s312, 0
      %s315 = sadd.s32 %s314, 1
      %s316 = scalar_select %p313, %s314, %s315
      %p319 = pneg %p313
      %p320 = scmp.eq.s32.totalorder %s26, 1
      %p321 = por %p319, %p320
      %p322 = scmp.ne.s32.totalorder %s314, %s317
      %p323 = scmp.eq.s32.totalorder %s26, 0
      %p324 = por %p322, %p323
      %p325 = scmp.ne.s32.totalorder %s314, %s317
      %p326 = scmp.eq.s32.totalorder %s31, 1
      %p327 = por %p325, %p326
      %p328 = scmp.ne.s32.totalorder %s317, %s318
      %p329 = scmp.eq.s32.totalorder %s31, 0
      %p330 = por %p328, %p329
      %p331 = scmp.ne.s32.totalorder %s317, %s318
      %p332 = scmp.eq.s32.totalorder %s32, 1
      %p333 = por %p331, %p332
      %p335 = scmp.ne.s32.totalorder %s318, %s334
      %p336 = scmp.eq.s32.totalorder %s32, 0
      %p337 = por %p335, %p336
      %p338 = scmp.le.s32.totalorder 1, %s26
      %p339 = scmp.lt.s32.totalorder %s26, 3
      %p340 = pnand %p338, %p339
      %p341 = pneg %p340
      // Predicated region
      $region9: #{simplenet_forward.2} parent=5 // pred_check
        _
      $region10: #{simplenet_forward.2} parent=5 // pred_check_branch
        %343 = sbr.rel (%p340) target = $region12
      $region11: #{simplenet_forward.2} parent=5 // pred_region
        %s344 = ssub.s32 %s26, 1
        // Predicated region
        $region13: #{simplenet_forward.2} parent=11 // pred_check
          %p345 = pneg %p73
        $region14: #{simplenet_forward.2} parent=11 // pred_check_branch
          %347 = sbr.rel (%p345) target = $region16
        $region15: #{simplenet_forward.2} parent=11 // pred_region
          %s349 = ssub.s32 9216, 9216
          %350 = vsyncadd [#allocation8], %s349
          %s351 = sshll.u32 [#allocation7], 4
          %s352 = int_to_ptr.vmem [resolvable:$true] %s351
          %357 = dma.hbm_to_vmem [thread:$0]  %s1, 9216, %s352, [#allocation8], 64, 64, 4
        $region16: #{simplenet_forward.2} parent=11 // pred_fallthru
          _
        // Predicated region
        $region17: #{simplenet_forward.2} parent=11 // pred_check
          %p358 = pneg %p94
        $region18: #{simplenet_forward.2} parent=11 // pred_check_branch
          %360 = sbr.rel (%p358) target = $region20
        $region19: #{simplenet_forward.2} parent=11 // pred_region
          %s362 = ssub.s32 16, 16
          %363 = vsyncadd [#allocation10], %s362
          %s365 = sshll.u32 [#allocation9], 4
          %s366 = int_to_ptr.vmem [resolvable:$true] %s365
          %368 = dma.hbm_to_vmem [thread:$0]  %s2, 16, %s366, [#allocation10]
        $region20: #{simplenet_forward.2} parent=11 // pred_fallthru
          _
        // Predicated region
        $region21: #{simplenet_forward.2} parent=11 // pred_check
          %p369 = pneg %p115
        $region22: #{simplenet_forward.2} parent=11 // pred_check_branch
          %371 = sbr.rel (%p369) target = $region24
        $region23: #{simplenet_forward.2} parent=11 // pred_region
          %s373 = ssub.s32 16, 16
          %374 = vsyncadd [#allocation10], %s373
          %s376 = sshll.u32 [#allocation11], 4
          %s377 = int_to_ptr.vmem [resolvable:$true] %s376
          %379 = dma.hbm_to_vmem [thread:$0]  %s3, 16, %s377, [#allocation10]
        $region24: #{simplenet_forward.2} parent=11 // pred_fallthru
          _
        // Predicated region
        $region25: #{simplenet_forward.2} parent=11 // pred_check
          %p380 = pneg %p136
        $region26: #{simplenet_forward.2} parent=11 // pred_check_branch
          %382 = sbr.rel (%p380) target = $region28
        $region27: #{simplenet_forward.2} parent=11 // pred_region
          %s384 = ssub.s32 16, 16
          %385 = vsyncadd [#allocation13], %s384
          %s387 = sshll.u32 [#allocation12], 4
          %s388 = int_to_ptr.vmem [resolvable:$true] %s387
          %390 = dma.hbm_to_vmem [thread:$0]  %s4, 16, %s388, [#allocation13]
        $region28: #{simplenet_forward.2} parent=11 // pred_fallthru
          _
        // Predicated region
        $region29: #{simplenet_forward.2} parent=11 // pred_check
          %p391 = pneg %p157
        $region30: #{simplenet_forward.2} parent=11 // pred_check_branch
          %393 = sbr.rel (%p391) target = $region32
        $region31: #{simplenet_forward.2} parent=11 // pred_region
          %s395 = ssub.s32 2048, 2048
          %396 = vsyncadd [#allocation13], %s395
          %s397 = sshll.u32 [#allocation14], 4
          %s398 = int_to_ptr.vmem [resolvable:$true] %s397
          %403 = dma.hbm_to_vmem [thread:$0]  %s5, 2048, %s398, [#allocation13], 128, 128, 8
        $region32: #{simplenet_forward.2} parent=11 // pred_fallthru
          _
        // Predicated region
        $region33: #{simplenet_forward.2} parent=11 // pred_check
          %p404 = pneg %p178
        $region34: #{simplenet_forward.2} parent=11 // pred_check_branch
          %406 = sbr.rel (%p404) target = $region36
        $region35: #{simplenet_forward.2} parent=11 // pred_region
          %s408 = ssub.s32 9216, 9216
          %409 = vsyncadd [#allocation16], %s408
          %s410 = sshll.u32 [#allocation15], 4
          %s411 = int_to_ptr.vmem [resolvable:$true] %s410
          %416 = dma.hbm_to_vmem [thread:$0]  %s6, 9216, %s411, [#allocation16], 64, 64, 4
        $region36: #{simplenet_forward.2} parent=11 // pred_fallthru
          _
        // Predicated region
        $region37: #{simplenet_forward.2} parent=11 // pred_check
          %p417 = pneg %p199
        $region38: #{simplenet_forward.2} parent=11 // pred_check_branch
          %419 = sbr.rel (%p417) target = $region40
        $region39: #{simplenet_forward.2} parent=11 // pred_region
          %s421 = ssub.s32 16, 16
          %422 = vsyncadd [#allocation16], %s421
          %s424 = sshll.u32 [#allocation17], 4
          %s425 = int_to_ptr.vmem [resolvable:$true] %s424
          %427 = dma.hbm_to_vmem [thread:$0]  %s7, 16, %s425, [#allocation16]
        $region40: #{simplenet_forward.2} parent=11 // pred_fallthru
          _
        // Predicated region
        $region41: #{simplenet_forward.2} parent=11 // pred_check
          %p428 = pneg %p220
        $region42: #{simplenet_forward.2} parent=11 // pred_check_branch
          %430 = sbr.rel (%p428) target = $region44
        $region43: #{simplenet_forward.2} parent=11 // pred_region
          %s432 = ssub.s32 9216, 9216
          %433 = vsyncadd [#allocation19], %s432
          %s434 = sshll.u32 [#allocation18], 4
          %s435 = int_to_ptr.vmem [resolvable:$true] %s434
          %440 = dma.hbm_to_vmem [thread:$0]  %s8, 9216, %s435, [#allocation19], 64, 64, 4
        $region44: #{simplenet_forward.2} parent=11 // pred_fallthru
          _
        // Predicated region
        $region45: #{simplenet_forward.2} parent=11 // pred_check
          %p441 = pneg %p241
        $region46: #{simplenet_forward.2} parent=11 // pred_check_branch
          %443 = sbr.rel (%p441) target = $region48
        $region47: #{simplenet_forward.2} parent=11 // pred_region
          %s445 = ssub.s32 16, 16
          %446 = vsyncadd [#allocation19], %s445
          %s448 = sshll.u32 [#allocation20], 4
          %s449 = int_to_ptr.vmem [resolvable:$true] %s448
          %451 = dma.hbm_to_vmem [thread:$0]  %s9, 16, %s449, [#allocation19]
        $region48: #{simplenet_forward.2} parent=11 // pred_fallthru
          _
        // Predicated region
        $region49: #{simplenet_forward.2} parent=11 // pred_check
          %p452 = pneg %p262
        $region50: #{simplenet_forward.2} parent=11 // pred_check_branch
          %454 = sbr.rel (%p452) target = $region52
        $region51: #{simplenet_forward.2} parent=11 // pred_region
          %s456 = ssub.s32 16, 16
          %457 = vsyncadd [#allocation22], %s456
          %s459 = sshll.u32 [#allocation21], 4
          %s460 = int_to_ptr.vmem [resolvable:$true] %s459
          %462 = dma.hbm_to_vmem [thread:$0]  %s10, 16, %s460, [#allocation22]
        $region52: #{simplenet_forward.2} parent=11 // pred_fallthru
          _
        // Predicated region
        $region53: #{simplenet_forward.2} parent=11 // pred_check
          %p463 = pneg %p283
        $region54: #{simplenet_forward.2} parent=11 // pred_check_branch
          %465 = sbr.rel (%p463) target = $region56
        $region55: #{simplenet_forward.2} parent=11 // pred_region
          %s467 = ssub.s32 16, 16
          %468 = vsyncadd [#allocation22], %s467
          %s470 = sshll.u32 [#allocation23], 4
          %s471 = int_to_ptr.vmem [resolvable:$true] %s470
          %473 = dma.hbm_to_vmem [thread:$0]  %s11, 16, %s471, [#allocation22]
        $region56: #{simplenet_forward.2} parent=11 // pred_fallthru
          _
        // Predicated region
        $region57: #{simplenet_forward.2} parent=11 // pred_check
          %p474 = pneg %p304
        $region58: #{simplenet_forward.2} parent=11 // pred_check_branch
          %476 = sbr.rel (%p474) target = $region60
        $region59: #{simplenet_forward.2} parent=11 // pred_region
          %s478 = ssub.s32 2048, 2048
          %479 = vsyncadd [#allocation25], %s478
          %s480 = sshll.u32 [#allocation24], 4
          %s481 = int_to_ptr.vmem [resolvable:$true] %s480
          %486 = dma.hbm_to_vmem [thread:$0]  %s12, 2048, %s481, [#allocation25], 128, 128, 8
        $region60: #{simplenet_forward.2} parent=11 // pred_fallthru
          _
      $region12: #{simplenet_forward.2} parent=5 // pred_fallthru
        _
      %p487 = scmp.lt.s32.totalorder %s26, 2
      // Predicated region
      $region61: #{simplenet_forward.2} parent=5 // pred_check
        %p488 = pneg %p487
      $region62: #{simplenet_forward.2} parent=5 // pred_check_branch
        %490 = sbr.rel (%p488) target = $region64
      $region63: #{simplenet_forward.2} parent=5 // pred_region
        // Predicated region
        $region65: #{simplenet_forward.2} parent=63 // pred_check
          %p491 = pneg %p46
        $region66: #{simplenet_forward.2} parent=63 // pred_check_branch
          %493 = sbr.rel (%p491) target = $region68
        $region67: #{simplenet_forward.2} parent=63 // pred_region
          %p494 = scmp.lt.s32.totalorder %s26, 1
          %s495 = scalar_select %p494, %s26, 1
          %s496 = smul.addr %s495, 32
          %s497 = smul.addr %s496, 8
          %s498 = scalar_lea.vmem %s0, %s497
        $region68: #{simplenet_forward.2} parent=63 // pred_fallthru
          _
      $region64: #{simplenet_forward.2} parent=5 // pred_fallthru
        _
      %p499 = scmp.le.s32.totalorder 1, %s26
      %p500 = scmp.lt.s32.totalorder %s26, 3
      %p501 = pnand %p499, %p500
      %p502 = pneg %p501
      // Predicated region
      $region69: #{simplenet_forward.2} parent=5 // pred_check
        _
      $region70: #{simplenet_forward.2} parent=5 // pred_check_branch
        %504 = sbr.rel (%p501) target = $region72
      $region71: #{simplenet_forward.2} parent=5 // pred_region
        %s505 = ssub.s32 %s26, 1
        // Predicated region
        $region73: #{simplenet_forward.2} parent=71 // pred_check
          %p506 = pneg %p73
        $region74: #{simplenet_forward.2} parent=71 // pred_check_branch
          %508 = sbr.rel (%p506) target = $region76
        $region75: #{simplenet_forward.2} parent=71 // pred_region
          %509 = dma.done [#allocation8], 9216
        $region76: #{simplenet_forward.2} parent=71 // pred_fallthru
          _
        // Predicated region
        $region77: #{simplenet_forward.2} parent=71 // pred_check
          %p510 = pneg %p94
        $region78: #{simplenet_forward.2} parent=71 // pred_check_branch
          %512 = sbr.rel (%p510) target = $region80
        $region79: #{simplenet_forward.2} parent=71 // pred_region
          %513 = dma.done [#allocation10], 16
        $region80: #{simplenet_forward.2} parent=71 // pred_fallthru
          _
        // Predicated region
        $region81: #{simplenet_forward.2} parent=71 // pred_check
          %p514 = pneg %p115
        $region82: #{simplenet_forward.2} parent=71 // pred_check_branch
          %516 = sbr.rel (%p514) target = $region84
        $region83: #{simplenet_forward.2} parent=71 // pred_region
          %517 = dma.done [#allocation10], 16
        $region84: #{simplenet_forward.2} parent=71 // pred_fallthru
          _
        // Predicated region
        $region85: #{simplenet_forward.2} parent=71 // pred_check
          %p518 = pneg %p136
        $region86: #{simplenet_forward.2} parent=71 // pred_check_branch
          %520 = sbr.rel (%p518) target = $region88
        $region87: #{simplenet_forward.2} parent=71 // pred_region
          %521 = dma.done [#allocation13], 16
        $region88: #{simplenet_forward.2} parent=71 // pred_fallthru
          _
        // Predicated region
        $region89: #{simplenet_forward.2} parent=71 // pred_check
          %p522 = pneg %p157
        $region90: #{simplenet_forward.2} parent=71 // pred_check_branch
          %524 = sbr.rel (%p522) target = $region92
        $region91: #{simplenet_forward.2} parent=71 // pred_region
          %525 = dma.done [#allocation13], 2048
        $region92: #{simplenet_forward.2} parent=71 // pred_fallthru
          _
        // Predicated region
        $region93: #{simplenet_forward.2} parent=71 // pred_check
          %p526 = pneg %p178
        $region94: #{simplenet_forward.2} parent=71 // pred_check_branch
          %528 = sbr.rel (%p526) target = $region96
        $region95: #{simplenet_forward.2} parent=71 // pred_region
          %529 = dma.done [#allocation16], 9216
        $region96: #{simplenet_forward.2} parent=71 // pred_fallthru
          _
        // Predicated region
        $region97: #{simplenet_forward.2} parent=71 // pred_check
          %p530 = pneg %p199
        $region98: #{simplenet_forward.2} parent=71 // pred_check_branch
          %532 = sbr.rel (%p530) target = $region100
        $region99: #{simplenet_forward.2} parent=71 // pred_region
          %533 = dma.done [#allocation16], 16
        $region100: #{simplenet_forward.2} parent=71 // pred_fallthru
          _
        // Predicated region
        $region101: #{simplenet_forward.2} parent=71 // pred_check
          %p534 = pneg %p220
        $region102: #{simplenet_forward.2} parent=71 // pred_check_branch
          %536 = sbr.rel (%p534) target = $region104
        $region103: #{simplenet_forward.2} parent=71 // pred_region
          %537 = dma.done [#allocation19], 9216
        $region104: #{simplenet_forward.2} parent=71 // pred_fallthru
          _
        // Predicated region
        $region105: #{simplenet_forward.2} parent=71 // pred_check
          %p538 = pneg %p241
        $region106: #{simplenet_forward.2} parent=71 // pred_check_branch
          %540 = sbr.rel (%p538) target = $region108
        $region107: #{simplenet_forward.2} parent=71 // pred_region
          %541 = dma.done [#allocation19], 16
        $region108: #{simplenet_forward.2} parent=71 // pred_fallthru
          _
        // Predicated region
        $region109: #{simplenet_forward.2} parent=71 // pred_check
          %p542 = pneg %p262
        $region110: #{simplenet_forward.2} parent=71 // pred_check_branch
          %544 = sbr.rel (%p542) target = $region112
        $region111: #{simplenet_forward.2} parent=71 // pred_region
          %545 = dma.done [#allocation22], 16
        $region112: #{simplenet_forward.2} parent=71 // pred_fallthru
          _
        // Predicated region
        $region113: #{simplenet_forward.2} parent=71 // pred_check
          %p546 = pneg %p283
        $region114: #{simplenet_forward.2} parent=71 // pred_check_branch
          %548 = sbr.rel (%p546) target = $region116
        $region115: #{simplenet_forward.2} parent=71 // pred_region
          %549 = dma.done [#allocation22], 16
        $region116: #{simplenet_forward.2} parent=71 // pred_fallthru
          _
        // Predicated region
        $region117: #{simplenet_forward.2} parent=71 // pred_check
          %p550 = pneg %p304
        $region118: #{simplenet_forward.2} parent=71 // pred_check_branch
          %552 = sbr.rel (%p550) target = $region120
        $region119: #{simplenet_forward.2} parent=71 // pred_region
          %553 = dma.done [#allocation25], 2048
        $region120: #{simplenet_forward.2} parent=71 // pred_fallthru
          _
        %p554 = scmp.lt.s32.totalorder %s31, 1
        %s555 = scalar_select %p554, %s31, 1
        %s556 = smul.addr %s555, 32
        %s557 = smul.addr %s556, 8
        %s558 = scalar_lea.vmem %s0, %s557
        %p559 = pneg %p52
        %p560 = pneg %p49
        %p561 = pneg %p73
        %p562 = pneg %p70
        %p563 = pneg %p94
        %p564 = pneg %p91
        %p565 = pneg %p115
        %p566 = pneg %p112
        %p567 = pneg %p136
        %p568 = pneg %p133
        %p569 = pneg %p157
        %p570 = pneg %p154
        %p571 = pneg %p178
        %p572 = pneg %p175
        %p573 = pneg %p199
        %p574 = pneg %p196
        %p575 = pneg %p220
        %p576 = pneg %p217
        %p577 = pneg %p241
        %p578 = pneg %p238
        %p579 = pneg %p262
        %p580 = pneg %p259
        %p581 = pneg %p283
        %p582 = pneg %p280
        %p583 = pneg %p304
        %p584 = pneg %p301
        %p585 = pneg %p330
        %p586 = pneg %p327
        %p587 = scmp.lt.s32.totalorder %s31, 1
        %s588 = scalar_select %p587, %s31, 1
        %s589 = smul.addr %s588, 2
        %s590 = smul.addr %s589, 8
        %s591 = scalar_lea.vmem %s13, %s590
        %p592 = scmp.lt.s32.totalorder %s31, 1
        %s593 = scalar_select %p592, %s31, 1
        %s594 = smul.addr %s593, 32
        %s595 = smul.addr %s594, 8
        %s596 = scalar_lea.vmem %s0, %s595
        %p597 = scmp.lt.s32.totalorder %s31, 1
        %s598 = scalar_select %p597, %s31, 1
        %s599 = smul.addr %s598, 2
        %s600 = smul.addr %s599, 8
        %s601 = scalar_lea.vmem %s13, %s600
        %v603 = vld [vmem:[%s596] sm:$0xff]
        %v604 = vld [vmem:[%s596 + $0x8] sm:$0xff]
        %v605 = vld [vmem:[%s596 + $0x10] sm:$0xff]
        %v606 = vld [vmem:[%s596 + $0x18] sm:$0xff]
        %v607 = vld [vmem:[%s596 + $0x20] sm:$0xff]
        %v608 = vld [vmem:[%s596 + $0x28] sm:$0xff]
        %v609 = vld [vmem:[%s596 + $0x30] sm:$0xff]
        %v610 = vld [vmem:[%s596 + $0x38] sm:$0xff]
        %v611 = vld [vmem:[%s596 + $0x40] sm:$0xff]
        %v612 = vld [vmem:[%s596 + $0x48] sm:$0xff]
        %v613 = vld [vmem:[%s596 + $0x50] sm:$0xff]
        %v614 = vld [vmem:[%s596 + $0x58] sm:$0xff]
        %v615 = vld [vmem:[%s596 + $0x60] sm:$0xff]
        %v616 = vld [vmem:[%s596 + $0x68] sm:$0xff]
        %v617 = vld [vmem:[%s596 + $0x70] sm:$0xff]
        %v618 = vld [vmem:[%s596 + $0x78] sm:$0xff]
        %v619 = vld [vmem:[%s596 + $0x80] sm:$0xff]
        %v620 = vld [vmem:[%s596 + $0x88] sm:$0xff]
        %v621 = vld [vmem:[%s596 + $0x90] sm:$0xff]
        %v622 = vld [vmem:[%s596 + $0x98] sm:$0xff]
        %v623 = vld [vmem:[%s596 + $0xa0] sm:$0xff]
        %v624 = vld [vmem:[%s596 + $0xa8] sm:$0xff]
        %v625 = vld [vmem:[%s596 + $0xb0] sm:$0xff]
        %v626 = vld [vmem:[%s596 + $0xb8] sm:$0xff]
        %v627 = vld [vmem:[%s596 + $0xc0] sm:$0xff]
        %v628 = vld [vmem:[%s596 + $0xc8] sm:$0xff]
        %v629 = vld [vmem:[%s596 + $0xd0] sm:$0xff]
        %v630 = vld [vmem:[%s596 + $0xd8] sm:$0xff]
        %v631 = vld [vmem:[%s596 + $0xe0] sm:$0xff]
        %v632 = vld [vmem:[%s596 + $0xe8] sm:$0xff]
        %v633 = vld [vmem:[%s596 + $0xf0] sm:$0xff]
        %v634 = vld [vmem:[%s596 + $0xf8] sm:$0xff]
        %v635 = vld [vmem:[#allocation7] sm:$0xf]
        %v636 = vld [vmem:[#allocation7 + $0x4] sm:$0xf]
        %v637 = vld [vmem:[#allocation7 + $0x8] sm:$0xf]
        %v638 = vld [vmem:[#allocation7 + $0xc] sm:$0xf]
        %v639 = vld [vmem:[#allocation7 + $0x10] sm:$0xf]
        %v640 = vld [vmem:[#allocation7 + $0x14] sm:$0xf]
        %v641 = vld [vmem:[#allocation7 + $0x18] sm:$0xf]
        %v642 = vld [vmem:[#allocation7 + $0x1c] sm:$0xf]
        %v643 = vld [vmem:[#allocation7 + $0x20] sm:$0xf]
        %v644 = vld [vmem:[#allocation7 + $0x24] sm:$0xf]
        %v645 = vld [vmem:[#allocation7 + $0x28] sm:$0xf]
        %v646 = vld [vmem:[#allocation7 + $0x2c] sm:$0xf]
        %v647 = vld [vmem:[#allocation7 + $0x30] sm:$0xf]
        %v648 = vld [vmem:[#allocation7 + $0x34] sm:$0xf]
        %v649 = vld [vmem:[#allocation7 + $0x38] sm:$0xf]
        %v650 = vld [vmem:[#allocation7 + $0x3c] sm:$0xf]
        %v651 = vld [vmem:[#allocation7 + $0x40] sm:$0xf]
        %v652 = vld [vmem:[#allocation7 + $0x44] sm:$0xf]
        %v653 = vld [vmem:[#allocation7 + $0x48] sm:$0xf]
        %v654 = vld [vmem:[#allocation7 + $0x4c] sm:$0xf]
        %v655 = vld [vmem:[#allocation7 + $0x50] sm:$0xf]
        %v656 = vld [vmem:[#allocation7 + $0x54] sm:$0xf]
        %v657 = vld [vmem:[#allocation7 + $0x58] sm:$0xf]
        %v658 = vld [vmem:[#allocation7 + $0x5c] sm:$0xf]
        %v659 = vld [vmem:[#allocation7 + $0x60] sm:$0xf]
        %v660 = vld [vmem:[#allocation7 + $0x64] sm:$0xf]
        %v661 = vld [vmem:[#allocation7 + $0x68] sm:$0xf]
        %v662 = vld [vmem:[#allocation7 + $0x6c] sm:$0xf]
        %v663 = vld [vmem:[#allocation7 + $0x70] sm:$0xf]
        %v664 = vld [vmem:[#allocation7 + $0x74] sm:$0xf]
        %v665 = vld [vmem:[#allocation7 + $0x78] sm:$0xf]
        %v666 = vld [vmem:[#allocation7 + $0x7c] sm:$0xf]
        %v667 = vld [vmem:[#allocation7 + $0x80] sm:$0xf]
        %v668 = vld [vmem:[#allocation7 + $0x84] sm:$0xf]
        %v669 = vld [vmem:[#allocation7 + $0x88] sm:$0xf]
        %v670 = vld [vmem:[#allocation7 + $0x8c] sm:$0xf]
        %v671 = vld [vmem:[#allocation7 + $0x90] sm:$0xf]
        %v672 = vld [vmem:[#allocation7 + $0x94] sm:$0xf]
        %v673 = vld [vmem:[#allocation7 + $0x98] sm:$0xf]
        %v674 = vld [vmem:[#allocation7 + $0x9c] sm:$0xf]
        %v675 = vld [vmem:[#allocation7 + $0xa0] sm:$0xf]
        %v676 = vld [vmem:[#allocation7 + $0xa4] sm:$0xf]
        %v677 = vld [vmem:[#allocation7 + $0xa8] sm:$0xf]
        %v678 = vld [vmem:[#allocation7 + $0xac] sm:$0xf]
        %v679 = vld [vmem:[#allocation7 + $0xb0] sm:$0xf]
        %v680 = vld [vmem:[#allocation7 + $0xb4] sm:$0xf]
        %v681 = vld [vmem:[#allocation7 + $0xb8] sm:$0xf]
        %v682 = vld [vmem:[#allocation7 + $0xbc] sm:$0xf]
        %v683 = vld [vmem:[#allocation7 + $0xc0] sm:$0xf]
        %v684 = vld [vmem:[#allocation7 + $0xc4] sm:$0xf]
        %v685 = vld [vmem:[#allocation7 + $0xc8] sm:$0xf]
        %v686 = vld [vmem:[#allocation7 + $0xcc] sm:$0xf]
        %v687 = vld [vmem:[#allocation7 + $0xd0] sm:$0xf]
        %v688 = vld [vmem:[#allocation7 + $0xd4] sm:$0xf]
        %v689 = vld [vmem:[#allocation7 + $0xd8] sm:$0xf]
        %v690 = vld [vmem:[#allocation7 + $0xdc] sm:$0xf]
        %v691 = vld [vmem:[#allocation7 + $0xe0] sm:$0xf]
        %v692 = vld [vmem:[#allocation7 + $0xe4] sm:$0xf]
        %v693 = vld [vmem:[#allocation7 + $0xe8] sm:$0xf]
        %v694 = vld [vmem:[#allocation7 + $0xec] sm:$0xf]
        %v695 = vld [vmem:[#allocation7 + $0xf0] sm:$0xf]
        %v696 = vld [vmem:[#allocation7 + $0xf4] sm:$0xf]
        %v697 = vld [vmem:[#allocation7 + $0xf8] sm:$0xf]
        %v698 = vld [vmem:[#allocation7 + $0xfc] sm:$0xf]
        %v699 = vld [vmem:[#allocation7 + $0x100] sm:$0xf]
        %v700 = vld [vmem:[#allocation7 + $0x104] sm:$0xf]
        %v701 = vld [vmem:[#allocation7 + $0x108] sm:$0xf]
        %v702 = vld [vmem:[#allocation7 + $0x10c] sm:$0xf]
        %v703 = vld [vmem:[#allocation7 + $0x110] sm:$0xf]
        %v704 = vld [vmem:[#allocation7 + $0x114] sm:$0xf]
        %v705 = vld [vmem:[#allocation7 + $0x118] sm:$0xf]
        %v706 = vld [vmem:[#allocation7 + $0x11c] sm:$0xf]
        %v707 = vld [vmem:[#allocation7 + $0x120] sm:$0xf]
        %v708 = vld [vmem:[#allocation7 + $0x124] sm:$0xf]
        %v709 = vld [vmem:[#allocation7 + $0x128] sm:$0xf]
        %v710 = vld [vmem:[#allocation7 + $0x12c] sm:$0xf]
        %v711 = vld [vmem:[#allocation7 + $0x130] sm:$0xf]
        %v712 = vld [vmem:[#allocation7 + $0x134] sm:$0xf]
        %v713 = vld [vmem:[#allocation7 + $0x138] sm:$0xf]
        %v714 = vld [vmem:[#allocation7 + $0x13c] sm:$0xf]
        %v715 = vld [vmem:[#allocation7 + $0x140] sm:$0xf]
        %v716 = vld [vmem:[#allocation7 + $0x144] sm:$0xf]
        %v717 = vld [vmem:[#allocation7 + $0x148] sm:$0xf]
        %v718 = vld [vmem:[#allocation7 + $0x14c] sm:$0xf]
        %v719 = vld [vmem:[#allocation7 + $0x150] sm:$0xf]
        %v720 = vld [vmem:[#allocation7 + $0x154] sm:$0xf]
        %v721 = vld [vmem:[#allocation7 + $0x158] sm:$0xf]
        %v722 = vld [vmem:[#allocation7 + $0x15c] sm:$0xf]
        %v723 = vld [vmem:[#allocation7 + $0x160] sm:$0xf]
        %v724 = vld [vmem:[#allocation7 + $0x164] sm:$0xf]
        %v725 = vld [vmem:[#allocation7 + $0x168] sm:$0xf]
        %v726 = vld [vmem:[#allocation7 + $0x16c] sm:$0xf]
        %v727 = vld [vmem:[#allocation7 + $0x170] sm:$0xf]
        %v728 = vld [vmem:[#allocation7 + $0x174] sm:$0xf]
        %v729 = vld [vmem:[#allocation7 + $0x178] sm:$0xf]
        %v730 = vld [vmem:[#allocation7 + $0x17c] sm:$0xf]
        %v731 = vld [vmem:[#allocation7 + $0x180] sm:$0xf]
        %v732 = vld [vmem:[#allocation7 + $0x184] sm:$0xf]
        %v733 = vld [vmem:[#allocation7 + $0x188] sm:$0xf]
        %v734 = vld [vmem:[#allocation7 + $0x18c] sm:$0xf]
        %v735 = vld [vmem:[#allocation7 + $0x190] sm:$0xf]
        %v736 = vld [vmem:[#allocation7 + $0x194] sm:$0xf]
        %v737 = vld [vmem:[#allocation7 + $0x198] sm:$0xf]
        %v738 = vld [vmem:[#allocation7 + $0x19c] sm:$0xf]
        %v739 = vld [vmem:[#allocation7 + $0x1a0] sm:$0xf]
        %v740 = vld [vmem:[#allocation7 + $0x1a4] sm:$0xf]
        %v741 = vld [vmem:[#allocation7 + $0x1a8] sm:$0xf]
        %v742 = vld [vmem:[#allocation7 + $0x1ac] sm:$0xf]
        %v743 = vld [vmem:[#allocation7 + $0x1b0] sm:$0xf]
        %v744 = vld [vmem:[#allocation7 + $0x1b4] sm:$0xf]
        %v745 = vld [vmem:[#allocation7 + $0x1b8] sm:$0xf]
        %v746 = vld [vmem:[#allocation7 + $0x1bc] sm:$0xf]
        %v747 = vld [vmem:[#allocation7 + $0x1c0] sm:$0xf]
        %v748 = vld [vmem:[#allocation7 + $0x1c4] sm:$0xf]
        %v749 = vld [vmem:[#allocation7 + $0x1c8] sm:$0xf]
        %v750 = vld [vmem:[#allocation7 + $0x1cc] sm:$0xf]
        %v751 = vld [vmem:[#allocation7 + $0x1d0] sm:$0xf]
        %v752 = vld [vmem:[#allocation7 + $0x1d4] sm:$0xf]
        %v753 = vld [vmem:[#allocation7 + $0x1d8] sm:$0xf]
        %v754 = vld [vmem:[#allocation7 + $0x1dc] sm:$0xf]
        %v755 = vld [vmem:[#allocation7 + $0x1e0] sm:$0xf]
        %v756 = vld [vmem:[#allocation7 + $0x1e4] sm:$0xf]
        %v757 = vld [vmem:[#allocation7 + $0x1e8] sm:$0xf]
        %v758 = vld [vmem:[#allocation7 + $0x1ec] sm:$0xf]
        %v759 = vld [vmem:[#allocation7 + $0x1f0] sm:$0xf]
        %v760 = vld [vmem:[#allocation7 + $0x1f4] sm:$0xf]
        %v761 = vld [vmem:[#allocation7 + $0x1f8] sm:$0xf]
        %v762 = vld [vmem:[#allocation7 + $0x1fc] sm:$0xf]
        %v763 = vld [vmem:[#allocation7 + $0x200] sm:$0xf]
        %v764 = vld [vmem:[#allocation7 + $0x204] sm:$0xf]
        %v765 = vld [vmem:[#allocation7 + $0x208] sm:$0xf]
        %v766 = vld [vmem:[#allocation7 + $0x20c] sm:$0xf]
        %v767 = vld [vmem:[#allocation7 + $0x210] sm:$0xf]
        %v768 = vld [vmem:[#allocation7 + $0x214] sm:$0xf]
        %v769 = vld [vmem:[#allocation7 + $0x218] sm:$0xf]
        %v770 = vld [vmem:[#allocation7 + $0x21c] sm:$0xf]
        %v771 = vld [vmem:[#allocation7 + $0x220] sm:$0xf]
        %v772 = vld [vmem:[#allocation7 + $0x224] sm:$0xf]
        %v773 = vld [vmem:[#allocation7 + $0x228] sm:$0xf]
        %v774 = vld [vmem:[#allocation7 + $0x22c] sm:$0xf]
        %v775 = vld [vmem:[#allocation7 + $0x230] sm:$0xf]
        %v776 = vld [vmem:[#allocation7 + $0x234] sm:$0xf]
        %v777 = vld [vmem:[#allocation7 + $0x238] sm:$0xf]
        %v778 = vld [vmem:[#allocation7 + $0x23c] sm:$0xf]
        %v779 = vld [vmem:[#allocation9] sm:$0x1]
        %780 = vst [vmem:[#allocation2] sm:$0xff] 0.0
        %781 = vst [vmem:[#allocation2 + $0x8] sm:$0xff] 0.0
        %782 = vst [vmem:[#allocation2 + $0x10] sm:$0x3] 0.0
        %783 = vst [vmem:[#allocation2 + $0x18] sm:$0xff] 0.0
        %784 = vst [vmem:[#allocation2 + $0x20] sm:$0xff] 0.0
        %785 = vst [vmem:[#allocation2 + $0x28] sm:$0x3] 0.0
        %786 = vst [vmem:[#allocation2 + $0x30] sm:$0xff] 0.0
        %787 = vst [vmem:[#allocation2 + $0x38] sm:$0xff] 0.0
        %788 = vst [vmem:[#allocation2 + $0x40] sm:$0x3] 0.0
        %789 = vst [vmem:[#allocation2 + $0x48] sm:$0xff] 0.0
        %790 = vst [vmem:[#allocation2 + $0x50] sm:$0xff] 0.0
        %791 = vst [vmem:[#allocation2 + $0x58] sm:$0x3] 0.0
        %792 = vst [vmem:[#allocation2 + $0x60] sm:$0xff] 0.0
        %793 = vst [vmem:[#allocation2 + $0x68] sm:$0xff] 0.0
        %794 = vst [vmem:[#allocation2 + $0x70] sm:$0x3] 0.0
        %795 = vst [vmem:[#allocation2 + $0x78] sm:$0xff] 0.0
        %796 = vst [vmem:[#allocation2 + $0x80] sm:$0xff] 0.0
        %797 = vst [vmem:[#allocation2 + $0x88] sm:$0x3] 0.0
        %798 = vst [vmem:[#allocation2 + $0x90] sm:$0xff] 0.0
        %799 = vst [vmem:[#allocation2 + $0x98] sm:$0xff] 0.0
        %800 = vst [vmem:[#allocation2 + $0xa0] sm:$0x3] 0.0
        %801 = vst [vmem:[#allocation2 + $0xa8] sm:$0xff] 0.0
        %802 = vst [vmem:[#allocation2 + $0xb0] sm:$0xff] 0.0
        %803 = vst [vmem:[#allocation2 + $0xb8] sm:$0x3] 0.0
        %804 = vst [vmem:[#allocation2 + $0xc0] sm:$0xff] 0.0
        %805 = vst [vmem:[#allocation2 + $0xc8] sm:$0xff] 0.0
        %806 = vst [vmem:[#allocation2 + $0xd0] sm:$0x3] 0.0
        %807 = vst [vmem:[#allocation2 + $0xd8] sm:$0xff] 0.0
        %808 = vst [vmem:[#allocation2 + $0xe0] sm:$0xff] 0.0
        %809 = vst [vmem:[#allocation2 + $0xe8] sm:$0x3] 0.0
        %810 = vst [vmem:[#allocation2 + $0xf0] sm:$0xff] 0.0
        %811 = vst [vmem:[#allocation2 + $0xf8] sm:$0xff] 0.0
        %812 = vst [vmem:[#allocation2 + $0x100] sm:$0x3] 0.0
        %813 = vst [vmem:[#allocation2 + $0x108] sm:$0xff] 0.0
        %814 = vst [vmem:[#allocation2 + $0x110] sm:$0xff] 0.0
        %815 = vst [vmem:[#allocation2 + $0x118] sm:$0x3] 0.0
        %816 = vst [vmem:[#allocation2 + $0x120] sm:$0xff] 0.0
        %817 = vst [vmem:[#allocation2 + $0x128] sm:$0xff] 0.0
        %818 = vst [vmem:[#allocation2 + $0x130] sm:$0x3] 0.0
        %819 = vst [vmem:[#allocation2 + $0x138] sm:$0xff] 0.0
        %820 = vst [vmem:[#allocation2 + $0x140] sm:$0xff] 0.0
        %821 = vst [vmem:[#allocation2 + $0x148] sm:$0x3] 0.0
        %822 = vst [vmem:[#allocation2 + $0x150] sm:$0xff] 0.0
        %823 = vst [vmem:[#allocation2 + $0x158] sm:$0xff] 0.0
        %824 = vst [vmem:[#allocation2 + $0x160] sm:$0x3] 0.0
        %825 = vst [vmem:[#allocation2 + $0x168] sm:$0xff] 0.0
        %826 = vst [vmem:[#allocation2 + $0x170] sm:$0xff] 0.0
        %827 = vst [vmem:[#allocation2 + $0x178] sm:$0x3] 0.0
        %828 = vst [vmem:[#allocation2 + $0x180] sm:$0xff] 0.0
        %829 = vst [vmem:[#allocation2 + $0x188] sm:$0xff] 0.0
        %830 = vst [vmem:[#allocation2 + $0x190] sm:$0x3] 0.0
        %831 = vst [vmem:[#allocation2 + $0x198] sm:$0xff] 0.0
        %832 = vst [vmem:[#allocation2 + $0x1a0] sm:$0xff] 0.0
        %833 = vst [vmem:[#allocation2 + $0x1a8] sm:$0x3] 0.0
        %s834 = scalar_lea.vmem [#allocation2], 24
        %835 = vst [vmem:[%s834 + $0x1] sm:$0xff] %v603
        %836 = vst [vmem:[%s834 + $0x9] sm:$0xff] %v604
        %837 = vst [vmem:[%s834 + $0x19] sm:$0xff] %v605
        %838 = vst [vmem:[%s834 + $0x21] sm:$0xff] %v606
        %839 = vst [vmem:[%s834 + $0x31] sm:$0xff] %v607
        %840 = vst [vmem:[%s834 + $0x39] sm:$0xff] %v608
        %841 = vst [vmem:[%s834 + $0x49] sm:$0xff] %v609
        %842 = vst [vmem:[%s834 + $0x51] sm:$0xff] %v610
        %843 = vst [vmem:[%s834 + $0x61] sm:$0xff] %v611
        %844 = vst [vmem:[%s834 + $0x69] sm:$0xff] %v612
        %845 = vst [vmem:[%s834 + $0x79] sm:$0xff] %v613
        %846 = vst [vmem:[%s834 + $0x81] sm:$0xff] %v614
        %847 = vst [vmem:[%s834 + $0x91] sm:$0xff] %v615
        %848 = vst [vmem:[%s834 + $0x99] sm:$0xff] %v616
        %849 = vst [vmem:[%s834 + $0xa9] sm:$0xff] %v617
        %850 = vst [vmem:[%s834 + $0xb1] sm:$0xff] %v618
        %851 = vst [vmem:[%s834 + $0xc1] sm:$0xff] %v619
        %852 = vst [vmem:[%s834 + $0xc9] sm:$0xff] %v620
        %853 = vst [vmem:[%s834 + $0xd9] sm:$0xff] %v621
        %854 = vst [vmem:[%s834 + $0xe1] sm:$0xff] %v622
        %855 = vst [vmem:[%s834 + $0xf1] sm:$0xff] %v623
        %856 = vst [vmem:[%s834 + $0xf9] sm:$0xff] %v624
        %857 = vst [vmem:[%s834 + $0x109] sm:$0xff] %v625
        %858 = vst [vmem:[%s834 + $0x111] sm:$0xff] %v626
        %859 = vst [vmem:[%s834 + $0x121] sm:$0xff] %v627
        %860 = vst [vmem:[%s834 + $0x129] sm:$0xff] %v628
        %861 = vst [vmem:[%s834 + $0x139] sm:$0xff] %v629
        %862 = vst [vmem:[%s834 + $0x141] sm:$0xff] %v630
        %863 = vst [vmem:[%s834 + $0x151] sm:$0xff] %v631
        %864 = vst [vmem:[%s834 + $0x159] sm:$0xff] %v632
        %865 = vst [vmem:[%s834 + $0x169] sm:$0xff] %v633
        %866 = vst [vmem:[%s834 + $0x171] sm:$0xff] %v634
        %v867 = vld [vmem:[#allocation2] sm:$0xff]
        %v868 = vld [vmem:[#allocation2 + $0x8] sm:$0xff]
        %v869 = vld [vmem:[#allocation2 + $0x18] sm:$0xff]
        %v870 = vld [vmem:[#allocation2 + $0x20] sm:$0xff]
        %v871 = vld [vmem:[#allocation2 + $0x30] sm:$0xff]
        %v872 = vld [vmem:[#allocation2 + $0x38] sm:$0xff]
        %v873 = vld [vmem:[#allocation2 + $0x48] sm:$0xff]
        %v874 = vld [vmem:[#allocation2 + $0x50] sm:$0xff]
        %v875 = vld [vmem:[#allocation2 + $0x60] sm:$0xff]
        %v876 = vld [vmem:[#allocation2 + $0x68] sm:$0xff]
        %v877 = vld [vmem:[#allocation2 + $0x78] sm:$0xff]
        %v878 = vld [vmem:[#allocation2 + $0x80] sm:$0xff]
        %v879 = vld [vmem:[#allocation2 + $0x90] sm:$0xff]
        %v880 = vld [vmem:[#allocation2 + $0x98] sm:$0xff]
        %v881 = vld [vmem:[#allocation2 + $0xa8] sm:$0xff]
        %v882 = vld [vmem:[#allocation2 + $0xb0] sm:$0xff]
        %v883 = vld [vmem:[#allocation2 + $0xc0] sm:$0xff]
        %v884 = vld [vmem:[#allocation2 + $0xc8] sm:$0xff]
        %v885 = vld [vmem:[#allocation2 + $0xd8] sm:$0xff]
        %v886 = vld [vmem:[#allocation2 + $0xe0] sm:$0xff]
        %v887 = vld [vmem:[#allocation2 + $0xf0] sm:$0xff]
        %v888 = vld [vmem:[#allocation2 + $0xf8] sm:$0xff]
        %v889 = vld [vmem:[#allocation2 + $0x108] sm:$0xff]
        %v890 = vld [vmem:[#allocation2 + $0x110] sm:$0xff]
        %v891 = vld [vmem:[#allocation2 + $0x120] sm:$0xff]
        %v892 = vld [vmem:[#allocation2 + $0x128] sm:$0xff]
        %v893 = vld [vmem:[#allocation2 + $0x138] sm:$0xff]
        %v894 = vld [vmem:[#allocation2 + $0x140] sm:$0xff]
        %v895 = vld [vmem:[#allocation2 + $0x150] sm:$0xff]
        %v896 = vld [vmem:[#allocation2 + $0x158] sm:$0xff]
        %v897 = vld [vmem:[#allocation2 + $0x168] sm:$0xff]
        %v898 = vld [vmem:[#allocation2 + $0x170] sm:$0xff]
        %v899 = vpack.c.bf16 %v868, %v867
        %v900 = vpack.c.bf16 %v870, %v869
        %v901 = vpack.c.bf16 %v872, %v871
        %v902 = vpack.c.bf16 %v874, %v873
        %v903 = vpack.c.bf16 %v876, %v875
        %v904 = vpack.c.bf16 %v878, %v877
        %v905 = vpack.c.bf16 %v880, %v879
        %v906 = vpack.c.bf16 %v882, %v881
        %v907 = vpack.c.bf16 %v884, %v883
        %v908 = vpack.c.bf16 %v886, %v885
        %v909 = vpack.c.bf16 %v888, %v887
        %v910 = vpack.c.bf16 %v890, %v889
        %v911 = vpack.c.bf16 %v892, %v891
        %v912 = vpack.c.bf16 %v894, %v893
        %v913 = vpack.c.bf16 %v896, %v895
        %v914 = vpack.c.bf16 %v898, %v897
        %v915 = vld [vmem:[#allocation2 + $0x1] sm:$0xff]
        %v916 = vld [vmem:[#allocation2 + $0x9] sm:$0xff]
        %v917 = vld [vmem:[#allocation2 + $0x19] sm:$0xff]
        %v918 = vld [vmem:[#allocation2 + $0x21] sm:$0xff]
        %v919 = vld [vmem:[#allocation2 + $0x31] sm:$0xff]
        %v920 = vld [vmem:[#allocation2 + $0x39] sm:$0xff]
        %v921 = vld [vmem:[#allocation2 + $0x49] sm:$0xff]
        %v922 = vld [vmem:[#allocation2 + $0x51] sm:$0xff]
        %v923 = vld [vmem:[#allocation2 + $0x61] sm:$0xff]
        %v924 = vld [vmem:[#allocation2 + $0x69] sm:$0xff]
        %v925 = vld [vmem:[#allocation2 + $0x79] sm:$0xff]
        %v926 = vld [vmem:[#allocation2 + $0x81] sm:$0xff]
        %v927 = vld [vmem:[#allocation2 + $0x91] sm:$0xff]
        %v928 = vld [vmem:[#allocation2 + $0x99] sm:$0xff]
        %v929 = vld [vmem:[#allocation2 + $0xa9] sm:$0xff]
        %v930 = vld [vmem:[#allocation2 + $0xb1] sm:$0xff]
        %v931 = vld [vmem:[#allocation2 + $0xc1] sm:$0xff]
        %v932 = vld [vmem:[#allocation2 + $0xc9] sm:$0xff]
        %v933 = vld [vmem:[#allocation2 + $0xd9] sm:$0xff]
        %v934 = vld [vmem:[#allocation2 + $0xe1] sm:$0xff]
        %v935 = vld [vmem:[#allocation2 + $0xf1] sm:$0xff]
        %v936 = vld [vmem:[#allocation2 + $0xf9] sm:$0xff]
        %v937 = vld [vmem:[#allocation2 + $0x109] sm:$0xff]
        %v938 = vld [vmem:[#allocation2 + $0x111] sm:$0xff]
        %v939 = vld [vmem:[#allocation2 + $0x121] sm:$0xff]
        %v940 = vld [vmem:[#allocation2 + $0x129] sm:$0xff]
        %v941 = vld [vmem:[#allocation2 + $0x139] sm:$0xff]
        %v942 = vld [vmem:[#allocation2 + $0x141] sm:$0xff]
        %v943 = vld [vmem:[#allocation2 + $0x151] sm:$0xff]
        %v944 = vld [vmem:[#allocation2 + $0x159] sm:$0xff]
        %v945 = vld [vmem:[#allocation2 + $0x169] sm:$0xff]
        %v946 = vld [vmem:[#allocation2 + $0x171] sm:$0xff]
        %v947 = vpack.c.bf16 %v916, %v915
        %v948 = vpack.c.bf16 %v918, %v917
        %v949 = vpack.c.bf16 %v920, %v919
        %v950 = vpack.c.bf16 %v922, %v921
        %v951 = vpack.c.bf16 %v924, %v923
        %v952 = vpack.c.bf16 %v926, %v925
        %v953 = vpack.c.bf16 %v928, %v927
        %v954 = vpack.c.bf16 %v930, %v929
        %v955 = vpack.c.bf16 %v932, %v931
        %v956 = vpack.c.bf16 %v934, %v933
        %v957 = vpack.c.bf16 %v936, %v935
        %v958 = vpack.c.bf16 %v938, %v937
        %v959 = vpack.c.bf16 %v940, %v939
        %v960 = vpack.c.bf16 %v942, %v941
        %v961 = vpack.c.bf16 %v944, %v943
        %v962 = vpack.c.bf16 %v946, %v945
        %v963 = vld [vmem:[#allocation2 + $0x2] sm:$0xff]
        %v964 = vld [vmem:[#allocation2 + $0xa] sm:$0xff]
        %v965 = vld [vmem:[#allocation2 + $0x1a] sm:$0xff]
        %v966 = vld [vmem:[#allocation2 + $0x22] sm:$0xff]
        %v967 = vld [vmem:[#allocation2 + $0x32] sm:$0xff]
        %v968 = vld [vmem:[#allocation2 + $0x3a] sm:$0xff]
        %v969 = vld [vmem:[#allocation2 + $0x4a] sm:$0xff]
        %v970 = vld [vmem:[#allocation2 + $0x52] sm:$0xff]
        %v971 = vld [vmem:[#allocation2 + $0x62] sm:$0xff]
        %v972 = vld [vmem:[#allocation2 + $0x6a] sm:$0xff]
        %v973 = vld [vmem:[#allocation2 + $0x7a] sm:$0xff]
        %v974 = vld [vmem:[#allocation2 + $0x82] sm:$0xff]
        %v975 = vld [vmem:[#allocation2 + $0x92] sm:$0xff]
        %v976 = vld [vmem:[#allocation2 + $0x9a] sm:$0xff]
        %v977 = vld [vmem:[#allocation2 + $0xaa] sm:$0xff]
        %v978 = vld [vmem:[#allocation2 + $0xb2] sm:$0xff]
        %v979 = vld [vmem:[#allocation2 + $0xc2] sm:$0xff]
        %v980 = vld [vmem:[#allocation2 + $0xca] sm:$0xff]
        %v981 = vld [vmem:[#allocation2 + $0xda] sm:$0xff]
        %v982 = vld [vmem:[#allocation2 + $0xe2] sm:$0xff]
        %v983 = vld [vmem:[#allocation2 + $0xf2] sm:$0xff]
        %v984 = vld [vmem:[#allocation2 + $0xfa] sm:$0xff]
        %v985 = vld [vmem:[#allocation2 + $0x10a] sm:$0xff]
        %v986 = vld [vmem:[#allocation2 + $0x112] sm:$0xff]
        %v987 = vld [vmem:[#allocation2 + $0x122] sm:$0xff]
        %v988 = vld [vmem:[#allocation2 + $0x12a] sm:$0xff]
        %v989 = vld [vmem:[#allocation2 + $0x13a] sm:$0xff]
        %v990 = vld [vmem:[#allocation2 + $0x142] sm:$0xff]
        %v991 = vld [vmem:[#allocation2 + $0x152] sm:$0xff]
        %v992 = vld [vmem:[#allocation2 + $0x15a] sm:$0xff]
        %v993 = vld [vmem:[#allocation2 + $0x16a] sm:$0xff]
        %v994 = vld [vmem:[#allocation2 + $0x172] sm:$0xff]
        %v995 = vpack.c.bf16 %v964, %v963
        %v996 = vpack.c.bf16 %v966, %v965
        %v997 = vpack.c.bf16 %v968, %v967
        %v998 = vpack.c.bf16 %v970, %v969
        %v999 = vpack.c.bf16 %v972, %v971
        %v1000 = vpack.c.bf16 %v974, %v973
        %v1001 = vpack.c.bf16 %v976, %v975
        %v1002 = vpack.c.bf16 %v978, %v977
        %v1003 = vpack.c.bf16 %v980, %v979
        %v1004 = vpack.c.bf16 %v982, %v981
        %v1005 = vpack.c.bf16 %v984, %v983
        %v1006 = vpack.c.bf16 %v986, %v985
        %v1007 = vpack.c.bf16 %v988, %v987
        %v1008 = vpack.c.bf16 %v990, %v989
        %v1009 = vpack.c.bf16 %v992, %v991
        %v1010 = vpack.c.bf16 %v994, %v993
        %v1011 = vld [vmem:[%s834] sm:$0xff]
        %v1012 = vld [vmem:[%s834 + $0x8] sm:$0xff]
        %v1013 = vld [vmem:[%s834 + $0x18] sm:$0xff]
        %v1014 = vld [vmem:[%s834 + $0x20] sm:$0xff]
        %v1015 = vld [vmem:[%s834 + $0x30] sm:$0xff]
        %v1016 = vld [vmem:[%s834 + $0x38] sm:$0xff]
        %v1017 = vld [vmem:[%s834 + $0x48] sm:$0xff]
        %v1018 = vld [vmem:[%s834 + $0x50] sm:$0xff]
        %v1019 = vld [vmem:[%s834 + $0x60] sm:$0xff]
        %v1020 = vld [vmem:[%s834 + $0x68] sm:$0xff]
        %v1021 = vld [vmem:[%s834 + $0x78] sm:$0xff]
        %v1022 = vld [vmem:[%s834 + $0x80] sm:$0xff]
        %v1023 = vld [vmem:[%s834 + $0x90] sm:$0xff]
        %v1024 = vld [vmem:[%s834 + $0x98] sm:$0xff]
        %v1025 = vld [vmem:[%s834 + $0xa8] sm:$0xff]
        %v1026 = vld [vmem:[%s834 + $0xb0] sm:$0xff]
        %v1027 = vld [vmem:[%s834 + $0xc0] sm:$0xff]
        %v1028 = vld [vmem:[%s834 + $0xc8] sm:$0xff]
        %v1029 = vld [vmem:[%s834 + $0xd8] sm:$0xff]
        %v1030 = vld [vmem:[%s834 + $0xe0] sm:$0xff]
        %v1031 = vld [vmem:[%s834 + $0xf0] sm:$0xff]
        %v1032 = vld [vmem:[%s834 + $0xf8] sm:$0xff]
        %v1033 = vld [vmem:[%s834 + $0x108] sm:$0xff]
        %v1034 = vld [vmem:[%s834 + $0x110] sm:$0xff]
        %v1035 = vld [vmem:[%s834 + $0x120] sm:$0xff]
        %v1036 = vld [vmem:[%s834 + $0x128] sm:$0xff]
        %v1037 = vld [vmem:[%s834 + $0x138] sm:$0xff]
        %v1038 = vld [vmem:[%s834 + $0x140] sm:$0xff]
        %v1039 = vld [vmem:[%s834 + $0x150] sm:$0xff]
        %v1040 = vld [vmem:[%s834 + $0x158] sm:$0xff]
        %v1041 = vld [vmem:[%s834 + $0x168] sm:$0xff]
        %v1042 = vld [vmem:[%s834 + $0x170] sm:$0xff]
        %v1043 = vpack.c.bf16 %v1012, %v1011
        %v1044 = vpack.c.bf16 %v1014, %v1013
        %v1045 = vpack.c.bf16 %v1016, %v1015
        %v1046 = vpack.c.bf16 %v1018, %v1017
        %v1047 = vpack.c.bf16 %v1020, %v1019
        %v1048 = vpack.c.bf16 %v1022, %v1021
        %v1049 = vpack.c.bf16 %v1024, %v1023
        %v1050 = vpack.c.bf16 %v1026, %v1025
        %v1051 = vpack.c.bf16 %v1028, %v1027
        %v1052 = vpack.c.bf16 %v1030, %v1029
        %v1053 = vpack.c.bf16 %v1032, %v1031
        %v1054 = vpack.c.bf16 %v1034, %v1033
        %v1055 = vpack.c.bf16 %v1036, %v1035
        %v1056 = vpack.c.bf16 %v1038, %v1037
        %v1057 = vpack.c.bf16 %v1040, %v1039
        %v1058 = vpack.c.bf16 %v1042, %v1041
        %v1059 = vld [vmem:[%s834 + $0x1] sm:$0xff]
        %v1060 = vld [vmem:[%s834 + $0x9] sm:$0xff]
        %v1061 = vld [vmem:[%s834 + $0x19] sm:$0xff]
        %v1062 = vld [vmem:[%s834 + $0x21] sm:$0xff]
        %v1063 = vld [vmem:[%s834 + $0x31] sm:$0xff]
        %v1064 = vld [vmem:[%s834 + $0x39] sm:$0xff]
        %v1065 = vld [vmem:[%s834 + $0x49] sm:$0xff]
        %v1066 = vld [vmem:[%s834 + $0x51] sm:$0xff]
        %v1067 = vld [vmem:[%s834 + $0x61] sm:$0xff]
        %v1068 = vld [vmem:[%s834 + $0x69] sm:$0xff]
        %v1069 = vld [vmem:[%s834 + $0x79] sm:$0xff]
        %v1070 = vld [vmem:[%s834 + $0x81] sm:$0xff]
        %v1071 = vld [vmem:[%s834 + $0x91] sm:$0xff]
        %v1072 = vld [vmem:[%s834 + $0x99] sm:$0xff]
        %v1073 = vld [vmem:[%s834 + $0xa9] sm:$0xff]
        %v1074 = vld [vmem:[%s834 + $0xb1] sm:$0xff]
        %v1075 = vld [vmem:[%s834 + $0xc1] sm:$0xff]
        %v1076 = vld [vmem:[%s834 + $0xc9] sm:$0xff]
        %v1077 = vld [vmem:[%s834 + $0xd9] sm:$0xff]
        %v1078 = vld [vmem:[%s834 + $0xe1] sm:$0xff]
        %v1079 = vld [vmem:[%s834 + $0xf1] sm:$0xff]
        %v1080 = vld [vmem:[%s834 + $0xf9] sm:$0xff]
        %v1081 = vld [vmem:[%s834 + $0x109] sm:$0xff]
        %v1082 = vld [vmem:[%s834 + $0x111] sm:$0xff]
        %v1083 = vld [vmem:[%s834 + $0x121] sm:$0xff]
        %v1084 = vld [vmem:[%s834 + $0x129] sm:$0xff]
        %v1085 = vld [vmem:[%s834 + $0x139] sm:$0xff]
        %v1086 = vld [vmem:[%s834 + $0x141] sm:$0xff]
        %v1087 = vld [vmem:[%s834 + $0x151] sm:$0xff]
        %v1088 = vld [vmem:[%s834 + $0x159] sm:$0xff]
        %v1089 = vld [vmem:[%s834 + $0x169] sm:$0xff]
        %v1090 = vld [vmem:[%s834 + $0x171] sm:$0xff]
        %v1091 = vpack.c.bf16 %v1060, %v1059
        %v1092 = vpack.c.bf16 %v1062, %v1061
        %v1093 = vpack.c.bf16 %v1064, %v1063
        %v1094 = vpack.c.bf16 %v1066, %v1065
        %v1095 = vpack.c.bf16 %v1068, %v1067
        %v1096 = vpack.c.bf16 %v1070, %v1069
        %v1097 = vpack.c.bf16 %v1072, %v1071
        %v1098 = vpack.c.bf16 %v1074, %v1073
        %v1099 = vpack.c.bf16 %v1076, %v1075
        %v1100 = vpack.c.bf16 %v1078, %v1077
        %v1101 = vpack.c.bf16 %v1080, %v1079
        %v1102 = vpack.c.bf16 %v1082, %v1081
        %v1103 = vpack.c.bf16 %v1084, %v1083
        %v1104 = vpack.c.bf16 %v1086, %v1085
        %v1105 = vpack.c.bf16 %v1088, %v1087
        %v1106 = vpack.c.bf16 %v1090, %v1089
        %v1107 = vld [vmem:[%s834 + $0x2] sm:$0xff]
        %v1108 = vld [vmem:[%s834 + $0xa] sm:$0xff]
        %v1109 = vld [vmem:[%s834 + $0x1a] sm:$0xff]
        %v1110 = vld [vmem:[%s834 + $0x22] sm:$0xff]
        %v1111 = vld [vmem:[%s834 + $0x32] sm:$0xff]
        %v1112 = vld [vmem:[%s834 + $0x3a] sm:$0xff]
        %v1113 = vld [vmem:[%s834 + $0x4a] sm:$0xff]
        %v1114 = vld [vmem:[%s834 + $0x52] sm:$0xff]
        %v1115 = vld [vmem:[%s834 + $0x62] sm:$0xff]
        %v1116 = vld [vmem:[%s834 + $0x6a] sm:$0xff]
        %v1117 = vld [vmem:[%s834 + $0x7a] sm:$0xff]
        %v1118 = vld [vmem:[%s834 + $0x82] sm:$0xff]
        %v1119 = vld [vmem:[%s834 + $0x92] sm:$0xff]
        %v1120 = vld [vmem:[%s834 + $0x9a] sm:$0xff]
        %v1121 = vld [vmem:[%s834 + $0xaa] sm:$0xff]
        %v1122 = vld [vmem:[%s834 + $0xb2] sm:$0xff]
        %v1123 = vld [vmem:[%s834 + $0xc2] sm:$0xff]
        %v1124 = vld [vmem:[%s834 + $0xca] sm:$0xff]
        %v1125 = vld [vmem:[%s834 + $0xda] sm:$0xff]
        %v1126 = vld [vmem:[%s834 + $0xe2] sm:$0xff]
        %v1127 = vld [vmem:[%s834 + $0xf2] sm:$0xff]
        %v1128 = vld [vmem:[%s834 + $0xfa] sm:$0xff]
        %v1129 = vld [vmem:[%s834 + $0x10a] sm:$0xff]
        %v1130 = vld [vmem:[%s834 + $0x112] sm:$0xff]
        %v1131 = vld [vmem:[%s834 + $0x122] sm:$0xff]
        %v1132 = vld [vmem:[%s834 + $0x12a] sm:$0xff]
        %v1133 = vld [vmem:[%s834 + $0x13a] sm:$0xff]
        %v1134 = vld [vmem:[%s834 + $0x142] sm:$0xff]
        %v1135 = vld [vmem:[%s834 + $0x152] sm:$0xff]
        %v1136 = vld [vmem:[%s834 + $0x15a] sm:$0xff]
        %v1137 = vld [vmem:[%s834 + $0x16a] sm:$0xff]
        %v1138 = vld [vmem:[%s834 + $0x172] sm:$0xff]
        %v1139 = vpack.c.bf16 %v1108, %v1107
        %v1140 = vpack.c.bf16 %v1110, %v1109
        %v1141 = vpack.c.bf16 %v1112, %v1111
        %v1142 = vpack.c.bf16 %v1114, %v1113
        %v1143 = vpack.c.bf16 %v1116, %v1115
        %v1144 = vpack.c.bf16 %v1118, %v1117
        %v1145 = vpack.c.bf16 %v1120, %v1119
        %v1146 = vpack.c.bf16 %v1122, %v1121
        %v1147 = vpack.c.bf16 %v1124, %v1123
        %v1148 = vpack.c.bf16 %v1126, %v1125
        %v1149 = vpack.c.bf16 %v1128, %v1127
        %v1150 = vpack.c.bf16 %v1130, %v1129
        %v1151 = vpack.c.bf16 %v1132, %v1131
        %v1152 = vpack.c.bf16 %v1134, %v1133
        %v1153 = vpack.c.bf16 %v1136, %v1135
        %v1154 = vpack.c.bf16 %v1138, %v1137
        %s1155 = scalar_lea.vmem [#allocation2], 48
        %v1156 = vld [vmem:[%s1155] sm:$0xff]
        %v1157 = vld [vmem:[%s1155 + $0x8] sm:$0xff]
        %v1158 = vld [vmem:[%s1155 + $0x18] sm:$0xff]
        %v1159 = vld [vmem:[%s1155 + $0x20] sm:$0xff]
        %v1160 = vld [vmem:[%s1155 + $0x30] sm:$0xff]
        %v1161 = vld [vmem:[%s1155 + $0x38] sm:$0xff]
        %v1162 = vld [vmem:[%s1155 + $0x48] sm:$0xff]
        %v1163 = vld [vmem:[%s1155 + $0x50] sm:$0xff]
        %v1164 = vld [vmem:[%s1155 + $0x60] sm:$0xff]
        %v1165 = vld [vmem:[%s1155 + $0x68] sm:$0xff]
        %v1166 = vld [vmem:[%s1155 + $0x78] sm:$0xff]
        %v1167 = vld [vmem:[%s1155 + $0x80] sm:$0xff]
        %v1168 = vld [vmem:[%s1155 + $0x90] sm:$0xff]
        %v1169 = vld [vmem:[%s1155 + $0x98] sm:$0xff]
        %v1170 = vld [vmem:[%s1155 + $0xa8] sm:$0xff]
        %v1171 = vld [vmem:[%s1155 + $0xb0] sm:$0xff]
        %v1172 = vld [vmem:[%s1155 + $0xc0] sm:$0xff]
        %v1173 = vld [vmem:[%s1155 + $0xc8] sm:$0xff]
        %v1174 = vld [vmem:[%s1155 + $0xd8] sm:$0xff]
        %v1175 = vld [vmem:[%s1155 + $0xe0] sm:$0xff]
        %v1176 = vld [vmem:[%s1155 + $0xf0] sm:$0xff]
        %v1177 = vld [vmem:[%s1155 + $0xf8] sm:$0xff]
        %v1178 = vld [vmem:[%s1155 + $0x108] sm:$0xff]
        %v1179 = vld [vmem:[%s1155 + $0x110] sm:$0xff]
        %v1180 = vld [vmem:[%s1155 + $0x120] sm:$0xff]
        %v1181 = vld [vmem:[%s1155 + $0x128] sm:$0xff]
        %v1182 = vld [vmem:[%s1155 + $0x138] sm:$0xff]
        %v1183 = vld [vmem:[%s1155 + $0x140] sm:$0xff]
        %v1184 = vld [vmem:[%s1155 + $0x150] sm:$0xff]
        %v1185 = vld [vmem:[%s1155 + $0x158] sm:$0xff]
        %v1186 = vld [vmem:[%s1155 + $0x168] sm:$0xff]
        %v1187 = vld [vmem:[%s1155 + $0x170] sm:$0xff]
        %v1188 = vpack.c.bf16 %v1157, %v1156
        %v1189 = vpack.c.bf16 %v1159, %v1158
        %v1190 = vpack.c.bf16 %v1161, %v1160
        %v1191 = vpack.c.bf16 %v1163, %v1162
        %v1192 = vpack.c.bf16 %v1165, %v1164
        %v1193 = vpack.c.bf16 %v1167, %v1166
        %v1194 = vpack.c.bf16 %v1169, %v1168
        %v1195 = vpack.c.bf16 %v1171, %v1170
        %v1196 = vpack.c.bf16 %v1173, %v1172
        %v1197 = vpack.c.bf16 %v1175, %v1174
        %v1198 = vpack.c.bf16 %v1177, %v1176
        %v1199 = vpack.c.bf16 %v1179, %v1178
        %v1200 = vpack.c.bf16 %v1181, %v1180
        %v1201 = vpack.c.bf16 %v1183, %v1182
        %v1202 = vpack.c.bf16 %v1185, %v1184
        %v1203 = vpack.c.bf16 %v1187, %v1186
        %v1204 = vld [vmem:[%s1155 + $0x1] sm:$0xff]
        %v1205 = vld [vmem:[%s1155 + $0x9] sm:$0xff]
        %v1206 = vld [vmem:[%s1155 + $0x19] sm:$0xff]
        %v1207 = vld [vmem:[%s1155 + $0x21] sm:$0xff]
        %v1208 = vld [vmem:[%s1155 + $0x31] sm:$0xff]
        %v1209 = vld [vmem:[%s1155 + $0x39] sm:$0xff]
        %v1210 = vld [vmem:[%s1155 + $0x49] sm:$0xff]
        %v1211 = vld [vmem:[%s1155 + $0x51] sm:$0xff]
        %v1212 = vld [vmem:[%s1155 + $0x61] sm:$0xff]
        %v1213 = vld [vmem:[%s1155 + $0x69] sm:$0xff]
        %v1214 = vld [vmem:[%s1155 + $0x79] sm:$0xff]
        %v1215 = vld [vmem:[%s1155 + $0x81] sm:$0xff]
        %v1216 = vld [vmem:[%s1155 + $0x91] sm:$0xff]
        %v1217 = vld [vmem:[%s1155 + $0x99] sm:$0xff]
        %v1218 = vld [vmem:[%s1155 + $0xa9] sm:$0xff]
        %v1219 = vld [vmem:[%s1155 + $0xb1] sm:$0xff]
        %v1220 = vld [vmem:[%s1155 + $0xc1] sm:$0xff]
        %v1221 = vld [vmem:[%s1155 + $0xc9] sm:$0xff]
        %v1222 = vld [vmem:[%s1155 + $0xd9] sm:$0xff]
        %v1223 = vld [vmem:[%s1155 + $0xe1] sm:$0xff]
        %v1224 = vld [vmem:[%s1155 + $0xf1] sm:$0xff]
        %v1225 = vld [vmem:[%s1155 + $0xf9] sm:$0xff]
        %v1226 = vld [vmem:[%s1155 + $0x109] sm:$0xff]
        %v1227 = vld [vmem:[%s1155 + $0x111] sm:$0xff]
        %v1228 = vld [vmem:[%s1155 + $0x121] sm:$0xff]
        %v1229 = vld [vmem:[%s1155 + $0x129] sm:$0xff]
        %v1230 = vld [vmem:[%s1155 + $0x139] sm:$0xff]
        %v1231 = vld [vmem:[%s1155 + $0x141] sm:$0xff]
        %v1232 = vld [vmem:[%s1155 + $0x151] sm:$0xff]
        %v1233 = vld [vmem:[%s1155 + $0x159] sm:$0xff]
        %v1234 = vld [vmem:[%s1155 + $0x169] sm:$0xff]
        %v1235 = vld [vmem:[%s1155 + $0x171] sm:$0xff]
        %v1236 = vpack.c.bf16 %v1205, %v1204
        %v1237 = vpack.c.bf16 %v1207, %v1206
        %v1238 = vpack.c.bf16 %v1209, %v1208
        %v1239 = vpack.c.bf16 %v1211, %v1210
        %v1240 = vpack.c.bf16 %v1213, %v1212
        %v1241 = vpack.c.bf16 %v1215, %v1214
        %v1242 = vpack.c.bf16 %v1217, %v1216
        %v1243 = vpack.c.bf16 %v1219, %v1218
        %v1244 = vpack.c.bf16 %v1221, %v1220
        %v1245 = vpack.c.bf16 %v1223, %v1222
        %v1246 = vpack.c.bf16 %v1225, %v1224
        %v1247 = vpack.c.bf16 %v1227, %v1226
        %v1248 = vpack.c.bf16 %v1229, %v1228
        %v1249 = vpack.c.bf16 %v1231, %v1230
        %v1250 = vpack.c.bf16 %v1233, %v1232
        %v1251 = vpack.c.bf16 %v1235, %v1234
        %v1252 = vld [vmem:[%s1155 + $0x2] sm:$0xff]
        %v1253 = vld [vmem:[%s1155 + $0xa] sm:$0xff]
        %v1254 = vld [vmem:[%s1155 + $0x1a] sm:$0xff]
        %v1255 = vld [vmem:[%s1155 + $0x22] sm:$0xff]
        %v1256 = vld [vmem:[%s1155 + $0x32] sm:$0xff]
        %v1257 = vld [vmem:[%s1155 + $0x3a] sm:$0xff]
        %v1258 = vld [vmem:[%s1155 + $0x4a] sm:$0xff]
        %v1259 = vld [vmem:[%s1155 + $0x52] sm:$0xff]
        %v1260 = vld [vmem:[%s1155 + $0x62] sm:$0xff]
        %v1261 = vld [vmem:[%s1155 + $0x6a] sm:$0xff]
        %v1262 = vld [vmem:[%s1155 + $0x7a] sm:$0xff]
        %v1263 = vld [vmem:[%s1155 + $0x82] sm:$0xff]
        %v1264 = vld [vmem:[%s1155 + $0x92] sm:$0xff]
        %v1265 = vld [vmem:[%s1155 + $0x9a] sm:$0xff]
        %v1266 = vld [vmem:[%s1155 + $0xaa] sm:$0xff]
        %v1267 = vld [vmem:[%s1155 + $0xb2] sm:$0xff]
        %v1268 = vld [vmem:[%s1155 + $0xc2] sm:$0xff]
        %v1269 = vld [vmem:[%s1155 + $0xca] sm:$0xff]
        %v1270 = vld [vmem:[%s1155 + $0xda] sm:$0xff]
        %v1271 = vld [vmem:[%s1155 + $0xe2] sm:$0xff]
        %v1272 = vld [vmem:[%s1155 + $0xf2] sm:$0xff]
        %v1273 = vld [vmem:[%s1155 + $0xfa] sm:$0xff]
        %v1274 = vld [vmem:[%s1155 + $0x10a] sm:$0xff]
        %v1275 = vld [vmem:[%s1155 + $0x112] sm:$0xff]
        %v1276 = vld [vmem:[%s1155 + $0x122] sm:$0xff]
        %v1277 = vld [vmem:[%s1155 + $0x12a] sm:$0xff]
        %v1278 = vld [vmem:[%s1155 + $0x13a] sm:$0xff]
        %v1279 = vld [vmem:[%s1155 + $0x142] sm:$0xff]
        %v1280 = vld [vmem:[%s1155 + $0x152] sm:$0xff]
        %v1281 = vld [vmem:[%s1155 + $0x15a] sm:$0xff]
        %v1282 = vld [vmem:[%s1155 + $0x16a] sm:$0xff]
        %v1283 = vld [vmem:[%s1155 + $0x172] sm:$0xff]
        %v1284 = vpack.c.bf16 %v1253, %v1252
        %v1285 = vpack.c.bf16 %v1255, %v1254
        %v1286 = vpack.c.bf16 %v1257, %v1256
        %v1287 = vpack.c.bf16 %v1259, %v1258
        %v1288 = vpack.c.bf16 %v1261, %v1260
        %v1289 = vpack.c.bf16 %v1263, %v1262
        %v1290 = vpack.c.bf16 %v1265, %v1264
        %v1291 = vpack.c.bf16 %v1267, %v1266
        %v1292 = vpack.c.bf16 %v1269, %v1268
        %v1293 = vpack.c.bf16 %v1271, %v1270
        %v1294 = vpack.c.bf16 %v1273, %v1272
        %v1295 = vpack.c.bf16 %v1275, %v1274
        %v1296 = vpack.c.bf16 %v1277, %v1276
        %v1297 = vpack.c.bf16 %v1279, %v1278
        %v1298 = vpack.c.bf16 %v1281, %v1280
        %v1299 = vpack.c.bf16 %v1283, %v1282
        %v1301 = vlaneseq
        %v1302 = vshrl.u32 %v1301, 7
        %v1303 = vsub.s32 0, %v1302
        %v1304 = vrot.slane %v779, %v1303
        %v1450 = vunpack.c.l.b16 %v635
        %v1451 = vunpack.c.l.b16 %v636
        %v1452 = vunpack.c.l.b16 %v637
        %v1453 = vunpack.c.l.b16 %v638
        %v1454 = vunpack.c.l.b16 %v639
        %v1455 = vunpack.c.l.b16 %v640
        %v1456 = vunpack.c.l.b16 %v641
        %v1457 = vunpack.c.l.b16 %v642
        %v1458 = vunpack.c.l.b16 %v643
        %v1459 = vunpack.c.l.b16 %v644
        %v1460 = vunpack.c.l.b16 %v645
        %v1461 = vunpack.c.l.b16 %v646
        %v1462 = vunpack.c.l.b16 %v647
        %v1463 = vunpack.c.l.b16 %v648
        %v1464 = vunpack.c.l.b16 %v649
        %v1465 = vunpack.c.l.b16 %v650
        %v1466 = vunpack.c.l.b16 %v651
        %v1467 = vunpack.c.l.b16 %v652
        %v1468 = vunpack.c.l.b16 %v653
        %v1469 = vunpack.c.l.b16 %v654
        %v1470 = vunpack.c.l.b16 %v655
        %v1471 = vunpack.c.l.b16 %v656
        %v1472 = vunpack.c.l.b16 %v657
        %v1473 = vunpack.c.l.b16 %v658
        %v1474 = vunpack.c.l.b16 %v659
        %v1475 = vunpack.c.l.b16 %v660
        %v1476 = vunpack.c.l.b16 %v661
        %v1477 = vunpack.c.l.b16 %v662
        %v1478 = vunpack.c.l.b16 %v663
        %v1479 = vunpack.c.l.b16 %v664
        %v1480 = vunpack.c.l.b16 %v665
        %v1481 = vunpack.c.l.b16 %v666
        %v1482 = vunpack.c.l.b16 %v667
        %v1483 = vunpack.c.l.b16 %v668
        %v1484 = vunpack.c.l.b16 %v669
        %v1485 = vunpack.c.l.b16 %v670
        %v1486 = vunpack.c.l.b16 %v671
        %v1487 = vunpack.c.l.b16 %v672
        %v1488 = vunpack.c.l.b16 %v673
        %v1489 = vunpack.c.l.b16 %v674
        %v1490 = vunpack.c.l.b16 %v675
        %v1491 = vunpack.c.l.b16 %v676
        %v1492 = vunpack.c.l.b16 %v677
        %v1493 = vunpack.c.l.b16 %v678
        %v1494 = vunpack.c.l.b16 %v679
        %v1495 = vunpack.c.l.b16 %v680
        %v1496 = vunpack.c.l.b16 %v681
        %v1497 = vunpack.c.l.b16 %v682
        %v1498 = vunpack.c.l.b16 %v683
        %v1499 = vunpack.c.l.b16 %v684
        %v1500 = vunpack.c.l.b16 %v685
        %v1501 = vunpack.c.l.b16 %v686
        %v1502 = vunpack.c.l.b16 %v687
        %v1503 = vunpack.c.l.b16 %v688
        %v1504 = vunpack.c.l.b16 %v689
        %v1505 = vunpack.c.l.b16 %v690
        %v1506 = vunpack.c.l.b16 %v691
        %v1507 = vunpack.c.l.b16 %v692
        %v1508 = vunpack.c.l.b16 %v693
        %v1509 = vunpack.c.l.b16 %v694
        %v1510 = vunpack.c.l.b16 %v695
        %v1511 = vunpack.c.l.b16 %v696
        %v1512 = vunpack.c.l.b16 %v697
        %v1513 = vunpack.c.l.b16 %v698
        %v1514 = vunpack.c.l.b16 %v699
        %v1515 = vunpack.c.l.b16 %v700
        %v1516 = vunpack.c.l.b16 %v701
        %v1517 = vunpack.c.l.b16 %v702
        %v1518 = vunpack.c.l.b16 %v703
        %v1519 = vunpack.c.l.b16 %v704
        %v1520 = vunpack.c.l.b16 %v705
        %v1521 = vunpack.c.l.b16 %v706
        %v1522 = vunpack.c.l.b16 %v707
        %v1523 = vunpack.c.l.b16 %v708
        %v1524 = vunpack.c.l.b16 %v709
        %v1525 = vunpack.c.l.b16 %v710
        %v1526 = vunpack.c.l.b16 %v711
        %v1527 = vunpack.c.l.b16 %v712
        %v1528 = vunpack.c.l.b16 %v713
        %v1529 = vunpack.c.l.b16 %v714
        %v1530 = vunpack.c.l.b16 %v715
        %v1531 = vunpack.c.l.b16 %v716
        %v1532 = vunpack.c.l.b16 %v717
        %v1533 = vunpack.c.l.b16 %v718
        %v1534 = vunpack.c.l.b16 %v719
        %v1535 = vunpack.c.l.b16 %v720
        %v1536 = vunpack.c.l.b16 %v721
        %v1537 = vunpack.c.l.b16 %v722
        %v1538 = vunpack.c.l.b16 %v723
        %v1539 = vunpack.c.l.b16 %v724
        %v1540 = vunpack.c.l.b16 %v725
        %v1541 = vunpack.c.l.b16 %v726
        %v1542 = vunpack.c.l.b16 %v727
        %v1543 = vunpack.c.l.b16 %v728
        %v1544 = vunpack.c.l.b16 %v729
        %v1545 = vunpack.c.l.b16 %v730
        %v1546 = vunpack.c.l.b16 %v731
        %v1547 = vunpack.c.l.b16 %v732
        %v1548 = vunpack.c.l.b16 %v733
        %v1549 = vunpack.c.l.b16 %v734
        %v1550 = vunpack.c.l.b16 %v735
        %v1551 = vunpack.c.l.b16 %v736
        %v1552 = vunpack.c.l.b16 %v737
        %v1553 = vunpack.c.l.b16 %v738
        %v1554 = vunpack.c.l.b16 %v739
        %v1555 = vunpack.c.l.b16 %v740
        %v1556 = vunpack.c.l.b16 %v741
        %v1557 = vunpack.c.l.b16 %v742
        %v1558 = vunpack.c.l.b16 %v743
        %v1559 = vunpack.c.l.b16 %v744
        %v1560 = vunpack.c.l.b16 %v745
        %v1561 = vunpack.c.l.b16 %v746
        %v1562 = vunpack.c.l.b16 %v747
        %v1563 = vunpack.c.l.b16 %v748
        %v1564 = vunpack.c.l.b16 %v749
        %v1565 = vunpack.c.l.b16 %v750
        %v1566 = vunpack.c.l.b16 %v751
        %v1567 = vunpack.c.l.b16 %v752
        %v1568 = vunpack.c.l.b16 %v753
        %v1569 = vunpack.c.l.b16 %v754
        %v1570 = vunpack.c.l.b16 %v755
        %v1571 = vunpack.c.l.b16 %v756
        %v1572 = vunpack.c.l.b16 %v757
        %v1573 = vunpack.c.l.b16 %v758
        %v1574 = vunpack.c.l.b16 %v759
        %v1575 = vunpack.c.l.b16 %v760
        %v1576 = vunpack.c.l.b16 %v761
        %v1577 = vunpack.c.l.b16 %v762
        %v1578 = vunpack.c.l.b16 %v763
        %v1579 = vunpack.c.l.b16 %v764
        %v1580 = vunpack.c.l.b16 %v765
        %v1581 = vunpack.c.l.b16 %v766
        %v1582 = vunpack.c.l.b16 %v767
        %v1583 = vunpack.c.l.b16 %v768
        %v1584 = vunpack.c.l.b16 %v769
        %v1585 = vunpack.c.l.b16 %v770
        %v1586 = vunpack.c.l.b16 %v771
        %v1587 = vunpack.c.l.b16 %v772
        %v1588 = vunpack.c.l.b16 %v773
        %v1589 = vunpack.c.l.b16 %v774
        %v1590 = vunpack.c.l.b16 %v775
        %v1591 = vunpack.c.l.b16 %v776
        %v1592 = vunpack.c.l.b16 %v777
        %v1593 = vunpack.c.l.b16 %v778
        %v1594 = vpack.c.b16 %v1451, %v1450
        %v1595 = vpack.c.b16 %v1453, %v1452
        %v1596 = vpack.c.b16 %v1455, %v1454
        %v1597 = vpack.c.b16 %v1457, %v1456
        %v1598 = vpack.c.b16 %v1459, %v1458
        %v1599 = vpack.c.b16 %v1461, %v1460
        %v1600 = vpack.c.b16 %v1463, %v1462
        %v1601 = vpack.c.b16 %v1465, %v1464
        %v1602 = vpack.c.b16 %v1467, %v1466
        %v1603 = vpack.c.b16 %v1469, %v1468
        %v1604 = vpack.c.b16 %v1471, %v1470
        %v1605 = vpack.c.b16 %v1473, %v1472
        %v1606 = vpack.c.b16 %v1475, %v1474
        %v1607 = vpack.c.b16 %v1477, %v1476
        %v1608 = vpack.c.b16 %v1479, %v1478
        %v1609 = vpack.c.b16 %v1481, %v1480
        %v1610 = vpack.c.b16 %v1483, %v1482
        %v1611 = vpack.c.b16 %v1485, %v1484
        %v1612 = vpack.c.b16 %v1487, %v1486
        %v1613 = vpack.c.b16 %v1489, %v1488
        %v1614 = vpack.c.b16 %v1491, %v1490
        %v1615 = vpack.c.b16 %v1493, %v1492
        %v1616 = vpack.c.b16 %v1495, %v1494
        %v1617 = vpack.c.b16 %v1497, %v1496
        %v1618 = vpack.c.b16 %v1499, %v1498
        %v1619 = vpack.c.b16 %v1501, %v1500
        %v1620 = vpack.c.b16 %v1503, %v1502
        %v1621 = vpack.c.b16 %v1505, %v1504
        %v1622 = vpack.c.b16 %v1507, %v1506
        %v1623 = vpack.c.b16 %v1509, %v1508
        %v1624 = vpack.c.b16 %v1511, %v1510
        %v1625 = vpack.c.b16 %v1513, %v1512
        %v1626 = vpack.c.b16 %v1515, %v1514
        %v1627 = vpack.c.b16 %v1517, %v1516
        %v1628 = vpack.c.b16 %v1519, %v1518
        %v1629 = vpack.c.b16 %v1521, %v1520
        %v1630 = vpack.c.b16 %v1523, %v1522
        %v1631 = vpack.c.b16 %v1525, %v1524
        %v1632 = vpack.c.b16 %v1527, %v1526
        %v1633 = vpack.c.b16 %v1529, %v1528
        %v1634 = vpack.c.b16 %v1531, %v1530
        %v1635 = vpack.c.b16 %v1533, %v1532
        %v1636 = vpack.c.b16 %v1535, %v1534
        %v1637 = vpack.c.b16 %v1537, %v1536
        %v1638 = vpack.c.b16 %v1539, %v1538
        %v1639 = vpack.c.b16 %v1541, %v1540
        %v1640 = vpack.c.b16 %v1543, %v1542
        %v1641 = vpack.c.b16 %v1545, %v1544
        %v1642 = vpack.c.b16 %v1547, %v1546
        %v1643 = vpack.c.b16 %v1549, %v1548
        %v1644 = vpack.c.b16 %v1551, %v1550
        %v1645 = vpack.c.b16 %v1553, %v1552
        %v1646 = vpack.c.b16 %v1555, %v1554
        %v1647 = vpack.c.b16 %v1557, %v1556
        %v1648 = vpack.c.b16 %v1559, %v1558
        %v1649 = vpack.c.b16 %v1561, %v1560
        %v1650 = vpack.c.b16 %v1563, %v1562
        %v1651 = vpack.c.b16 %v1565, %v1564
        %v1652 = vpack.c.b16 %v1567, %v1566
        %v1653 = vpack.c.b16 %v1569, %v1568
        %v1654 = vpack.c.b16 %v1571, %v1570
        %v1655 = vpack.c.b16 %v1573, %v1572
        %v1656 = vpack.c.b16 %v1575, %v1574
        %v1657 = vpack.c.b16 %v1577, %v1576
        %v1658 = vpack.c.b16 %v1579, %v1578
        %v1659 = vpack.c.b16 %v1581, %v1580
        %v1660 = vpack.c.b16 %v1583, %v1582
        %v1661 = vpack.c.b16 %v1585, %v1584
        %v1662 = vpack.c.b16 %v1587, %v1586
        %v1663 = vpack.c.b16 %v1589, %v1588
        %v1664 = vpack.c.b16 %v1591, %v1590
        %v1665 = vpack.c.b16 %v1593, %v1592
        %1738 = vmatprep.subr.bf16.mxu0 0
        %1739 = vmatpush1.bf16.msra.mxu0 %v1594
        %1740 = vmatprep.subr.bf16.mxu0 0
        %1741 = vmatpush1.bf16.msra.mxu0 %v1595
        %1742 = vmatprep.subr.bf16.mxu0 0
        %1743 = vmatpush1.bf16.msra.mxu0 %v1596
        %1744 = vmatprep.subr.bf16.mxu0 0
        %1745 = vmatpush1.bf16.msra.mxu0 %v1597
        %1746 = vmatprep.subr.bf16.mxu0 0
        %1747 = vmatpush1.bf16.msra.mxu0 %v1598
        %1748 = vmatprep.subr.bf16.mxu0 0
        %1749 = vmatpush1.bf16.msra.mxu0 %v1599
        %1750 = vmatprep.subr.bf16.mxu0 0
        %1751 = vmatpush1.bf16.msra.mxu0 %v1600
        %1752 = vmatprep.subr.bf16.mxu0 0
        %1753 = vmatpush1.bf16.msra.mxu0 %v1601
        %1754 = vmatprep.subr.bf16.mxu0 0
        %1755 = vmatpush1.bf16.msra.mxu0 %v1602
        %1756 = vmatprep.subr.bf16.mxu0 0
        %1757 = vmatpush1.bf16.msra.mxu0 %v1603
        %1758 = vmatprep.subr.bf16.mxu0 0
        %1759 = vmatpush1.bf16.msra.mxu0 %v1604
        %1760 = vmatprep.subr.bf16.mxu0 0
        %1761 = vmatpush1.bf16.msra.mxu0 %v1605
        %1762 = vmatprep.subr.bf16.mxu0 0
        %1763 = vmatpush1.bf16.msra.mxu0 %v1606
        %1764 = vmatprep.subr.bf16.mxu0 0
        %1765 = vmatpush1.bf16.msra.mxu0 %v1607
        %1766 = vmatprep.subr.bf16.mxu0 0
        %1767 = vmatpush1.bf16.msra.mxu0 %v1608
        %1768 = vmatprep.subr.bf16.mxu0 0
        %1769 = vmatpush1.bf16.msra.mxu0 %v1609
        %1770 = vmatprep.mubr.bf16.mxu0 %v947
        %1771 = vmatmul.mubr.bf16.gmra.mrb[0].mxu0 %v899
        %v1772 = vpop.f32.mrb[0].mxu0
        %v1773 = vadd.f32 %v1304, %v1772
        %v1774 = vpop.f32.mrb[0].mxu0
        %v1775 = vpop.f32.mrb[0].mxu0
        %v1776 = vadd.f32 %v1304, %v1775
        %v1777 = vpop.f32.mrb[0].mxu0
        %1778 = vmatprep.mubr.bf16.mxu0 %v948
        %1779 = vmatmul.mubr.bf16.gmra.mrb[0].mxu0 %v900
        %v1780 = vpop.f32.mrb[0].mxu0
        %v1781 = vadd.f32 %v1304, %v1780
        %v1782 = vpop.f32.mrb[0].mxu0
        %v1783 = vpop.f32.mrb[0].mxu0
        %v1784 = vadd.f32 %v1304, %v1783
        %v1785 = vpop.f32.mrb[0].mxu0
        %1786 = vmatprep.mubr.bf16.mxu0 %v949
        %1787 = vmatmul.mubr.bf16.gmra.mrb[0].mxu0 %v901
        %v1788 = vpop.f32.mrb[0].mxu0
        %v1789 = vadd.f32 %v1304, %v1788
        %v1790 = vpop.f32.mrb[0].mxu0
        %v1791 = vpop.f32.mrb[0].mxu0
        %v1792 = vadd.f32 %v1304, %v1791
        %v1793 = vpop.f32.mrb[0].mxu0
        %1794 = vmatprep.mubr.bf16.mxu0 %v950
        %1795 = vmatmul.mubr.bf16.gmra.mrb[0].mxu0 %v902
        %v1796 = vpop.f32.mrb[0].mxu0
        %v1797 = vadd.f32 %v1304, %v1796
        %v1798 = vpop.f32.mrb[0].mxu0
        %v1799 = vpop.f32.mrb[0].mxu0
        %v1800 = vadd.f32 %v1304, %v1799
        %v1801 = vpop.f32.mrb[0].mxu0
        %1802 = vmatprep.mubr.bf16.mxu0 %v951
        %1803 = vmatmul.mubr.bf16.gmra.mrb[0].mxu0 %v903
        %v1804 = vpop.f32.mrb[0].mxu0
        %v1805 = vadd.f32 %v1304, %v1804
        %v1806 = vpop.f32.mrb[0].mxu0
        %v1807 = vpop.f32.mrb[0].mxu0
        %v1808 = vadd.f32 %v1304, %v1807
        %v1809 = vpop.f32.mrb[0].mxu0
        %1810 = vmatprep.mubr.bf16.mxu0 %v952
        %1811 = vmatmul.mubr.bf16.gmra.mrb[0].mxu0 %v904
        %v1812 = vpop.f32.mrb[0].mxu0
        %v1813 = vadd.f32 %v1304, %v1812
        %v1814 = vpop.f32.mrb[0].mxu0
        %v1815 = vpop.f32.mrb[0].mxu0
        %v1816 = vadd.f32 %v1304, %v1815
        %v1817 = vpop.f32.mrb[0].mxu0
        %1818 = vmatprep.mubr.bf16.mxu0 %v953
        %1819 = vmatmul.mubr.bf16.gmra.mrb[0].mxu0 %v905
        %v1820 = vpop.f32.mrb[0].mxu0
        %v1821 = vadd.f32 %v1304, %v1820
        %v1822 = vpop.f32.mrb[0].mxu0
        %v1823 = vpop.f32.mrb[0].mxu0
        %v1824 = vadd.f32 %v1304, %v1823
        %v1825 = vpop.f32.mrb[0].mxu0
        %1826 = vmatprep.mubr.bf16.mxu0 %v954
        %1827 = vmatmul.mubr.bf16.gmra.mrb[0].mxu0 %v906
        %v1828 = vpop.f32.mrb[0].mxu0
        %v1829 = vadd.f32 %v1304, %v1828
        %v1830 = vpop.f32.mrb[0].mxu0
        %v1831 = vpop.f32.mrb[0].mxu0
        %v1832 = vadd.f32 %v1304, %v1831
        %v1833 = vpop.f32.mrb[0].mxu0
        %1834 = vmatprep.mubr.bf16.mxu0 %v955
        %1835 = vmatmul.mubr.bf16.gmra.mrb[0].mxu0 %v907
        %v1836 = vpop.f32.mrb[0].mxu0
        %v1837 = vadd.f32 %v1304, %v1836
        %v1838 = vpop.f32.mrb[0].mxu0
        %v1839 = vpop.f32.mrb[0].mxu0
        %v1840 = vadd.f32 %v1304, %v1839
        %v1841 = vpop.f32.mrb[0].mxu0
        %1842 = vmatprep.mubr.bf16.mxu0 %v956
        %1843 = vmatmul.mubr.bf16.gmra.mrb[0].mxu0 %v908
        %v1844 = vpop.f32.mrb[0].mxu0
        %v1845 = vadd.f32 %v1304, %v1844
        %v1846 = vpop.f32.mrb[0].mxu0
        %v1847 = vpop.f32.mrb[0].mxu0
        %v1848 = vadd.f32 %v1304, %v1847
        %v1849 = vpop.f32.mrb[0].mxu0
        %1850 = vmatprep.mubr.bf16.mxu0 %v957
        %1851 = vmatmul.mubr.bf16.gmra.mrb[0].mxu0 %v909
        %v1852 = vpop.f32.mrb[0].mxu0
        %v1853 = vadd.f32 %v1304, %v1852
        %v1854 = vpop.f32.mrb[0].mxu0
        %v1855 = vpop.f32.mrb[0].mxu0
        %v1856 = vadd.f32 %v1304, %v1855
        %v1857 = vpop.f32.mrb[0].mxu0
        %1858 = vmatprep.mubr.bf16.mxu0 %v958
        %1859 = vmatmul.mubr.bf16.gmra.mrb[0].mxu0 %v910
        %v1860 = vpop.f32.mrb[0].mxu0
        %v1861 = vadd.f32 %v1304, %v1860
        %v1862 = vpop.f32.mrb[0].mxu0
        %v1863 = vpop.f32.mrb[0].mxu0
        %v1864 = vadd.f32 %v1304, %v1863
        %v1865 = vpop.f32.mrb[0].mxu0
        %1866 = vmatprep.mubr.bf16.mxu0 %v959
        %1867 = vmatmul.mubr.bf16.gmra.mrb[0].mxu0 %v911
        %v1868 = vpop.f32.mrb[0].mxu0
        %v1869 = vadd.f32 %v1304, %v1868
        %v1870 = vpop.f32.mrb[0].mxu0
        %v1871 = vpop.f32.mrb[0].mxu0
        %v1872 = vadd.f32 %v1304, %v1871
        %v1873 = vpop.f32.mrb[0].mxu0
        %1874 = vmatprep.mubr.bf16.mxu0 %v960
        %1875 = vmatmul.mubr.bf16.gmra.mrb[0].mxu0 %v912
        %v1876 = vpop.f32.mrb[0].mxu0
        %v1877 = vadd.f32 %v1304, %v1876
        %v1878 = vpop.f32.mrb[0].mxu0
        %v1879 = vpop.f32.mrb[0].mxu0
        %v1880 = vadd.f32 %v1304, %v1879
        %v1881 = vpop.f32.mrb[0].mxu0
        %1882 = vmatprep.mubr.bf16.mxu0 %v961
        %1883 = vmatmul.mubr.bf16.gmra.mrb[0].mxu0 %v913
        %v1884 = vpop.f32.mrb[0].mxu0
        %v1885 = vadd.f32 %v1304, %v1884
        %v1886 = vpop.f32.mrb[0].mxu0
        %v1887 = vpop.f32.mrb[0].mxu0
        %v1888 = vadd.f32 %v1304, %v1887
        %v1889 = vpop.f32.mrb[0].mxu0
        %1890 = vmatprep.mubr.bf16.mxu0 %v962
        %1891 = vmatmul.mubr.bf16.gmra.mrb[0].mxu0 %v914
        %v1892 = vpop.f32.mrb[0].mxu0
        %v1893 = vadd.f32 %v1304, %v1892
        %v1894 = vpop.f32.mrb[0].mxu0
        %v1895 = vpop.f32.mrb[0].mxu0
        %v1896 = vadd.f32 %v1304, %v1895
        %v1897 = vpop.f32.mrb[0].mxu0
        %1898 = vdwg.mxu0
        %1899 = vmatprep.subr.bf16.mxu0 0
        %1900 = vmatpush1.bf16.msra.mxu0 %v1610
        %1901 = vmatprep.subr.bf16.mxu0 0
        %1902 = vmatpush1.bf16.msra.mxu0 %v1611
        %1903 = vmatprep.subr.bf16.mxu0 0
        %1904 = vmatpush1.bf16.msra.mxu0 %v1612
        %1905 = vmatprep.subr.bf16.mxu0 0
        %1906 = vmatpush1.bf16.msra.mxu0 %v1613
        %1907 = vmatprep.subr.bf16.mxu0 0
        %1908 = vmatpush1.bf16.msra.mxu0 %v1614
        %1909 = vmatprep.subr.bf16.mxu0 0
        %1910 = vmatpush1.bf16.msra.mxu0 %v1615
        %1911 = vmatprep.subr.bf16.mxu0 0
        %1912 = vmatpush1.bf16.msra.mxu0 %v1616
        %1913 = vmatprep.subr.bf16.mxu0 0
        %1914 = vmatpush1.bf16.msra.mxu0 %v1617
        %1915 = vmatprep.subr.bf16.mxu0 0
        %1916 = vmatpush1.bf16.msra.mxu0 %v1618
        %1917 = vmatprep.subr.bf16.mxu0 0
        %1918 = vmatpush1.bf16.msra.mxu0 %v1619
        %1919 = vmatprep.subr.bf16.mxu0 0
        %1920 = vmatpush1.bf16.msra.mxu0 %v1620
        %1921 = vmatprep.subr.bf16.mxu0 0
        %1922 = vmatpush1.bf16.msra.mxu0 %v1621
        %1923 = vmatprep.subr.bf16.mxu0 0
        %1924 = vmatpush1.bf16.msra.mxu0 %v1622
        %1925 = vmatprep.subr.bf16.mxu0 0
        %1926 = vmatpush1.bf16.msra.mxu0 %v1623
        %1927 = vmatprep.subr.bf16.mxu0 0
        %1928 = vmatpush1.bf16.msra.mxu0 %v1624
        %1929 = vmatprep.subr.bf16.mxu0 0
        %1930 = vmatpush1.bf16.msra.mxu0 %v1625
        %1931 = vmatprep.mubr.bf16.mxu0 %v1043
        %1932 = vmatmul.mubr.bf16.gmra.mrb[0].mxu0 %v995
        %v1933 = vpop.f32.mrb[0].mxu0
        %v1934 = vadd.f32 %v1773, %v1933
        %v1935 = vpop.f32.mrb[0].mxu0
        %v1936 = vpop.f32.mrb[0].mxu0
        %v1937 = vadd.f32 %v1776, %v1936
        %v1938 = vpop.f32.mrb[0].mxu0
        %1939 = vmatprep.mubr.bf16.mxu0 %v1044
        %1940 = vmatmul.mubr.bf16.gmra.mrb[0].mxu0 %v996
        %v1941 = vpop.f32.mrb[0].mxu0
        %v1942 = vadd.f32 %v1781, %v1941
        %v1943 = vpop.f32.mrb[0].mxu0
        %v1944 = vpop.f32.mrb[0].mxu0
        %v1945 = vadd.f32 %v1784, %v1944
        %v1946 = vpop.f32.mrb[0].mxu0
        %1947 = vmatprep.mubr.bf16.mxu0 %v1045
        %1948 = vmatmul.mubr.bf16.gmra.mrb[0].mxu0 %v997
        %v1949 = vpop.f32.mrb[0].mxu0
        %v1950 = vadd.f32 %v1789, %v1949
        %v1951 = vpop.f32.mrb[0].mxu0
        %v1952 = vpop.f32.mrb[0].mxu0
        %v1953 = vadd.f32 %v1792, %v1952
        %v1954 = vpop.f32.mrb[0].mxu0
        %1955 = vmatprep.mubr.bf16.mxu0 %v1046
        %1956 = vmatmul.mubr.bf16.gmra.mrb[0].mxu0 %v998
        %v1957 = vpop.f32.mrb[0].mxu0
        %v1958 = vadd.f32 %v1797, %v1957
        %v1959 = vpop.f32.mrb[0].mxu0
        %v1960 = vpop.f32.mrb[0].mxu0
        %v1961 = vadd.f32 %v1800, %v1960
        %v1962 = vpop.f32.mrb[0].mxu0
        %1963 = vmatprep.mubr.bf16.mxu0 %v1047
        %1964 = vmatmul.mubr.bf16.gmra.mrb[0].mxu0 %v999
        %v1965 = vpop.f32.mrb[0].mxu0
        %v1966 = vadd.f32 %v1805, %v1965
        %v1967 = vpop.f32.mrb[0].mxu0
        %v1968 = vpop.f32.mrb[0].mxu0
        %v1969 = vadd.f32 %v1808, %v1968
        %v1970 = vpop.f32.mrb[0].mxu0
        %1971 = vmatprep.mubr.bf16.mxu0 %v1048
        %1972 = vmatmul.mubr.bf16.gmra.mrb[0].mxu0 %v1000
        %v1973 = vpop.f32.mrb[0].mxu0
        %v1974 = vadd.f32 %v1813, %v1973
        %v1975 = vpop.f32.mrb[0].mxu0
        %v1976 = vpop.f32.mrb[0].mxu0
        %v1977 = vadd.f32 %v1816, %v1976
        %v1978 = vpop.f32.mrb[0].mxu0
        %1979 = vmatprep.mubr.bf16.mxu0 %v1049
        %1980 = vmatmul.mubr.bf16.gmra.mrb[0].mxu0 %v1001
        %v1981 = vpop.f32.mrb[0].mxu0
        %v1982 = vadd.f32 %v1821, %v1981
        %v1983 = vpop.f32.mrb[0].mxu0
        %v1984 = vpop.f32.mrb[0].mxu0
        %v1985 = vadd.f32 %v1824, %v1984
        %v1986 = vpop.f32.mrb[0].mxu0
        %1987 = vmatprep.mubr.bf16.mxu0 %v1050
        %1988 = vmatmul.mubr.bf16.gmra.mrb[0].mxu0 %v1002
        %v1989 = vpop.f32.mrb[0].mxu0
        %v1990 = vadd.f32 %v1829, %v1989
        %v1991 = vpop.f32.mrb[0].mxu0
        %v1992 = vpop.f32.mrb[0].mxu0
        %v1993 = vadd.f32 %v1832, %v1992
        %v1994 = vpop.f32.mrb[0].mxu0
        %1995 = vmatprep.mubr.bf16.mxu0 %v1051
        %1996 = vmatmul.mubr.bf16.gmra.mrb[0].mxu0 %v1003
        %v1997 = vpop.f32.mrb[0].mxu0
        %v1998 = vadd.f32 %v1837, %v1997
        %v1999 = vpop.f32.mrb[0].mxu0
        %v2000 = vpop.f32.mrb[0].mxu0
        %v2001 = vadd.f32 %v1840, %v2000
        %v2002 = vpop.f32.mrb[0].mxu0
        %2003 = vmatprep.mubr.bf16.mxu0 %v1052
        %2004 = vmatmul.mubr.bf16.gmra.mrb[0].mxu0 %v1004
        %v2005 = vpop.f32.mrb[0].mxu0
        %v2006 = vadd.f32 %v1845, %v2005
        %v2007 = vpop.f32.mrb[0].mxu0
        %v2008 = vpop.f32.mrb[0].mxu0
        %v2009 = vadd.f32 %v1848, %v2008
        %v2010 = vpop.f32.mrb[0].mxu0
        %2011 = vmatprep.mubr.bf16.mxu0 %v1053
        %2012 = vmatmul.mubr.bf16.gmra.mrb[0].mxu0 %v1005
        %v2013 = vpop.f32.mrb[0].mxu0
        %v2014 = vadd.f32 %v1853, %v2013
        %v2015 = vpop.f32.mrb[0].mxu0
        %v2016 = vpop.f32.mrb[0].mxu0
        %v2017 = vadd.f32 %v1856, %v2016
        %v2018 = vpop.f32.mrb[0].mxu0
        %2019 = vmatprep.mubr.bf16.mxu0 %v1054
        %2020 = vmatmul.mubr.bf16.gmra.mrb[0].mxu0 %v1006
        %v2021 = vpop.f32.mrb[0].mxu0
        %v2022 = vadd.f32 %v1861, %v2021
        %v2023 = vpop.f32.mrb[0].mxu0
        %v2024 = vpop.f32.mrb[0].mxu0
        %v2025 = vadd.f32 %v1864, %v2024
        %v2026 = vpop.f32.mrb[0].mxu0
        %2027 = vmatprep.mubr.bf16.mxu0 %v1055
        %2028 = vmatmul.mubr.bf16.gmra.mrb[0].mxu0 %v1007
        %v2029 = vpop.f32.mrb[0].mxu0
        %v2030 = vadd.f32 %v1869, %v2029
        %v2031 = vpop.f32.mrb[0].mxu0
        %v2032 = vpop.f32.mrb[0].mxu0
        %v2033 = vadd.f32 %v1872, %v2032
        %v2034 = vpop.f32.mrb[0].mxu0
        %2035 = vmatprep.mubr.bf16.mxu0 %v1056
        %2036 = vmatmul.mubr.bf16.gmra.mrb[0].mxu0 %v1008
        %v2037 = vpop.f32.mrb[0].mxu0
        %v2038 = vadd.f32 %v1877, %v2037
        %v2039 = vpop.f32.mrb[0].mxu0
        %v2040 = vpop.f32.mrb[0].mxu0
        %v2041 = vadd.f32 %v1880, %v2040
        %v2042 = vpop.f32.mrb[0].mxu0
        %2043 = vmatprep.mubr.bf16.mxu0 %v1057
        %2044 = vmatmul.mubr.bf16.gmra.mrb[0].mxu0 %v1009
        %v2045 = vpop.f32.mrb[0].mxu0
        %v2046 = vadd.f32 %v1885, %v2045
        %v2047 = vpop.f32.mrb[0].mxu0
        %v2048 = vpop.f32.mrb[0].mxu0
        %v2049 = vadd.f32 %v1888, %v2048
        %v2050 = vpop.f32.mrb[0].mxu0
        %2051 = vmatprep.mubr.bf16.mxu0 %v1058
        %2052 = vmatmul.mubr.bf16.gmra.mrb[0].mxu0 %v1010
        %v2053 = vpop.f32.mrb[0].mxu0
        %v2054 = vadd.f32 %v1893, %v2053
        %v2055 = vpop.f32.mrb[0].mxu0
        %v2056 = vpop.f32.mrb[0].mxu0
        %v2057 = vadd.f32 %v1896, %v2056
        %v2058 = vpop.f32.mrb[0].mxu0
        %2059 = vdwg.mxu0
        %2060 = vmatprep.subr.bf16.mxu0 0
        %2061 = vmatpush1.bf16.msra.mxu0 %v1626
        %2062 = vmatprep.subr.bf16.mxu0 0
        %2063 = vmatpush1.bf16.msra.mxu0 %v1627
        %2064 = vmatprep.subr.bf16.mxu0 0
        %2065 = vmatpush1.bf16.msra.mxu0 %v1628
        %2066 = vmatprep.subr.bf16.mxu0 0
        %2067 = vmatpush1.bf16.msra.mxu0 %v1629
        %2068 = vmatprep.subr.bf16.mxu0 0
        %2069 = vmatpush1.bf16.msra.mxu0 %v1630
        %2070 = vmatprep.subr.bf16.mxu0 0
        %2071 = vmatpush1.bf16.msra.mxu0 %v1631
        %2072 = vmatprep.subr.bf16.mxu0 0
        %2073 = vmatpush1.bf16.msra.mxu0 %v1632
        %2074 = vmatprep.subr.bf16.mxu0 0
        %2075 = vmatpush1.bf16.msra.mxu0 %v1633
        %2076 = vmatprep.subr.bf16.mxu0 0
        %2077 = vmatpush1.bf16.msra.mxu0 %v1634
        %2078 = vmatprep.subr.bf16.mxu0 0
        %2079 = vmatpush1.bf16.msra.mxu0 %v1635
        %2080 = vmatprep.subr.bf16.mxu0 0
        %2081 = vmatpush1.bf16.msra.mxu0 %v1636
        %2082 = vmatprep.subr.bf16.mxu0 0
        %2083 = vmatpush1.bf16.msra.mxu0 %v1637
        %2084 = vmatprep.subr.bf16.mxu0 0
        %2085 = vmatpush1.bf16.msra.mxu0 %v1638
        %2086 = vmatprep.subr.bf16.mxu0 0
        %2087 = vmatpush1.bf16.msra.mxu0 %v1639
        %2088 = vmatprep.subr.bf16.mxu0 0
        %2089 = vmatpush1.bf16.msra.mxu0 %v1640
        %2090 = vmatprep.subr.bf16.mxu0 0
        %2091 = vmatpush1.bf16.msra.mxu0 %v1641
        %2092 = vmatprep.mubr.bf16.mxu0 %v1139
        %2093 = vmatmul.mubr.bf16.gmra.mrb[0].mxu0 %v1091
        %v2094 = vpop.f32.mrb[0].mxu0
        %v2095 = vadd.f32 %v1934, %v2094
        %v2096 = vpop.f32.mrb[0].mxu0
        %v2097 = vpop.f32.mrb[0].mxu0
        %v2098 = vadd.f32 %v1937, %v2097
        %v2099 = vpop.f32.mrb[0].mxu0
        %2100 = vmatprep.mubr.bf16.mxu0 %v1140
        %2101 = vmatmul.mubr.bf16.gmra.mrb[0].mxu0 %v1092
        %v2102 = vpop.f32.mrb[0].mxu0
        %v2103 = vadd.f32 %v1942, %v2102
        %v2104 = vpop.f32.mrb[0].mxu0
        %v2105 = vpop.f32.mrb[0].mxu0
        %v2106 = vadd.f32 %v1945, %v2105
        %v2107 = vpop.f32.mrb[0].mxu0
        %2108 = vmatprep.mubr.bf16.mxu0 %v1141
        %2109 = vmatmul.mubr.bf16.gmra.mrb[0].mxu0 %v1093
        %v2110 = vpop.f32.mrb[0].mxu0
        %v2111 = vadd.f32 %v1950, %v2110
        %v2112 = vpop.f32.mrb[0].mxu0
        %v2113 = vpop.f32.mrb[0].mxu0
        %v2114 = vadd.f32 %v1953, %v2113
        %v2115 = vpop.f32.mrb[0].mxu0
        %2116 = vmatprep.mubr.bf16.mxu0 %v1142
        %2117 = vmatmul.mubr.bf16.gmra.mrb[0].mxu0 %v1094
        %v2118 = vpop.f32.mrb[0].mxu0
        %v2119 = vadd.f32 %v1958, %v2118
        %v2120 = vpop.f32.mrb[0].mxu0
        %v2121 = vpop.f32.mrb[0].mxu0
        %v2122 = vadd.f32 %v1961, %v2121
        %v2123 = vpop.f32.mrb[0].mxu0
        %2124 = vmatprep.mubr.bf16.mxu0 %v1143
        %2125 = vmatmul.mubr.bf16.gmra.mrb[0].mxu0 %v1095
        %v2126 = vpop.f32.mrb[0].mxu0
        %v2127 = vadd.f32 %v1966, %v2126
        %v2128 = vpop.f32.mrb[0].mxu0
        %v2129 = vpop.f32.mrb[0].mxu0
        %v2130 = vadd.f32 %v1969, %v2129
        %v2131 = vpop.f32.mrb[0].mxu0
        %2132 = vmatprep.mubr.bf16.mxu0 %v1144
        %2133 = vmatmul.mubr.bf16.gmra.mrb[0].mxu0 %v1096
        %v2134 = vpop.f32.mrb[0].mxu0
        %v2135 = vadd.f32 %v1974, %v2134
        %v2136 = vpop.f32.mrb[0].mxu0
        %v2137 = vpop.f32.mrb[0].mxu0
        %v2138 = vadd.f32 %v1977, %v2137
        %v2139 = vpop.f32.mrb[0].mxu0
        %2140 = vmatprep.mubr.bf16.mxu0 %v1145
        %2141 = vmatmul.mubr.bf16.gmra.mrb[0].mxu0 %v1097
        %v2142 = vpop.f32.mrb[0].mxu0
        %v2143 = vadd.f32 %v1982, %v2142
        %v2144 = vpop.f32.mrb[0].mxu0
        %v2145 = vpop.f32.mrb[0].mxu0
        %v2146 = vadd.f32 %v1985, %v2145
        %v2147 = vpop.f32.mrb[0].mxu0
        %2148 = vmatprep.mubr.bf16.mxu0 %v1146
        %2149 = vmatmul.mubr.bf16.gmra.mrb[0].mxu0 %v1098
        %v2150 = vpop.f32.mrb[0].mxu0
        %v2151 = vadd.f32 %v1990, %v2150
        %v2152 = vpop.f32.mrb[0].mxu0
        %v2153 = vpop.f32.mrb[0].mxu0
        %v2154 = vadd.f32 %v1993, %v2153
        %v2155 = vpop.f32.mrb[0].mxu0
        %2156 = vmatprep.mubr.bf16.mxu0 %v1147
        %2157 = vmatmul.mubr.bf16.gmra.mrb[0].mxu0 %v1099
        %v2158 = vpop.f32.mrb[0].mxu0
        %v2159 = vadd.f32 %v1998, %v2158
        %v2160 = vpop.f32.mrb[0].mxu0
        %v2161 = vpop.f32.mrb[0].mxu0
        %v2162 = vadd.f32 %v2001, %v2161
        %v2163 = vpop.f32.mrb[0].mxu0
        %2164 = vmatprep.mubr.bf16.mxu0 %v1148
        %2165 = vmatmul.mubr.bf16.gmra.mrb[0].mxu0 %v1100
        %v2166 = vpop.f32.mrb[0].mxu0
        %v2167 = vadd.f32 %v2006, %v2166
        %v2168 = vpop.f32.mrb[0].mxu0
        %v2169 = vpop.f32.mrb[0].mxu0
        %v2170 = vadd.f32 %v2009, %v2169
        %v2171 = vpop.f32.mrb[0].mxu0
        %2172 = vmatprep.mubr.bf16.mxu0 %v1149
        %2173 = vmatmul.mubr.bf16.gmra.mrb[0].mxu0 %v1101
        %v2174 = vpop.f32.mrb[0].mxu0
        %v2175 = vadd.f32 %v2014, %v2174
        %v2176 = vpop.f32.mrb[0].mxu0
        %v2177 = vpop.f32.mrb[0].mxu0
        %v2178 = vadd.f32 %v2017, %v2177
        %v2179 = vpop.f32.mrb[0].mxu0
        %2180 = vmatprep.mubr.bf16.mxu0 %v1150
        %2181 = vmatmul.mubr.bf16.gmra.mrb[0].mxu0 %v1102
        %v2182 = vpop.f32.mrb[0].mxu0
        %v2183 = vadd.f32 %v2022, %v2182
        %v2184 = vpop.f32.mrb[0].mxu0
        %v2185 = vpop.f32.mrb[0].mxu0
        %v2186 = vadd.f32 %v2025, %v2185
        %v2187 = vpop.f32.mrb[0].mxu0
        %2188 = vmatprep.mubr.bf16.mxu0 %v1151
        %2189 = vmatmul.mubr.bf16.gmra.mrb[0].mxu0 %v1103
        %v2190 = vpop.f32.mrb[0].mxu0
        %v2191 = vadd.f32 %v2030, %v2190
        %v2192 = vpop.f32.mrb[0].mxu0
        %v2193 = vpop.f32.mrb[0].mxu0
        %v2194 = vadd.f32 %v2033, %v2193
        %v2195 = vpop.f32.mrb[0].mxu0
        %2196 = vmatprep.mubr.bf16.mxu0 %v1152
        %2197 = vmatmul.mubr.bf16.gmra.mrb[0].mxu0 %v1104
        %v2198 = vpop.f32.mrb[0].mxu0
        %v2199 = vadd.f32 %v2038, %v2198
        %v2200 = vpop.f32.mrb[0].mxu0
        %v2201 = vpop.f32.mrb[0].mxu0
        %v2202 = vadd.f32 %v2041, %v2201
        %v2203 = vpop.f32.mrb[0].mxu0
        %2204 = vmatprep.mubr.bf16.mxu0 %v1153
        %2205 = vmatmul.mubr.bf16.gmra.mrb[0].mxu0 %v1105
        %v2206 = vpop.f32.mrb[0].mxu0
        %v2207 = vadd.f32 %v2046, %v2206
        %v2208 = vpop.f32.mrb[0].mxu0
        %v2209 = vpop.f32.mrb[0].mxu0
        %v2210 = vadd.f32 %v2049, %v2209
        %v2211 = vpop.f32.mrb[0].mxu0
        %2212 = vmatprep.mubr.bf16.mxu0 %v1154
        %2213 = vmatmul.mubr.bf16.gmra.mrb[0].mxu0 %v1106
        %v2214 = vpop.f32.mrb[0].mxu0
        %v2215 = vadd.f32 %v2054, %v2214
        %v2216 = vpop.f32.mrb[0].mxu0
        %v2217 = vpop.f32.mrb[0].mxu0
        %v2218 = vadd.f32 %v2057, %v2217
        %v2219 = vpop.f32.mrb[0].mxu0
        %2220 = vdwg.mxu0
        %2221 = vmatprep.subr.bf16.mxu0 0
        %2222 = vmatpush1.bf16.msra.mxu0 %v1642
        %2223 = vmatprep.subr.bf16.mxu0 0
        %2224 = vmatpush1.bf16.msra.mxu0 %v1643
        %2225 = vmatprep.subr.bf16.mxu0 0
        %2226 = vmatpush1.bf16.msra.mxu0 %v1644
        %2227 = vmatprep.subr.bf16.mxu0 0
        %2228 = vmatpush1.bf16.msra.mxu0 %v1645
        %2229 = vmatprep.subr.bf16.mxu0 0
        %2230 = vmatpush1.bf16.msra.mxu0 %v1646
        %2231 = vmatprep.subr.bf16.mxu0 0
        %2232 = vmatpush1.bf16.msra.mxu0 %v1647
        %2233 = vmatprep.subr.bf16.mxu0 0
        %2234 = vmatpush1.bf16.msra.mxu0 %v1648
        %2235 = vmatprep.subr.bf16.mxu0 0
        %2236 = vmatpush1.bf16.msra.mxu0 %v1649
        %2237 = vmatprep.subr.bf16.mxu0 0
        %2238 = vmatpush1.bf16.msra.mxu0 %v1650
        %2239 = vmatprep.subr.bf16.mxu0 0
        %2240 = vmatpush1.bf16.msra.mxu0 %v1651
        %2241 = vmatprep.subr.bf16.mxu0 0
        %2242 = vmatpush1.bf16.msra.mxu0 %v1652
        %2243 = vmatprep.subr.bf16.mxu0 0
        %2244 = vmatpush1.bf16.msra.mxu0 %v1653
        %2245 = vmatprep.subr.bf16.mxu0 0
        %2246 = vmatpush1.bf16.msra.mxu0 %v1654
        %2247 = vmatprep.subr.bf16.mxu0 0
        %2248 = vmatpush1.bf16.msra.mxu0 %v1655
        %2249 = vmatprep.subr.bf16.mxu0 0
        %2250 = vmatpush1.bf16.msra.mxu0 %v1656
        %2251 = vmatprep.subr.bf16.mxu0 0
        %2252 = vmatpush1.bf16.msra.mxu0 %v1657
        %2253 = vmatprep.mubr.bf16.mxu0 %v1236
        %2254 = vmatmul.mubr.bf16.gmra.mrb[0].mxu0 %v1188
        %v2255 = vpop.f32.mrb[0].mxu0
        %v2256 = vadd.f32 %v2095, %v2255
        %v2257 = vpop.f32.mrb[0].mxu0
        %v2258 = vpop.f32.mrb[0].mxu0
        %v2259 = vadd.f32 %v2098, %v2258
        %v2260 = vpop.f32.mrb[0].mxu0
        %2261 = vmatprep.mubr.bf16.mxu0 %v1237
        %2262 = vmatmul.mubr.bf16.gmra.mrb[0].mxu0 %v1189
        %v2263 = vpop.f32.mrb[0].mxu0
        %v2264 = vadd.f32 %v2103, %v2263
        %v2265 = vpop.f32.mrb[0].mxu0
        %v2266 = vpop.f32.mrb[0].mxu0
        %v2267 = vadd.f32 %v2106, %v2266
        %v2268 = vpop.f32.mrb[0].mxu0
        %2269 = vmatprep.mubr.bf16.mxu0 %v1238
        %2270 = vmatmul.mubr.bf16.gmra.mrb[0].mxu0 %v1190
        %v2271 = vpop.f32.mrb[0].mxu0
        %v2272 = vadd.f32 %v2111, %v2271
        %v2273 = vpop.f32.mrb[0].mxu0
        %v2274 = vpop.f32.mrb[0].mxu0
        %v2275 = vadd.f32 %v2114, %v2274
        %v2276 = vpop.f32.mrb[0].mxu0
        %2277 = vmatprep.mubr.bf16.mxu0 %v1239
        %2278 = vmatmul.mubr.bf16.gmra.mrb[0].mxu0 %v1191
        %v2279 = vpop.f32.mrb[0].mxu0
        %v2280 = vadd.f32 %v2119, %v2279
        %v2281 = vpop.f32.mrb[0].mxu0
        %v2282 = vpop.f32.mrb[0].mxu0
        %v2283 = vadd.f32 %v2122, %v2282
        %v2284 = vpop.f32.mrb[0].mxu0
        %2285 = vmatprep.mubr.bf16.mxu0 %v1240
        %2286 = vmatmul.mubr.bf16.gmra.mrb[0].mxu0 %v1192
        %v2287 = vpop.f32.mrb[0].mxu0
        %v2288 = vadd.f32 %v2127, %v2287
        %v2289 = vpop.f32.mrb[0].mxu0
        %v2290 = vpop.f32.mrb[0].mxu0
        %v2291 = vadd.f32 %v2130, %v2290
        %v2292 = vpop.f32.mrb[0].mxu0
        %2293 = vmatprep.mubr.bf16.mxu0 %v1241
        %2294 = vmatmul.mubr.bf16.gmra.mrb[0].mxu0 %v1193
        %v2295 = vpop.f32.mrb[0].mxu0
        %v2296 = vadd.f32 %v2135, %v2295
        %v2297 = vpop.f32.mrb[0].mxu0
        %v2298 = vpop.f32.mrb[0].mxu0
        %v2299 = vadd.f32 %v2138, %v2298
        %v2300 = vpop.f32.mrb[0].mxu0
        %2301 = vmatprep.mubr.bf16.mxu0 %v1242
        %2302 = vmatmul.mubr.bf16.gmra.mrb[0].mxu0 %v1194
        %v2303 = vpop.f32.mrb[0].mxu0
        %v2304 = vadd.f32 %v2143, %v2303
        %v2305 = vpop.f32.mrb[0].mxu0
        %v2306 = vpop.f32.mrb[0].mxu0
        %v2307 = vadd.f32 %v2146, %v2306
        %v2308 = vpop.f32.mrb[0].mxu0
        %2309 = vmatprep.mubr.bf16.mxu0 %v1243
        %2310 = vmatmul.mubr.bf16.gmra.mrb[0].mxu0 %v1195
        %v2311 = vpop.f32.mrb[0].mxu0
        %v2312 = vadd.f32 %v2151, %v2311
        %v2313 = vpop.f32.mrb[0].mxu0
        %v2314 = vpop.f32.mrb[0].mxu0
        %v2315 = vadd.f32 %v2154, %v2314
        %v2316 = vpop.f32.mrb[0].mxu0
        %2317 = vmatprep.mubr.bf16.mxu0 %v1244
        %2318 = vmatmul.mubr.bf16.gmra.mrb[0].mxu0 %v1196
        %v2319 = vpop.f32.mrb[0].mxu0
        %v2320 = vadd.f32 %v2159, %v2319
        %v2321 = vpop.f32.mrb[0].mxu0
        %v2322 = vpop.f32.mrb[0].mxu0
        %v2323 = vadd.f32 %v2162, %v2322
        %v2324 = vpop.f32.mrb[0].mxu0
        %2325 = vmatprep.mubr.bf16.mxu0 %v1245
        %2326 = vmatmul.mubr.bf16.gmra.mrb[0].mxu0 %v1197
        %v2327 = vpop.f32.mrb[0].mxu0
        %v2328 = vadd.f32 %v2167, %v2327
        %v2329 = vpop.f32.mrb[0].mxu0
        %v2330 = vpop.f32.mrb[0].mxu0
        %v2331 = vadd.f32 %v2170, %v2330
        %v2332 = vpop.f32.mrb[0].mxu0
        %2333 = vmatprep.mubr.bf16.mxu0 %v1246
        %2334 = vmatmul.mubr.bf16.gmra.mrb[0].mxu0 %v1198
        %v2335 = vpop.f32.mrb[0].mxu0
        %v2336 = vadd.f32 %v2175, %v2335
        %v2337 = vpop.f32.mrb[0].mxu0
        %v2338 = vpop.f32.mrb[0].mxu0
        %v2339 = vadd.f32 %v2178, %v2338
        %v2340 = vpop.f32.mrb[0].mxu0
        %2341 = vmatprep.mubr.bf16.mxu0 %v1247
        %2342 = vmatmul.mubr.bf16.gmra.mrb[0].mxu0 %v1199
        %v2343 = vpop.f32.mrb[0].mxu0
        %v2344 = vadd.f32 %v2183, %v2343
        %v2345 = vpop.f32.mrb[0].mxu0
        %v2346 = vpop.f32.mrb[0].mxu0
        %v2347 = vadd.f32 %v2186, %v2346
        %v2348 = vpop.f32.mrb[0].mxu0
        %2349 = vmatprep.mubr.bf16.mxu0 %v1248
        %2350 = vmatmul.mubr.bf16.gmra.mrb[0].mxu0 %v1200
        %v2351 = vpop.f32.mrb[0].mxu0
        %v2352 = vadd.f32 %v2191, %v2351
        %v2353 = vpop.f32.mrb[0].mxu0
        %v2354 = vpop.f32.mrb[0].mxu0
        %v2355 = vadd.f32 %v2194, %v2354
        %v2356 = vpop.f32.mrb[0].mxu0
        %2357 = vmatprep.mubr.bf16.mxu0 %v1249
        %2358 = vmatmul.mubr.bf16.gmra.mrb[0].mxu0 %v1201
        %v2359 = vpop.f32.mrb[0].mxu0
        %v2360 = vadd.f32 %v2199, %v2359
        %v2361 = vpop.f32.mrb[0].mxu0
        %v2362 = vpop.f32.mrb[0].mxu0
        %v2363 = vadd.f32 %v2202, %v2362
        %v2364 = vpop.f32.mrb[0].mxu0
        %2365 = vmatprep.mubr.bf16.mxu0 %v1250
        %2366 = vmatmul.mubr.bf16.gmra.mrb[0].mxu0 %v1202
        %v2367 = vpop.f32.mrb[0].mxu0
        %v2368 = vadd.f32 %v2207, %v2367
        %v2369 = vpop.f32.mrb[0].mxu0
        %v2370 = vpop.f32.mrb[0].mxu0
        %v2371 = vadd.f32 %v2210, %v2370
        %v2372 = vpop.f32.mrb[0].mxu0
        %2373 = vmatprep.mubr.bf16.mxu0 %v1251
        %2374 = vmatmul.mubr.bf16.gmra.mrb[0].mxu0 %v1203
        %v2375 = vpop.f32.mrb[0].mxu0
        %v2376 = vadd.f32 %v2215, %v2375
        %v2377 = vpop.f32.mrb[0].mxu0
        %v2378 = vpop.f32.mrb[0].mxu0
        %v2379 = vadd.f32 %v2218, %v2378
        %v2380 = vpop.f32.mrb[0].mxu0
        %2381 = vdwg.mxu0
        %2382 = vmatprep.subr.bf16.mxu0 0
        %2383 = vmatpush1.bf16.msra.mxu0 %v1658
        %2384 = vmatprep.subr.bf16.mxu0 0
        %2385 = vmatpush1.bf16.msra.mxu0 %v1659
        %2386 = vmatprep.subr.bf16.mxu0 0
        %2387 = vmatpush1.bf16.msra.mxu0 %v1660
        %2388 = vmatprep.subr.bf16.mxu0 0
        %2389 = vmatpush1.bf16.msra.mxu0 %v1661
        %2390 = vmatprep.subr.bf16.mxu0 0
        %2391 = vmatpush1.bf16.msra.mxu0 %v1662
        %2392 = vmatprep.subr.bf16.mxu0 0
        %2393 = vmatpush1.bf16.msra.mxu0 %v1663
        %2394 = vmatprep.subr.bf16.mxu0 0
        %2395 = vmatpush1.bf16.msra.mxu0 %v1664
        %2396 = vmatprep.subr.bf16.mxu0 0
        %2397 = vmatpush1.bf16.msra.mxu0 %v1665
        %2398 = vmatprep.subr.bf16.mxu0 0
        %2399 = vmatpush1.bf16.msra.mxu0 0
        %2400 = vmatprep.subr.bf16.mxu0 0
        %2401 = vmatpush1.bf16.msra.mxu0 0
        %2402 = vmatprep.subr.bf16.mxu0 0
        %2403 = vmatpush1.bf16.msra.mxu0 0
        %2404 = vmatprep.subr.bf16.mxu0 0
        %2405 = vmatpush1.bf16.msra.mxu0 0
        %2406 = vmatprep.subr.bf16.mxu0 0
        %2407 = vmatpush1.bf16.msra.mxu0 0
        %2408 = vmatprep.subr.bf16.mxu0 0
        %2409 = vmatpush1.bf16.msra.mxu0 0
        %2410 = vmatprep.subr.bf16.mxu0 0
        %2411 = vmatpush1.bf16.msra.mxu0 0
        %2412 = vmatprep.subr.bf16.mxu0 0
        %2413 = vmatpush1.bf16.msra.mxu0 0
        %2414 = vmatprep.mubr.bf16.mxu0 0
        %2415 = vmatmul.mubr.bf16.gmra.mrb[0].mxu0 %v1284
        %v2416 = vpop.f32.mrb[0].mxu0
        %v2417 = vadd.f32 %v2256, %v2416
        %v2418 = vpop.f32.mrb[0].mxu0
        %v2419 = vpop.f32.mrb[0].mxu0
        %v2420 = vadd.f32 %v2259, %v2419
        %v2421 = vpop.f32.mrb[0].mxu0
        %2422 = vmatprep.mubr.bf16.mxu0 0
        %2423 = vmatmul.mubr.bf16.gmra.mrb[0].mxu0 %v1285
        %v2424 = vpop.f32.mrb[0].mxu0
        %v2425 = vadd.f32 %v2264, %v2424
        %v2426 = vpop.f32.mrb[0].mxu0
        %v2427 = vpop.f32.mrb[0].mxu0
        %v2428 = vadd.f32 %v2267, %v2427
        %v2429 = vpop.f32.mrb[0].mxu0
        %2430 = vmatprep.mubr.bf16.mxu0 0
        %2431 = vmatmul.mubr.bf16.gmra.mrb[0].mxu0 %v1286
        %v2432 = vpop.f32.mrb[0].mxu0
        %v2433 = vadd.f32 %v2272, %v2432
        %v2434 = vpop.f32.mrb[0].mxu0
        %v2435 = vpop.f32.mrb[0].mxu0
        %v2436 = vadd.f32 %v2275, %v2435
        %v2437 = vpop.f32.mrb[0].mxu0
        %2438 = vmatprep.mubr.bf16.mxu0 0
        %2439 = vmatmul.mubr.bf16.gmra.mrb[0].mxu0 %v1287
        %v2440 = vpop.f32.mrb[0].mxu0
        %v2441 = vadd.f32 %v2280, %v2440
        %v2442 = vpop.f32.mrb[0].mxu0
        %v2443 = vpop.f32.mrb[0].mxu0
        %v2444 = vadd.f32 %v2283, %v2443
        %v2445 = vpop.f32.mrb[0].mxu0
        %2446 = vmatprep.mubr.bf16.mxu0 0
        %2447 = vmatmul.mubr.bf16.gmra.mrb[0].mxu0 %v1288
        %v2448 = vpop.f32.mrb[0].mxu0
        %v2449 = vadd.f32 %v2288, %v2448
        %v2450 = vpop.f32.mrb[0].mxu0
        %v2451 = vpop.f32.mrb[0].mxu0
        %v2452 = vadd.f32 %v2291, %v2451
        %v2453 = vpop.f32.mrb[0].mxu0
        %2454 = vmatprep.mubr.bf16.mxu0 0
        %2455 = vmatmul.mubr.bf16.gmra.mrb[0].mxu0 %v1289
        %v2456 = vpop.f32.mrb[0].mxu0
        %v2457 = vadd.f32 %v2296, %v2456
        %v2458 = vpop.f32.mrb[0].mxu0
        %v2459 = vpop.f32.mrb[0].mxu0
        %v2460 = vadd.f32 %v2299, %v2459
        %v2461 = vpop.f32.mrb[0].mxu0
        %2462 = vmatprep.mubr.bf16.mxu0 0
        %2463 = vmatmul.mubr.bf16.gmra.mrb[0].mxu0 %v1290
        %v2464 = vpop.f32.mrb[0].mxu0
        %v2465 = vadd.f32 %v2304, %v2464
        %v2466 = vpop.f32.mrb[0].mxu0
        %v2467 = vpop.f32.mrb[0].mxu0
        %v2468 = vadd.f32 %v2307, %v2467
        %v2469 = vpop.f32.mrb[0].mxu0
        %2470 = vmatprep.mubr.bf16.mxu0 0
        %2471 = vmatmul.mubr.bf16.gmra.mrb[0].mxu0 %v1291
        %v2472 = vpop.f32.mrb[0].mxu0
        %v2473 = vadd.f32 %v2312, %v2472
        %v2474 = vpop.f32.mrb[0].mxu0
        %v2475 = vpop.f32.mrb[0].mxu0
        %v2476 = vadd.f32 %v2315, %v2475
        %v2477 = vpop.f32.mrb[0].mxu0
        %2478 = vmatprep.mubr.bf16.mxu0 0
        %2479 = vmatmul.mubr.bf16.gmra.mrb[0].mxu0 %v1292
        %v2480 = vpop.f32.mrb[0].mxu0
        %v2481 = vadd.f32 %v2320, %v2480
        %v2482 = vpop.f32.mrb[0].mxu0
        %v2483 = vpop.f32.mrb[0].mxu0
        %v2484 = vadd.f32 %v2323, %v2483
        %v2485 = vpop.f32.mrb[0].mxu0
        %2486 = vmatprep.mubr.bf16.mxu0 0
        %2487 = vmatmul.mubr.bf16.gmra.mrb[0].mxu0 %v1293
        %v2488 = vpop.f32.mrb[0].mxu0
        %v2489 = vadd.f32 %v2328, %v2488
        %v2490 = vpop.f32.mrb[0].mxu0
        %v2491 = vpop.f32.mrb[0].mxu0
        %v2492 = vadd.f32 %v2331, %v2491
        %v2493 = vpop.f32.mrb[0].mxu0
        %2494 = vmatprep.mubr.bf16.mxu0 0
        %2495 = vmatmul.mubr.bf16.gmra.mrb[0].mxu0 %v1294
        %v2496 = vpop.f32.mrb[0].mxu0
        %v2497 = vadd.f32 %v2336, %v2496
        %v2498 = vpop.f32.mrb[0].mxu0
        %v2499 = vpop.f32.mrb[0].mxu0
        %v2500 = vadd.f32 %v2339, %v2499
        %v2501 = vpop.f32.mrb[0].mxu0
        %2502 = vmatprep.mubr.bf16.mxu0 0
        %2503 = vmatmul.mubr.bf16.gmra.mrb[0].mxu0 %v1295
        %v2504 = vpop.f32.mrb[0].mxu0
        %v2505 = vadd.f32 %v2344, %v2504
        %v2506 = vpop.f32.mrb[0].mxu0
        %v2507 = vpop.f32.mrb[0].mxu0
        %v2508 = vadd.f32 %v2347, %v2507
        %v2509 = vpop.f32.mrb[0].mxu0
        %2510 = vmatprep.mubr.bf16.mxu0 0
        %2511 = vmatmul.mubr.bf16.gmra.mrb[0].mxu0 %v1296
        %v2512 = vpop.f32.mrb[0].mxu0
        %v2513 = vadd.f32 %v2352, %v2512
        %v2514 = vpop.f32.mrb[0].mxu0
        %v2515 = vpop.f32.mrb[0].mxu0
        %v2516 = vadd.f32 %v2355, %v2515
        %v2517 = vpop.f32.mrb[0].mxu0
        %2518 = vmatprep.mubr.bf16.mxu0 0
        %2519 = vmatmul.mubr.bf16.gmra.mrb[0].mxu0 %v1297
        %v2520 = vpop.f32.mrb[0].mxu0
        %v2521 = vadd.f32 %v2360, %v2520
        %v2522 = vpop.f32.mrb[0].mxu0
        %v2523 = vpop.f32.mrb[0].mxu0
        %v2524 = vadd.f32 %v2363, %v2523
        %v2525 = vpop.f32.mrb[0].mxu0
        %2526 = vmatprep.mubr.bf16.mxu0 0
        %2527 = vmatmul.mubr.bf16.gmra.mrb[0].mxu0 %v1298
        %v2528 = vpop.f32.mrb[0].mxu0
        %v2529 = vadd.f32 %v2368, %v2528
        %v2530 = vpop.f32.mrb[0].mxu0
        %v2531 = vpop.f32.mrb[0].mxu0
        %v2532 = vadd.f32 %v2371, %v2531
        %v2533 = vpop.f32.mrb[0].mxu0
        %2534 = vmatprep.mubr.bf16.mxu0 0
        %2535 = vmatmul.mubr.bf16.gmra.mrb[0].mxu0 %v1299
        %v2536 = vpop.f32.mrb[0].mxu0
        %v2537 = vadd.f32 %v2376, %v2536
        %v2538 = vpop.f32.mrb[0].mxu0
        %v2539 = vpop.f32.mrb[0].mxu0
        %v2540 = vadd.f32 %v2379, %v2539
        %v2541 = vpop.f32.mrb[0].mxu0
        %2542 = vdwg.mxu0
        %v2543 = vld [vmem:[#allocation14] sm:$0xff]
        %v2544 = vld [vmem:[#allocation14 + $0x8] sm:$0xff]
        %v2545 = vld [vmem:[#allocation14 + $0x10] sm:$0xff]
        %v2546 = vld [vmem:[#allocation14 + $0x18] sm:$0xff]
        %v2547 = vld [vmem:[#allocation14 + $0x20] sm:$0xff]
        %v2548 = vld [vmem:[#allocation14 + $0x28] sm:$0xff]
        %v2549 = vld [vmem:[#allocation14 + $0x30] sm:$0xff]
        %v2550 = vld [vmem:[#allocation14 + $0x38] sm:$0xff]
        %v2551 = vld [vmem:[#allocation14 + $0x40] sm:$0xff]
        %v2552 = vld [vmem:[#allocation14 + $0x48] sm:$0xff]
        %v2553 = vld [vmem:[#allocation14 + $0x50] sm:$0xff]
        %v2554 = vld [vmem:[#allocation14 + $0x58] sm:$0xff]
        %v2555 = vld [vmem:[#allocation14 + $0x60] sm:$0xff]
        %v2556 = vld [vmem:[#allocation14 + $0x68] sm:$0xff]
        %v2557 = vld [vmem:[#allocation14 + $0x70] sm:$0xff]
        %v2558 = vld [vmem:[#allocation14 + $0x78] sm:$0xff]
        %v2559 = vld [vmem:[#allocation11] sm:$0x1]
        %v2560 = vld [vmem:[#allocation12] sm:$0x1]
        %v2561 = vadd.f32 %v2417, %v2420
        %v2562 = vadd.f32 %v2561, %v2425
        %v2563 = vadd.f32 %v2562, %v2428
        %v2564 = vadd.f32 %v2563, %v2433
        %v2565 = vadd.f32 %v2564, %v2436
        %v2566 = vadd.f32 %v2565, %v2441
        %v2567 = vadd.f32 %v2566, %v2444
        %v2568 = vadd.f32 %v2567, %v2449
        %v2569 = vadd.f32 %v2568, %v2452
        %v2570 = vadd.f32 %v2569, %v2457
        %v2571 = vadd.f32 %v2570, %v2460
        %v2572 = vadd.f32 %v2571, %v2465
        %v2573 = vadd.f32 %v2572, %v2468
        %v2574 = vadd.f32 %v2573, %v2473
        %v2575 = vadd.f32 %v2574, %v2476
        %v2576 = vadd.f32 %v2575, %v2481
        %v2577 = vadd.f32 %v2576, %v2484
        %v2578 = vadd.f32 %v2577, %v2489
        %v2579 = vadd.f32 %v2578, %v2492
        %v2580 = vadd.f32 %v2579, %v2497
        %v2581 = vadd.f32 %v2580, %v2500
        %v2582 = vadd.f32 %v2581, %v2505
        %v2583 = vadd.f32 %v2582, %v2508
        %v2584 = vadd.f32 %v2583, %v2513
        %v2585 = vadd.f32 %v2584, %v2516
        %v2586 = vadd.f32 %v2585, %v2521
        %v2587 = vadd.f32 %v2586, %v2524
        %v2588 = vadd.f32 %v2587, %v2529
        %v2589 = vadd.f32 %v2588, %v2532
        %v2590 = vadd.f32 %v2589, %v2537
        %v2591 = vadd.f32 %v2590, %v2540
        %v2592 = vrot.slane %v2591, 4
        %v2593 = vadd.f32 %v2591, %v2592
        %v2594 = vrot.slane %v2593, 2
        %v2595 = vadd.f32 %v2593, %v2594
        %v2596 = vrot.slane %v2595, 1
        %v2597 = vadd.f32 %v2595, %v2596
        %2598 = vmatprep.subr.mxu0 0.0
        %2599 = vmatpush1.msra.mxu0 %v2543
        %2600 = vmatprep.subr.mxu0 0.0
        %2601 = vmatpush1.msra.mxu0 %v2544
        %2602 = vmatprep.subr.mxu0 0.0
        %2603 = vmatpush1.msra.mxu0 %v2545
        %2604 = vmatprep.subr.mxu0 0.0
        %2605 = vmatpush1.msra.mxu0 %v2546
        %2606 = vmatprep.subr.mxu0 0.0
        %2607 = vmatpush1.msra.mxu0 %v2547
        %2608 = vmatprep.subr.mxu0 0.0
        %2609 = vmatpush1.msra.mxu0 %v2548
        %2610 = vmatprep.subr.mxu0 0.0
        %2611 = vmatpush1.msra.mxu0 %v2549
        %2612 = vmatprep.subr.mxu0 0.0
        %2613 = vmatpush1.msra.mxu0 %v2550
        %2614 = vmatprep.subr.mxu0 0.0
        %2615 = vmatpush1.msra.mxu0 %v2551
        %2616 = vmatprep.subr.mxu0 0.0
        %2617 = vmatpush1.msra.mxu0 %v2552
        %2618 = vmatprep.subr.mxu0 0.0
        %2619 = vmatpush1.msra.mxu0 %v2553
        %2620 = vmatprep.subr.mxu0 0.0
        %2621 = vmatpush1.msra.mxu0 %v2554
        %2622 = vmatprep.subr.mxu0 0.0
        %2623 = vmatpush1.msra.mxu0 %v2555
        %2624 = vmatprep.subr.mxu0 0.0
        %2625 = vmatpush1.msra.mxu0 %v2556
        %2626 = vmatprep.subr.mxu0 0.0
        %2627 = vmatpush1.msra.mxu0 %v2557
        %2628 = vmatprep.subr.mxu0 0.0
        %2629 = vmatpush1.msra.mxu0 %v2558
        %2630 = vmatprep.subr.mxu0 0.0
        %2631 = vmatpush1.msra.mxu0 0.0
        %2632 = vmatprep.subr.mxu0 0.0
        %2633 = vmatpush1.msra.mxu0 0.0
        %2634 = vmatprep.subr.mxu0 0.0
        %2635 = vmatpush1.msra.mxu0 0.0
        %2636 = vmatprep.subr.mxu0 0.0
        %2637 = vmatpush1.msra.mxu0 0.0
        %2638 = vmatprep.subr.mxu0 0.0
        %2639 = vmatpush1.msra.mxu0 0.0
        %2640 = vmatprep.subr.mxu0 0.0
        %2641 = vmatpush1.msra.mxu0 0.0
        %2642 = vmatprep.subr.mxu0 0.0
        %2643 = vmatpush1.msra.mxu0 0.0
        %2644 = vmatprep.subr.mxu0 0.0
        %2645 = vmatpush1.msra.mxu0 0.0
        %2646 = vmatprep.subr.mxu0 0.0
        %2647 = vmatpush1.msra.mxu0 0.0
        %2648 = vmatprep.subr.mxu0 0.0
        %2649 = vmatpush1.msra.mxu0 0.0
        %2650 = vmatprep.subr.mxu0 0.0
        %2651 = vmatpush1.msra.mxu0 0.0
        %2652 = vmatprep.subr.mxu0 0.0
        %2653 = vmatpush1.msra.mxu0 0.0
        %2654 = vmatprep.subr.mxu0 0.0
        %2655 = vmatpush1.msra.mxu0 0.0
        %2656 = vmatprep.subr.mxu0 0.0
        %2657 = vmatpush1.msra.mxu0 0.0
        %2658 = vmatprep.subr.mxu0 0.0
        %2659 = vmatpush1.msra.mxu0 0.0
        %2660 = vmatprep.subr.mxu0 0.0
        %2661 = vmatpush1.msra.mxu0 0.0
        %2662 = vmatprep.mubr.f32.mxu0 0.0
        %2663 = vmatmul.mubr.f32.gmra.mrb[0].mxu0 %v2597
        %v2664 = vpop.f32.mrb[0].mxu0
        %v2665 = vadd.f32 0.0, %v2664
        %v2666 = vpop.f32.mrb[0].mxu0
        %2667 = vdwg.mxu0
        %v2668 = vmul.f32 %v2665, 0.00048828125
        %v2669 = vlaneseq
        %v2670 = vshrl.u32 %v2669, 7
        %v2671 = vsub.s32 0, %v2670
        %v2672 = vrot.slane %v2668, %v2671
        %v2673 = vsub.f32 %v2417, %v2672
        %v2674 = vsub.f32 %v2420, %v2672
        %v2675 = vsub.f32 %v2425, %v2672
        %v2676 = vsub.f32 %v2428, %v2672
        %v2677 = vsub.f32 %v2433, %v2672
        %v2678 = vsub.f32 %v2436, %v2672
        %v2679 = vsub.f32 %v2441, %v2672
        %v2680 = vsub.f32 %v2444, %v2672
        %v2681 = vsub.f32 %v2449, %v2672
        %v2682 = vsub.f32 %v2452, %v2672
        %v2683 = vsub.f32 %v2457, %v2672
        %v2684 = vsub.f32 %v2460, %v2672
        %v2685 = vsub.f32 %v2465, %v2672
        %v2686 = vsub.f32 %v2468, %v2672
        %v2687 = vsub.f32 %v2473, %v2672
        %v2688 = vsub.f32 %v2476, %v2672
        %v2689 = vsub.f32 %v2481, %v2672
        %v2690 = vsub.f32 %v2484, %v2672
        %v2691 = vsub.f32 %v2489, %v2672
        %v2692 = vsub.f32 %v2492, %v2672
        %v2693 = vsub.f32 %v2497, %v2672
        %v2694 = vsub.f32 %v2500, %v2672
        %v2695 = vsub.f32 %v2505, %v2672
        %v2696 = vsub.f32 %v2508, %v2672
        %v2697 = vsub.f32 %v2513, %v2672
        %v2698 = vsub.f32 %v2516, %v2672
        %v2699 = vsub.f32 %v2521, %v2672
        %v2700 = vsub.f32 %v2524, %v2672
        %v2701 = vsub.f32 %v2529, %v2672
        %v2702 = vsub.f32 %v2532, %v2672
        %v2703 = vsub.f32 %v2537, %v2672
        %v2704 = vsub.f32 %v2540, %v2672
        %v2705 = vmul.f32 %v2673, %v2673
        %v2706 = vmul.f32 %v2674, %v2674
        %v2707 = vmul.f32 %v2675, %v2675
        %v2708 = vmul.f32 %v2676, %v2676
        %v2709 = vmul.f32 %v2677, %v2677
        %v2710 = vmul.f32 %v2678, %v2678
        %v2711 = vmul.f32 %v2679, %v2679
        %v2712 = vmul.f32 %v2680, %v2680
        %v2713 = vmul.f32 %v2681, %v2681
        %v2714 = vmul.f32 %v2682, %v2682
        %v2715 = vmul.f32 %v2683, %v2683
        %v2716 = vmul.f32 %v2684, %v2684
        %v2717 = vmul.f32 %v2685, %v2685
        %v2718 = vmul.f32 %v2686, %v2686
        %v2719 = vmul.f32 %v2687, %v2687
        %v2720 = vmul.f32 %v2688, %v2688
        %v2721 = vmul.f32 %v2689, %v2689
        %v2722 = vmul.f32 %v2690, %v2690
        %v2723 = vmul.f32 %v2691, %v2691
        %v2724 = vmul.f32 %v2692, %v2692
        %v2725 = vmul.f32 %v2693, %v2693
        %v2726 = vmul.f32 %v2694, %v2694
        %v2727 = vmul.f32 %v2695, %v2695
        %v2728 = vmul.f32 %v2696, %v2696
        %v2729 = vmul.f32 %v2697, %v2697
        %v2730 = vmul.f32 %v2698, %v2698
        %v2731 = vmul.f32 %v2699, %v2699
        %v2732 = vmul.f32 %v2700, %v2700
        %v2733 = vmul.f32 %v2701, %v2701
        %v2734 = vmul.f32 %v2702, %v2702
        %v2735 = vmul.f32 %v2703, %v2703
        %v2736 = vmul.f32 %v2704, %v2704
        %v2737 = vadd.f32 %v2705, %v2706
        %v2738 = vadd.f32 %v2737, %v2707
        %v2739 = vadd.f32 %v2738, %v2708
        %v2740 = vadd.f32 %v2739, %v2709
        %v2741 = vadd.f32 %v2740, %v2710
        %v2742 = vadd.f32 %v2741, %v2711
        %v2743 = vadd.f32 %v2742, %v2712
        %v2744 = vadd.f32 %v2743, %v2713
        %v2745 = vadd.f32 %v2744, %v2714
        %v2746 = vadd.f32 %v2745, %v2715
        %v2747 = vadd.f32 %v2746, %v2716
        %v2748 = vadd.f32 %v2747, %v2717
        %v2749 = vadd.f32 %v2748, %v2718
        %v2750 = vadd.f32 %v2749, %v2719
        %v2751 = vadd.f32 %v2750, %v2720
        %v2752 = vadd.f32 %v2751, %v2721
        %v2753 = vadd.f32 %v2752, %v2722
        %v2754 = vadd.f32 %v2753, %v2723
        %v2755 = vadd.f32 %v2754, %v2724
        %v2756 = vadd.f32 %v2755, %v2725
        %v2757 = vadd.f32 %v2756, %v2726
        %v2758 = vadd.f32 %v2757, %v2727
        %v2759 = vadd.f32 %v2758, %v2728
        %v2760 = vadd.f32 %v2759, %v2729
        %v2761 = vadd.f32 %v2760, %v2730
        %v2762 = vadd.f32 %v2761, %v2731
        %v2763 = vadd.f32 %v2762, %v2732
        %v2764 = vadd.f32 %v2763, %v2733
        %v2765 = vadd.f32 %v2764, %v2734
        %v2766 = vadd.f32 %v2765, %v2735
        %v2767 = vadd.f32 %v2766, %v2736
        %v2768 = vrot.slane %v2767, 4
        %v2769 = vadd.f32 %v2767, %v2768
        %v2770 = vrot.slane %v2769, 2
        %v2771 = vadd.f32 %v2769, %v2770
        %v2772 = vrot.slane %v2771, 1
        %v2773 = vadd.f32 %v2771, %v2772
        %2774 = vmatprep.subr.mxu0 0.0
        %2775 = vmatpush1.msra.mxu0 %v2543
        %2776 = vmatprep.subr.mxu0 0.0
        %2777 = vmatpush1.msra.mxu0 %v2544
        %2778 = vmatprep.subr.mxu0 0.0
        %2779 = vmatpush1.msra.mxu0 %v2545
        %2780 = vmatprep.subr.mxu0 0.0
        %2781 = vmatpush1.msra.mxu0 %v2546
        %2782 = vmatprep.subr.mxu0 0.0
        %2783 = vmatpush1.msra.mxu0 %v2547
        %2784 = vmatprep.subr.mxu0 0.0
        %2785 = vmatpush1.msra.mxu0 %v2548
        %2786 = vmatprep.subr.mxu0 0.0
        %2787 = vmatpush1.msra.mxu0 %v2549
        %2788 = vmatprep.subr.mxu0 0.0
        %2789 = vmatpush1.msra.mxu0 %v2550
        %2790 = vmatprep.subr.mxu0 0.0
        %2791 = vmatpush1.msra.mxu0 %v2551
        %2792 = vmatprep.subr.mxu0 0.0
        %2793 = vmatpush1.msra.mxu0 %v2552
        %2794 = vmatprep.subr.mxu0 0.0
        %2795 = vmatpush1.msra.mxu0 %v2553
        %2796 = vmatprep.subr.mxu0 0.0
        %2797 = vmatpush1.msra.mxu0 %v2554
        %2798 = vmatprep.subr.mxu0 0.0
        %2799 = vmatpush1.msra.mxu0 %v2555
        %2800 = vmatprep.subr.mxu0 0.0
        %2801 = vmatpush1.msra.mxu0 %v2556
        %2802 = vmatprep.subr.mxu0 0.0
        %2803 = vmatpush1.msra.mxu0 %v2557
        %2804 = vmatprep.subr.mxu0 0.0
        %2805 = vmatpush1.msra.mxu0 %v2558
        %2806 = vmatprep.subr.mxu0 0.0
        %2807 = vmatpush1.msra.mxu0 0.0
        %2808 = vmatprep.subr.mxu0 0.0
        %2809 = vmatpush1.msra.mxu0 0.0
        %2810 = vmatprep.subr.mxu0 0.0
        %2811 = vmatpush1.msra.mxu0 0.0
        %2812 = vmatprep.subr.mxu0 0.0
        %2813 = vmatpush1.msra.mxu0 0.0
        %2814 = vmatprep.subr.mxu0 0.0
        %2815 = vmatpush1.msra.mxu0 0.0
        %2816 = vmatprep.subr.mxu0 0.0
        %2817 = vmatpush1.msra.mxu0 0.0
        %2818 = vmatprep.subr.mxu0 0.0
        %2819 = vmatpush1.msra.mxu0 0.0
        %2820 = vmatprep.subr.mxu0 0.0
        %2821 = vmatpush1.msra.mxu0 0.0
        %2822 = vmatprep.subr.mxu0 0.0
        %2823 = vmatpush1.msra.mxu0 0.0
        %2824 = vmatprep.subr.mxu0 0.0
        %2825 = vmatpush1.msra.mxu0 0.0
        %2826 = vmatprep.subr.mxu0 0.0
        %2827 = vmatpush1.msra.mxu0 0.0
        %2828 = vmatprep.subr.mxu0 0.0
        %2829 = vmatpush1.msra.mxu0 0.0
        %2830 = vmatprep.subr.mxu0 0.0
        %2831 = vmatpush1.msra.mxu0 0.0
        %2832 = vmatprep.subr.mxu0 0.0
        %2833 = vmatpush1.msra.mxu0 0.0
        %2834 = vmatprep.subr.mxu0 0.0
        %2835 = vmatpush1.msra.mxu0 0.0
        %2836 = vmatprep.subr.mxu0 0.0
        %2837 = vmatpush1.msra.mxu0 0.0
        %2838 = vmatprep.mubr.f32.mxu0 0.0
        %2839 = vmatmul.mubr.f32.gmra.mrb[0].mxu0 %v2773
        %v2840 = vpop.f32.mrb[0].mxu0
        %v2841 = vadd.f32 0.0, %v2840
        %v2842 = vpop.f32.mrb[0].mxu0
        %2843 = vdwg.mxu0
        %v2844 = vmul.f32 %v2841, 0.00048828125
        %v2845 = vadd.f32 %v2844, 1e-05
        %v2846 = vrsqrt.pop %v2845
        %v2847 = vlaneseq
        %v2848 = vshrl.u32 %v2847, 7
        %v2849 = vsub.s32 0, %v2848
        %v2850 = vrot.slane %v2846, %v2849
        %v2851 = vmul.f32 %v2673, %v2850
        %v2852 = vmul.f32 %v2674, %v2850
        %v2853 = vmul.f32 %v2675, %v2850
        %v2854 = vmul.f32 %v2676, %v2850
        %v2855 = vmul.f32 %v2677, %v2850
        %v2856 = vmul.f32 %v2678, %v2850
        %v2857 = vmul.f32 %v2679, %v2850
        %v2858 = vmul.f32 %v2680, %v2850
        %v2859 = vmul.f32 %v2681, %v2850
        %v2860 = vmul.f32 %v2682, %v2850
        %v2861 = vmul.f32 %v2683, %v2850
        %v2862 = vmul.f32 %v2684, %v2850
        %v2863 = vmul.f32 %v2685, %v2850
        %v2864 = vmul.f32 %v2686, %v2850
        %v2865 = vmul.f32 %v2687, %v2850
        %v2866 = vmul.f32 %v2688, %v2850
        %v2867 = vmul.f32 %v2689, %v2850
        %v2868 = vmul.f32 %v2690, %v2850
        %v2869 = vmul.f32 %v2691, %v2850
        %v2870 = vmul.f32 %v2692, %v2850
        %v2871 = vmul.f32 %v2693, %v2850
        %v2872 = vmul.f32 %v2694, %v2850
        %v2873 = vmul.f32 %v2695, %v2850
        %v2874 = vmul.f32 %v2696, %v2850
        %v2875 = vmul.f32 %v2697, %v2850
        %v2876 = vmul.f32 %v2698, %v2850
        %v2877 = vmul.f32 %v2699, %v2850
        %v2878 = vmul.f32 %v2700, %v2850
        %v2879 = vmul.f32 %v2701, %v2850
        %v2880 = vmul.f32 %v2702, %v2850
        %v2881 = vmul.f32 %v2703, %v2850
        %v2882 = vmul.f32 %v2704, %v2850
        %v2884 = vlaneseq
        %v2885 = vshrl.u32 %v2884, 7
        %v2886 = vsub.s32 0, %v2885
        %v2887 = vrot.slane %v2559, %v2886
        %v2889 = vmul.f32 %v2851, %v2887
        %v2890 = vmul.f32 %v2852, %v2887
        %v2891 = vmul.f32 %v2853, %v2887
        %v2892 = vmul.f32 %v2854, %v2887
        %v2893 = vmul.f32 %v2855, %v2887
        %v2894 = vmul.f32 %v2856, %v2887
        %v2895 = vmul.f32 %v2857, %v2887
        %v2896 = vmul.f32 %v2858, %v2887
        %v2897 = vmul.f32 %v2859, %v2887
        %v2898 = vmul.f32 %v2860, %v2887
        %v2899 = vmul.f32 %v2861, %v2887
        %v2900 = vmul.f32 %v2862, %v2887
        %v2901 = vmul.f32 %v2863, %v2887
        %v2902 = vmul.f32 %v2864, %v2887
        %v2903 = vmul.f32 %v2865, %v2887
        %v2904 = vmul.f32 %v2866, %v2887
        %v2905 = vmul.f32 %v2867, %v2887
        %v2906 = vmul.f32 %v2868, %v2887
        %v2907 = vmul.f32 %v2869, %v2887
        %v2908 = vmul.f32 %v2870, %v2887
        %v2909 = vmul.f32 %v2871, %v2887
        %v2910 = vmul.f32 %v2872, %v2887
        %v2911 = vmul.f32 %v2873, %v2887
        %v2912 = vmul.f32 %v2874, %v2887
        %v2913 = vmul.f32 %v2875, %v2887
        %v2914 = vmul.f32 %v2876, %v2887
        %v2915 = vmul.f32 %v2877, %v2887
        %v2916 = vmul.f32 %v2878, %v2887
        %v2917 = vmul.f32 %v2879, %v2887
        %v2918 = vmul.f32 %v2880, %v2887
        %v2919 = vmul.f32 %v2881, %v2887
        %v2920 = vmul.f32 %v2882, %v2887
        %v2922 = vlaneseq
        %v2923 = vshrl.u32 %v2922, 7
        %v2924 = vsub.s32 0, %v2923
        %v2925 = vrot.slane %v2560, %v2924
        %v2927 = vadd.f32 %v2889, %v2925
        %v2928 = vadd.f32 %v2890, %v2925
        %v2929 = vadd.f32 %v2891, %v2925
        %v2930 = vadd.f32 %v2892, %v2925
        %v2931 = vadd.f32 %v2893, %v2925
        %v2932 = vadd.f32 %v2894, %v2925
        %v2933 = vadd.f32 %v2895, %v2925
        %v2934 = vadd.f32 %v2896, %v2925
        %v2935 = vadd.f32 %v2897, %v2925
        %v2936 = vadd.f32 %v2898, %v2925
        %v2937 = vadd.f32 %v2899, %v2925
        %v2938 = vadd.f32 %v2900, %v2925
        %v2939 = vadd.f32 %v2901, %v2925
        %v2940 = vadd.f32 %v2902, %v2925
        %v2941 = vadd.f32 %v2903, %v2925
        %v2942 = vadd.f32 %v2904, %v2925
        %v2943 = vadd.f32 %v2905, %v2925
        %v2944 = vadd.f32 %v2906, %v2925
        %v2945 = vadd.f32 %v2907, %v2925
        %v2946 = vadd.f32 %v2908, %v2925
        %v2947 = vadd.f32 %v2909, %v2925
        %v2948 = vadd.f32 %v2910, %v2925
        %v2949 = vadd.f32 %v2911, %v2925
        %v2950 = vadd.f32 %v2912, %v2925
        %v2951 = vadd.f32 %v2913, %v2925
        %v2952 = vadd.f32 %v2914, %v2925
        %v2953 = vadd.f32 %v2915, %v2925
        %v2954 = vadd.f32 %v2916, %v2925
        %v2955 = vadd.f32 %v2917, %v2925
        %v2956 = vadd.f32 %v2918, %v2925
        %v2957 = vadd.f32 %v2919, %v2925
        %v2958 = vadd.f32 %v2920, %v2925
        %v2959 = vmax.f32 %v2927, 0.0
        %v2960 = vmax.f32 %v2928, 0.0
        %v2961 = vmax.f32 %v2929, 0.0
        %v2962 = vmax.f32 %v2930, 0.0
        %v2963 = vmax.f32 %v2931, 0.0
        %v2964 = vmax.f32 %v2932, 0.0
        %v2965 = vmax.f32 %v2933, 0.0
        %v2966 = vmax.f32 %v2934, 0.0
        %v2967 = vmax.f32 %v2935, 0.0
        %v2968 = vmax.f32 %v2936, 0.0
        %v2969 = vmax.f32 %v2937, 0.0
        %v2970 = vmax.f32 %v2938, 0.0
        %v2971 = vmax.f32 %v2939, 0.0
        %v2972 = vmax.f32 %v2940, 0.0
        %v2973 = vmax.f32 %v2941, 0.0
        %v2974 = vmax.f32 %v2942, 0.0
        %v2975 = vmax.f32 %v2943, 0.0
        %v2976 = vmax.f32 %v2944, 0.0
        %v2977 = vmax.f32 %v2945, 0.0
        %v2978 = vmax.f32 %v2946, 0.0
        %v2979 = vmax.f32 %v2947, 0.0
        %v2980 = vmax.f32 %v2948, 0.0
        %v2981 = vmax.f32 %v2949, 0.0
        %v2982 = vmax.f32 %v2950, 0.0
        %v2983 = vmax.f32 %v2951, 0.0
        %v2984 = vmax.f32 %v2952, 0.0
        %v2985 = vmax.f32 %v2953, 0.0
        %v2986 = vmax.f32 %v2954, 0.0
        %v2987 = vmax.f32 %v2955, 0.0
        %v2988 = vmax.f32 %v2956, 0.0
        %v2989 = vmax.f32 %v2957, 0.0
        %v2990 = vmax.f32 %v2958, 0.0
        %2991 = vst [vmem:[#allocation5] sm:$0xff] %v2959
        %2992 = vst [vmem:[#allocation5 + $0x8] sm:$0xff] %v2960
        %2993 = vst [vmem:[#allocation5 + $0x10] sm:$0xff] %v2961
        %2994 = vst [vmem:[#allocation5 + $0x18] sm:$0xff] %v2962
        %2995 = vst [vmem:[#allocation5 + $0x20] sm:$0xff] %v2963
        %2996 = vst [vmem:[#allocation5 + $0x28] sm:$0xff] %v2964
        %2997 = vst [vmem:[#allocation5 + $0x30] sm:$0xff] %v2965
        %2998 = vst [vmem:[#allocation5 + $0x38] sm:$0xff] %v2966
        %2999 = vst [vmem:[#allocation5 + $0x40] sm:$0xff] %v2967
        %3000 = vst [vmem:[#allocation5 + $0x48] sm:$0xff] %v2968
        %3001 = vst [vmem:[#allocation5 + $0x50] sm:$0xff] %v2969
        %3002 = vst [vmem:[#allocation5 + $0x58] sm:$0xff] %v2970
        %3003 = vst [vmem:[#allocation5 + $0x60] sm:$0xff] %v2971
        %3004 = vst [vmem:[#allocation5 + $0x68] sm:$0xff] %v2972
        %3005 = vst [vmem:[#allocation5 + $0x70] sm:$0xff] %v2973
        %3006 = vst [vmem:[#allocation5 + $0x78] sm:$0xff] %v2974
        %3007 = vst [vmem:[#allocation5 + $0x80] sm:$0xff] %v2975
        %3008 = vst [vmem:[#allocation5 + $0x88] sm:$0xff] %v2976
        %3009 = vst [vmem:[#allocation5 + $0x90] sm:$0xff] %v2977
        %3010 = vst [vmem:[#allocation5 + $0x98] sm:$0xff] %v2978
        %3011 = vst [vmem:[#allocation5 + $0xa0] sm:$0xff] %v2979
        %3012 = vst [vmem:[#allocation5 + $0xa8] sm:$0xff] %v2980
        %3013 = vst [vmem:[#allocation5 + $0xb0] sm:$0xff] %v2981
        %3014 = vst [vmem:[#allocation5 + $0xb8] sm:$0xff] %v2982
        %3015 = vst [vmem:[#allocation5 + $0xc0] sm:$0xff] %v2983
        %3016 = vst [vmem:[#allocation5 + $0xc8] sm:$0xff] %v2984
        %3017 = vst [vmem:[#allocation5 + $0xd0] sm:$0xff] %v2985
        %3018 = vst [vmem:[#allocation5 + $0xd8] sm:$0xff] %v2986
        %3019 = vst [vmem:[#allocation5 + $0xe0] sm:$0xff] %v2987
        %3020 = vst [vmem:[#allocation5 + $0xe8] sm:$0xff] %v2988
        %3021 = vst [vmem:[#allocation5 + $0xf0] sm:$0xff] %v2989
        %3022 = vst [vmem:[#allocation5 + $0xf8] sm:$0xff] %v2990
        %v3023 = vld [vmem:[#allocation5] ss:$2 sm:$0xff]
        %s3024 = scalar_lea.vmem [#allocation5], 16
        %v3025 = vld [vmem:[%s3024] ss:$2 sm:$0xff]
        %s3026 = scalar_lea.vmem [#allocation5], 32
        %v3027 = vld [vmem:[%s3026] ss:$2 sm:$0xff]
        %s3028 = scalar_lea.vmem [#allocation5], 48
        %v3029 = vld [vmem:[%s3028] ss:$2 sm:$0xff]
        %s3030 = scalar_lea.vmem [#allocation5], 64
        %v3031 = vld [vmem:[%s3030] ss:$2 sm:$0xff]
        %s3032 = scalar_lea.vmem [#allocation5], 80
        %v3033 = vld [vmem:[%s3032] ss:$2 sm:$0xff]
        %s3034 = scalar_lea.vmem [#allocation5], 96
        %v3035 = vld [vmem:[%s3034] ss:$2 sm:$0xff]
        %s3036 = scalar_lea.vmem [#allocation5], 112
        %v3037 = vld [vmem:[%s3036] ss:$2 sm:$0xff]
        %s3038 = scalar_lea.vmem [#allocation5], 128
        %v3039 = vld [vmem:[%s3038] ss:$2 sm:$0xff]
        %s3040 = scalar_lea.vmem [#allocation5], 144
        %v3041 = vld [vmem:[%s3040] ss:$2 sm:$0xff]
        %s3042 = scalar_lea.vmem [#allocation5], 160
        %v3043 = vld [vmem:[%s3042] ss:$2 sm:$0xff]
        %s3044 = scalar_lea.vmem [#allocation5], 176
        %v3045 = vld [vmem:[%s3044] ss:$2 sm:$0xff]
        %s3046 = scalar_lea.vmem [#allocation5], 192
        %v3047 = vld [vmem:[%s3046] ss:$2 sm:$0xff]
        %s3048 = scalar_lea.vmem [#allocation5], 208
        %v3049 = vld [vmem:[%s3048] ss:$2 sm:$0xff]
        %s3050 = scalar_lea.vmem [#allocation5], 224
        %v3051 = vld [vmem:[%s3050] ss:$2 sm:$0xff]
        %s3052 = scalar_lea.vmem [#allocation5], 240
        %v3053 = vld [vmem:[%s3052] ss:$2 sm:$0xff]
        %s3054 = scalar_lea.vmem [#allocation5], 1
        %v3055 = vld [vmem:[%s3054] ss:$2 sm:$0xff]
        %s3056 = scalar_lea.vmem [#allocation5], 17
        %v3057 = vld [vmem:[%s3056] ss:$2 sm:$0xff]
        %s3058 = scalar_lea.vmem [#allocation5], 33
        %v3059 = vld [vmem:[%s3058] ss:$2 sm:$0xff]
        %s3060 = scalar_lea.vmem [#allocation5], 49
        %v3061 = vld [vmem:[%s3060] ss:$2 sm:$0xff]
        %s3062 = scalar_lea.vmem [#allocation5], 65
        %v3063 = vld [vmem:[%s3062] ss:$2 sm:$0xff]
        %s3064 = scalar_lea.vmem [#allocation5], 81
        %v3065 = vld [vmem:[%s3064] ss:$2 sm:$0xff]
        %s3066 = scalar_lea.vmem [#allocation5], 97
        %v3067 = vld [vmem:[%s3066] ss:$2 sm:$0xff]
        %s3068 = scalar_lea.vmem [#allocation5], 113
        %v3069 = vld [vmem:[%s3068] ss:$2 sm:$0xff]
        %s3070 = scalar_lea.vmem [#allocation5], 129
        %v3071 = vld [vmem:[%s3070] ss:$2 sm:$0xff]
        %s3072 = scalar_lea.vmem [#allocation5], 145
        %v3073 = vld [vmem:[%s3072] ss:$2 sm:$0xff]
        %s3074 = scalar_lea.vmem [#allocation5], 161
        %v3075 = vld [vmem:[%s3074] ss:$2 sm:$0xff]
        %s3076 = scalar_lea.vmem [#allocation5], 177
        %v3077 = vld [vmem:[%s3076] ss:$2 sm:$0xff]
        %s3078 = scalar_lea.vmem [#allocation5], 193
        %v3079 = vld [vmem:[%s3078] ss:$2 sm:$0xff]
        %s3080 = scalar_lea.vmem [#allocation5], 209
        %v3081 = vld [vmem:[%s3080] ss:$2 sm:$0xff]
        %s3082 = scalar_lea.vmem [#allocation5], 225
        %v3083 = vld [vmem:[%s3082] ss:$2 sm:$0xff]
        %s3084 = scalar_lea.vmem [#allocation5], 241
        %v3085 = vld [vmem:[%s3084] ss:$2 sm:$0xff]
        %v3086 = vmax.f32 %v3023, %v3055
        %v3087 = vmax.f32 %v3025, %v3057
        %v3088 = vmax.f32 %v3027, %v3059
        %v3089 = vmax.f32 %v3029, %v3061
        %v3090 = vmax.f32 %v3031, %v3063
        %v3091 = vmax.f32 %v3033, %v3065
        %v3092 = vmax.f32 %v3035, %v3067
        %v3093 = vmax.f32 %v3037, %v3069
        %v3094 = vmax.f32 %v3039, %v3071
        %v3095 = vmax.f32 %v3041, %v3073
        %v3096 = vmax.f32 %v3043, %v3075
        %v3097 = vmax.f32 %v3045, %v3077
        %v3098 = vmax.f32 %v3047, %v3079
        %v3099 = vmax.f32 %v3049, %v3081
        %v3100 = vmax.f32 %v3051, %v3083
        %v3101 = vmax.f32 %v3053, %v3085
        %v3102 = vmax.f32 %v3086, %v3087
        %v3103 = vmax.f32 %v3088, %v3089
        %v3104 = vmax.f32 %v3090, %v3091
        %v3105 = vmax.f32 %v3092, %v3093
        %v3106 = vmax.f32 %v3094, %v3095
        %v3107 = vmax.f32 %v3096, %v3097
        %v3108 = vmax.f32 %v3098, %v3099
        %v3109 = vmax.f32 %v3100, %v3101
        %v3110 = vld [vmem:[#allocation15] sm:$0xf]
        %v3111 = vld [vmem:[#allocation15 + $0x4] sm:$0xf]
        %v3112 = vld [vmem:[#allocation15 + $0x8] sm:$0xf]
        %v3113 = vld [vmem:[#allocation15 + $0xc] sm:$0xf]
        %v3114 = vld [vmem:[#allocation15 + $0x10] sm:$0xf]
        %v3115 = vld [vmem:[#allocation15 + $0x14] sm:$0xf]
        %v3116 = vld [vmem:[#allocation15 + $0x18] sm:$0xf]
        %v3117 = vld [vmem:[#allocation15 + $0x1c] sm:$0xf]
        %v3118 = vld [vmem:[#allocation15 + $0x20] sm:$0xf]
        %v3119 = vld [vmem:[#allocation15 + $0x24] sm:$0xf]
        %v3120 = vld [vmem:[#allocation15 + $0x28] sm:$0xf]
        %v3121 = vld [vmem:[#allocation15 + $0x2c] sm:$0xf]
        %v3122 = vld [vmem:[#allocation15 + $0x30] sm:$0xf]
        %v3123 = vld [vmem:[#allocation15 + $0x34] sm:$0xf]
        %v3124 = vld [vmem:[#allocation15 + $0x38] sm:$0xf]
        %v3125 = vld [vmem:[#allocation15 + $0x3c] sm:$0xf]
        %v3126 = vld [vmem:[#allocation15 + $0x40] sm:$0xf]
        %v3127 = vld [vmem:[#allocation15 + $0x44] sm:$0xf]
        %v3128 = vld [vmem:[#allocation15 + $0x48] sm:$0xf]
        %v3129 = vld [vmem:[#allocation15 + $0x4c] sm:$0xf]
        %v3130 = vld [vmem:[#allocation15 + $0x50] sm:$0xf]
        %v3131 = vld [vmem:[#allocation15 + $0x54] sm:$0xf]
        %v3132 = vld [vmem:[#allocation15 + $0x58] sm:$0xf]
        %v3133 = vld [vmem:[#allocation15 + $0x5c] sm:$0xf]
        %v3134 = vld [vmem:[#allocation15 + $0x60] sm:$0xf]
        %v3135 = vld [vmem:[#allocation15 + $0x64] sm:$0xf]
        %v3136 = vld [vmem:[#allocation15 + $0x68] sm:$0xf]
        %v3137 = vld [vmem:[#allocation15 + $0x6c] sm:$0xf]
        %v3138 = vld [vmem:[#allocation15 + $0x70] sm:$0xf]
        %v3139 = vld [vmem:[#allocation15 + $0x74] sm:$0xf]
        %v3140 = vld [vmem:[#allocation15 + $0x78] sm:$0xf]
        %v3141 = vld [vmem:[#allocation15 + $0x7c] sm:$0xf]
        %v3142 = vld [vmem:[#allocation15 + $0x80] sm:$0xf]
        %v3143 = vld [vmem:[#allocation15 + $0x84] sm:$0xf]
        %v3144 = vld [vmem:[#allocation15 + $0x88] sm:$0xf]
        %v3145 = vld [vmem:[#allocation15 + $0x8c] sm:$0xf]
        %v3146 = vld [vmem:[#allocation15 + $0x90] sm:$0xf]
        %v3147 = vld [vmem:[#allocation15 + $0x94] sm:$0xf]
        %v3148 = vld [vmem:[#allocation15 + $0x98] sm:$0xf]
        %v3149 = vld [vmem:[#allocation15 + $0x9c] sm:$0xf]
        %v3150 = vld [vmem:[#allocation15 + $0xa0] sm:$0xf]
        %v3151 = vld [vmem:[#allocation15 + $0xa4] sm:$0xf]
        %v3152 = vld [vmem:[#allocation15 + $0xa8] sm:$0xf]
        %v3153 = vld [vmem:[#allocation15 + $0xac] sm:$0xf]
        %v3154 = vld [vmem:[#allocation15 + $0xb0] sm:$0xf]
        %v3155 = vld [vmem:[#allocation15 + $0xb4] sm:$0xf]
        %v3156 = vld [vmem:[#allocation15 + $0xb8] sm:$0xf]
        %v3157 = vld [vmem:[#allocation15 + $0xbc] sm:$0xf]
        %v3158 = vld [vmem:[#allocation15 + $0xc0] sm:$0xf]
        %v3159 = vld [vmem:[#allocation15 + $0xc4] sm:$0xf]
        %v3160 = vld [vmem:[#allocation15 + $0xc8] sm:$0xf]
        %v3161 = vld [vmem:[#allocation15 + $0xcc] sm:$0xf]
        %v3162 = vld [vmem:[#allocation15 + $0xd0] sm:$0xf]
        %v3163 = vld [vmem:[#allocation15 + $0xd4] sm:$0xf]
        %v3164 = vld [vmem:[#allocation15 + $0xd8] sm:$0xf]
        %v3165 = vld [vmem:[#allocation15 + $0xdc] sm:$0xf]
        %v3166 = vld [vmem:[#allocation15 + $0xe0] sm:$0xf]
        %v3167 = vld [vmem:[#allocation15 + $0xe4] sm:$0xf]
        %v3168 = vld [vmem:[#allocation15 + $0xe8] sm:$0xf]
        %v3169 = vld [vmem:[#allocation15 + $0xec] sm:$0xf]
        %v3170 = vld [vmem:[#allocation15 + $0xf0] sm:$0xf]
        %v3171 = vld [vmem:[#allocation15 + $0xf4] sm:$0xf]
        %v3172 = vld [vmem:[#allocation15 + $0xf8] sm:$0xf]
        %v3173 = vld [vmem:[#allocation15 + $0xfc] sm:$0xf]
        %v3174 = vld [vmem:[#allocation15 + $0x100] sm:$0xf]
        %v3175 = vld [vmem:[#allocation15 + $0x104] sm:$0xf]
        %v3176 = vld [vmem:[#allocation15 + $0x108] sm:$0xf]
        %v3177 = vld [vmem:[#allocation15 + $0x10c] sm:$0xf]
        %v3178 = vld [vmem:[#allocation15 + $0x110] sm:$0xf]
        %v3179 = vld [vmem:[#allocation15 + $0x114] sm:$0xf]
        %v3180 = vld [vmem:[#allocation15 + $0x118] sm:$0xf]
        %v3181 = vld [vmem:[#allocation15 + $0x11c] sm:$0xf]
        %v3182 = vld [vmem:[#allocation15 + $0x120] sm:$0xf]
        %v3183 = vld [vmem:[#allocation15 + $0x124] sm:$0xf]
        %v3184 = vld [vmem:[#allocation15 + $0x128] sm:$0xf]
        %v3185 = vld [vmem:[#allocation15 + $0x12c] sm:$0xf]
        %v3186 = vld [vmem:[#allocation15 + $0x130] sm:$0xf]
        %v3187 = vld [vmem:[#allocation15 + $0x134] sm:$0xf]
        %v3188 = vld [vmem:[#allocation15 + $0x138] sm:$0xf]
        %v3189 = vld [vmem:[#allocation15 + $0x13c] sm:$0xf]
        %v3190 = vld [vmem:[#allocation15 + $0x140] sm:$0xf]
        %v3191 = vld [vmem:[#allocation15 + $0x144] sm:$0xf]
        %v3192 = vld [vmem:[#allocation15 + $0x148] sm:$0xf]
        %v3193 = vld [vmem:[#allocation15 + $0x14c] sm:$0xf]
        %v3194 = vld [vmem:[#allocation15 + $0x150] sm:$0xf]
        %v3195 = vld [vmem:[#allocation15 + $0x154] sm:$0xf]
        %v3196 = vld [vmem:[#allocation15 + $0x158] sm:$0xf]
        %v3197 = vld [vmem:[#allocation15 + $0x15c] sm:$0xf]
        %v3198 = vld [vmem:[#allocation15 + $0x160] sm:$0xf]
        %v3199 = vld [vmem:[#allocation15 + $0x164] sm:$0xf]
        %v3200 = vld [vmem:[#allocation15 + $0x168] sm:$0xf]
        %v3201 = vld [vmem:[#allocation15 + $0x16c] sm:$0xf]
        %v3202 = vld [vmem:[#allocation15 + $0x170] sm:$0xf]
        %v3203 = vld [vmem:[#allocation15 + $0x174] sm:$0xf]
        %v3204 = vld [vmem:[#allocation15 + $0x178] sm:$0xf]
        %v3205 = vld [vmem:[#allocation15 + $0x17c] sm:$0xf]
        %v3206 = vld [vmem:[#allocation15 + $0x180] sm:$0xf]
        %v3207 = vld [vmem:[#allocation15 + $0x184] sm:$0xf]
        %v3208 = vld [vmem:[#allocation15 + $0x188] sm:$0xf]
        %v3209 = vld [vmem:[#allocation15 + $0x18c] sm:$0xf]
        %v3210 = vld [vmem:[#allocation15 + $0x190] sm:$0xf]
        %v3211 = vld [vmem:[#allocation15 + $0x194] sm:$0xf]
        %v3212 = vld [vmem:[#allocation15 + $0x198] sm:$0xf]
        %v3213 = vld [vmem:[#allocation15 + $0x19c] sm:$0xf]
        %v3214 = vld [vmem:[#allocation15 + $0x1a0] sm:$0xf]
        %v3215 = vld [vmem:[#allocation15 + $0x1a4] sm:$0xf]
        %v3216 = vld [vmem:[#allocation15 + $0x1a8] sm:$0xf]
        %v3217 = vld [vmem:[#allocation15 + $0x1ac] sm:$0xf]
        %v3218 = vld [vmem:[#allocation15 + $0x1b0] sm:$0xf]
        %v3219 = vld [vmem:[#allocation15 + $0x1b4] sm:$0xf]
        %v3220 = vld [vmem:[#allocation15 + $0x1b8] sm:$0xf]
        %v3221 = vld [vmem:[#allocation15 + $0x1bc] sm:$0xf]
        %v3222 = vld [vmem:[#allocation15 + $0x1c0] sm:$0xf]
        %v3223 = vld [vmem:[#allocation15 + $0x1c4] sm:$0xf]
        %v3224 = vld [vmem:[#allocation15 + $0x1c8] sm:$0xf]
        %v3225 = vld [vmem:[#allocation15 + $0x1cc] sm:$0xf]
        %v3226 = vld [vmem:[#allocation15 + $0x1d0] sm:$0xf]
        %v3227 = vld [vmem:[#allocation15 + $0x1d4] sm:$0xf]
        %v3228 = vld [vmem:[#allocation15 + $0x1d8] sm:$0xf]
        %v3229 = vld [vmem:[#allocation15 + $0x1dc] sm:$0xf]
        %v3230 = vld [vmem:[#allocation15 + $0x1e0] sm:$0xf]
        %v3231 = vld [vmem:[#allocation15 + $0x1e4] sm:$0xf]
        %v3232 = vld [vmem:[#allocation15 + $0x1e8] sm:$0xf]
        %v3233 = vld [vmem:[#allocation15 + $0x1ec] sm:$0xf]
        %v3234 = vld [vmem:[#allocation15 + $0x1f0] sm:$0xf]
        %v3235 = vld [vmem:[#allocation15 + $0x1f4] sm:$0xf]
        %v3236 = vld [vmem:[#allocation15 + $0x1f8] sm:$0xf]
        %v3237 = vld [vmem:[#allocation15 + $0x1fc] sm:$0xf]
        %v3238 = vld [vmem:[#allocation15 + $0x200] sm:$0xf]
        %v3239 = vld [vmem:[#allocation15 + $0x204] sm:$0xf]
        %v3240 = vld [vmem:[#allocation15 + $0x208] sm:$0xf]
        %v3241 = vld [vmem:[#allocation15 + $0x20c] sm:$0xf]
        %v3242 = vld [vmem:[#allocation15 + $0x210] sm:$0xf]
        %v3243 = vld [vmem:[#allocation15 + $0x214] sm:$0xf]
        %v3244 = vld [vmem:[#allocation15 + $0x218] sm:$0xf]
        %v3245 = vld [vmem:[#allocation15 + $0x21c] sm:$0xf]
        %v3246 = vld [vmem:[#allocation15 + $0x220] sm:$0xf]
        %v3247 = vld [vmem:[#allocation15 + $0x224] sm:$0xf]
        %v3248 = vld [vmem:[#allocation15 + $0x228] sm:$0xf]
        %v3249 = vld [vmem:[#allocation15 + $0x22c] sm:$0xf]
        %v3250 = vld [vmem:[#allocation15 + $0x230] sm:$0xf]
        %v3251 = vld [vmem:[#allocation15 + $0x234] sm:$0xf]
        %v3252 = vld [vmem:[#allocation15 + $0x238] sm:$0xf]
        %v3253 = vld [vmem:[#allocation15 + $0x23c] sm:$0xf]
        %v3254 = vld [vmem:[#allocation17] sm:$0x1]
        %3255 = vst [vmem:[#allocation3] sm:$0xff] 0.0
        %3256 = vst [vmem:[#allocation3 + $0x8] sm:$0x3] 0.0
        %3257 = vst [vmem:[#allocation3 + $0x10] sm:$0xff] 0.0
        %3258 = vst [vmem:[#allocation3 + $0x18] sm:$0x3] 0.0
        %3259 = vst [vmem:[#allocation3 + $0x20] sm:$0xff] 0.0
        %3260 = vst [vmem:[#allocation3 + $0x28] sm:$0x3] 0.0
        %3261 = vst [vmem:[#allocation3 + $0x30] sm:$0xff] 0.0
        %3262 = vst [vmem:[#allocation3 + $0x38] sm:$0x3] 0.0
        %3263 = vst [vmem:[#allocation3 + $0x40] sm:$0xff] 0.0
        %3264 = vst [vmem:[#allocation3 + $0x48] sm:$0x3] 0.0
        %3265 = vst [vmem:[#allocation3 + $0x50] sm:$0xff] 0.0
        %3266 = vst [vmem:[#allocation3 + $0x58] sm:$0x3] 0.0
        %3267 = vst [vmem:[#allocation3 + $0x60] sm:$0xff] 0.0
        %3268 = vst [vmem:[#allocation3 + $0x68] sm:$0x3] 0.0
        %3269 = vst [vmem:[#allocation3 + $0x70] sm:$0xff] 0.0
        %3270 = vst [vmem:[#allocation3 + $0x78] sm:$0x3] 0.0
        %3271 = vst [vmem:[#allocation3 + $0x80] sm:$0xff] 0.0
        %3272 = vst [vmem:[#allocation3 + $0x88] sm:$0x3] 0.0
        %3273 = vst [vmem:[#allocation3 + $0x90] sm:$0xff] 0.0
        %3274 = vst [vmem:[#allocation3 + $0x98] sm:$0x3] 0.0
        %s3275 = scalar_lea.vmem [#allocation3], 16
        %3276 = vst [vmem:[%s3275 + $0x1] sm:$0xff] %v3102
        %3277 = vst [vmem:[%s3275 + $0x11] sm:$0xff] %v3103
        %3278 = vst [vmem:[%s3275 + $0x21] sm:$0xff] %v3104
        %3279 = vst [vmem:[%s3275 + $0x31] sm:$0xff] %v3105
        %3280 = vst [vmem:[%s3275 + $0x41] sm:$0xff] %v3106
        %3281 = vst [vmem:[%s3275 + $0x51] sm:$0xff] %v3107
        %3282 = vst [vmem:[%s3275 + $0x61] sm:$0xff] %v3108
        %3283 = vst [vmem:[%s3275 + $0x71] sm:$0xff] %v3109
        %v3284 = vld [vmem:[#allocation3] sm:$0xff]
        %v3285 = vld [vmem:[#allocation3 + $0x10] sm:$0xff]
        %v3286 = vld [vmem:[#allocation3 + $0x20] sm:$0xff]
        %v3287 = vld [vmem:[#allocation3 + $0x30] sm:$0xff]
        %v3288 = vld [vmem:[#allocation3 + $0x40] sm:$0xff]
        %v3289 = vld [vmem:[#allocation3 + $0x50] sm:$0xff]
        %v3290 = vld [vmem:[#allocation3 + $0x60] sm:$0xff]
        %v3291 = vld [vmem:[#allocation3 + $0x70] sm:$0xff]
        %v3292 = vpack.c.bf16 %v3285, %v3284
        %v3293 = vpack.c.bf16 %v3287, %v3286
        %v3294 = vpack.c.bf16 %v3289, %v3288
        %v3295 = vpack.c.bf16 %v3291, %v3290
        %v3296 = vld [vmem:[#allocation3 + $0x1] sm:$0xff]
        %v3297 = vld [vmem:[#allocation3 + $0x11] sm:$0xff]
        %v3298 = vld [vmem:[#allocation3 + $0x21] sm:$0xff]
        %v3299 = vld [vmem:[#allocation3 + $0x31] sm:$0xff]
        %v3300 = vld [vmem:[#allocation3 + $0x41] sm:$0xff]
        %v3301 = vld [vmem:[#allocation3 + $0x51] sm:$0xff]
        %v3302 = vld [vmem:[#allocation3 + $0x61] sm:$0xff]
        %v3303 = vld [vmem:[#allocation3 + $0x71] sm:$0xff]
        %v3304 = vpack.c.bf16 %v3297, %v3296
        %v3305 = vpack.c.bf16 %v3299, %v3298
        %v3306 = vpack.c.bf16 %v3301, %v3300
        %v3307 = vpack.c.bf16 %v3303, %v3302
        %v3308 = vld [vmem:[#allocation3 + $0x2] sm:$0xff]
        %v3309 = vld [vmem:[#allocation3 + $0x12] sm:$0xff]
        %v3310 = vld [vmem:[#allocation3 + $0x22] sm:$0xff]
        %v3311 = vld [vmem:[#allocation3 + $0x32] sm:$0xff]
        %v3312 = vld [vmem:[#allocation3 + $0x42] sm:$0xff]
        %v3313 = vld [vmem:[#allocation3 + $0x52] sm:$0xff]
        %v3314 = vld [vmem:[#allocation3 + $0x62] sm:$0xff]
        %v3315 = vld [vmem:[#allocation3 + $0x72] sm:$0xff]
        %v3316 = vpack.c.bf16 %v3309, %v3308
        %v3317 = vpack.c.bf16 %v3311, %v3310
        %v3318 = vpack.c.bf16 %v3313, %v3312
        %v3319 = vpack.c.bf16 %v3315, %v3314
        %v3320 = vld [vmem:[%s3275] sm:$0xff]
        %v3321 = vld [vmem:[%s3275 + $0x10] sm:$0xff]
        %v3322 = vld [vmem:[%s3275 + $0x20] sm:$0xff]
        %v3323 = vld [vmem:[%s3275 + $0x30] sm:$0xff]
        %v3324 = vld [vmem:[%s3275 + $0x40] sm:$0xff]
        %v3325 = vld [vmem:[%s3275 + $0x50] sm:$0xff]
        %v3326 = vld [vmem:[%s3275 + $0x60] sm:$0xff]
        %v3327 = vld [vmem:[%s3275 + $0x70] sm:$0xff]
        %v3328 = vpack.c.bf16 %v3321, %v3320
        %v3329 = vpack.c.bf16 %v3323, %v3322
        %v3330 = vpack.c.bf16 %v3325, %v3324
        %v3331 = vpack.c.bf16 %v3327, %v3326
        %v3332 = vld [vmem:[%s3275 + $0x1] sm:$0xff]
        %v3333 = vld [vmem:[%s3275 + $0x11] sm:$0xff]
        %v3334 = vld [vmem:[%s3275 + $0x21] sm:$0xff]
        %v3335 = vld [vmem:[%s3275 + $0x31] sm:$0xff]
        %v3336 = vld [vmem:[%s3275 + $0x41] sm:$0xff]
        %v3337 = vld [vmem:[%s3275 + $0x51] sm:$0xff]
        %v3338 = vld [vmem:[%s3275 + $0x61] sm:$0xff]
        %v3339 = vld [vmem:[%s3275 + $0x71] sm:$0xff]
        %v3340 = vpack.c.bf16 %v3333, %v3332
        %v3341 = vpack.c.bf16 %v3335, %v3334
        %v3342 = vpack.c.bf16 %v3337, %v3336
        %v3343 = vpack.c.bf16 %v3339, %v3338
        %v3344 = vld [vmem:[%s3275 + $0x2] sm:$0xff]
        %v3345 = vld [vmem:[%s3275 + $0x12] sm:$0xff]
        %v3346 = vld [vmem:[%s3275 + $0x22] sm:$0xff]
        %v3347 = vld [vmem:[%s3275 + $0x32] sm:$0xff]
        %v3348 = vld [vmem:[%s3275 + $0x42] sm:$0xff]
        %v3349 = vld [vmem:[%s3275 + $0x52] sm:$0xff]
        %v3350 = vld [vmem:[%s3275 + $0x62] sm:$0xff]
        %v3351 = vld [vmem:[%s3275 + $0x72] sm:$0xff]
        %v3352 = vpack.c.bf16 %v3345, %v3344
        %v3353 = vpack.c.bf16 %v3347, %v3346
        %v3354 = vpack.c.bf16 %v3349, %v3348
        %v3355 = vpack.c.bf16 %v3351, %v3350
        %s3356 = scalar_lea.vmem [#allocation3], 32
        %v3357 = vld [vmem:[%s3356] sm:$0xff]
        %v3358 = vld [vmem:[%s3356 + $0x10] sm:$0xff]
        %v3359 = vld [vmem:[%s3356 + $0x20] sm:$0xff]
        %v3360 = vld [vmem:[%s3356 + $0x30] sm:$0xff]
        %v3361 = vld [vmem:[%s3356 + $0x40] sm:$0xff]
        %v3362 = vld [vmem:[%s3356 + $0x50] sm:$0xff]
        %v3363 = vld [vmem:[%s3356 + $0x60] sm:$0xff]
        %v3364 = vld [vmem:[%s3356 + $0x70] sm:$0xff]
        %v3365 = vpack.c.bf16 %v3358, %v3357
        %v3366 = vpack.c.bf16 %v3360, %v3359
        %v3367 = vpack.c.bf16 %v3362, %v3361
        %v3368 = vpack.c.bf16 %v3364, %v3363
        %v3369 = vld [vmem:[%s3356 + $0x1] sm:$0xff]
        %v3370 = vld [vmem:[%s3356 + $0x11] sm:$0xff]
        %v3371 = vld [vmem:[%s3356 + $0x21] sm:$0xff]
        %v3372 = vld [vmem:[%s3356 + $0x31] sm:$0xff]
        %v3373 = vld [vmem:[%s3356 + $0x41] sm:$0xff]
        %v3374 = vld [vmem:[%s3356 + $0x51] sm:$0xff]
        %v3375 = vld [vmem:[%s3356 + $0x61] sm:$0xff]
        %v3376 = vld [vmem:[%s3356 + $0x71] sm:$0xff]
        %v3377 = vpack.c.bf16 %v3370, %v3369
        %v3378 = vpack.c.bf16 %v3372, %v3371
        %v3379 = vpack.c.bf16 %v3374, %v3373
        %v3380 = vpack.c.bf16 %v3376, %v3375
        %v3381 = vld [vmem:[%s3356 + $0x2] sm:$0xff]
        %v3382 = vld [vmem:[%s3356 + $0x12] sm:$0xff]
        %v3383 = vld [vmem:[%s3356 + $0x22] sm:$0xff]
        %v3384 = vld [vmem:[%s3356 + $0x32] sm:$0xff]
        %v3385 = vld [vmem:[%s3356 + $0x42] sm:$0xff]
        %v3386 = vld [vmem:[%s3356 + $0x52] sm:$0xff]
        %v3387 = vld [vmem:[%s3356 + $0x62] sm:$0xff]
        %v3388 = vld [vmem:[%s3356 + $0x72] sm:$0xff]
        %v3389 = vpack.c.bf16 %v3382, %v3381
        %v3390 = vpack.c.bf16 %v3384, %v3383
        %v3391 = vpack.c.bf16 %v3386, %v3385
        %v3392 = vpack.c.bf16 %v3388, %v3387
        %v3394 = vlaneseq
        %v3395 = vshrl.u32 %v3394, 7
        %v3396 = vsub.s32 0, %v3395
        %v3397 = vrot.slane %v3254, %v3396
        %v3543 = vunpack.c.l.b16 %v3110
        %v3544 = vunpack.c.l.b16 %v3111
        %v3545 = vunpack.c.l.b16 %v3112
        %v3546 = vunpack.c.l.b16 %v3113
        %v3547 = vunpack.c.l.b16 %v3114
        %v3548 = vunpack.c.l.b16 %v3115
        %v3549 = vunpack.c.l.b16 %v3116
        %v3550 = vunpack.c.l.b16 %v3117
        %v3551 = vunpack.c.l.b16 %v3118
        %v3552 = vunpack.c.l.b16 %v3119
        %v3553 = vunpack.c.l.b16 %v3120
        %v3554 = vunpack.c.l.b16 %v3121
        %v3555 = vunpack.c.l.b16 %v3122
        %v3556 = vunpack.c.l.b16 %v3123
        %v3557 = vunpack.c.l.b16 %v3124
        %v3558 = vunpack.c.l.b16 %v3125
        %v3559 = vunpack.c.l.b16 %v3126
        %v3560 = vunpack.c.l.b16 %v3127
        %v3561 = vunpack.c.l.b16 %v3128
        %v3562 = vunpack.c.l.b16 %v3129
        %v3563 = vunpack.c.l.b16 %v3130
        %v3564 = vunpack.c.l.b16 %v3131
        %v3565 = vunpack.c.l.b16 %v3132
        %v3566 = vunpack.c.l.b16 %v3133
        %v3567 = vunpack.c.l.b16 %v3134
        %v3568 = vunpack.c.l.b16 %v3135
        %v3569 = vunpack.c.l.b16 %v3136
        %v3570 = vunpack.c.l.b16 %v3137
        %v3571 = vunpack.c.l.b16 %v3138
        %v3572 = vunpack.c.l.b16 %v3139
        %v3573 = vunpack.c.l.b16 %v3140
        %v3574 = vunpack.c.l.b16 %v3141
        %v3575 = vunpack.c.l.b16 %v3142
        %v3576 = vunpack.c.l.b16 %v3143
        %v3577 = vunpack.c.l.b16 %v3144
        %v3578 = vunpack.c.l.b16 %v3145
        %v3579 = vunpack.c.l.b16 %v3146
        %v3580 = vunpack.c.l.b16 %v3147
        %v3581 = vunpack.c.l.b16 %v3148
        %v3582 = vunpack.c.l.b16 %v3149
        %v3583 = vunpack.c.l.b16 %v3150
        %v3584 = vunpack.c.l.b16 %v3151
        %v3585 = vunpack.c.l.b16 %v3152
        %v3586 = vunpack.c.l.b16 %v3153
        %v3587 = vunpack.c.l.b16 %v3154
        %v3588 = vunpack.c.l.b16 %v3155
        %v3589 = vunpack.c.l.b16 %v3156
        %v3590 = vunpack.c.l.b16 %v3157
        %v3591 = vunpack.c.l.b16 %v3158
        %v3592 = vunpack.c.l.b16 %v3159
        %v3593 = vunpack.c.l.b16 %v3160
        %v3594 = vunpack.c.l.b16 %v3161
        %v3595 = vunpack.c.l.b16 %v3162
        %v3596 = vunpack.c.l.b16 %v3163
        %v3597 = vunpack.c.l.b16 %v3164
        %v3598 = vunpack.c.l.b16 %v3165
        %v3599 = vunpack.c.l.b16 %v3166
        %v3600 = vunpack.c.l.b16 %v3167
        %v3601 = vunpack.c.l.b16 %v3168
        %v3602 = vunpack.c.l.b16 %v3169
        %v3603 = vunpack.c.l.b16 %v3170
        %v3604 = vunpack.c.l.b16 %v3171
        %v3605 = vunpack.c.l.b16 %v3172
        %v3606 = vunpack.c.l.b16 %v3173
        %v3607 = vunpack.c.l.b16 %v3174
        %v3608 = vunpack.c.l.b16 %v3175
        %v3609 = vunpack.c.l.b16 %v3176
        %v3610 = vunpack.c.l.b16 %v3177
        %v3611 = vunpack.c.l.b16 %v3178
        %v3612 = vunpack.c.l.b16 %v3179
        %v3613 = vunpack.c.l.b16 %v3180
        %v3614 = vunpack.c.l.b16 %v3181
        %v3615 = vunpack.c.l.b16 %v3182
        %v3616 = vunpack.c.l.b16 %v3183
        %v3617 = vunpack.c.l.b16 %v3184
        %v3618 = vunpack.c.l.b16 %v3185
        %v3619 = vunpack.c.l.b16 %v3186
        %v3620 = vunpack.c.l.b16 %v3187
        %v3621 = vunpack.c.l.b16 %v3188
        %v3622 = vunpack.c.l.b16 %v3189
        %v3623 = vunpack.c.l.b16 %v3190
        %v3624 = vunpack.c.l.b16 %v3191
        %v3625 = vunpack.c.l.b16 %v3192
        %v3626 = vunpack.c.l.b16 %v3193
        %v3627 = vunpack.c.l.b16 %v3194
        %v3628 = vunpack.c.l.b16 %v3195
        %v3629 = vunpack.c.l.b16 %v3196
        %v3630 = vunpack.c.l.b16 %v3197
        %v3631 = vunpack.c.l.b16 %v3198
        %v3632 = vunpack.c.l.b16 %v3199
        %v3633 = vunpack.c.l.b16 %v3200
        %v3634 = vunpack.c.l.b16 %v3201
        %v3635 = vunpack.c.l.b16 %v3202
        %v3636 = vunpack.c.l.b16 %v3203
        %v3637 = vunpack.c.l.b16 %v3204
        %v3638 = vunpack.c.l.b16 %v3205
        %v3639 = vunpack.c.l.b16 %v3206
        %v3640 = vunpack.c.l.b16 %v3207
        %v3641 = vunpack.c.l.b16 %v3208
        %v3642 = vunpack.c.l.b16 %v3209
        %v3643 = vunpack.c.l.b16 %v3210
        %v3644 = vunpack.c.l.b16 %v3211
        %v3645 = vunpack.c.l.b16 %v3212
        %v3646 = vunpack.c.l.b16 %v3213
        %v3647 = vunpack.c.l.b16 %v3214
        %v3648 = vunpack.c.l.b16 %v3215
        %v3649 = vunpack.c.l.b16 %v3216
        %v3650 = vunpack.c.l.b16 %v3217
        %v3651 = vunpack.c.l.b16 %v3218
        %v3652 = vunpack.c.l.b16 %v3219
        %v3653 = vunpack.c.l.b16 %v3220
        %v3654 = vunpack.c.l.b16 %v3221
        %v3655 = vunpack.c.l.b16 %v3222
        %v3656 = vunpack.c.l.b16 %v3223
        %v3657 = vunpack.c.l.b16 %v3224
        %v3658 = vunpack.c.l.b16 %v3225
        %v3659 = vunpack.c.l.b16 %v3226
        %v3660 = vunpack.c.l.b16 %v3227
        %v3661 = vunpack.c.l.b16 %v3228
        %v3662 = vunpack.c.l.b16 %v3229
        %v3663 = vunpack.c.l.b16 %v3230
        %v3664 = vunpack.c.l.b16 %v3231
        %v3665 = vunpack.c.l.b16 %v3232
        %v3666 = vunpack.c.l.b16 %v3233
        %v3667 = vunpack.c.l.b16 %v3234
        %v3668 = vunpack.c.l.b16 %v3235
        %v3669 = vunpack.c.l.b16 %v3236
        %v3670 = vunpack.c.l.b16 %v3237
        %v3671 = vunpack.c.l.b16 %v3238
        %v3672 = vunpack.c.l.b16 %v3239
        %v3673 = vunpack.c.l.b16 %v3240
        %v3674 = vunpack.c.l.b16 %v3241
        %v3675 = vunpack.c.l.b16 %v3242
        %v3676 = vunpack.c.l.b16 %v3243
        %v3677 = vunpack.c.l.b16 %v3244
        %v3678 = vunpack.c.l.b16 %v3245
        %v3679 = vunpack.c.l.b16 %v3246
        %v3680 = vunpack.c.l.b16 %v3247
        %v3681 = vunpack.c.l.b16 %v3248
        %v3682 = vunpack.c.l.b16 %v3249
        %v3683 = vunpack.c.l.b16 %v3250
        %v3684 = vunpack.c.l.b16 %v3251
        %v3685 = vunpack.c.l.b16 %v3252
        %v3686 = vunpack.c.l.b16 %v3253
        %v3687 = vpack.c.b16 %v3544, %v3543
        %v3688 = vpack.c.b16 %v3546, %v3545
        %v3689 = vpack.c.b16 %v3548, %v3547
        %v3690 = vpack.c.b16 %v3550, %v3549
        %v3691 = vpack.c.b16 %v3552, %v3551
        %v3692 = vpack.c.b16 %v3554, %v3553
        %v3693 = vpack.c.b16 %v3556, %v3555
        %v3694 = vpack.c.b16 %v3558, %v3557
        %v3695 = vpack.c.b16 %v3560, %v3559
        %v3696 = vpack.c.b16 %v3562, %v3561
        %v3697 = vpack.c.b16 %v3564, %v3563
        %v3698 = vpack.c.b16 %v3566, %v3565
        %v3699 = vpack.c.b16 %v3568, %v3567
        %v3700 = vpack.c.b16 %v3570, %v3569
        %v3701 = vpack.c.b16 %v3572, %v3571
        %v3702 = vpack.c.b16 %v3574, %v3573
        %v3703 = vpack.c.b16 %v3576, %v3575
        %v3704 = vpack.c.b16 %v3578, %v3577
        %v3705 = vpack.c.b16 %v3580, %v3579
        %v3706 = vpack.c.b16 %v3582, %v3581
        %v3707 = vpack.c.b16 %v3584, %v3583
        %v3708 = vpack.c.b16 %v3586, %v3585
        %v3709 = vpack.c.b16 %v3588, %v3587
        %v3710 = vpack.c.b16 %v3590, %v3589
        %v3711 = vpack.c.b16 %v3592, %v3591
        %v3712 = vpack.c.b16 %v3594, %v3593
        %v3713 = vpack.c.b16 %v3596, %v3595
        %v3714 = vpack.c.b16 %v3598, %v3597
        %v3715 = vpack.c.b16 %v3600, %v3599
        %v3716 = vpack.c.b16 %v3602, %v3601
        %v3717 = vpack.c.b16 %v3604, %v3603
        %v3718 = vpack.c.b16 %v3606, %v3605
        %v3719 = vpack.c.b16 %v3608, %v3607
        %v3720 = vpack.c.b16 %v3610, %v3609
        %v3721 = vpack.c.b16 %v3612, %v3611
        %v3722 = vpack.c.b16 %v3614, %v3613
        %v3723 = vpack.c.b16 %v3616, %v3615
        %v3724 = vpack.c.b16 %v3618, %v3617
        %v3725 = vpack.c.b16 %v3620, %v3619
        %v3726 = vpack.c.b16 %v3622, %v3621
        %v3727 = vpack.c.b16 %v3624, %v3623
        %v3728 = vpack.c.b16 %v3626, %v3625
        %v3729 = vpack.c.b16 %v3628, %v3627
        %v3730 = vpack.c.b16 %v3630, %v3629
        %v3731 = vpack.c.b16 %v3632, %v3631
        %v3732 = vpack.c.b16 %v3634, %v3633
        %v3733 = vpack.c.b16 %v3636, %v3635
        %v3734 = vpack.c.b16 %v3638, %v3637
        %v3735 = vpack.c.b16 %v3640, %v3639
        %v3736 = vpack.c.b16 %v3642, %v3641
        %v3737 = vpack.c.b16 %v3644, %v3643
        %v3738 = vpack.c.b16 %v3646, %v3645
        %v3739 = vpack.c.b16 %v3648, %v3647
        %v3740 = vpack.c.b16 %v3650, %v3649
        %v3741 = vpack.c.b16 %v3652, %v3651
        %v3742 = vpack.c.b16 %v3654, %v3653
        %v3743 = vpack.c.b16 %v3656, %v3655
        %v3744 = vpack.c.b16 %v3658, %v3657
        %v3745 = vpack.c.b16 %v3660, %v3659
        %v3746 = vpack.c.b16 %v3662, %v3661
        %v3747 = vpack.c.b16 %v3664, %v3663
        %v3748 = vpack.c.b16 %v3666, %v3665
        %v3749 = vpack.c.b16 %v3668, %v3667
        %v3750 = vpack.c.b16 %v3670, %v3669
        %v3751 = vpack.c.b16 %v3672, %v3671
        %v3752 = vpack.c.b16 %v3674, %v3673
        %v3753 = vpack.c.b16 %v3676, %v3675
        %v3754 = vpack.c.b16 %v3678, %v3677
        %v3755 = vpack.c.b16 %v3680, %v3679
        %v3756 = vpack.c.b16 %v3682, %v3681
        %v3757 = vpack.c.b16 %v3684, %v3683
        %v3758 = vpack.c.b16 %v3686, %v3685
        %3831 = vmatprep.subr.bf16.mxu0 0
        %3832 = vmatpush1.bf16.msra.mxu0 %v3687
        %3833 = vmatprep.subr.bf16.mxu0 0
        %3834 = vmatpush1.bf16.msra.mxu0 %v3688
        %3835 = vmatprep.subr.bf16.mxu0 0
        %3836 = vmatpush1.bf16.msra.mxu0 %v3689
        %3837 = vmatprep.subr.bf16.mxu0 0
        %3838 = vmatpush1.bf16.msra.mxu0 %v3690
        %3839 = vmatprep.subr.bf16.mxu0 0
        %3840 = vmatpush1.bf16.msra.mxu0 %v3691
        %3841 = vmatprep.subr.bf16.mxu0 0
        %3842 = vmatpush1.bf16.msra.mxu0 %v3692
        %3843 = vmatprep.subr.bf16.mxu0 0
        %3844 = vmatpush1.bf16.msra.mxu0 %v3693
        %3845 = vmatprep.subr.bf16.mxu0 0
        %3846 = vmatpush1.bf16.msra.mxu0 %v3694
        %3847 = vmatprep.subr.bf16.mxu0 0
        %3848 = vmatpush1.bf16.msra.mxu0 %v3695
        %3849 = vmatprep.subr.bf16.mxu0 0
        %3850 = vmatpush1.bf16.msra.mxu0 %v3696
        %3851 = vmatprep.subr.bf16.mxu0 0
        %3852 = vmatpush1.bf16.msra.mxu0 %v3697
        %3853 = vmatprep.subr.bf16.mxu0 0
        %3854 = vmatpush1.bf16.msra.mxu0 %v3698
        %3855 = vmatprep.subr.bf16.mxu0 0
        %3856 = vmatpush1.bf16.msra.mxu0 %v3699
        %3857 = vmatprep.subr.bf16.mxu0 0
        %3858 = vmatpush1.bf16.msra.mxu0 %v3700
        %3859 = vmatprep.subr.bf16.mxu0 0
        %3860 = vmatpush1.bf16.msra.mxu0 %v3701
        %3861 = vmatprep.subr.bf16.mxu0 0
        %3862 = vmatpush1.bf16.msra.mxu0 %v3702
        %3863 = vmatprep.mubr.bf16.mxu0 %v3304
        %3864 = vmatmul.mubr.bf16.gmra.mrb[0].mxu0 %v3292
        %v3865 = vpop.f32.mrb[0].mxu0
        %v3866 = vadd.f32 %v3397, %v3865
        %v3867 = vpop.f32.mrb[0].mxu0
        %v3868 = vpop.f32.mrb[0].mxu0
        %v3869 = vadd.f32 %v3397, %v3868
        %v3870 = vpop.f32.mrb[0].mxu0
        %3871 = vmatprep.mubr.bf16.mxu0 %v3305
        %3872 = vmatmul.mubr.bf16.gmra.mrb[0].mxu0 %v3293
        %v3873 = vpop.f32.mrb[0].mxu0
        %v3874 = vadd.f32 %v3397, %v3873
        %v3875 = vpop.f32.mrb[0].mxu0
        %v3876 = vpop.f32.mrb[0].mxu0
        %v3877 = vadd.f32 %v3397, %v3876
        %v3878 = vpop.f32.mrb[0].mxu0
        %3879 = vmatprep.mubr.bf16.mxu0 %v3306
        %3880 = vmatmul.mubr.bf16.gmra.mrb[0].mxu0 %v3294
        %v3881 = vpop.f32.mrb[0].mxu0
        %v3882 = vadd.f32 %v3397, %v3881
        %v3883 = vpop.f32.mrb[0].mxu0
        %v3884 = vpop.f32.mrb[0].mxu0
        %v3885 = vadd.f32 %v3397, %v3884
        %v3886 = vpop.f32.mrb[0].mxu0
        %3887 = vmatprep.mubr.bf16.mxu0 %v3307
        %3888 = vmatmul.mubr.bf16.gmra.mrb[0].mxu0 %v3295
        %v3889 = vpop.f32.mrb[0].mxu0
        %v3890 = vadd.f32 %v3397, %v3889
        %v3891 = vpop.f32.mrb[0].mxu0
        %v3892 = vpop.f32.mrb[0].mxu0
        %v3893 = vadd.f32 %v3397, %v3892
        %v3894 = vpop.f32.mrb[0].mxu0
        %3895 = vdwg.mxu0
        %3896 = vmatprep.subr.bf16.mxu0 0
        %3897 = vmatpush1.bf16.msra.mxu0 %v3703
        %3898 = vmatprep.subr.bf16.mxu0 0
        %3899 = vmatpush1.bf16.msra.mxu0 %v3704
        %3900 = vmatprep.subr.bf16.mxu0 0
        %3901 = vmatpush1.bf16.msra.mxu0 %v3705
        %3902 = vmatprep.subr.bf16.mxu0 0
        %3903 = vmatpush1.bf16.msra.mxu0 %v3706
        %3904 = vmatprep.subr.bf16.mxu0 0
        %3905 = vmatpush1.bf16.msra.mxu0 %v3707
        %3906 = vmatprep.subr.bf16.mxu0 0
        %3907 = vmatpush1.bf16.msra.mxu0 %v3708
        %3908 = vmatprep.subr.bf16.mxu0 0
        %3909 = vmatpush1.bf16.msra.mxu0 %v3709
        %3910 = vmatprep.subr.bf16.mxu0 0
        %3911 = vmatpush1.bf16.msra.mxu0 %v3710
        %3912 = vmatprep.subr.bf16.mxu0 0
        %3913 = vmatpush1.bf16.msra.mxu0 %v3711
        %3914 = vmatprep.subr.bf16.mxu0 0
        %3915 = vmatpush1.bf16.msra.mxu0 %v3712
        %3916 = vmatprep.subr.bf16.mxu0 0
        %3917 = vmatpush1.bf16.msra.mxu0 %v3713
        %3918 = vmatprep.subr.bf16.mxu0 0
        %3919 = vmatpush1.bf16.msra.mxu0 %v3714
        %3920 = vmatprep.subr.bf16.mxu0 0
        %3921 = vmatpush1.bf16.msra.mxu0 %v3715
        %3922 = vmatprep.subr.bf16.mxu0 0
        %3923 = vmatpush1.bf16.msra.mxu0 %v3716
        %3924 = vmatprep.subr.bf16.mxu0 0
        %3925 = vmatpush1.bf16.msra.mxu0 %v3717
        %3926 = vmatprep.subr.bf16.mxu0 0
        %3927 = vmatpush1.bf16.msra.mxu0 %v3718
        %3928 = vmatprep.mubr.bf16.mxu0 %v3328
        %3929 = vmatmul.mubr.bf16.gmra.mrb[0].mxu0 %v3316
        %v3930 = vpop.f32.mrb[0].mxu0
        %v3931 = vadd.f32 %v3866, %v3930
        %v3932 = vpop.f32.mrb[0].mxu0
        %v3933 = vpop.f32.mrb[0].mxu0
        %v3934 = vadd.f32 %v3869, %v3933
        %v3935 = vpop.f32.mrb[0].mxu0
        %3936 = vmatprep.mubr.bf16.mxu0 %v3329
        %3937 = vmatmul.mubr.bf16.gmra.mrb[0].mxu0 %v3317
        %v3938 = vpop.f32.mrb[0].mxu0
        %v3939 = vadd.f32 %v3874, %v3938
        %v3940 = vpop.f32.mrb[0].mxu0
        %v3941 = vpop.f32.mrb[0].mxu0
        %v3942 = vadd.f32 %v3877, %v3941
        %v3943 = vpop.f32.mrb[0].mxu0
        %3944 = vmatprep.mubr.bf16.mxu0 %v3330
        %3945 = vmatmul.mubr.bf16.gmra.mrb[0].mxu0 %v3318
        %v3946 = vpop.f32.mrb[0].mxu0
        %v3947 = vadd.f32 %v3882, %v3946
        %v3948 = vpop.f32.mrb[0].mxu0
        %v3949 = vpop.f32.mrb[0].mxu0
        %v3950 = vadd.f32 %v3885, %v3949
        %v3951 = vpop.f32.mrb[0].mxu0
        %3952 = vmatprep.mubr.bf16.mxu0 %v3331
        %3953 = vmatmul.mubr.bf16.gmra.mrb[0].mxu0 %v3319
        %v3954 = vpop.f32.mrb[0].mxu0
        %v3955 = vadd.f32 %v3890, %v3954
        %v3956 = vpop.f32.mrb[0].mxu0
        %v3957 = vpop.f32.mrb[0].mxu0
        %v3958 = vadd.f32 %v3893, %v3957
        %v3959 = vpop.f32.mrb[0].mxu0
        %3960 = vdwg.mxu0
        %3961 = vmatprep.subr.bf16.mxu0 0
        %3962 = vmatpush1.bf16.msra.mxu0 %v3719
        %3963 = vmatprep.subr.bf16.mxu0 0
        %3964 = vmatpush1.bf16.msra.mxu0 %v3720
        %3965 = vmatprep.subr.bf16.mxu0 0
        %3966 = vmatpush1.bf16.msra.mxu0 %v3721
        %3967 = vmatprep.subr.bf16.mxu0 0
        %3968 = vmatpush1.bf16.msra.mxu0 %v3722
        %3969 = vmatprep.subr.bf16.mxu0 0
        %3970 = vmatpush1.bf16.msra.mxu0 %v3723
        %3971 = vmatprep.subr.bf16.mxu0 0
        %3972 = vmatpush1.bf16.msra.mxu0 %v3724
        %3973 = vmatprep.subr.bf16.mxu0 0
        %3974 = vmatpush1.bf16.msra.mxu0 %v3725
        %3975 = vmatprep.subr.bf16.mxu0 0
        %3976 = vmatpush1.bf16.msra.mxu0 %v3726
        %3977 = vmatprep.subr.bf16.mxu0 0
        %3978 = vmatpush1.bf16.msra.mxu0 %v3727
        %3979 = vmatprep.subr.bf16.mxu0 0
        %3980 = vmatpush1.bf16.msra.mxu0 %v3728
        %3981 = vmatprep.subr.bf16.mxu0 0
        %3982 = vmatpush1.bf16.msra.mxu0 %v3729
        %3983 = vmatprep.subr.bf16.mxu0 0
        %3984 = vmatpush1.bf16.msra.mxu0 %v3730
        %3985 = vmatprep.subr.bf16.mxu0 0
        %3986 = vmatpush1.bf16.msra.mxu0 %v3731
        %3987 = vmatprep.subr.bf16.mxu0 0
        %3988 = vmatpush1.bf16.msra.mxu0 %v3732
        %3989 = vmatprep.subr.bf16.mxu0 0
        %3990 = vmatpush1.bf16.msra.mxu0 %v3733
        %3991 = vmatprep.subr.bf16.mxu0 0
        %3992 = vmatpush1.bf16.msra.mxu0 %v3734
        %3993 = vmatprep.mubr.bf16.mxu0 %v3352
        %3994 = vmatmul.mubr.bf16.gmra.mrb[0].mxu0 %v3340
        %v3995 = vpop.f32.mrb[0].mxu0
        %v3996 = vadd.f32 %v3931, %v3995
        %v3997 = vpop.f32.mrb[0].mxu0
        %v3998 = vpop.f32.mrb[0].mxu0
        %v3999 = vadd.f32 %v3934, %v3998
        %v4000 = vpop.f32.mrb[0].mxu0
        %4001 = vmatprep.mubr.bf16.mxu0 %v3353
        %4002 = vmatmul.mubr.bf16.gmra.mrb[0].mxu0 %v3341
        %v4003 = vpop.f32.mrb[0].mxu0
        %v4004 = vadd.f32 %v3939, %v4003
        %v4005 = vpop.f32.mrb[0].mxu0
        %v4006 = vpop.f32.mrb[0].mxu0
        %v4007 = vadd.f32 %v3942, %v4006
        %v4008 = vpop.f32.mrb[0].mxu0
        %4009 = vmatprep.mubr.bf16.mxu0 %v3354
        %4010 = vmatmul.mubr.bf16.gmra.mrb[0].mxu0 %v3342
        %v4011 = vpop.f32.mrb[0].mxu0
        %v4012 = vadd.f32 %v3947, %v4011
        %v4013 = vpop.f32.mrb[0].mxu0
        %v4014 = vpop.f32.mrb[0].mxu0
        %v4015 = vadd.f32 %v3950, %v4014
        %v4016 = vpop.f32.mrb[0].mxu0
        %4017 = vmatprep.mubr.bf16.mxu0 %v3355
        %4018 = vmatmul.mubr.bf16.gmra.mrb[0].mxu0 %v3343
        %v4019 = vpop.f32.mrb[0].mxu0
        %v4020 = vadd.f32 %v3955, %v4019
        %v4021 = vpop.f32.mrb[0].mxu0
        %v4022 = vpop.f32.mrb[0].mxu0
        %v4023 = vadd.f32 %v3958, %v4022
        %v4024 = vpop.f32.mrb[0].mxu0
        %4025 = vdwg.mxu0
        %4026 = vmatprep.subr.bf16.mxu0 0
        %4027 = vmatpush1.bf16.msra.mxu0 %v3735
        %4028 = vmatprep.subr.bf16.mxu0 0
        %4029 = vmatpush1.bf16.msra.mxu0 %v3736
        %4030 = vmatprep.subr.bf16.mxu0 0
        %4031 = vmatpush1.bf16.msra.mxu0 %v3737
        %4032 = vmatprep.subr.bf16.mxu0 0
        %4033 = vmatpush1.bf16.msra.mxu0 %v3738
        %4034 = vmatprep.subr.bf16.mxu0 0
        %4035 = vmatpush1.bf16.msra.mxu0 %v3739
        %4036 = vmatprep.subr.bf16.mxu0 0
        %4037 = vmatpush1.bf16.msra.mxu0 %v3740
        %4038 = vmatprep.subr.bf16.mxu0 0
        %4039 = vmatpush1.bf16.msra.mxu0 %v3741
        %4040 = vmatprep.subr.bf16.mxu0 0
        %4041 = vmatpush1.bf16.msra.mxu0 %v3742
        %4042 = vmatprep.subr.bf16.mxu0 0
        %4043 = vmatpush1.bf16.msra.mxu0 %v3743
        %4044 = vmatprep.subr.bf16.mxu0 0
        %4045 = vmatpush1.bf16.msra.mxu0 %v3744
        %4046 = vmatprep.subr.bf16.mxu0 0
        %4047 = vmatpush1.bf16.msra.mxu0 %v3745
        %4048 = vmatprep.subr.bf16.mxu0 0
        %4049 = vmatpush1.bf16.msra.mxu0 %v3746
        %4050 = vmatprep.subr.bf16.mxu0 0
        %4051 = vmatpush1.bf16.msra.mxu0 %v3747
        %4052 = vmatprep.subr.bf16.mxu0 0
        %4053 = vmatpush1.bf16.msra.mxu0 %v3748
        %4054 = vmatprep.subr.bf16.mxu0 0
        %4055 = vmatpush1.bf16.msra.mxu0 %v3749
        %4056 = vmatprep.subr.bf16.mxu0 0
        %4057 = vmatpush1.bf16.msra.mxu0 %v3750
        %4058 = vmatprep.mubr.bf16.mxu0 %v3377
        %4059 = vmatmul.mubr.bf16.gmra.mrb[0].mxu0 %v3365
        %v4060 = vpop.f32.mrb[0].mxu0
        %v4061 = vadd.f32 %v3996, %v4060
        %v4062 = vpop.f32.mrb[0].mxu0
        %v4063 = vpop.f32.mrb[0].mxu0
        %v4064 = vadd.f32 %v3999, %v4063
        %v4065 = vpop.f32.mrb[0].mxu0
        %4066 = vmatprep.mubr.bf16.mxu0 %v3378
        %4067 = vmatmul.mubr.bf16.gmra.mrb[0].mxu0 %v3366
        %v4068 = vpop.f32.mrb[0].mxu0
        %v4069 = vadd.f32 %v4004, %v4068
        %v4070 = vpop.f32.mrb[0].mxu0
        %v4071 = vpop.f32.mrb[0].mxu0
        %v4072 = vadd.f32 %v4007, %v4071
        %v4073 = vpop.f32.mrb[0].mxu0
        %4074 = vmatprep.mubr.bf16.mxu0 %v3379
        %4075 = vmatmul.mubr.bf16.gmra.mrb[0].mxu0 %v3367
        %v4076 = vpop.f32.mrb[0].mxu0
        %v4077 = vadd.f32 %v4012, %v4076
        %v4078 = vpop.f32.mrb[0].mxu0
        %v4079 = vpop.f32.mrb[0].mxu0
        %v4080 = vadd.f32 %v4015, %v4079
        %v4081 = vpop.f32.mrb[0].mxu0
        %4082 = vmatprep.mubr.bf16.mxu0 %v3380
        %4083 = vmatmul.mubr.bf16.gmra.mrb[0].mxu0 %v3368
        %v4084 = vpop.f32.mrb[0].mxu0
        %v4085 = vadd.f32 %v4020, %v4084
        %v4086 = vpop.f32.mrb[0].mxu0
        %v4087 = vpop.f32.mrb[0].mxu0
        %v4088 = vadd.f32 %v4023, %v4087
        %v4089 = vpop.f32.mrb[0].mxu0
        %4090 = vdwg.mxu0
        %4091 = vmatprep.subr.bf16.mxu0 0
        %4092 = vmatpush1.bf16.msra.mxu0 %v3751
        %4093 = vmatprep.subr.bf16.mxu0 0
        %4094 = vmatpush1.bf16.msra.mxu0 %v3752
        %4095 = vmatprep.subr.bf16.mxu0 0
        %4096 = vmatpush1.bf16.msra.mxu0 %v3753
        %4097 = vmatprep.subr.bf16.mxu0 0
        %4098 = vmatpush1.bf16.msra.mxu0 %v3754
        %4099 = vmatprep.subr.bf16.mxu0 0
        %4100 = vmatpush1.bf16.msra.mxu0 %v3755
        %4101 = vmatprep.subr.bf16.mxu0 0
        %4102 = vmatpush1.bf16.msra.mxu0 %v3756
        %4103 = vmatprep.subr.bf16.mxu0 0
        %4104 = vmatpush1.bf16.msra.mxu0 %v3757
        %4105 = vmatprep.subr.bf16.mxu0 0
        %4106 = vmatpush1.bf16.msra.mxu0 %v3758
        %4107 = vmatprep.subr.bf16.mxu0 0
        %4108 = vmatpush1.bf16.msra.mxu0 0
        %4109 = vmatprep.subr.bf16.mxu0 0
        %4110 = vmatpush1.bf16.msra.mxu0 0
        %4111 = vmatprep.subr.bf16.mxu0 0
        %4112 = vmatpush1.bf16.msra.mxu0 0
        %4113 = vmatprep.subr.bf16.mxu0 0
        %4114 = vmatpush1.bf16.msra.mxu0 0
        %4115 = vmatprep.subr.bf16.mxu0 0
        %4116 = vmatpush1.bf16.msra.mxu0 0
        %4117 = vmatprep.subr.bf16.mxu0 0
        %4118 = vmatpush1.bf16.msra.mxu0 0
        %4119 = vmatprep.subr.bf16.mxu0 0
        %4120 = vmatpush1.bf16.msra.mxu0 0
        %4121 = vmatprep.subr.bf16.mxu0 0
        %4122 = vmatpush1.bf16.msra.mxu0 0
        %4123 = vmatprep.mubr.bf16.mxu0 0
        %4124 = vmatmul.mubr.bf16.gmra.mrb[0].mxu0 %v3389
        %v4125 = vpop.f32.mrb[0].mxu0
        %v4126 = vadd.f32 %v4061, %v4125
        %v4127 = vpop.f32.mrb[0].mxu0
        %v4128 = vpop.f32.mrb[0].mxu0
        %v4129 = vadd.f32 %v4064, %v4128
        %v4130 = vpop.f32.mrb[0].mxu0
        %4131 = vmatprep.mubr.bf16.mxu0 0
        %4132 = vmatmul.mubr.bf16.gmra.mrb[0].mxu0 %v3390
        %v4133 = vpop.f32.mrb[0].mxu0
        %v4134 = vadd.f32 %v4069, %v4133
        %v4135 = vpop.f32.mrb[0].mxu0
        %v4136 = vpop.f32.mrb[0].mxu0
        %v4137 = vadd.f32 %v4072, %v4136
        %v4138 = vpop.f32.mrb[0].mxu0
        %4139 = vmatprep.mubr.bf16.mxu0 0
        %4140 = vmatmul.mubr.bf16.gmra.mrb[0].mxu0 %v3391
        %v4141 = vpop.f32.mrb[0].mxu0
        %v4142 = vadd.f32 %v4077, %v4141
        %v4143 = vpop.f32.mrb[0].mxu0
        %v4144 = vpop.f32.mrb[0].mxu0
        %v4145 = vadd.f32 %v4080, %v4144
        %v4146 = vpop.f32.mrb[0].mxu0
        %4147 = vmatprep.mubr.bf16.mxu0 0
        %4148 = vmatmul.mubr.bf16.gmra.mrb[0].mxu0 %v3392
        %v4149 = vpop.f32.mrb[0].mxu0
        %v4150 = vadd.f32 %v4085, %v4149
        %v4151 = vpop.f32.mrb[0].mxu0
        %v4152 = vpop.f32.mrb[0].mxu0
        %v4153 = vadd.f32 %v4088, %v4152
        %v4154 = vpop.f32.mrb[0].mxu0
        %4155 = vdwg.mxu0
        %v4156 = vmax.f32 %v4126, 0.0
        %v4157 = vmax.f32 %v4129, 0.0
        %v4158 = vmax.f32 %v4134, 0.0
        %v4159 = vmax.f32 %v4137, 0.0
        %v4160 = vmax.f32 %v4142, 0.0
        %v4161 = vmax.f32 %v4145, 0.0
        %v4162 = vmax.f32 %v4150, 0.0
        %v4163 = vmax.f32 %v4153, 0.0
        %v4164 = vld [vmem:[#allocation18] sm:$0xf]
        %v4165 = vld [vmem:[#allocation18 + $0x4] sm:$0xf]
        %v4166 = vld [vmem:[#allocation18 + $0x8] sm:$0xf]
        %v4167 = vld [vmem:[#allocation18 + $0xc] sm:$0xf]
        %v4168 = vld [vmem:[#allocation18 + $0x10] sm:$0xf]
        %v4169 = vld [vmem:[#allocation18 + $0x14] sm:$0xf]
        %v4170 = vld [vmem:[#allocation18 + $0x18] sm:$0xf]
        %v4171 = vld [vmem:[#allocation18 + $0x1c] sm:$0xf]
        %v4172 = vld [vmem:[#allocation18 + $0x20] sm:$0xf]
        %v4173 = vld [vmem:[#allocation18 + $0x24] sm:$0xf]
        %v4174 = vld [vmem:[#allocation18 + $0x28] sm:$0xf]
        %v4175 = vld [vmem:[#allocation18 + $0x2c] sm:$0xf]
        %v4176 = vld [vmem:[#allocation18 + $0x30] sm:$0xf]
        %v4177 = vld [vmem:[#allocation18 + $0x34] sm:$0xf]
        %v4178 = vld [vmem:[#allocation18 + $0x38] sm:$0xf]
        %v4179 = vld [vmem:[#allocation18 + $0x3c] sm:$0xf]
        %v4180 = vld [vmem:[#allocation18 + $0x40] sm:$0xf]
        %v4181 = vld [vmem:[#allocation18 + $0x44] sm:$0xf]
        %v4182 = vld [vmem:[#allocation18 + $0x48] sm:$0xf]
        %v4183 = vld [vmem:[#allocation18 + $0x4c] sm:$0xf]
        %v4184 = vld [vmem:[#allocation18 + $0x50] sm:$0xf]
        %v4185 = vld [vmem:[#allocation18 + $0x54] sm:$0xf]
        %v4186 = vld [vmem:[#allocation18 + $0x58] sm:$0xf]
        %v4187 = vld [vmem:[#allocation18 + $0x5c] sm:$0xf]
        %v4188 = vld [vmem:[#allocation18 + $0x60] sm:$0xf]
        %v4189 = vld [vmem:[#allocation18 + $0x64] sm:$0xf]
        %v4190 = vld [vmem:[#allocation18 + $0x68] sm:$0xf]
        %v4191 = vld [vmem:[#allocation18 + $0x6c] sm:$0xf]
        %v4192 = vld [vmem:[#allocation18 + $0x70] sm:$0xf]
        %v4193 = vld [vmem:[#allocation18 + $0x74] sm:$0xf]
        %v4194 = vld [vmem:[#allocation18 + $0x78] sm:$0xf]
        %v4195 = vld [vmem:[#allocation18 + $0x7c] sm:$0xf]
        %v4196 = vld [vmem:[#allocation18 + $0x80] sm:$0xf]
        %v4197 = vld [vmem:[#allocation18 + $0x84] sm:$0xf]
        %v4198 = vld [vmem:[#allocation18 + $0x88] sm:$0xf]
        %v4199 = vld [vmem:[#allocation18 + $0x8c] sm:$0xf]
        %v4200 = vld [vmem:[#allocation18 + $0x90] sm:$0xf]
        %v4201 = vld [vmem:[#allocation18 + $0x94] sm:$0xf]
        %v4202 = vld [vmem:[#allocation18 + $0x98] sm:$0xf]
        %v4203 = vld [vmem:[#allocation18 + $0x9c] sm:$0xf]
        %v4204 = vld [vmem:[#allocation18 + $0xa0] sm:$0xf]
        %v4205 = vld [vmem:[#allocation18 + $0xa4] sm:$0xf]
        %v4206 = vld [vmem:[#allocation18 + $0xa8] sm:$0xf]
        %v4207 = vld [vmem:[#allocation18 + $0xac] sm:$0xf]
        %v4208 = vld [vmem:[#allocation18 + $0xb0] sm:$0xf]
        %v4209 = vld [vmem:[#allocation18 + $0xb4] sm:$0xf]
        %v4210 = vld [vmem:[#allocation18 + $0xb8] sm:$0xf]
        %v4211 = vld [vmem:[#allocation18 + $0xbc] sm:$0xf]
        %v4212 = vld [vmem:[#allocation18 + $0xc0] sm:$0xf]
        %v4213 = vld [vmem:[#allocation18 + $0xc4] sm:$0xf]
        %v4214 = vld [vmem:[#allocation18 + $0xc8] sm:$0xf]
        %v4215 = vld [vmem:[#allocation18 + $0xcc] sm:$0xf]
        %v4216 = vld [vmem:[#allocation18 + $0xd0] sm:$0xf]
        %v4217 = vld [vmem:[#allocation18 + $0xd4] sm:$0xf]
        %v4218 = vld [vmem:[#allocation18 + $0xd8] sm:$0xf]
        %v4219 = vld [vmem:[#allocation18 + $0xdc] sm:$0xf]
        %v4220 = vld [vmem:[#allocation18 + $0xe0] sm:$0xf]
        %v4221 = vld [vmem:[#allocation18 + $0xe4] sm:$0xf]
        %v4222 = vld [vmem:[#allocation18 + $0xe8] sm:$0xf]
        %v4223 = vld [vmem:[#allocation18 + $0xec] sm:$0xf]
        %v4224 = vld [vmem:[#allocation18 + $0xf0] sm:$0xf]
        %v4225 = vld [vmem:[#allocation18 + $0xf4] sm:$0xf]
        %v4226 = vld [vmem:[#allocation18 + $0xf8] sm:$0xf]
        %v4227 = vld [vmem:[#allocation18 + $0xfc] sm:$0xf]
        %v4228 = vld [vmem:[#allocation18 + $0x100] sm:$0xf]
        %v4229 = vld [vmem:[#allocation18 + $0x104] sm:$0xf]
        %v4230 = vld [vmem:[#allocation18 + $0x108] sm:$0xf]
        %v4231 = vld [vmem:[#allocation18 + $0x10c] sm:$0xf]
        %v4232 = vld [vmem:[#allocation18 + $0x110] sm:$0xf]
        %v4233 = vld [vmem:[#allocation18 + $0x114] sm:$0xf]
        %v4234 = vld [vmem:[#allocation18 + $0x118] sm:$0xf]
        %v4235 = vld [vmem:[#allocation18 + $0x11c] sm:$0xf]
        %v4236 = vld [vmem:[#allocation18 + $0x120] sm:$0xf]
        %v4237 = vld [vmem:[#allocation18 + $0x124] sm:$0xf]
        %v4238 = vld [vmem:[#allocation18 + $0x128] sm:$0xf]
        %v4239 = vld [vmem:[#allocation18 + $0x12c] sm:$0xf]
        %v4240 = vld [vmem:[#allocation18 + $0x130] sm:$0xf]
        %v4241 = vld [vmem:[#allocation18 + $0x134] sm:$0xf]
        %v4242 = vld [vmem:[#allocation18 + $0x138] sm:$0xf]
        %v4243 = vld [vmem:[#allocation18 + $0x13c] sm:$0xf]
        %v4244 = vld [vmem:[#allocation18 + $0x140] sm:$0xf]
        %v4245 = vld [vmem:[#allocation18 + $0x144] sm:$0xf]
        %v4246 = vld [vmem:[#allocation18 + $0x148] sm:$0xf]
        %v4247 = vld [vmem:[#allocation18 + $0x14c] sm:$0xf]
        %v4248 = vld [vmem:[#allocation18 + $0x150] sm:$0xf]
        %v4249 = vld [vmem:[#allocation18 + $0x154] sm:$0xf]
        %v4250 = vld [vmem:[#allocation18 + $0x158] sm:$0xf]
        %v4251 = vld [vmem:[#allocation18 + $0x15c] sm:$0xf]
        %v4252 = vld [vmem:[#allocation18 + $0x160] sm:$0xf]
        %v4253 = vld [vmem:[#allocation18 + $0x164] sm:$0xf]
        %v4254 = vld [vmem:[#allocation18 + $0x168] sm:$0xf]
        %v4255 = vld [vmem:[#allocation18 + $0x16c] sm:$0xf]
        %v4256 = vld [vmem:[#allocation18 + $0x170] sm:$0xf]
        %v4257 = vld [vmem:[#allocation18 + $0x174] sm:$0xf]
        %v4258 = vld [vmem:[#allocation18 + $0x178] sm:$0xf]
        %v4259 = vld [vmem:[#allocation18 + $0x17c] sm:$0xf]
        %v4260 = vld [vmem:[#allocation18 + $0x180] sm:$0xf]
        %v4261 = vld [vmem:[#allocation18 + $0x184] sm:$0xf]
        %v4262 = vld [vmem:[#allocation18 + $0x188] sm:$0xf]
        %v4263 = vld [vmem:[#allocation18 + $0x18c] sm:$0xf]
        %v4264 = vld [vmem:[#allocation18 + $0x190] sm:$0xf]
        %v4265 = vld [vmem:[#allocation18 + $0x194] sm:$0xf]
        %v4266 = vld [vmem:[#allocation18 + $0x198] sm:$0xf]
        %v4267 = vld [vmem:[#allocation18 + $0x19c] sm:$0xf]
        %v4268 = vld [vmem:[#allocation18 + $0x1a0] sm:$0xf]
        %v4269 = vld [vmem:[#allocation18 + $0x1a4] sm:$0xf]
        %v4270 = vld [vmem:[#allocation18 + $0x1a8] sm:$0xf]
        %v4271 = vld [vmem:[#allocation18 + $0x1ac] sm:$0xf]
        %v4272 = vld [vmem:[#allocation18 + $0x1b0] sm:$0xf]
        %v4273 = vld [vmem:[#allocation18 + $0x1b4] sm:$0xf]
        %v4274 = vld [vmem:[#allocation18 + $0x1b8] sm:$0xf]
        %v4275 = vld [vmem:[#allocation18 + $0x1bc] sm:$0xf]
        %v4276 = vld [vmem:[#allocation18 + $0x1c0] sm:$0xf]
        %v4277 = vld [vmem:[#allocation18 + $0x1c4] sm:$0xf]
        %v4278 = vld [vmem:[#allocation18 + $0x1c8] sm:$0xf]
        %v4279 = vld [vmem:[#allocation18 + $0x1cc] sm:$0xf]
        %v4280 = vld [vmem:[#allocation18 + $0x1d0] sm:$0xf]
        %v4281 = vld [vmem:[#allocation18 + $0x1d4] sm:$0xf]
        %v4282 = vld [vmem:[#allocation18 + $0x1d8] sm:$0xf]
        %v4283 = vld [vmem:[#allocation18 + $0x1dc] sm:$0xf]
        %v4284 = vld [vmem:[#allocation18 + $0x1e0] sm:$0xf]
        %v4285 = vld [vmem:[#allocation18 + $0x1e4] sm:$0xf]
        %v4286 = vld [vmem:[#allocation18 + $0x1e8] sm:$0xf]
        %v4287 = vld [vmem:[#allocation18 + $0x1ec] sm:$0xf]
        %v4288 = vld [vmem:[#allocation18 + $0x1f0] sm:$0xf]
        %v4289 = vld [vmem:[#allocation18 + $0x1f4] sm:$0xf]
        %v4290 = vld [vmem:[#allocation18 + $0x1f8] sm:$0xf]
        %v4291 = vld [vmem:[#allocation18 + $0x1fc] sm:$0xf]
        %v4292 = vld [vmem:[#allocation18 + $0x200] sm:$0xf]
        %v4293 = vld [vmem:[#allocation18 + $0x204] sm:$0xf]
        %v4294 = vld [vmem:[#allocation18 + $0x208] sm:$0xf]
        %v4295 = vld [vmem:[#allocation18 + $0x20c] sm:$0xf]
        %v4296 = vld [vmem:[#allocation18 + $0x210] sm:$0xf]
        %v4297 = vld [vmem:[#allocation18 + $0x214] sm:$0xf]
        %v4298 = vld [vmem:[#allocation18 + $0x218] sm:$0xf]
        %v4299 = vld [vmem:[#allocation18 + $0x21c] sm:$0xf]
        %v4300 = vld [vmem:[#allocation18 + $0x220] sm:$0xf]
        %v4301 = vld [vmem:[#allocation18 + $0x224] sm:$0xf]
        %v4302 = vld [vmem:[#allocation18 + $0x228] sm:$0xf]
        %v4303 = vld [vmem:[#allocation18 + $0x22c] sm:$0xf]
        %v4304 = vld [vmem:[#allocation18 + $0x230] sm:$0xf]
        %v4305 = vld [vmem:[#allocation18 + $0x234] sm:$0xf]
        %v4306 = vld [vmem:[#allocation18 + $0x238] sm:$0xf]
        %v4307 = vld [vmem:[#allocation18 + $0x23c] sm:$0xf]
        %v4308 = vld [vmem:[#allocation20] sm:$0x1]
        %4309 = vst [vmem:[#allocation4] sm:$0xff] 0.0
        %4310 = vst [vmem:[#allocation4 + $0x8] sm:$0x3] 0.0
        %4311 = vst [vmem:[#allocation4 + $0x10] sm:$0xff] 0.0
        %4312 = vst [vmem:[#allocation4 + $0x18] sm:$0x3] 0.0
        %4313 = vst [vmem:[#allocation4 + $0x20] sm:$0xff] 0.0
        %4314 = vst [vmem:[#allocation4 + $0x28] sm:$0x3] 0.0
        %4315 = vst [vmem:[#allocation4 + $0x30] sm:$0xff] 0.0
        %4316 = vst [vmem:[#allocation4 + $0x38] sm:$0x3] 0.0
        %4317 = vst [vmem:[#allocation4 + $0x40] sm:$0xff] 0.0
        %4318 = vst [vmem:[#allocation4 + $0x48] sm:$0x3] 0.0
        %4319 = vst [vmem:[#allocation4 + $0x50] sm:$0xff] 0.0
        %4320 = vst [vmem:[#allocation4 + $0x58] sm:$0x3] 0.0
        %4321 = vst [vmem:[#allocation4 + $0x60] sm:$0xff] 0.0
        %4322 = vst [vmem:[#allocation4 + $0x68] sm:$0x3] 0.0
        %4323 = vst [vmem:[#allocation4 + $0x70] sm:$0xff] 0.0
        %4324 = vst [vmem:[#allocation4 + $0x78] sm:$0x3] 0.0
        %4325 = vst [vmem:[#allocation4 + $0x80] sm:$0xff] 0.0
        %4326 = vst [vmem:[#allocation4 + $0x88] sm:$0x3] 0.0
        %4327 = vst [vmem:[#allocation4 + $0x90] sm:$0xff] 0.0
        %4328 = vst [vmem:[#allocation4 + $0x98] sm:$0x3] 0.0
        %s4329 = scalar_lea.vmem [#allocation4], 16
        %4330 = vst [vmem:[%s4329 + $0x1] sm:$0xff] %v4156
        %4331 = vst [vmem:[%s4329 + $0x11] sm:$0xff] %v4157
        %4332 = vst [vmem:[%s4329 + $0x21] sm:$0xff] %v4158
        %4333 = vst [vmem:[%s4329 + $0x31] sm:$0xff] %v4159
        %4334 = vst [vmem:[%s4329 + $0x41] sm:$0xff] %v4160
        %4335 = vst [vmem:[%s4329 + $0x51] sm:$0xff] %v4161
        %4336 = vst [vmem:[%s4329 + $0x61] sm:$0xff] %v4162
        %4337 = vst [vmem:[%s4329 + $0x71] sm:$0xff] %v4163
        %v4338 = vld [vmem:[#allocation4] sm:$0xff]
        %v4339 = vld [vmem:[#allocation4 + $0x10] sm:$0xff]
        %v4340 = vld [vmem:[#allocation4 + $0x20] sm:$0xff]
        %v4341 = vld [vmem:[#allocation4 + $0x30] sm:$0xff]
        %v4342 = vld [vmem:[#allocation4 + $0x40] sm:$0xff]
        %v4343 = vld [vmem:[#allocation4 + $0x50] sm:$0xff]
        %v4344 = vld [vmem:[#allocation4 + $0x60] sm:$0xff]
        %v4345 = vld [vmem:[#allocation4 + $0x70] sm:$0xff]
        %v4346 = vpack.c.bf16 %v4339, %v4338
        %v4347 = vpack.c.bf16 %v4341, %v4340
        %v4348 = vpack.c.bf16 %v4343, %v4342
        %v4349 = vpack.c.bf16 %v4345, %v4344
        %v4350 = vld [vmem:[#allocation4 + $0x1] sm:$0xff]
        %v4351 = vld [vmem:[#allocation4 + $0x11] sm:$0xff]
        %v4352 = vld [vmem:[#allocation4 + $0x21] sm:$0xff]
        %v4353 = vld [vmem:[#allocation4 + $0x31] sm:$0xff]
        %v4354 = vld [vmem:[#allocation4 + $0x41] sm:$0xff]
        %v4355 = vld [vmem:[#allocation4 + $0x51] sm:$0xff]
        %v4356 = vld [vmem:[#allocation4 + $0x61] sm:$0xff]
        %v4357 = vld [vmem:[#allocation4 + $0x71] sm:$0xff]
        %v4358 = vpack.c.bf16 %v4351, %v4350
        %v4359 = vpack.c.bf16 %v4353, %v4352
        %v4360 = vpack.c.bf16 %v4355, %v4354
        %v4361 = vpack.c.bf16 %v4357, %v4356
        %v4362 = vld [vmem:[#allocation4 + $0x2] sm:$0xff]
        %v4363 = vld [vmem:[#allocation4 + $0x12] sm:$0xff]
        %v4364 = vld [vmem:[#allocation4 + $0x22] sm:$0xff]
        %v4365 = vld [vmem:[#allocation4 + $0x32] sm:$0xff]
        %v4366 = vld [vmem:[#allocation4 + $0x42] sm:$0xff]
        %v4367 = vld [vmem:[#allocation4 + $0x52] sm:$0xff]
        %v4368 = vld [vmem:[#allocation4 + $0x62] sm:$0xff]
        %v4369 = vld [vmem:[#allocation4 + $0x72] sm:$0xff]
        %v4370 = vpack.c.bf16 %v4363, %v4362
        %v4371 = vpack.c.bf16 %v4365, %v4364
        %v4372 = vpack.c.bf16 %v4367, %v4366
        %v4373 = vpack.c.bf16 %v4369, %v4368
        %v4374 = vld [vmem:[%s4329] sm:$0xff]
        %v4375 = vld [vmem:[%s4329 + $0x10] sm:$0xff]
        %v4376 = vld [vmem:[%s4329 + $0x20] sm:$0xff]
        %v4377 = vld [vmem:[%s4329 + $0x30] sm:$0xff]
        %v4378 = vld [vmem:[%s4329 + $0x40] sm:$0xff]
        %v4379 = vld [vmem:[%s4329 + $0x50] sm:$0xff]
        %v4380 = vld [vmem:[%s4329 + $0x60] sm:$0xff]
        %v4381 = vld [vmem:[%s4329 + $0x70] sm:$0xff]
        %v4382 = vpack.c.bf16 %v4375, %v4374
        %v4383 = vpack.c.bf16 %v4377, %v4376
        %v4384 = vpack.c.bf16 %v4379, %v4378
        %v4385 = vpack.c.bf16 %v4381, %v4380
        %v4386 = vld [vmem:[%s4329 + $0x1] sm:$0xff]
        %v4387 = vld [vmem:[%s4329 + $0x11] sm:$0xff]
        %v4388 = vld [vmem:[%s4329 + $0x21] sm:$0xff]
        %v4389 = vld [vmem:[%s4329 + $0x31] sm:$0xff]
        %v4390 = vld [vmem:[%s4329 + $0x41] sm:$0xff]
        %v4391 = vld [vmem:[%s4329 + $0x51] sm:$0xff]
        %v4392 = vld [vmem:[%s4329 + $0x61] sm:$0xff]
        %v4393 = vld [vmem:[%s4329 + $0x71] sm:$0xff]
        %v4394 = vpack.c.bf16 %v4387, %v4386
        %v4395 = vpack.c.bf16 %v4389, %v4388
        %v4396 = vpack.c.bf16 %v4391, %v4390
        %v4397 = vpack.c.bf16 %v4393, %v4392
        %v4398 = vld [vmem:[%s4329 + $0x2] sm:$0xff]
        %v4399 = vld [vmem:[%s4329 + $0x12] sm:$0xff]
        %v4400 = vld [vmem:[%s4329 + $0x22] sm:$0xff]
        %v4401 = vld [vmem:[%s4329 + $0x32] sm:$0xff]
        %v4402 = vld [vmem:[%s4329 + $0x42] sm:$0xff]
        %v4403 = vld [vmem:[%s4329 + $0x52] sm:$0xff]
        %v4404 = vld [vmem:[%s4329 + $0x62] sm:$0xff]
        %v4405 = vld [vmem:[%s4329 + $0x72] sm:$0xff]
        %v4406 = vpack.c.bf16 %v4399, %v4398
        %v4407 = vpack.c.bf16 %v4401, %v4400
        %v4408 = vpack.c.bf16 %v4403, %v4402
        %v4409 = vpack.c.bf16 %v4405, %v4404
        %s4410 = scalar_lea.vmem [#allocation4], 32
        %v4411 = vld [vmem:[%s4410] sm:$0xff]
        %v4412 = vld [vmem:[%s4410 + $0x10] sm:$0xff]
        %v4413 = vld [vmem:[%s4410 + $0x20] sm:$0xff]
        %v4414 = vld [vmem:[%s4410 + $0x30] sm:$0xff]
        %v4415 = vld [vmem:[%s4410 + $0x40] sm:$0xff]
        %v4416 = vld [vmem:[%s4410 + $0x50] sm:$0xff]
        %v4417 = vld [vmem:[%s4410 + $0x60] sm:$0xff]
        %v4418 = vld [vmem:[%s4410 + $0x70] sm:$0xff]
        %v4419 = vpack.c.bf16 %v4412, %v4411
        %v4420 = vpack.c.bf16 %v4414, %v4413
        %v4421 = vpack.c.bf16 %v4416, %v4415
        %v4422 = vpack.c.bf16 %v4418, %v4417
        %v4423 = vld [vmem:[%s4410 + $0x1] sm:$0xff]
        %v4424 = vld [vmem:[%s4410 + $0x11] sm:$0xff]
        %v4425 = vld [vmem:[%s4410 + $0x21] sm:$0xff]
        %v4426 = vld [vmem:[%s4410 + $0x31] sm:$0xff]
        %v4427 = vld [vmem:[%s4410 + $0x41] sm:$0xff]
        %v4428 = vld [vmem:[%s4410 + $0x51] sm:$0xff]
        %v4429 = vld [vmem:[%s4410 + $0x61] sm:$0xff]
        %v4430 = vld [vmem:[%s4410 + $0x71] sm:$0xff]
        %v4431 = vpack.c.bf16 %v4424, %v4423
        %v4432 = vpack.c.bf16 %v4426, %v4425
        %v4433 = vpack.c.bf16 %v4428, %v4427
        %v4434 = vpack.c.bf16 %v4430, %v4429
        %v4435 = vld [vmem:[%s4410 + $0x2] sm:$0xff]
        %v4436 = vld [vmem:[%s4410 + $0x12] sm:$0xff]
        %v4437 = vld [vmem:[%s4410 + $0x22] sm:$0xff]
        %v4438 = vld [vmem:[%s4410 + $0x32] sm:$0xff]
        %v4439 = vld [vmem:[%s4410 + $0x42] sm:$0xff]
        %v4440 = vld [vmem:[%s4410 + $0x52] sm:$0xff]
        %v4441 = vld [vmem:[%s4410 + $0x62] sm:$0xff]
        %v4442 = vld [vmem:[%s4410 + $0x72] sm:$0xff]
        %v4443 = vpack.c.bf16 %v4436, %v4435
        %v4444 = vpack.c.bf16 %v4438, %v4437
        %v4445 = vpack.c.bf16 %v4440, %v4439
        %v4446 = vpack.c.bf16 %v4442, %v4441
        %v4448 = vlaneseq
        %v4449 = vshrl.u32 %v4448, 7
        %v4450 = vsub.s32 0, %v4449
        %v4451 = vrot.slane %v4308, %v4450
        %v4597 = vunpack.c.l.b16 %v4164
        %v4598 = vunpack.c.l.b16 %v4165
        %v4599 = vunpack.c.l.b16 %v4166
        %v4600 = vunpack.c.l.b16 %v4167
        %v4601 = vunpack.c.l.b16 %v4168
        %v4602 = vunpack.c.l.b16 %v4169
        %v4603 = vunpack.c.l.b16 %v4170
        %v4604 = vunpack.c.l.b16 %v4171
        %v4605 = vunpack.c.l.b16 %v4172
        %v4606 = vunpack.c.l.b16 %v4173
        %v4607 = vunpack.c.l.b16 %v4174
        %v4608 = vunpack.c.l.b16 %v4175
        %v4609 = vunpack.c.l.b16 %v4176
        %v4610 = vunpack.c.l.b16 %v4177
        %v4611 = vunpack.c.l.b16 %v4178
        %v4612 = vunpack.c.l.b16 %v4179
        %v4613 = vunpack.c.l.b16 %v4180
        %v4614 = vunpack.c.l.b16 %v4181
        %v4615 = vunpack.c.l.b16 %v4182
        %v4616 = vunpack.c.l.b16 %v4183
        %v4617 = vunpack.c.l.b16 %v4184
        %v4618 = vunpack.c.l.b16 %v4185
        %v4619 = vunpack.c.l.b16 %v4186
        %v4620 = vunpack.c.l.b16 %v4187
        %v4621 = vunpack.c.l.b16 %v4188
        %v4622 = vunpack.c.l.b16 %v4189
        %v4623 = vunpack.c.l.b16 %v4190
        %v4624 = vunpack.c.l.b16 %v4191
        %v4625 = vunpack.c.l.b16 %v4192
        %v4626 = vunpack.c.l.b16 %v4193
        %v4627 = vunpack.c.l.b16 %v4194
        %v4628 = vunpack.c.l.b16 %v4195
        %v4629 = vunpack.c.l.b16 %v4196
        %v4630 = vunpack.c.l.b16 %v4197
        %v4631 = vunpack.c.l.b16 %v4198
        %v4632 = vunpack.c.l.b16 %v4199
        %v4633 = vunpack.c.l.b16 %v4200
        %v4634 = vunpack.c.l.b16 %v4201
        %v4635 = vunpack.c.l.b16 %v4202
        %v4636 = vunpack.c.l.b16 %v4203
        %v4637 = vunpack.c.l.b16 %v4204
        %v4638 = vunpack.c.l.b16 %v4205
        %v4639 = vunpack.c.l.b16 %v4206
        %v4640 = vunpack.c.l.b16 %v4207
        %v4641 = vunpack.c.l.b16 %v4208
        %v4642 = vunpack.c.l.b16 %v4209
        %v4643 = vunpack.c.l.b16 %v4210
        %v4644 = vunpack.c.l.b16 %v4211
        %v4645 = vunpack.c.l.b16 %v4212
        %v4646 = vunpack.c.l.b16 %v4213
        %v4647 = vunpack.c.l.b16 %v4214
        %v4648 = vunpack.c.l.b16 %v4215
        %v4649 = vunpack.c.l.b16 %v4216
        %v4650 = vunpack.c.l.b16 %v4217
        %v4651 = vunpack.c.l.b16 %v4218
        %v4652 = vunpack.c.l.b16 %v4219
        %v4653 = vunpack.c.l.b16 %v4220
        %v4654 = vunpack.c.l.b16 %v4221
        %v4655 = vunpack.c.l.b16 %v4222
        %v4656 = vunpack.c.l.b16 %v4223
        %v4657 = vunpack.c.l.b16 %v4224
        %v4658 = vunpack.c.l.b16 %v4225
        %v4659 = vunpack.c.l.b16 %v4226
        %v4660 = vunpack.c.l.b16 %v4227
        %v4661 = vunpack.c.l.b16 %v4228
        %v4662 = vunpack.c.l.b16 %v4229
        %v4663 = vunpack.c.l.b16 %v4230
        %v4664 = vunpack.c.l.b16 %v4231
        %v4665 = vunpack.c.l.b16 %v4232
        %v4666 = vunpack.c.l.b16 %v4233
        %v4667 = vunpack.c.l.b16 %v4234
        %v4668 = vunpack.c.l.b16 %v4235
        %v4669 = vunpack.c.l.b16 %v4236
        %v4670 = vunpack.c.l.b16 %v4237
        %v4671 = vunpack.c.l.b16 %v4238
        %v4672 = vunpack.c.l.b16 %v4239
        %v4673 = vunpack.c.l.b16 %v4240
        %v4674 = vunpack.c.l.b16 %v4241
        %v4675 = vunpack.c.l.b16 %v4242
        %v4676 = vunpack.c.l.b16 %v4243
        %v4677 = vunpack.c.l.b16 %v4244
        %v4678 = vunpack.c.l.b16 %v4245
        %v4679 = vunpack.c.l.b16 %v4246
        %v4680 = vunpack.c.l.b16 %v4247
        %v4681 = vunpack.c.l.b16 %v4248
        %v4682 = vunpack.c.l.b16 %v4249
        %v4683 = vunpack.c.l.b16 %v4250
        %v4684 = vunpack.c.l.b16 %v4251
        %v4685 = vunpack.c.l.b16 %v4252
        %v4686 = vunpack.c.l.b16 %v4253
        %v4687 = vunpack.c.l.b16 %v4254
        %v4688 = vunpack.c.l.b16 %v4255
        %v4689 = vunpack.c.l.b16 %v4256
        %v4690 = vunpack.c.l.b16 %v4257
        %v4691 = vunpack.c.l.b16 %v4258
        %v4692 = vunpack.c.l.b16 %v4259
        %v4693 = vunpack.c.l.b16 %v4260
        %v4694 = vunpack.c.l.b16 %v4261
        %v4695 = vunpack.c.l.b16 %v4262
        %v4696 = vunpack.c.l.b16 %v4263
        %v4697 = vunpack.c.l.b16 %v4264
        %v4698 = vunpack.c.l.b16 %v4265
        %v4699 = vunpack.c.l.b16 %v4266
        %v4700 = vunpack.c.l.b16 %v4267
        %v4701 = vunpack.c.l.b16 %v4268
        %v4702 = vunpack.c.l.b16 %v4269
        %v4703 = vunpack.c.l.b16 %v4270
        %v4704 = vunpack.c.l.b16 %v4271
        %v4705 = vunpack.c.l.b16 %v4272
        %v4706 = vunpack.c.l.b16 %v4273
        %v4707 = vunpack.c.l.b16 %v4274
        %v4708 = vunpack.c.l.b16 %v4275
        %v4709 = vunpack.c.l.b16 %v4276
        %v4710 = vunpack.c.l.b16 %v4277
        %v4711 = vunpack.c.l.b16 %v4278
        %v4712 = vunpack.c.l.b16 %v4279
        %v4713 = vunpack.c.l.b16 %v4280
        %v4714 = vunpack.c.l.b16 %v4281
        %v4715 = vunpack.c.l.b16 %v4282
        %v4716 = vunpack.c.l.b16 %v4283
        %v4717 = vunpack.c.l.b16 %v4284
        %v4718 = vunpack.c.l.b16 %v4285
        %v4719 = vunpack.c.l.b16 %v4286
        %v4720 = vunpack.c.l.b16 %v4287
        %v4721 = vunpack.c.l.b16 %v4288
        %v4722 = vunpack.c.l.b16 %v4289
        %v4723 = vunpack.c.l.b16 %v4290
        %v4724 = vunpack.c.l.b16 %v4291
        %v4725 = vunpack.c.l.b16 %v4292
        %v4726 = vunpack.c.l.b16 %v4293
        %v4727 = vunpack.c.l.b16 %v4294
        %v4728 = vunpack.c.l.b16 %v4295
        %v4729 = vunpack.c.l.b16 %v4296
        %v4730 = vunpack.c.l.b16 %v4297
        %v4731 = vunpack.c.l.b16 %v4298
        %v4732 = vunpack.c.l.b16 %v4299
        %v4733 = vunpack.c.l.b16 %v4300
        %v4734 = vunpack.c.l.b16 %v4301
        %v4735 = vunpack.c.l.b16 %v4302
        %v4736 = vunpack.c.l.b16 %v4303
        %v4737 = vunpack.c.l.b16 %v4304
        %v4738 = vunpack.c.l.b16 %v4305
        %v4739 = vunpack.c.l.b16 %v4306
        %v4740 = vunpack.c.l.b16 %v4307
        %v4741 = vpack.c.b16 %v4598, %v4597
        %v4742 = vpack.c.b16 %v4600, %v4599
        %v4743 = vpack.c.b16 %v4602, %v4601
        %v4744 = vpack.c.b16 %v4604, %v4603
        %v4745 = vpack.c.b16 %v4606, %v4605
        %v4746 = vpack.c.b16 %v4608, %v4607
        %v4747 = vpack.c.b16 %v4610, %v4609
        %v4748 = vpack.c.b16 %v4612, %v4611
        %v4749 = vpack.c.b16 %v4614, %v4613
        %v4750 = vpack.c.b16 %v4616, %v4615
        %v4751 = vpack.c.b16 %v4618, %v4617
        %v4752 = vpack.c.b16 %v4620, %v4619
        %v4753 = vpack.c.b16 %v4622, %v4621
        %v4754 = vpack.c.b16 %v4624, %v4623
        %v4755 = vpack.c.b16 %v4626, %v4625
        %v4756 = vpack.c.b16 %v4628, %v4627
        %v4757 = vpack.c.b16 %v4630, %v4629
        %v4758 = vpack.c.b16 %v4632, %v4631
        %v4759 = vpack.c.b16 %v4634, %v4633
        %v4760 = vpack.c.b16 %v4636, %v4635
        %v4761 = vpack.c.b16 %v4638, %v4637
        %v4762 = vpack.c.b16 %v4640, %v4639
        %v4763 = vpack.c.b16 %v4642, %v4641
        %v4764 = vpack.c.b16 %v4644, %v4643
        %v4765 = vpack.c.b16 %v4646, %v4645
        %v4766 = vpack.c.b16 %v4648, %v4647
        %v4767 = vpack.c.b16 %v4650, %v4649
        %v4768 = vpack.c.b16 %v4652, %v4651
        %v4769 = vpack.c.b16 %v4654, %v4653
        %v4770 = vpack.c.b16 %v4656, %v4655
        %v4771 = vpack.c.b16 %v4658, %v4657
        %v4772 = vpack.c.b16 %v4660, %v4659
        %v4773 = vpack.c.b16 %v4662, %v4661
        %v4774 = vpack.c.b16 %v4664, %v4663
        %v4775 = vpack.c.b16 %v4666, %v4665
        %v4776 = vpack.c.b16 %v4668, %v4667
        %v4777 = vpack.c.b16 %v4670, %v4669
        %v4778 = vpack.c.b16 %v4672, %v4671
        %v4779 = vpack.c.b16 %v4674, %v4673
        %v4780 = vpack.c.b16 %v4676, %v4675
        %v4781 = vpack.c.b16 %v4678, %v4677
        %v4782 = vpack.c.b16 %v4680, %v4679
        %v4783 = vpack.c.b16 %v4682, %v4681
        %v4784 = vpack.c.b16 %v4684, %v4683
        %v4785 = vpack.c.b16 %v4686, %v4685
        %v4786 = vpack.c.b16 %v4688, %v4687
        %v4787 = vpack.c.b16 %v4690, %v4689
        %v4788 = vpack.c.b16 %v4692, %v4691
        %v4789 = vpack.c.b16 %v4694, %v4693
        %v4790 = vpack.c.b16 %v4696, %v4695
        %v4791 = vpack.c.b16 %v4698, %v4697
        %v4792 = vpack.c.b16 %v4700, %v4699
        %v4793 = vpack.c.b16 %v4702, %v4701
        %v4794 = vpack.c.b16 %v4704, %v4703
        %v4795 = vpack.c.b16 %v4706, %v4705
        %v4796 = vpack.c.b16 %v4708, %v4707
        %v4797 = vpack.c.b16 %v4710, %v4709
        %v4798 = vpack.c.b16 %v4712, %v4711
        %v4799 = vpack.c.b16 %v4714, %v4713
        %v4800 = vpack.c.b16 %v4716, %v4715
        %v4801 = vpack.c.b16 %v4718, %v4717
        %v4802 = vpack.c.b16 %v4720, %v4719
        %v4803 = vpack.c.b16 %v4722, %v4721
        %v4804 = vpack.c.b16 %v4724, %v4723
        %v4805 = vpack.c.b16 %v4726, %v4725
        %v4806 = vpack.c.b16 %v4728, %v4727
        %v4807 = vpack.c.b16 %v4730, %v4729
        %v4808 = vpack.c.b16 %v4732, %v4731
        %v4809 = vpack.c.b16 %v4734, %v4733
        %v4810 = vpack.c.b16 %v4736, %v4735
        %v4811 = vpack.c.b16 %v4738, %v4737
        %v4812 = vpack.c.b16 %v4740, %v4739
        %4885 = vmatprep.subr.bf16.mxu0 0
        %4886 = vmatpush1.bf16.msra.mxu0 %v4741
        %4887 = vmatprep.subr.bf16.mxu0 0
        %4888 = vmatpush1.bf16.msra.mxu0 %v4742
        %4889 = vmatprep.subr.bf16.mxu0 0
        %4890 = vmatpush1.bf16.msra.mxu0 %v4743
        %4891 = vmatprep.subr.bf16.mxu0 0
        %4892 = vmatpush1.bf16.msra.mxu0 %v4744
        %4893 = vmatprep.subr.bf16.mxu0 0
        %4894 = vmatpush1.bf16.msra.mxu0 %v4745
        %4895 = vmatprep.subr.bf16.mxu0 0
        %4896 = vmatpush1.bf16.msra.mxu0 %v4746
        %4897 = vmatprep.subr.bf16.mxu0 0
        %4898 = vmatpush1.bf16.msra.mxu0 %v4747
        %4899 = vmatprep.subr.bf16.mxu0 0
        %4900 = vmatpush1.bf16.msra.mxu0 %v4748
        %4901 = vmatprep.subr.bf16.mxu0 0
        %4902 = vmatpush1.bf16.msra.mxu0 %v4749
        %4903 = vmatprep.subr.bf16.mxu0 0
        %4904 = vmatpush1.bf16.msra.mxu0 %v4750
        %4905 = vmatprep.subr.bf16.mxu0 0
        %4906 = vmatpush1.bf16.msra.mxu0 %v4751
        %4907 = vmatprep.subr.bf16.mxu0 0
        %4908 = vmatpush1.bf16.msra.mxu0 %v4752
        %4909 = vmatprep.subr.bf16.mxu0 0
        %4910 = vmatpush1.bf16.msra.mxu0 %v4753
        %4911 = vmatprep.subr.bf16.mxu0 0
        %4912 = vmatpush1.bf16.msra.mxu0 %v4754
        %4913 = vmatprep.subr.bf16.mxu0 0
        %4914 = vmatpush1.bf16.msra.mxu0 %v4755
        %4915 = vmatprep.subr.bf16.mxu0 0
        %4916 = vmatpush1.bf16.msra.mxu0 %v4756
        %4917 = vmatprep.mubr.bf16.mxu0 %v4358
        %4918 = vmatmul.mubr.bf16.gmra.mrb[0].mxu0 %v4346
        %v4919 = vpop.f32.mrb[0].mxu0
        %v4920 = vadd.f32 %v4451, %v4919
        %v4921 = vpop.f32.mrb[0].mxu0
        %v4922 = vpop.f32.mrb[0].mxu0
        %v4923 = vadd.f32 %v4451, %v4922
        %v4924 = vpop.f32.mrb[0].mxu0
        %4925 = vmatprep.mubr.bf16.mxu0 %v4359
        %4926 = vmatmul.mubr.bf16.gmra.mrb[0].mxu0 %v4347
        %v4927 = vpop.f32.mrb[0].mxu0
        %v4928 = vadd.f32 %v4451, %v4927
        %v4929 = vpop.f32.mrb[0].mxu0
        %v4930 = vpop.f32.mrb[0].mxu0
        %v4931 = vadd.f32 %v4451, %v4930
        %v4932 = vpop.f32.mrb[0].mxu0
        %4933 = vmatprep.mubr.bf16.mxu0 %v4360
        %4934 = vmatmul.mubr.bf16.gmra.mrb[0].mxu0 %v4348
        %v4935 = vpop.f32.mrb[0].mxu0
        %v4936 = vadd.f32 %v4451, %v4935
        %v4937 = vpop.f32.mrb[0].mxu0
        %v4938 = vpop.f32.mrb[0].mxu0
        %v4939 = vadd.f32 %v4451, %v4938
        %v4940 = vpop.f32.mrb[0].mxu0
        %4941 = vmatprep.mubr.bf16.mxu0 %v4361
        %4942 = vmatmul.mubr.bf16.gmra.mrb[0].mxu0 %v4349
        %v4943 = vpop.f32.mrb[0].mxu0
        %v4944 = vadd.f32 %v4451, %v4943
        %v4945 = vpop.f32.mrb[0].mxu0
        %v4946 = vpop.f32.mrb[0].mxu0
        %v4947 = vadd.f32 %v4451, %v4946
        %v4948 = vpop.f32.mrb[0].mxu0
        %4949 = vdwg.mxu0
        %4950 = vmatprep.subr.bf16.mxu0 0
        %4951 = vmatpush1.bf16.msra.mxu0 %v4757
        %4952 = vmatprep.subr.bf16.mxu0 0
        %4953 = vmatpush1.bf16.msra.mxu0 %v4758
        %4954 = vmatprep.subr.bf16.mxu0 0
        %4955 = vmatpush1.bf16.msra.mxu0 %v4759
        %4956 = vmatprep.subr.bf16.mxu0 0
        %4957 = vmatpush1.bf16.msra.mxu0 %v4760
        %4958 = vmatprep.subr.bf16.mxu0 0
        %4959 = vmatpush1.bf16.msra.mxu0 %v4761
        %4960 = vmatprep.subr.bf16.mxu0 0
        %4961 = vmatpush1.bf16.msra.mxu0 %v4762
        %4962 = vmatprep.subr.bf16.mxu0 0
        %4963 = vmatpush1.bf16.msra.mxu0 %v4763
        %4964 = vmatprep.subr.bf16.mxu0 0
        %4965 = vmatpush1.bf16.msra.mxu0 %v4764
        %4966 = vmatprep.subr.bf16.mxu0 0
        %4967 = vmatpush1.bf16.msra.mxu0 %v4765
        %4968 = vmatprep.subr.bf16.mxu0 0
        %4969 = vmatpush1.bf16.msra.mxu0 %v4766
        %4970 = vmatprep.subr.bf16.mxu0 0
        %4971 = vmatpush1.bf16.msra.mxu0 %v4767
        %4972 = vmatprep.subr.bf16.mxu0 0
        %4973 = vmatpush1.bf16.msra.mxu0 %v4768
        %4974 = vmatprep.subr.bf16.mxu0 0
        %4975 = vmatpush1.bf16.msra.mxu0 %v4769
        %4976 = vmatprep.subr.bf16.mxu0 0
        %4977 = vmatpush1.bf16.msra.mxu0 %v4770
        %4978 = vmatprep.subr.bf16.mxu0 0
        %4979 = vmatpush1.bf16.msra.mxu0 %v4771
        %4980 = vmatprep.subr.bf16.mxu0 0
        %4981 = vmatpush1.bf16.msra.mxu0 %v4772
        %4982 = vmatprep.mubr.bf16.mxu0 %v4382
        %4983 = vmatmul.mubr.bf16.gmra.mrb[0].mxu0 %v4370
        %v4984 = vpop.f32.mrb[0].mxu0
        %v4985 = vadd.f32 %v4920, %v4984
        %v4986 = vpop.f32.mrb[0].mxu0
        %v4987 = vpop.f32.mrb[0].mxu0
        %v4988 = vadd.f32 %v4923, %v4987
        %v4989 = vpop.f32.mrb[0].mxu0
        %4990 = vmatprep.mubr.bf16.mxu0 %v4383
        %4991 = vmatmul.mubr.bf16.gmra.mrb[0].mxu0 %v4371
        %v4992 = vpop.f32.mrb[0].mxu0
        %v4993 = vadd.f32 %v4928, %v4992
        %v4994 = vpop.f32.mrb[0].mxu0
        %v4995 = vpop.f32.mrb[0].mxu0
        %v4996 = vadd.f32 %v4931, %v4995
        %v4997 = vpop.f32.mrb[0].mxu0
        %4998 = vmatprep.mubr.bf16.mxu0 %v4384
        %4999 = vmatmul.mubr.bf16.gmra.mrb[0].mxu0 %v4372
        %v5000 = vpop.f32.mrb[0].mxu0
        %v5001 = vadd.f32 %v4936, %v5000
        %v5002 = vpop.f32.mrb[0].mxu0
        %v5003 = vpop.f32.mrb[0].mxu0
        %v5004 = vadd.f32 %v4939, %v5003
        %v5005 = vpop.f32.mrb[0].mxu0
        %5006 = vmatprep.mubr.bf16.mxu0 %v4385
        %5007 = vmatmul.mubr.bf16.gmra.mrb[0].mxu0 %v4373
        %v5008 = vpop.f32.mrb[0].mxu0
        %v5009 = vadd.f32 %v4944, %v5008
        %v5010 = vpop.f32.mrb[0].mxu0
        %v5011 = vpop.f32.mrb[0].mxu0
        %v5012 = vadd.f32 %v4947, %v5011
        %v5013 = vpop.f32.mrb[0].mxu0
        %5014 = vdwg.mxu0
        %5015 = vmatprep.subr.bf16.mxu0 0
        %5016 = vmatpush1.bf16.msra.mxu0 %v4773
        %5017 = vmatprep.subr.bf16.mxu0 0
        %5018 = vmatpush1.bf16.msra.mxu0 %v4774
        %5019 = vmatprep.subr.bf16.mxu0 0
        %5020 = vmatpush1.bf16.msra.mxu0 %v4775
        %5021 = vmatprep.subr.bf16.mxu0 0
        %5022 = vmatpush1.bf16.msra.mxu0 %v4776
        %5023 = vmatprep.subr.bf16.mxu0 0
        %5024 = vmatpush1.bf16.msra.mxu0 %v4777
        %5025 = vmatprep.subr.bf16.mxu0 0
        %5026 = vmatpush1.bf16.msra.mxu0 %v4778
        %5027 = vmatprep.subr.bf16.mxu0 0
        %5028 = vmatpush1.bf16.msra.mxu0 %v4779
        %5029 = vmatprep.subr.bf16.mxu0 0
        %5030 = vmatpush1.bf16.msra.mxu0 %v4780
        %5031 = vmatprep.subr.bf16.mxu0 0
        %5032 = vmatpush1.bf16.msra.mxu0 %v4781
        %5033 = vmatprep.subr.bf16.mxu0 0
        %5034 = vmatpush1.bf16.msra.mxu0 %v4782
        %5035 = vmatprep.subr.bf16.mxu0 0
        %5036 = vmatpush1.bf16.msra.mxu0 %v4783
        %5037 = vmatprep.subr.bf16.mxu0 0
        %5038 = vmatpush1.bf16.msra.mxu0 %v4784
        %5039 = vmatprep.subr.bf16.mxu0 0
        %5040 = vmatpush1.bf16.msra.mxu0 %v4785
        %5041 = vmatprep.subr.bf16.mxu0 0
        %5042 = vmatpush1.bf16.msra.mxu0 %v4786
        %5043 = vmatprep.subr.bf16.mxu0 0
        %5044 = vmatpush1.bf16.msra.mxu0 %v4787
        %5045 = vmatprep.subr.bf16.mxu0 0
        %5046 = vmatpush1.bf16.msra.mxu0 %v4788
        %5047 = vmatprep.mubr.bf16.mxu0 %v4406
        %5048 = vmatmul.mubr.bf16.gmra.mrb[0].mxu0 %v4394
        %v5049 = vpop.f32.mrb[0].mxu0
        %v5050 = vadd.f32 %v4985, %v5049
        %v5051 = vpop.f32.mrb[0].mxu0
        %v5052 = vpop.f32.mrb[0].mxu0
        %v5053 = vadd.f32 %v4988, %v5052
        %v5054 = vpop.f32.mrb[0].mxu0
        %5055 = vmatprep.mubr.bf16.mxu0 %v4407
        %5056 = vmatmul.mubr.bf16.gmra.mrb[0].mxu0 %v4395
        %v5057 = vpop.f32.mrb[0].mxu0
        %v5058 = vadd.f32 %v4993, %v5057
        %v5059 = vpop.f32.mrb[0].mxu0
        %v5060 = vpop.f32.mrb[0].mxu0
        %v5061 = vadd.f32 %v4996, %v5060
        %v5062 = vpop.f32.mrb[0].mxu0
        %5063 = vmatprep.mubr.bf16.mxu0 %v4408
        %5064 = vmatmul.mubr.bf16.gmra.mrb[0].mxu0 %v4396
        %v5065 = vpop.f32.mrb[0].mxu0
        %v5066 = vadd.f32 %v5001, %v5065
        %v5067 = vpop.f32.mrb[0].mxu0
        %v5068 = vpop.f32.mrb[0].mxu0
        %v5069 = vadd.f32 %v5004, %v5068
        %v5070 = vpop.f32.mrb[0].mxu0
        %5071 = vmatprep.mubr.bf16.mxu0 %v4409
        %5072 = vmatmul.mubr.bf16.gmra.mrb[0].mxu0 %v4397
        %v5073 = vpop.f32.mrb[0].mxu0
        %v5074 = vadd.f32 %v5009, %v5073
        %v5075 = vpop.f32.mrb[0].mxu0
        %v5076 = vpop.f32.mrb[0].mxu0
        %v5077 = vadd.f32 %v5012, %v5076
        %v5078 = vpop.f32.mrb[0].mxu0
        %5079 = vdwg.mxu0
        %5080 = vmatprep.subr.bf16.mxu0 0
        %5081 = vmatpush1.bf16.msra.mxu0 %v4789
        %5082 = vmatprep.subr.bf16.mxu0 0
        %5083 = vmatpush1.bf16.msra.mxu0 %v4790
        %5084 = vmatprep.subr.bf16.mxu0 0
        %5085 = vmatpush1.bf16.msra.mxu0 %v4791
        %5086 = vmatprep.subr.bf16.mxu0 0
        %5087 = vmatpush1.bf16.msra.mxu0 %v4792
        %5088 = vmatprep.subr.bf16.mxu0 0
        %5089 = vmatpush1.bf16.msra.mxu0 %v4793
        %5090 = vmatprep.subr.bf16.mxu0 0
        %5091 = vmatpush1.bf16.msra.mxu0 %v4794
        %5092 = vmatprep.subr.bf16.mxu0 0
        %5093 = vmatpush1.bf16.msra.mxu0 %v4795
        %5094 = vmatprep.subr.bf16.mxu0 0
        %5095 = vmatpush1.bf16.msra.mxu0 %v4796
        %5096 = vmatprep.subr.bf16.mxu0 0
        %5097 = vmatpush1.bf16.msra.mxu0 %v4797
        %5098 = vmatprep.subr.bf16.mxu0 0
        %5099 = vmatpush1.bf16.msra.mxu0 %v4798
        %5100 = vmatprep.subr.bf16.mxu0 0
        %5101 = vmatpush1.bf16.msra.mxu0 %v4799
        %5102 = vmatprep.subr.bf16.mxu0 0
        %5103 = vmatpush1.bf16.msra.mxu0 %v4800
        %5104 = vmatprep.subr.bf16.mxu0 0
        %5105 = vmatpush1.bf16.msra.mxu0 %v4801
        %5106 = vmatprep.subr.bf16.mxu0 0
        %5107 = vmatpush1.bf16.msra.mxu0 %v4802
        %5108 = vmatprep.subr.bf16.mxu0 0
        %5109 = vmatpush1.bf16.msra.mxu0 %v4803
        %5110 = vmatprep.subr.bf16.mxu0 0
        %5111 = vmatpush1.bf16.msra.mxu0 %v4804
        %5112 = vmatprep.mubr.bf16.mxu0 %v4431
        %5113 = vmatmul.mubr.bf16.gmra.mrb[0].mxu0 %v4419
        %v5114 = vpop.f32.mrb[0].mxu0
        %v5115 = vadd.f32 %v5050, %v5114
        %v5116 = vpop.f32.mrb[0].mxu0
        %v5117 = vpop.f32.mrb[0].mxu0
        %v5118 = vadd.f32 %v5053, %v5117
        %v5119 = vpop.f32.mrb[0].mxu0
        %5120 = vmatprep.mubr.bf16.mxu0 %v4432
        %5121 = vmatmul.mubr.bf16.gmra.mrb[0].mxu0 %v4420
        %v5122 = vpop.f32.mrb[0].mxu0
        %v5123 = vadd.f32 %v5058, %v5122
        %v5124 = vpop.f32.mrb[0].mxu0
        %v5125 = vpop.f32.mrb[0].mxu0
        %v5126 = vadd.f32 %v5061, %v5125
        %v5127 = vpop.f32.mrb[0].mxu0
        %5128 = vmatprep.mubr.bf16.mxu0 %v4433
        %5129 = vmatmul.mubr.bf16.gmra.mrb[0].mxu0 %v4421
        %v5130 = vpop.f32.mrb[0].mxu0
        %v5131 = vadd.f32 %v5066, %v5130
        %v5132 = vpop.f32.mrb[0].mxu0
        %v5133 = vpop.f32.mrb[0].mxu0
        %v5134 = vadd.f32 %v5069, %v5133
        %v5135 = vpop.f32.mrb[0].mxu0
        %5136 = vmatprep.mubr.bf16.mxu0 %v4434
        %5137 = vmatmul.mubr.bf16.gmra.mrb[0].mxu0 %v4422
        %v5138 = vpop.f32.mrb[0].mxu0
        %v5139 = vadd.f32 %v5074, %v5138
        %v5140 = vpop.f32.mrb[0].mxu0
        %v5141 = vpop.f32.mrb[0].mxu0
        %v5142 = vadd.f32 %v5077, %v5141
        %v5143 = vpop.f32.mrb[0].mxu0
        %5144 = vdwg.mxu0
        %5145 = vmatprep.subr.bf16.mxu0 0
        %5146 = vmatpush1.bf16.msra.mxu0 %v4805
        %5147 = vmatprep.subr.bf16.mxu0 0
        %5148 = vmatpush1.bf16.msra.mxu0 %v4806
        %5149 = vmatprep.subr.bf16.mxu0 0
        %5150 = vmatpush1.bf16.msra.mxu0 %v4807
        %5151 = vmatprep.subr.bf16.mxu0 0
        %5152 = vmatpush1.bf16.msra.mxu0 %v4808
        %5153 = vmatprep.subr.bf16.mxu0 0
        %5154 = vmatpush1.bf16.msra.mxu0 %v4809
        %5155 = vmatprep.subr.bf16.mxu0 0
        %5156 = vmatpush1.bf16.msra.mxu0 %v4810
        %5157 = vmatprep.subr.bf16.mxu0 0
        %5158 = vmatpush1.bf16.msra.mxu0 %v4811
        %5159 = vmatprep.subr.bf16.mxu0 0
        %5160 = vmatpush1.bf16.msra.mxu0 %v4812
        %5161 = vmatprep.subr.bf16.mxu0 0
        %5162 = vmatpush1.bf16.msra.mxu0 0
        %5163 = vmatprep.subr.bf16.mxu0 0
        %5164 = vmatpush1.bf16.msra.mxu0 0
        %5165 = vmatprep.subr.bf16.mxu0 0
        %5166 = vmatpush1.bf16.msra.mxu0 0
        %5167 = vmatprep.subr.bf16.mxu0 0
        %5168 = vmatpush1.bf16.msra.mxu0 0
        %5169 = vmatprep.subr.bf16.mxu0 0
        %5170 = vmatpush1.bf16.msra.mxu0 0
        %5171 = vmatprep.subr.bf16.mxu0 0
        %5172 = vmatpush1.bf16.msra.mxu0 0
        %5173 = vmatprep.subr.bf16.mxu0 0
        %5174 = vmatpush1.bf16.msra.mxu0 0
        %5175 = vmatprep.subr.bf16.mxu0 0
        %5176 = vmatpush1.bf16.msra.mxu0 0
        %5177 = vmatprep.mubr.bf16.mxu0 0
        %5178 = vmatmul.mubr.bf16.gmra.mrb[0].mxu0 %v4443
        %v5179 = vpop.f32.mrb[0].mxu0
        %v5180 = vadd.f32 %v5115, %v5179
        %v5181 = vpop.f32.mrb[0].mxu0
        %v5182 = vpop.f32.mrb[0].mxu0
        %v5183 = vadd.f32 %v5118, %v5182
        %v5184 = vpop.f32.mrb[0].mxu0
        %5185 = vmatprep.mubr.bf16.mxu0 0
        %5186 = vmatmul.mubr.bf16.gmra.mrb[0].mxu0 %v4444
        %v5187 = vpop.f32.mrb[0].mxu0
        %v5188 = vadd.f32 %v5123, %v5187
        %v5189 = vpop.f32.mrb[0].mxu0
        %v5190 = vpop.f32.mrb[0].mxu0
        %v5191 = vadd.f32 %v5126, %v5190
        %v5192 = vpop.f32.mrb[0].mxu0
        %5193 = vmatprep.mubr.bf16.mxu0 0
        %5194 = vmatmul.mubr.bf16.gmra.mrb[0].mxu0 %v4445
        %v5195 = vpop.f32.mrb[0].mxu0
        %v5196 = vadd.f32 %v5131, %v5195
        %v5197 = vpop.f32.mrb[0].mxu0
        %v5198 = vpop.f32.mrb[0].mxu0
        %v5199 = vadd.f32 %v5134, %v5198
        %v5200 = vpop.f32.mrb[0].mxu0
        %5201 = vmatprep.mubr.bf16.mxu0 0
        %5202 = vmatmul.mubr.bf16.gmra.mrb[0].mxu0 %v4446
        %v5203 = vpop.f32.mrb[0].mxu0
        %v5204 = vadd.f32 %v5139, %v5203
        %v5205 = vpop.f32.mrb[0].mxu0
        %v5206 = vpop.f32.mrb[0].mxu0
        %v5207 = vadd.f32 %v5142, %v5206
        %v5208 = vpop.f32.mrb[0].mxu0
        %5209 = vdwg.mxu0
        %v5210 = vmax.f32 %v5180, 0.0
        %v5211 = vmax.f32 %v5183, 0.0
        %v5212 = vmax.f32 %v5188, 0.0
        %v5213 = vmax.f32 %v5191, 0.0
        %v5214 = vmax.f32 %v5196, 0.0
        %v5215 = vmax.f32 %v5199, 0.0
        %v5216 = vmax.f32 %v5204, 0.0
        %v5217 = vmax.f32 %v5207, 0.0
        %v5218 = vld [vmem:[#allocation24] sm:$0xff]
        %v5219 = vld [vmem:[#allocation24 + $0x8] sm:$0xff]
        %v5220 = vld [vmem:[#allocation24 + $0x10] sm:$0xff]
        %v5221 = vld [vmem:[#allocation24 + $0x18] sm:$0xff]
        %v5222 = vld [vmem:[#allocation24 + $0x20] sm:$0xff]
        %v5223 = vld [vmem:[#allocation24 + $0x28] sm:$0xff]
        %v5224 = vld [vmem:[#allocation24 + $0x30] sm:$0xff]
        %v5225 = vld [vmem:[#allocation24 + $0x38] sm:$0xff]
        %v5226 = vld [vmem:[#allocation24 + $0x40] sm:$0xff]
        %v5227 = vld [vmem:[#allocation24 + $0x48] sm:$0xff]
        %v5228 = vld [vmem:[#allocation24 + $0x50] sm:$0xff]
        %v5229 = vld [vmem:[#allocation24 + $0x58] sm:$0xff]
        %v5230 = vld [vmem:[#allocation24 + $0x60] sm:$0xff]
        %v5231 = vld [vmem:[#allocation24 + $0x68] sm:$0xff]
        %v5232 = vld [vmem:[#allocation24 + $0x70] sm:$0xff]
        %v5233 = vld [vmem:[#allocation24 + $0x78] sm:$0xff]
        %v5234 = vld [vmem:[#allocation21] sm:$0x1]
        %v5235 = vld [vmem:[#allocation23] sm:$0x1]
        %v5236 = vadd.f32 %v5210, %v5211
        %v5237 = vadd.f32 %v5236, %v5212
        %v5238 = vadd.f32 %v5237, %v5213
        %v5239 = vadd.f32 %v5238, %v5214
        %v5240 = vadd.f32 %v5239, %v5215
        %v5241 = vadd.f32 %v5240, %v5216
        %v5242 = vadd.f32 %v5241, %v5217
        %v5243 = vrot.slane %v5242, 4
        %v5244 = vadd.f32 %v5242, %v5243
        %v5245 = vrot.slane %v5244, 2
        %v5246 = vadd.f32 %v5244, %v5245
        %v5247 = vrot.slane %v5246, 1
        %v5248 = vadd.f32 %v5246, %v5247
        %5249 = vmatprep.subr.mxu0 0.0
        %5250 = vmatpush1.msra.mxu0 %v5218
        %5251 = vmatprep.subr.mxu0 0.0
        %5252 = vmatpush1.msra.mxu0 %v5219
        %5253 = vmatprep.subr.mxu0 0.0
        %5254 = vmatpush1.msra.mxu0 %v5220
        %5255 = vmatprep.subr.mxu0 0.0
        %5256 = vmatpush1.msra.mxu0 %v5221
        %5257 = vmatprep.subr.mxu0 0.0
        %5258 = vmatpush1.msra.mxu0 %v5222
        %5259 = vmatprep.subr.mxu0 0.0
        %5260 = vmatpush1.msra.mxu0 %v5223
        %5261 = vmatprep.subr.mxu0 0.0
        %5262 = vmatpush1.msra.mxu0 %v5224
        %5263 = vmatprep.subr.mxu0 0.0
        %5264 = vmatpush1.msra.mxu0 %v5225
        %5265 = vmatprep.subr.mxu0 0.0
        %5266 = vmatpush1.msra.mxu0 %v5226
        %5267 = vmatprep.subr.mxu0 0.0
        %5268 = vmatpush1.msra.mxu0 %v5227
        %5269 = vmatprep.subr.mxu0 0.0
        %5270 = vmatpush1.msra.mxu0 %v5228
        %5271 = vmatprep.subr.mxu0 0.0
        %5272 = vmatpush1.msra.mxu0 %v5229
        %5273 = vmatprep.subr.mxu0 0.0
        %5274 = vmatpush1.msra.mxu0 %v5230
        %5275 = vmatprep.subr.mxu0 0.0
        %5276 = vmatpush1.msra.mxu0 %v5231
        %5277 = vmatprep.subr.mxu0 0.0
        %5278 = vmatpush1.msra.mxu0 %v5232
        %5279 = vmatprep.subr.mxu0 0.0
        %5280 = vmatpush1.msra.mxu0 %v5233
        %5281 = vmatprep.subr.mxu0 0.0
        %5282 = vmatpush1.msra.mxu0 0.0
        %5283 = vmatprep.subr.mxu0 0.0
        %5284 = vmatpush1.msra.mxu0 0.0
        %5285 = vmatprep.subr.mxu0 0.0
        %5286 = vmatpush1.msra.mxu0 0.0
        %5287 = vmatprep.subr.mxu0 0.0
        %5288 = vmatpush1.msra.mxu0 0.0
        %5289 = vmatprep.subr.mxu0 0.0
        %5290 = vmatpush1.msra.mxu0 0.0
        %5291 = vmatprep.subr.mxu0 0.0
        %5292 = vmatpush1.msra.mxu0 0.0
        %5293 = vmatprep.subr.mxu0 0.0
        %5294 = vmatpush1.msra.mxu0 0.0
        %5295 = vmatprep.subr.mxu0 0.0
        %5296 = vmatpush1.msra.mxu0 0.0
        %5297 = vmatprep.subr.mxu0 0.0
        %5298 = vmatpush1.msra.mxu0 0.0
        %5299 = vmatprep.subr.mxu0 0.0
        %5300 = vmatpush1.msra.mxu0 0.0
        %5301 = vmatprep.subr.mxu0 0.0
        %5302 = vmatpush1.msra.mxu0 0.0
        %5303 = vmatprep.subr.mxu0 0.0
        %5304 = vmatpush1.msra.mxu0 0.0
        %5305 = vmatprep.subr.mxu0 0.0
        %5306 = vmatpush1.msra.mxu0 0.0
        %5307 = vmatprep.subr.mxu0 0.0
        %5308 = vmatpush1.msra.mxu0 0.0
        %5309 = vmatprep.subr.mxu0 0.0
        %5310 = vmatpush1.msra.mxu0 0.0
        %5311 = vmatprep.subr.mxu0 0.0
        %5312 = vmatpush1.msra.mxu0 0.0
        %5313 = vmatprep.mubr.f32.mxu0 0.0
        %5314 = vmatmul.mubr.f32.gmra.mrb[0].mxu0 %v5248
        %v5315 = vpop.f32.mrb[0].mxu0
        %v5316 = vadd.f32 0.0, %v5315
        %v5317 = vpop.f32.mrb[0].mxu0
        %5318 = vdwg.mxu0
        %v5319 = vmul.f32 %v5316, 0.001953125
        %v5320 = vlaneseq
        %v5321 = vshrl.u32 %v5320, 7
        %v5322 = vsub.s32 0, %v5321
        %v5323 = vrot.slane %v5319, %v5322
        %v5324 = vsub.f32 %v5210, %v5323
        %v5325 = vsub.f32 %v5211, %v5323
        %v5326 = vsub.f32 %v5212, %v5323
        %v5327 = vsub.f32 %v5213, %v5323
        %v5328 = vsub.f32 %v5214, %v5323
        %v5329 = vsub.f32 %v5215, %v5323
        %v5330 = vsub.f32 %v5216, %v5323
        %v5331 = vsub.f32 %v5217, %v5323
        %v5332 = vmul.f32 %v5324, %v5324
        %v5333 = vmul.f32 %v5325, %v5325
        %v5334 = vmul.f32 %v5326, %v5326
        %v5335 = vmul.f32 %v5327, %v5327
        %v5336 = vmul.f32 %v5328, %v5328
        %v5337 = vmul.f32 %v5329, %v5329
        %v5338 = vmul.f32 %v5330, %v5330
        %v5339 = vmul.f32 %v5331, %v5331
        %v5340 = vadd.f32 %v5332, %v5333
        %v5341 = vadd.f32 %v5340, %v5334
        %v5342 = vadd.f32 %v5341, %v5335
        %v5343 = vadd.f32 %v5342, %v5336
        %v5344 = vadd.f32 %v5343, %v5337
        %v5345 = vadd.f32 %v5344, %v5338
        %v5346 = vadd.f32 %v5345, %v5339
        %v5347 = vrot.slane %v5346, 4
        %v5348 = vadd.f32 %v5346, %v5347
        %v5349 = vrot.slane %v5348, 2
        %v5350 = vadd.f32 %v5348, %v5349
        %v5351 = vrot.slane %v5350, 1
        %v5352 = vadd.f32 %v5350, %v5351
        %5353 = vmatprep.subr.mxu0 0.0
        %5354 = vmatpush1.msra.mxu0 %v5218
        %5355 = vmatprep.subr.mxu0 0.0
        %5356 = vmatpush1.msra.mxu0 %v5219
        %5357 = vmatprep.subr.mxu0 0.0
        %5358 = vmatpush1.msra.mxu0 %v5220
        %5359 = vmatprep.subr.mxu0 0.0
        %5360 = vmatpush1.msra.mxu0 %v5221
        %5361 = vmatprep.subr.mxu0 0.0
        %5362 = vmatpush1.msra.mxu0 %v5222
        %5363 = vmatprep.subr.mxu0 0.0
        %5364 = vmatpush1.msra.mxu0 %v5223
        %5365 = vmatprep.subr.mxu0 0.0
        %5366 = vmatpush1.msra.mxu0 %v5224
        %5367 = vmatprep.subr.mxu0 0.0
        %5368 = vmatpush1.msra.mxu0 %v5225
        %5369 = vmatprep.subr.mxu0 0.0
        %5370 = vmatpush1.msra.mxu0 %v5226
        %5371 = vmatprep.subr.mxu0 0.0
        %5372 = vmatpush1.msra.mxu0 %v5227
        %5373 = vmatprep.subr.mxu0 0.0
        %5374 = vmatpush1.msra.mxu0 %v5228
        %5375 = vmatprep.subr.mxu0 0.0
        %5376 = vmatpush1.msra.mxu0 %v5229
        %5377 = vmatprep.subr.mxu0 0.0
        %5378 = vmatpush1.msra.mxu0 %v5230
        %5379 = vmatprep.subr.mxu0 0.0
        %5380 = vmatpush1.msra.mxu0 %v5231
        %5381 = vmatprep.subr.mxu0 0.0
        %5382 = vmatpush1.msra.mxu0 %v5232
        %5383 = vmatprep.subr.mxu0 0.0
        %5384 = vmatpush1.msra.mxu0 %v5233
        %5385 = vmatprep.subr.mxu0 0.0
        %5386 = vmatpush1.msra.mxu0 0.0
        %5387 = vmatprep.subr.mxu0 0.0
        %5388 = vmatpush1.msra.mxu0 0.0
        %5389 = vmatprep.subr.mxu0 0.0
        %5390 = vmatpush1.msra.mxu0 0.0
        %5391 = vmatprep.subr.mxu0 0.0
        %5392 = vmatpush1.msra.mxu0 0.0
        %5393 = vmatprep.subr.mxu0 0.0
        %5394 = vmatpush1.msra.mxu0 0.0
        %5395 = vmatprep.subr.mxu0 0.0
        %5396 = vmatpush1.msra.mxu0 0.0
        %5397 = vmatprep.subr.mxu0 0.0
        %5398 = vmatpush1.msra.mxu0 0.0
        %5399 = vmatprep.subr.mxu0 0.0
        %5400 = vmatpush1.msra.mxu0 0.0
        %5401 = vmatprep.subr.mxu0 0.0
        %5402 = vmatpush1.msra.mxu0 0.0
        %5403 = vmatprep.subr.mxu0 0.0
        %5404 = vmatpush1.msra.mxu0 0.0
        %5405 = vmatprep.subr.mxu0 0.0
        %5406 = vmatpush1.msra.mxu0 0.0
        %5407 = vmatprep.subr.mxu0 0.0
        %5408 = vmatpush1.msra.mxu0 0.0
        %5409 = vmatprep.subr.mxu0 0.0
        %5410 = vmatpush1.msra.mxu0 0.0
        %5411 = vmatprep.subr.mxu0 0.0
        %5412 = vmatpush1.msra.mxu0 0.0
        %5413 = vmatprep.subr.mxu0 0.0
        %5414 = vmatpush1.msra.mxu0 0.0
        %5415 = vmatprep.subr.mxu0 0.0
        %5416 = vmatpush1.msra.mxu0 0.0
        %5417 = vmatprep.mubr.f32.mxu0 0.0
        %5418 = vmatmul.mubr.f32.gmra.mrb[0].mxu0 %v5352
        %v5419 = vpop.f32.mrb[0].mxu0
        %v5420 = vadd.f32 0.0, %v5419
        %v5421 = vpop.f32.mrb[0].mxu0
        %5422 = vdwg.mxu0
        %v5423 = vmul.f32 %v5420, 0.001953125
        %v5424 = vadd.f32 %v5423, 1e-05
        %v5425 = vrsqrt.pop %v5424
        %v5426 = vlaneseq
        %v5427 = vshrl.u32 %v5426, 7
        %v5428 = vsub.s32 0, %v5427
        %v5429 = vrot.slane %v5425, %v5428
        %v5430 = vmul.f32 %v5324, %v5429
        %v5431 = vmul.f32 %v5325, %v5429
        %v5432 = vmul.f32 %v5326, %v5429
        %v5433 = vmul.f32 %v5327, %v5429
        %v5434 = vmul.f32 %v5328, %v5429
        %v5435 = vmul.f32 %v5329, %v5429
        %v5436 = vmul.f32 %v5330, %v5429
        %v5437 = vmul.f32 %v5331, %v5429
        %v5439 = vlaneseq
        %v5440 = vshrl.u32 %v5439, 7
        %v5441 = vsub.s32 0, %v5440
        %v5442 = vrot.slane %v5234, %v5441
        %v5444 = vmul.f32 %v5430, %v5442
        %v5445 = vmul.f32 %v5431, %v5442
        %v5446 = vmul.f32 %v5432, %v5442
        %v5447 = vmul.f32 %v5433, %v5442
        %v5448 = vmul.f32 %v5434, %v5442
        %v5449 = vmul.f32 %v5435, %v5442
        %v5450 = vmul.f32 %v5436, %v5442
        %v5451 = vmul.f32 %v5437, %v5442
        %v5453 = vlaneseq
        %v5454 = vshrl.u32 %v5453, 7
        %v5455 = vsub.s32 0, %v5454
        %v5456 = vrot.slane %v5235, %v5455
        %v5458 = vadd.f32 %v5444, %v5456
        %v5459 = vadd.f32 %v5445, %v5456
        %v5460 = vadd.f32 %v5446, %v5456
        %v5461 = vadd.f32 %v5447, %v5456
        %v5462 = vadd.f32 %v5448, %v5456
        %v5463 = vadd.f32 %v5449, %v5456
        %v5464 = vadd.f32 %v5450, %v5456
        %v5465 = vadd.f32 %v5451, %v5456
        %5466 = vst [vmem:[#allocation6] sm:$0xff] %v5458
        %5467 = vst [vmem:[#allocation6 + $0x8] sm:$0xff] %v5459
        %5468 = vst [vmem:[#allocation6 + $0x10] sm:$0xff] %v5460
        %5469 = vst [vmem:[#allocation6 + $0x18] sm:$0xff] %v5461
        %5470 = vst [vmem:[#allocation6 + $0x20] sm:$0xff] %v5462
        %5471 = vst [vmem:[#allocation6 + $0x28] sm:$0xff] %v5463
        %5472 = vst [vmem:[#allocation6 + $0x30] sm:$0xff] %v5464
        %5473 = vst [vmem:[#allocation6 + $0x38] sm:$0xff] %v5465
        %v5474 = vld [vmem:[#allocation6] ss:$2 sm:$0xf]
        %s5475 = scalar_lea.vmem [#allocation6], 8
        %v5476 = vld [vmem:[%s5475] ss:$2 sm:$0xf]
        %s5477 = scalar_lea.vmem [#allocation6], 16
        %v5478 = vld [vmem:[%s5477] ss:$2 sm:$0xf]
        %s5479 = scalar_lea.vmem [#allocation6], 24
        %v5480 = vld [vmem:[%s5479] ss:$2 sm:$0xf]
        %s5481 = scalar_lea.vmem [#allocation6], 32
        %v5482 = vld [vmem:[%s5481] ss:$2 sm:$0xf]
        %s5483 = scalar_lea.vmem [#allocation6], 40
        %v5484 = vld [vmem:[%s5483] ss:$2 sm:$0xf]
        %s5485 = scalar_lea.vmem [#allocation6], 48
        %v5486 = vld [vmem:[%s5485] ss:$2 sm:$0xf]
        %s5487 = scalar_lea.vmem [#allocation6], 56
        %v5488 = vld [vmem:[%s5487] ss:$2 sm:$0xf]
        %s5489 = scalar_lea.vmem [#allocation6], 1
        %v5490 = vld [vmem:[%s5489] ss:$2 sm:$0xf]
        %s5491 = scalar_lea.vmem [#allocation6], 9
        %v5492 = vld [vmem:[%s5491] ss:$2 sm:$0xf]
        %s5493 = scalar_lea.vmem [#allocation6], 17
        %v5494 = vld [vmem:[%s5493] ss:$2 sm:$0xf]
        %s5495 = scalar_lea.vmem [#allocation6], 25
        %v5496 = vld [vmem:[%s5495] ss:$2 sm:$0xf]
        %s5497 = scalar_lea.vmem [#allocation6], 33
        %v5498 = vld [vmem:[%s5497] ss:$2 sm:$0xf]
        %s5499 = scalar_lea.vmem [#allocation6], 41
        %v5500 = vld [vmem:[%s5499] ss:$2 sm:$0xf]
        %s5501 = scalar_lea.vmem [#allocation6], 49
        %v5502 = vld [vmem:[%s5501] ss:$2 sm:$0xf]
        %s5503 = scalar_lea.vmem [#allocation6], 57
        %v5504 = vld [vmem:[%s5503] ss:$2 sm:$0xf]
        %v5505 = vmax.f32 %v5474, %v5490
        %v5506 = vmax.f32 %v5476, %v5492
        %v5507 = vmax.f32 %v5478, %v5494
        %v5508 = vmax.f32 %v5480, %v5496
        %v5509 = vmax.f32 %v5482, %v5498
        %v5510 = vmax.f32 %v5484, %v5500
        %v5511 = vmax.f32 %v5486, %v5502
        %v5512 = vmax.f32 %v5488, %v5504
        %vm5513 = vcmask 1043456
        %v5514 = vsel %vm5513, %v5505, -inf
        %v5515 = vsel %vm5513, %v5506, -inf
        %v5516 = vmax.f32 %v5514, %v5515
        %v5517 = vsel %vm5513, %v5507, -inf
        %v5518 = vsel %vm5513, %v5508, -inf
        %v5519 = vmax.f32 %v5517, %v5518
        %v5520 = vsel %vm5513, %v5509, -inf
        %v5521 = vsel %vm5513, %v5510, -inf
        %v5522 = vmax.f32 %v5520, %v5521
        %v5523 = vsel %vm5513, %v5511, -inf
        %v5524 = vsel %vm5513, %v5512, -inf
        %v5525 = vmax.f32 %v5523, %v5524
        %v5530 = vcombine.low %v5516, %v5519
        %v5531 = vcombine.low %v5522, %v5525
        %5534 = vst [vmem:[%s601] sm:$0xff] %v5530
        %5535 = vst [vmem:[%s601 + $0x8] sm:$0xff] %v5531
        %p5536 = scmp.lt.s32.totalorder %s31, 1
        %s5537 = scalar_select %p5536, %s31, 1
        %s5538 = smul.addr %s5537, 2
        %s5539 = smul.addr %s5538, 8
        %s5540 = scalar_lea.vmem %s13, %s5539
        // Predicated region
        $region121: #{simplenet_forward.2} parent=71 // pred_check
          %p5541 = pneg %p327
        $region122: #{simplenet_forward.2} parent=71 // pred_check_branch
          %5543 = sbr.rel (%p5541) target = $region124
        $region123: #{simplenet_forward.2} parent=71 // pred_region
          _
        $region124: #{simplenet_forward.2} parent=71 // pred_fallthru
          _
      $region72: #{simplenet_forward.2} parent=5 // pred_fallthru
        _
      %p5544 = scmp.le.s32.totalorder 2, %s26
      // Predicated region
      $region125: #{simplenet_forward.2} parent=5 // pred_check
        %p5545 = pneg %p5544
      $region126: #{simplenet_forward.2} parent=5 // pred_check_branch
        %5547 = sbr.rel (%p5545) target = $region128
      $region127: #{simplenet_forward.2} parent=5 // pred_region
        %s5548 = ssub.s32 %s26, 2
        // Predicated region
        $region129: #{simplenet_forward.2} parent=127 // pred_check
          %p5549 = pneg %p333
        $region130: #{simplenet_forward.2} parent=127 // pred_check_branch
          %5551 = sbr.rel (%p5549) target = $region132
        $region131: #{simplenet_forward.2} parent=127 // pred_region
          %p5552 = scmp.lt.s32.totalorder %s32, 1
          %s5553 = scalar_select %p5552, %s32, 1
          %s5554 = smul.addr %s5553, 2
          %s5555 = smul.addr %s5554, 8
          %s5556 = scalar_lea.vmem %s13, %s5555
        $region132: #{simplenet_forward.2} parent=127 // pred_fallthru
          _
      $region128: #{simplenet_forward.2} parent=5 // pred_fallthru
        _
    $region6: #{simplenet_forward.2} parent=1 // loop_footer
      %s30 = sadd.s32 1, %s26
    $region7: #{simplenet_forward.2} parent=1 // loop_footer_branch
      %25 = sbr.rel target = $region3
    $region8: #{simplenet_forward.2} parent=1 // loop_exit
      _
    %5557 = vsyncpa [#allocation8], 1
    %s5558 = scalar_lea.sflag [#allocation8], 1
    %5559 = vsyncpa %s5558, 1
    %5560 = vsyncpa [#allocation10], 1
    %5561 = vsyncpa [#allocation13], 1
    %5562 = vsyncpa [#allocation16], 1
    %5563 = vsyncpa [#allocation19], 1
    %5564 = vsyncpa [#allocation22], 1
    %5565 = vsyncpa [#allocation25], 1

</llo_original>
